<compile_context>
chip_gen: v5e
topology: v5e:2x2
jax: 0.10.0
libtpu: 0.0.40
codegen_flags: <defaults>
</compile_context>

<pallas_src>
import functools

import jax
import jax.numpy as jnp
import numpy as np
from jax.experimental import pallas as pl
from jax.experimental.pallas import tpu as pltpu


# Explicit scoped-VMEM budget: above the 32 MiB scoped default on v5e/v6e,
# below v7x's 64 MiB/TC physical.  (Cap only; actual use here is a few MiB.)
_VMEM_LIMIT_BYTES = 48 * 1024 * 1024


# ---------------------------------------------------------------------------
# Generic tiled linear kernel:  y = x @ W_t + b   (bf16 MXU, f32 accumulate)
# ---------------------------------------------------------------------------
def _linear_kernel(x_ref, w_ref, b_ref, out_ref):
    # x_ref: (tm, K) bf16 ; w_ref: (K, N) bf16 ; b_ref: (1, N) f32
    acc = jnp.dot(x_ref[...], w_ref[...], preferred_element_type=jnp.float32)
    out_ref[...] = (acc + b_ref[...]).astype(out_ref.dtype)


def _pick_tm(M):
    for tm in (512, 256, 128):
        if M % tm == 0:
            return tm
    # TODO(synk): for large non-128-multiple M, pad to a 128 multiple (masked
    #             tail) instead of one full-M block (VMEM risk on v7x).
    return M


def _linear_pallas(x, w_t, b, *, out_dtype):
    """x: (M, K) bf16; w_t: (K, N) bf16; b: (1, N) f32 -> (M, N) out_dtype."""
    M, K = x.shape
    N = w_t.shape[1]
    tm = _pick_tm(M)
    cost = pl.CostEstimate(
        flops=2 * M * K * N,
        transcendentals=0,
        bytes_accessed=(M * K * x.dtype.itemsize
                        + K * N * w_t.dtype.itemsize
                        + N * b.dtype.itemsize
                        + M * N * jnp.dtype(out_dtype).itemsize))
    # NOTE: weight/bias blocks have a constant block index (resident across the
    # grid); pipeline_mode=pl.Buffered(1) would halve their VMEM footprint for
    # large E, left at the default here since the demo weight is tiny.
    return pl.pallas_call(
        _linear_kernel,
        out_shape=jax.ShapeDtypeStruct((M, N), out_dtype),
        grid_spec=pltpu.PrefetchScalarGridSpec(
            num_scalar_prefetch=0,
            grid=(M // tm,),
            in_specs=[
                pl.BlockSpec((tm, K), lambda i: (i, 0)),   # activations (tiled over M)
                pl.BlockSpec((K, N), lambda i: (0, 0)),    # weight, resident
                pl.BlockSpec((1, N), lambda i: (0, 0)),    # bias, resident
            ],
            out_specs=pl.BlockSpec((tm, N), lambda i: (i, 0)),
        ),
        compiler_params=pltpu.CompilerParams(
            dimension_semantics=("parallel",),
            vmem_limit_bytes=_VMEM_LIMIT_BYTES),
        cost_estimate=cost,
    )(x, w_t, b)


# ---------------------------------------------------------------------------
# Attention core.
# Grid = (batch, head-pair, q-tile); Q/K/V are lane-blocks of one (B, T, 3E)
# slab (no head-split transposes), output is written directly head-merged
# into a (B, T, E) slab (no head-merge transpose).
# ---------------------------------------------------------------------------
def _mha_kernel(q_ref, k_ref, v_ref, bias_ref, out_ref, *, hpb, hd):
    """q_ref: (1, tq, hpb*hd) bf16; k_ref/v_ref: (1, S, hpb*hd) bf16;
    bias_ref: (1, 1, S) f32 additive key-padding bias; out_ref: (1, tq, hpb*hd)."""
    bias = bias_ref[0]                                   # (1, S) f32
    # Static unrolled loop over the heads in this block: back-to-back 128-lane
    # matmuls keep the 256-wide MXU (v6e/v7x) full while staying under 64 vregs.
    for h in range(hpb):
        lo, hi = h * hd, (h + 1) * hd                    # lane-aligned (hd = 128)
        q = q_ref[0, :, lo:hi]                           # (tq, hd) bf16 (q-scaling pre-folded)
        k = k_ref[0, :, lo:hi]                           # (S,  hd) bf16
        v = v_ref[0, :, lo:hi]                           # (S,  hd) bf16

        # QK^T without materializing a K transpose: contract head_dim of both.
        scores = jax.lax.dot_general(
            q, k, dimension_numbers=(((1,), (1,)), ((), ())),
            preferred_element_type=jnp.float32)          # (tq, S) f32

        scores = scores + bias                           # additive key-padding bias
        scores = scores - jnp.max(scores, axis=-1, keepdims=True)
        p = jnp.exp(scores)
        denom = jnp.sum(p, axis=-1, keepdims=True)
        p = p * pl.reciprocal(denom, approx=True)        # EUP reciprocal, no VALU divide
        # TODO(synk): F.dropout on attention probs not implemented (p=0.0 / eval).

        ctx = jnp.dot(p.astype(jnp.bfloat16), v,
                      preferred_element_type=jnp.float32)  # (tq, hd) f32
        out_ref[0, :, lo:hi] = ctx.astype(out_ref.dtype)   # 128-lane unmasked store


# ---------------------------------------------------------------------------
# One-time parameter preparation (hoisted out of the forward path)
# ---------------------------------------------------------------------------
def prepare_params(params, num_heads):
    """Fuse QKV weights, fold q scaling, transpose, pre-cast to bf16 — once."""
    E = params["wq"].shape[0]
    hd = E // num_heads
    scaling = hd ** -0.5
    w_qkv_t = jnp.concatenate(
        [params["wq"].T * scaling, params["wk"].T, params["wv"].T],
        axis=1).astype(jnp.bfloat16)                     # (E, 3E)
    b_qkv = jnp.concatenate(
        [params["bq"] * scaling, params["bk"], params["bv"]]
    ).astype(jnp.float32)[None, :]                       # (1, 3E)
    wo_t = params["wo"].T.astype(jnp.bfloat16)           # (E, E)
    bo = params["bo"].astype(jnp.float32)[None, :]       # (1, E)
    return {"w_qkv_t": w_qkv_t, "b_qkv": b_qkv, "wo_t": wo_t, "bo": bo}


# ---------------------------------------------------------------------------
# Forward wrapper (layout plumbing only; all reshapes are free)
# ---------------------------------------------------------------------------
def self_attention_pallas(query, key_padding_mask, prepped, num_heads):
    """query: (T, B, E) f32; key_padding_mask: (B, S) bool (True == pad)."""
    T, B, E = query.shape
    H = num_heads
    hd = E // H
    assert hd * H == E
    S = T  # self-attention

    # Heads per attention grid step: 2 fills the 256-wide MXU on v6e/v7x and
    # halves per-step overhead; lane-block width (hpb*hd) must stay a
    # multiple of 128.  (v5e's 128-wide MXU is fine either way.)
    hpb = 2 if (H % 2 == 0 and hd % 128 == 0) else 1
    assert (hpb * hd) % 128 == 0, "head_dim must be lane-aligned (see TODO for hd<128)"
    HP = H // hpb

    # --- batch-major bf16 token slab (single cast; all MXU operands bf16) ---
    x_flat = jnp.transpose(query, (1, 0, 2)).reshape(B * T, E).astype(jnp.bfloat16)

    # --- fused QKV projection -> (B, T, 3E) slab (free reshape, no transposes) ---
    qkv = _linear_pallas(x_flat, prepped["w_qkv_t"], prepped["b_qkv"],
                         out_dtype=jnp.bfloat16).reshape(B, T, 3 * E)

    # --- key padding mask -> additive finite bias (computed once) ---
    bias = jnp.where(key_padding_mask, -1e30, 0.0).astype(jnp.float32)[:, None, :]  # (B,1,S)

    # --- attention kernel: grid over (batch, head-pair, q-tile) ---
    # Leading axis B=2 is parallel and even -> both v7x TensorCores get work.
    tq = 128 if T % 128 == 0 else T
    nq = T // tq
    cost = pl.CostEstimate(
        flops=4 * B * H * T * S * hd,                    # QK^T + PV
        transcendentals=B * H * T * S,                   # exp
        bytes_accessed=3 * B * T * E * 2 + B * S * 4 + B * T * E * 2)

    kernel = functools.partial(_mha_kernel, hpb=hpb, hd=hd)
    ctx = pl.pallas_call(
        kernel,
        out_shape=jax.ShapeDtypeStruct((B, T, E), jnp.bfloat16),
        grid_spec=pltpu.PrefetchScalarGridSpec(
            num_scalar_prefetch=0,
            grid=(B, HP, nq),
            in_specs=[
                # Q heads: lane-block hp of the Q third of the (B,T,3E) slab.
                pl.BlockSpec((1, tq, hpb * hd), lambda b, hp, i: (b, i, hp)),
                # K heads: lane-block HP + hp (K third of the slab).
                pl.BlockSpec((1, S, hpb * hd), lambda b, hp, i: (b, 0, HP + hp)),
                # V heads: lane-block 2*HP + hp (V third of the slab).
                pl.BlockSpec((1, S, hpb * hd), lambda b, hp, i: (b, 0, 2 * HP + hp)),
                # Key-padding bias.
                pl.BlockSpec((1, 1, S), lambda b, hp, i: (b, 0, 0)),
            ],
            # Heads store directly into their lane slice of (B, T, E):
            out_specs=pl.BlockSpec((1, tq, hpb * hd), lambda b, hp, i: (b, i, hp)),
        ),
        compiler_params=pltpu.CompilerParams(
            dimension_semantics=("parallel", "parallel", "parallel"),
            vmem_limit_bytes=_VMEM_LIMIT_BYTES),
        cost_estimate=cost,
    )(qkv, qkv, qkv, bias)

    # --- heads already merged by the out_spec lane placement: free reshape ---
    ctx_flat = ctx.reshape(B * T, E)                     # bf16, lane-dense

    # --- output projection ---
    out_flat = _linear_pallas(ctx_flat, prepped["wo_t"], prepped["bo"],
                              out_dtype=query.dtype)     # (B*T, E)

    attn_output = jnp.transpose(out_flat.reshape(B, T, E), (1, 0, 2))  # (T, B, E)
    attn_weights = None                                  # output_attentions=False
    return attn_output, attn_weights


# ---------------------------------------------------------------------------
# Pure-JAX reference mirroring the PyTorch forward (self-attention path)
# ---------------------------------------------------------------------------
def reference_forward(query, key_padding_mask, params, num_heads):
    T, B, E = query.shape
    hd = E // num_heads
    scaling = hd ** -0.5

    q = (query @ params["wq"].T + params["bq"]) * scaling
    k = query @ params["wk"].T + params["bk"]
    v = query @ params["wv"].T + params["bv"]

    def _shape(t):  # (T, B, E) -> (B*H, T, hd)
        return jnp.transpose(t.reshape(T, B * num_heads, hd), (1, 0, 2))

    q, k, v = _shape(q), _shape(k), _shape(v)
    attn = jnp.einsum("btd,bsd->bts", q, k)
    S = k.shape[1]
    attn = attn.reshape(B, num_heads, T, S)
    attn = jnp.where(key_padding_mask[:, None, None, :], -jnp.inf, attn)
    attn = attn.reshape(B * num_heads, T, S)
    attn = jax.nn.softmax(attn, axis=-1)
    out = jnp.einsum("bts,bsd->btd", attn, v)
    out = jnp.transpose(out, (1, 0, 2)).reshape(T, B, E)
    return out @ params["wo"].T + params["bo"]


def make_params(key, embed_dim):
    keys = jax.random.split(key, 8)
    scale = 0.02
    return {
        "wq": scale * jax.random.normal(keys[0], (embed_dim, embed_dim), jnp.float32),
        "bq": scale * jax.random.normal(keys[1], (embed_dim,), jnp.float32),
        "wk": scale * jax.random.normal(keys[2], (embed_dim, embed_dim), jnp.float32),
        "bk": scale * jax.random.normal(keys[3], (embed_dim,), jnp.float32),
        "wv": scale * jax.random.normal(keys[4], (embed_dim, embed_dim), jnp.float32),
        "bv": scale * jax.random.normal(keys[5], (embed_dim,), jnp.float32),
        "wo": scale * jax.random.normal(keys[6], (embed_dim, embed_dim), jnp.float32),
        "bo": scale * jax.random.normal(keys[7], (embed_dim,), jnp.float32),
    }


if __name__ == "__main__":
    # Small but TPU-friendly shapes: lane-dense head_dim (=128) and E, 3E, T
    # multiples of 128 so every block / store is unmasked.
    T, B, E, H = 128, 2, 512, 4       # seq, batch, embed_dim, heads (head_dim=128)

    root = jax.random.PRNGKey(0)
    k_param, k_x = jax.random.split(root)
    params = make_params(k_param, E)
    prepped = prepare_params(params, H)   # weight prep hoisted out of the forward

    query = jax.random.normal(k_x, (T, B, E), jnp.float32)  # (Time, Batch, Channel)
    # key_padding_mask: True == padded key; pad the last 16 keys of batch 1.
    key_padding_mask = jnp.zeros((B, T), dtype=bool).at[1, -16:].set(True)

    fwd = jax.jit(functools.partial(self_attention_pallas, num_heads=H))
    out, attn_w = fwd(query, key_padding_mask, prepped)
    out = jax.block_until_ready(out)

    ref = jax.block_until_ready(
        reference_forward(query, key_padding_mask, params, H))

    # bf16 MXU operands (f32 accumulation) vs a pure-f32 reference.
    np.testing.assert_allclose(np.asarray(out), np.asarray(ref),
                               rtol=2e-2, atol=2e-2)
    assert out.shape == (T, B, E)
    assert attn_w is None
    print("KERNEL_OK")
</pallas_src>

<mosaic_0001>
module attributes {stable_mosaic.version = 11 : i64} {
  func.func @_linear_kernel(%arg0: i32, %arg1: memref<256x512xbf16, #tpu.memory_space<vmem>>, %arg2: memref<512x1536xbf16, #tpu.memory_space<vmem>>, %arg3: memref<1x1536xf32, #tpu.memory_space<vmem>>, %arg4: memref<256x1536xbf16, #tpu.memory_space<vmem>>) attributes {dimension_semantics = [#tpu.dimension_semantics<parallel>], iteration_bounds = array<i64: 1>, scalar_prefetch = 0 : i64, scratch_operands = 0 : i64, tpu.core_type = #tpu.core_type<tc>, window_params = [{transform_indices = @transform_0, window_bounds = array<i64: 256, 512>}, {pipeline_mode = #tpu.pipeline_mode<synchronous>, transform_indices = @transform_1, window_bounds = array<i64: 512, 1536>}, {pipeline_mode = #tpu.pipeline_mode<synchronous>, transform_indices = @transform_2, window_bounds = array<i64: 1, 1536>}, {transform_indices = @transform_3, window_bounds = array<i64: 256, 1536>}]} {
    %c0 = arith.constant 0 : index
    %c0_0 = arith.constant 0 : index
    %0 = vector.load %arg1[%c0, %c0_0] : memref<256x512xbf16, #tpu.memory_space<vmem>>, vector<256x512xbf16>
    %c0_1 = arith.constant 0 : index
    %c0_2 = arith.constant 0 : index
    %1 = vector.load %arg2[%c0_1, %c0_2] : memref<512x1536xbf16, #tpu.memory_space<vmem>>, vector<512x1536xbf16>
    %cst = arith.constant dense<0.000000e+00> : vector<256x1536xf32>
    %2 = tpu.matmul %0, %1, %cst {dimension_numbers = #tpu.dot_dimension_numbers<[1], [0], [0], [1], [0, 0, 1, 1], [], []>} : vector<256x512xbf16>, vector<512x1536xbf16>, vector<256x1536xf32> -> vector<256x1536xf32>
    %c0_3 = arith.constant 0 : index
    %c0_4 = arith.constant 0 : index
    %3 = vector.load %arg3[%c0_3, %c0_4] : memref<1x1536xf32, #tpu.memory_space<vmem>>, vector<1x1536xf32>
    %4 = vector.broadcast %3 : vector<1x1536xf32> to vector<256x1536xf32>
    %5 = arith.addf %2, %4 : vector<256x1536xf32>
    %6 = arith.truncf %5 : vector<256x1536xf32> to vector<256x1536xbf16>
    %c0_5 = arith.constant 0 : index
    %c0_6 = arith.constant 0 : index
    %7 = vector.load %arg4[%c0_5, %c0_6] : memref<256x1536xbf16, #tpu.memory_space<vmem>>, vector<256x1536xbf16>
    tpu.vector_store %arg4[%c0_5, %c0_6], %6 {strides = array<i32>} : memref<256x1536xbf16, #tpu.memory_space<vmem>>, vector<256x1536xbf16>,
    return
  }
  func.func @transform_0(%arg0: i32) -> (i32, i32) {
    %c0_i32 = arith.constant 0 : i32
    %c0_i32_0 = arith.constant 0 : i32
    return %arg0, %c0_i32 : i32, i32
  }
  func.func @transform_1(%arg0: i32) -> (i32, i32) {
    %c0_i32 = arith.constant 0 : i32
    %c0_i32_0 = arith.constant 0 : i32
    %c0_i32_1 = arith.constant 0 : i32
    return %c0_i32, %c0_i32_0 : i32, i32
  }
  func.func @transform_2(%arg0: i32) -> (i32, i32) {
    %c0_i32 = arith.constant 0 : i32
    %c0_i32_0 = arith.constant 0 : i32
    %c0_i32_1 = arith.constant 0 : i32
    return %c0_i32, %c0_i32_0 : i32, i32
  }
  func.func @transform_3(%arg0: i32) -> (i32, i32) {
    %c0_i32 = arith.constant 0 : i32
    %c0_i32_0 = arith.constant 0 : i32
    return %arg0, %c0_i32 : i32, i32
  }
}

module attributes {stable_mosaic.version = 11 : i64} {
  func.func @_mha_kernel(%arg0: i32, %arg1: i32, %arg2: i32, %arg3: memref<1x128x256xbf16, #tpu.memory_space<vmem>>, %arg4: memref<1x128x256xbf16, #tpu.memory_space<vmem>>, %arg5: memref<1x128x256xbf16, #tpu.memory_space<vmem>>, %arg6: memref<1x1x128xf32, #tpu.memory_space<vmem>>, %arg7: memref<1x128x256xbf16, #tpu.memory_space<vmem>>) attributes {dimension_semantics = [#tpu.dimension_semantics<parallel>, #tpu.dimension_semantics<parallel>, #tpu.dimension_semantics<parallel>], iteration_bounds = array<i64: 2, 2, 1>, scalar_prefetch = 0 : i64, scratch_operands = 0 : i64, tpu.core_type = #tpu.core_type<tc>, window_params = [{transform_indices = @transform_0, window_bounds = array<i64: 1, 128, 256>}, {transform_indices = @transform_1, window_bounds = array<i64: 1, 128, 256>}, {transform_indices = @transform_2, window_bounds = array<i64: 1, 128, 256>}, {transform_indices = @transform_3, window_bounds = array<i64: 1, 1, 128>}, {transform_indices = @transform_4, window_bounds = array<i64: 1, 128, 256>}]} {
    %c0 = arith.constant 0 : index
    %c0_0 = arith.constant 0 : index
    %c0_1 = arith.constant 0 : index
    %0 = vector.load %arg6[%c0, %c0_0, %c0_1] : memref<1x1x128xf32, #tpu.memory_space<vmem>>, vector<1x1x128xf32>
    %1 = vector.shape_cast %0 : vector<1x1x128xf32> to vector<1x128xf32>
    %c0_2 = arith.constant 0 : index
    %c0_3 = arith.constant 0 : index
    %c0_4 = arith.constant 0 : index
    %2 = vector.load %arg3[%c0_2, %c0_3, %c0_4] : memref<1x128x256xbf16, #tpu.memory_space<vmem>>, vector<1x128x128xbf16>
    %3 = vector.shape_cast %2 : vector<1x128x128xbf16> to vector<128x128xbf16>
    %c0_5 = arith.constant 0 : index
    %c0_6 = arith.constant 0 : index
    %c0_7 = arith.constant 0 : index
    %4 = vector.load %arg4[%c0_5, %c0_6, %c0_7] : memref<1x128x256xbf16, #tpu.memory_space<vmem>>, vector<1x128x128xbf16>
    %5 = vector.shape_cast %4 : vector<1x128x128xbf16> to vector<128x128xbf16>
    %c0_8 = arith.constant 0 : index
    %c0_9 = arith.constant 0 : index
    %c0_10 = arith.constant 0 : index
    %6 = vector.load %arg5[%c0_8, %c0_9, %c0_10] : memref<1x128x256xbf16, #tpu.memory_space<vmem>>, vector<1x128x128xbf16>
    %7 = vector.shape_cast %6 : vector<1x128x128xbf16> to vector<128x128xbf16>
    %cst = arith.constant dense<0.000000e+00> : vector<128x128xf32>
    %8 = tpu.matmul %3, %5, %cst {dimension_numbers = #tpu.dot_dimension_numbers<[1], [1], [0], [0], [0, 0, 1, 0], [], []>} : vector<128x128xbf16>, vector<128x128xbf16>, vector<128x128xf32> -> vector<128x128xf32>
    %9 = vector.broadcast %1 : vector<1x128xf32> to vector<128x128xf32>
    %10 = arith.addf %8, %9 : vector<128x128xf32>
    %cst_11 = arith.constant dense<0xFF800000> : vector<128xf32>
    %11 = vector.multi_reduction <maximumf>, %10, %cst_11 [1] : vector<128x128xf32> to vector<128xf32>
    %12 = vector.shape_cast %11 : vector<128xf32> to vector<128x1xf32>
    %13 = vector.broadcast %12 : vector<128x1xf32> to vector<128x128xf32>
    %14 = arith.subf %10, %13 : vector<128x128xf32>
    %15 = math.exp %14 : vector<128x128xf32>
    %cst_12 = arith.constant dense<0.000000e+00> : vector<128xf32>
    %16 = vector.multi_reduction <add>, %15, %cst_12 [1] : vector<128x128xf32> to vector<128xf32>
    %17 = vector.shape_cast %16 : vector<128xf32> to vector<128x1xf32>
    %18 = tpu.reciprocal %17 {approx = true} : vector<128x1xf32> -> vector<128x1xf32>
    %19 = vector.broadcast %18 : vector<128x1xf32> to vector<128x128xf32>
    %20 = arith.mulf %15, %19 : vector<128x128xf32>
    %21 = arith.truncf %20 : vector<128x128xf32> to vector<128x128xbf16>
    %cst_13 = arith.constant dense<0.000000e+00> : vector<128x128xf32>
    %22 = tpu.matmul %21, %7, %cst_13 {dimension_numbers = #tpu.dot_dimension_numbers<[1], [0], [0], [1], [0, 0, 1, 1], [], []>} : vector<128x128xbf16>, vector<128x128xbf16>, vector<128x128xf32> -> vector<128x128xf32>
    %23 = arith.truncf %22 : vector<128x128xf32> to vector<128x128xbf16>
    %c0_14 = arith.constant 0 : index
    %c0_15 = arith.constant 0 : index
    %c0_16 = arith.constant 0 : index
    %24 = vector.load %arg7[%c0_14, %c0_15, %c0_16] : memref<1x128x256xbf16, #tpu.memory_space<vmem>>, vector<1x128x128xbf16>
    %25 = vector.shape_cast %24 : vector<1x128x128xbf16> to vector<128x128xbf16>
    %26 = vector.shape_cast %23 : vector<128x128xbf16> to vector<1x128x128xbf16>
    tpu.vector_store %arg7[%c0_14, %c0_15, %c0_16], %26 {strides = array<i32>} : memref<1x128x256xbf16, #tpu.memory_space<vmem>>, vector<1x128x128xbf16>,
    %c0_17 = arith.constant 0 : index
    %c0_18 = arith.constant 0 : index
    %c128 = arith.constant 128 : index
    %27 = vector.load %arg3[%c0_17, %c0_18, %c128] : memref<1x128x256xbf16, #tpu.memory_space<vmem>>, vector<1x128x128xbf16>
    %28 = vector.shape_cast %27 : vector<1x128x128xbf16> to vector<128x128xbf16>
    %c0_19 = arith.constant 0 : index
    %c0_20 = arith.constant 0 : index
    %c128_21 = arith.constant 128 : index
    %29 = vector.load %arg4[%c0_19, %c0_20, %c128_21] : memref<1x128x256xbf16, #tpu.memory_space<vmem>>, vector<1x128x128xbf16>
    %30 = vector.shape_cast %29 : vector<1x128x128xbf16> to vector<128x128xbf16>
    %c0_22 = arith.constant 0 : index
    %c0_23 = arith.constant 0 : index
    %c128_24 = arith.constant 128 : index
    %31 = vector.load %arg5[%c0_22, %c0_23, %c128_24] : memref<1x128x256xbf16, #tpu.memory_space<vmem>>, vector<1x128x128xbf16>
    %32 = vector.shape_cast %31 : vector<1x128x128xbf16> to vector<128x128xbf16>
    %cst_25 = arith.constant dense<0.000000e+00> : vector<128x128xf32>
    %33 = tpu.matmul %28, %30, %cst_25 {dimension_numbers = #tpu.dot_dimension_numbers<[1], [1], [0], [0], [0, 0, 1, 0], [], []>} : vector<128x128xbf16>, vector<128x128xbf16>, vector<128x128xf32> -> vector<128x128xf32>
    %34 = vector.broadcast %1 : vector<1x128xf32> to vector<128x128xf32>
    %35 = arith.addf %33, %34 : vector<128x128xf32>
    %cst_26 = arith.constant dense<0xFF800000> : vector<128xf32>
    %36 = vector.multi_reduction <maximumf>, %35, %cst_26 [1] : vector<128x128xf32> to vector<128xf32>
    %37 = vector.shape_cast %36 : vector<128xf32> to vector<128x1xf32>
    %38 = vector.broadcast %37 : vector<128x1xf32> to vector<128x128xf32>
    %39 = arith.subf %35, %38 : vector<128x128xf32>
    %40 = math.exp %39 : vector<128x128xf32>
    %cst_27 = arith.constant dense<0.000000e+00> : vector<128xf32>
    %41 = vector.multi_reduction <add>, %40, %cst_27 [1] : vector<128x128xf32> to vector<128xf32>
    %42 = vector.shape_cast %41 : vector<128xf32> to vector<128x1xf32>
    %43 = tpu.reciprocal %42 {approx = true} : vector<128x1xf32> -> vector<128x1xf32>
    %44 = vector.broadcast %43 : vector<128x1xf32> to vector<128x128xf32>
    %45 = arith.mulf %40, %44 : vector<128x128xf32>
    %46 = arith.truncf %45 : vector<128x128xf32> to vector<128x128xbf16>
    %cst_28 = arith.constant dense<0.000000e+00> : vector<128x128xf32>
    %47 = tpu.matmul %46, %32, %cst_28 {dimension_numbers = #tpu.dot_dimension_numbers<[1], [0], [0], [1], [0, 0, 1, 1], [], []>} : vector<128x128xbf16>, vector<128x128xbf16>, vector<128x128xf32> -> vector<128x128xf32>
    %48 = arith.truncf %47 : vector<128x128xf32> to vector<128x128xbf16>
    %c0_29 = arith.constant 0 : index
    %c0_30 = arith.constant 0 : index
    %c128_31 = arith.constant 128 : index
    %49 = vector.load %arg7[%c0_29, %c0_30, %c128_31] : memref<1x128x256xbf16, #tpu.memory_space<vmem>>, vector<1x128x128xbf16>
    %50 = vector.shape_cast %49 : vector<1x128x128xbf16> to vector<128x128xbf16>
    %51 = vector.shape_cast %48 : vector<128x128xbf16> to vector<1x128x128xbf16>
    tpu.vector_store %arg7[%c0_29, %c0_30, %c128_31], %51 {strides = array<i32>} : memref<1x128x256xbf16, #tpu.memory_space<vmem>>, vector<1x128x128xbf16>,
    return
  }
  func.func @transform_0(%arg0: i32, %arg1: i32, %arg2: i32) -> (i32, i32, i32) {
    %c0_i32 = arith.constant 0 : i32
    return %arg0, %arg2, %arg1 : i32, i32, i32
  }
  func.func @transform_1(%arg0: i32, %arg1: i32, %arg2: i32) -> (i32, i32, i32) {
    %c2_i32 = arith.constant 2 : i32
    %0 = arith.addi %c2_i32, %arg1 : i32
    %c0_i32 = arith.constant 0 : i32
    %c0_i32_0 = arith.constant 0 : i32
    return %arg0, %c0_i32, %0 : i32, i32, i32
  }
  func.func @transform_2(%arg0: i32, %arg1: i32, %arg2: i32) -> (i32, i32, i32) {
    %c4_i32 = arith.constant 4 : i32
    %0 = arith.addi %c4_i32, %arg1 : i32
    %c0_i32 = arith.constant 0 : i32
    %c0_i32_0 = arith.constant 0 : i32
    return %arg0, %c0_i32, %0 : i32, i32, i32
  }
  func.func @transform_3(%arg0: i32, %arg1: i32, %arg2: i32) -> (i32, i32, i32) {
    %c0_i32 = arith.constant 0 : i32
    %c0_i32_0 = arith.constant 0 : i32
    %c0_i32_1 = arith.constant 0 : i32
    return %arg0, %c0_i32, %c0_i32_0 : i32, i32, i32
  }
  func.func @transform_4(%arg0: i32, %arg1: i32, %arg2: i32) -> (i32, i32, i32) {
    %c0_i32 = arith.constant 0 : i32
    return %arg0, %arg2, %arg1 : i32, i32, i32
  }
}

module attributes {stable_mosaic.version = 11 : i64} {
  func.func @_linear_kernel(%arg0: i32, %arg1: memref<256x512xbf16, #tpu.memory_space<vmem>>, %arg2: memref<512x512xbf16, #tpu.memory_space<vmem>>, %arg3: memref<1x512xf32, #tpu.memory_space<vmem>>, %arg4: memref<256x512xf32, #tpu.memory_space<vmem>>) attributes {dimension_semantics = [#tpu.dimension_semantics<parallel>], iteration_bounds = array<i64: 1>, scalar_prefetch = 0 : i64, scratch_operands = 0 : i64, tpu.core_type = #tpu.core_type<tc>, window_params = [{transform_indices = @transform_0, window_bounds = array<i64: 256, 512>}, {pipeline_mode = #tpu.pipeline_mode<synchronous>, transform_indices = @transform_1, window_bounds = array<i64: 512, 512>}, {pipeline_mode = #tpu.pipeline_mode<synchronous>, transform_indices = @transform_2, window_bounds = array<i64: 1, 512>}, {transform_indices = @transform_3, window_bounds = array<i64: 256, 512>}]} {
    %c0 = arith.constant 0 : index
    %c0_0 = arith.constant 0 : index
    %0 = vector.load %arg1[%c0, %c0_0] : memref<256x512xbf16, #tpu.memory_space<vmem>>, vector<256x512xbf16>
    %c0_1 = arith.constant 0 : index
    %c0_2 = arith.constant 0 : index
    %1 = vector.load %arg2[%c0_1, %c0_2] : memref<512x512xbf16, #tpu.memory_space<vmem>>, vector<512x512xbf16>
    %cst = arith.constant dense<0.000000e+00> : vector<256x512xf32>
    %2 = tpu.matmul %0, %1, %cst {dimension_numbers = #tpu.dot_dimension_numbers<[1], [0], [0], [1], [0, 0, 1, 1], [], []>} : vector<256x512xbf16>, vector<512x512xbf16>, vector<256x512xf32> -> vector<256x512xf32>
    %c0_3 = arith.constant 0 : index
    %c0_4 = arith.constant 0 : index
    %3 = vector.load %arg3[%c0_3, %c0_4] : memref<1x512xf32, #tpu.memory_space<vmem>>, vector<1x512xf32>
    %4 = vector.broadcast %3 : vector<1x512xf32> to vector<256x512xf32>
    %5 = arith.addf %2, %4 : vector<256x512xf32>
    %c0_5 = arith.constant 0 : index
    %c0_6 = arith.constant 0 : index
    %6 = vector.load %arg4[%c0_5, %c0_6] : memref<256x512xf32, #tpu.memory_space<vmem>>, vector<256x512xf32>
    tpu.vector_store %arg4[%c0_5, %c0_6], %5 {strides = array<i32>} : memref<256x512xf32, #tpu.memory_space<vmem>>, vector<256x512xf32>,
    return
  }
  func.func @transform_0(%arg0: i32) -> (i32, i32) {
    %c0_i32 = arith.constant 0 : i32
    %c0_i32_0 = arith.constant 0 : i32
    return %arg0, %c0_i32 : i32, i32
  }
  func.func @transform_1(%arg0: i32) -> (i32, i32) {
    %c0_i32 = arith.constant 0 : i32
    %c0_i32_0 = arith.constant 0 : i32
    %c0_i32_1 = arith.constant 0 : i32
    return %c0_i32, %c0_i32_0 : i32, i32
  }
  func.func @transform_2(%arg0: i32) -> (i32, i32) {
    %c0_i32 = arith.constant 0 : i32
    %c0_i32_0 = arith.constant 0 : i32
    %c0_i32_1 = arith.constant 0 : i32
    return %c0_i32, %c0_i32_0 : i32, i32
  }
  func.func @transform_3(%arg0: i32) -> (i32, i32) {
    %c0_i32 = arith.constant 0 : i32
    %c0_i32_0 = arith.constant 0 : i32
    return %arg0, %c0_i32 : i32, i32
  }
}

</mosaic_0001>

<llo_original>
// kernel: self_attention_pallas.4
$region0: #{self_attention_pallas.4}
  #allocation0 [shape = 'u32[]', space=smem, size = 0x4, offset = 0x4, fixed_abs, tag = 'smem constant byte address 0x4 - core index']
  #allocation1 [shape = 'u32[72,128]{1,0:T(1,128)}', space=vmem, size = 0x9000, scoped, tag = 'internal scratch']
  %s0 = inlined_call_operand.vmem [shape: bf16[2,128,1536], index: 0, kind: input, shape index: {}, may-alias: {0,1,2}]
  %s1 = inlined_call_operand.vmem [shape: bf16[2,128,1536], index: 1, kind: input, shape index: {}, may-alias: {0,1,2}]
  %s2 = inlined_call_operand.vmem [shape: bf16[2,128,1536], index: 2, kind: input, shape index: {}, may-alias: {0,1,2}]
  %s3 = inlined_call_operand.vmem [shape: f32[2,1,128], index: 3, kind: input, shape index: {}]
  %s4 = inlined_call_operand.vmem [shape: bf16[2,128,512], index: 4, kind: output, shape index: {}]
  %s5 = sld [smem:[#allocation0]]
  $region197: #{self_attention_pallas.4} parent=0
    _
  %s7 = ssub.s32 1, %s5
  %s8 = scalar_select 0, %s7, %s5
  $region1: #{self_attention_pallas.4} parent=0
    #allocation2 [shape = 'u8[131072]{0}', space=vmem, size = 0x20000, scoped, tag = 'input window, operand 0']
    #allocation3 [shape = 'u8[131072]{0}', space=vmem, size = 0x20000, scoped, tag = 'input window, operand 1']
    #allocation4 [shape = 'u8[131072]{0}', space=vmem, size = 0x20000, scoped, tag = 'input window, operand 2']
    #allocation5 [shape = 'u8[131072]{0}', space=vmem, size = 0x20000, scoped, tag = 'output window, operand 0']
    loop: start=0, step=1, limit=6
    $region2: #{self_attention_pallas.4} parent=1 // loop_pre_header
      _
    $region3: #{self_attention_pallas.4} parent=1 // loop_header
      %s10 = sphi 0, %s14
      %p11 = scmp.ge.s32.totalorder %s10, 6
      %s17 = sphi 0, %s36
      %s18 = sphi 0, %s32
      %s19 = sphi 0, %s28
      %s20 = sphi 0, %s17
      %s21 = sphi 0, %s18
      %s22 = sphi 0, %s19
      %s23 = sphi 0, %s20
      %s24 = sphi 0, %s21
      %s25 = sphi 0, %s22
      %s43 = sphi 0, %s45
      %s46 = sphi 0, %s43
      %s47 = sphi 0, %s46
      %s63 = sphi 0, %s47
      %s73 = sphi 0, %s75
      %s76 = sphi 0, %s73
      %s77 = sphi 0, %s76
      %s93 = sphi 0, %s77
      %s103 = sphi 0, %s105
      %s106 = sphi 0, %s103
      %s107 = sphi 0, %s106
      %s123 = sphi 0, %s107
      %s129 = sphi 0, %s131
      %s132 = sphi 0, %s129
      %s133 = sphi 0, %s132
      %s149 = sphi 0, %s133
      %s159 = sphi 0, %s161
      %s162 = sphi 0, %s159
      %s163 = sphi 0, %s162
      %s179 = sphi 0, %s163
    $region4: #{self_attention_pallas.4} parent=1 // loop_header_branch
      %13 = sbr.rel (%p11) target = $region8
    $region5: #{self_attention_pallas.4} parent=1 // loop_body
      %s15 = ssub.s32 %s10, 1
      %s16 = ssub.s32 %s10, 2
      %s26 = sadd.s32 1, %s19
      %p27 = scmp.ge.s32.totalorder %s26, 1
      %s28 = scalar_select %p27, 0, %s26
      %s29 = sadd.s32 1, %s18
      %s30 = scalar_select %p27, %s29, %s18
      %p31 = scmp.ge.s32.totalorder %s30, 2
      %s32 = scalar_select %p31, 0, %s30
      %s33 = sadd.s32 1, %s17
      %s34 = scalar_select %p31, %s33, %s17
      %p35 = scmp.ge.s32.totalorder %s34, 2
      %s36 = scalar_select %p35, 0, %s34
      %s37 = ssub.s32 %s17, %s36
      %s38 = ssub.s32 %s19, %s28
      %s39 = sor.u32 %s37, %s38
      %s40 = ssub.s32 %s18, %s32
      %s41 = sor.u32 %s39, %s40
      %p42 = scmp.eq.s32.totalorder %s41, 0
      %s44 = sadd.s32 %s43, 1
      %s45 = scalar_select %p42, %s43, %s44
      %p48 = pneg %p42
      %p49 = scmp.eq.s32.totalorder %s10, 3
      %p50 = por %p48, %p49
      %p51 = scmp.ne.s32.totalorder %s43, %s46
      %p52 = scmp.eq.s32.totalorder %s10, 0
      %p53 = por %p51, %p52
      %p54 = scmp.ne.s32.totalorder %s43, %s46
      %p55 = scmp.eq.s32.totalorder %s15, 3
      %p56 = por %p54, %p55
      %p57 = scmp.ne.s32.totalorder %s46, %s47
      %p58 = scmp.eq.s32.totalorder %s15, 0
      %p59 = por %p57, %p58
      %p60 = scmp.ne.s32.totalorder %s46, %s47
      %p61 = scmp.eq.s32.totalorder %s16, 3
      %p62 = por %p60, %p61
      %p64 = scmp.ne.s32.totalorder %s47, %s63
      %p65 = scmp.eq.s32.totalorder %s16, 0
      %p66 = por %p64, %p65
      %s67 = sadd.s32 %s18, 2
      %s68 = sadd.s32 %s32, 2
      %s69 = ssub.s32 %s17, %s36
      %s70 = ssub.s32 %s67, %s68
      %s71 = sor.u32 %s69, %s70
      %p72 = scmp.eq.s32.totalorder %s71, 0
      %s74 = sadd.s32 %s73, 1
      %s75 = scalar_select %p72, %s73, %s74
      %p78 = pneg %p72
      %p79 = scmp.eq.s32.totalorder %s10, 3
      %p80 = por %p78, %p79
      %p81 = scmp.ne.s32.totalorder %s73, %s76
      %p82 = scmp.eq.s32.totalorder %s10, 0
      %p83 = por %p81, %p82
      %p84 = scmp.ne.s32.totalorder %s73, %s76
      %p85 = scmp.eq.s32.totalorder %s15, 3
      %p86 = por %p84, %p85
      %p87 = scmp.ne.s32.totalorder %s76, %s77
      %p88 = scmp.eq.s32.totalorder %s15, 0
      %p89 = por %p87, %p88
      %p90 = scmp.ne.s32.totalorder %s76, %s77
      %p91 = scmp.eq.s32.totalorder %s16, 3
      %p92 = por %p90, %p91
      %p94 = scmp.ne.s32.totalorder %s77, %s93
      %p95 = scmp.eq.s32.totalorder %s16, 0
      %p96 = por %p94, %p95
      %s97 = sadd.s32 %s18, 4
      %s98 = sadd.s32 %s32, 4
      %s99 = ssub.s32 %s17, %s36
      %s100 = ssub.s32 %s97, %s98
      %s101 = sor.u32 %s99, %s100
      %p102 = scmp.eq.s32.totalorder %s101, 0
      %s104 = sadd.s32 %s103, 1
      %s105 = scalar_select %p102, %s103, %s104
      %p108 = pneg %p102
      %p109 = scmp.eq.s32.totalorder %s10, 3
      %p110 = por %p108, %p109
      %p111 = scmp.ne.s32.totalorder %s103, %s106
      %p112 = scmp.eq.s32.totalorder %s10, 0
      %p113 = por %p111, %p112
      %p114 = scmp.ne.s32.totalorder %s103, %s106
      %p115 = scmp.eq.s32.totalorder %s15, 3
      %p116 = por %p114, %p115
      %p117 = scmp.ne.s32.totalorder %s106, %s107
      %p118 = scmp.eq.s32.totalorder %s15, 0
      %p119 = por %p117, %p118
      %p120 = scmp.ne.s32.totalorder %s106, %s107
      %p121 = scmp.eq.s32.totalorder %s16, 3
      %p122 = por %p120, %p121
      %p124 = scmp.ne.s32.totalorder %s107, %s123
      %p125 = scmp.eq.s32.totalorder %s16, 0
      %p126 = por %p124, %p125
      %s127 = ssub.s32 %s17, %s36
      %p128 = scmp.eq.s32.totalorder %s127, 0
      %s130 = sadd.s32 %s129, 1
      %s131 = scalar_select %p128, %s129, %s130
      %p134 = pneg %p128
      %p135 = scmp.eq.s32.totalorder %s10, 3
      %p136 = por %p134, %p135
      %p137 = scmp.ne.s32.totalorder %s129, %s132
      %p138 = scmp.eq.s32.totalorder %s10, 0
      %p139 = por %p137, %p138
      %p140 = scmp.ne.s32.totalorder %s129, %s132
      %p141 = scmp.eq.s32.totalorder %s15, 3
      %p142 = por %p140, %p141
      %p143 = scmp.ne.s32.totalorder %s132, %s133
      %p144 = scmp.eq.s32.totalorder %s15, 0
      %p145 = por %p143, %p144
      %p146 = scmp.ne.s32.totalorder %s132, %s133
      %p147 = scmp.eq.s32.totalorder %s16, 3
      %p148 = por %p146, %p147
      %p150 = scmp.ne.s32.totalorder %s133, %s149
      %p151 = scmp.eq.s32.totalorder %s16, 0
      %p152 = por %p150, %p151
      %s153 = ssub.s32 %s17, %s36
      %s154 = ssub.s32 %s19, %s28
      %s155 = sor.u32 %s153, %s154
      %s156 = ssub.s32 %s18, %s32
      %s157 = sor.u32 %s155, %s156
      %p158 = scmp.eq.s32.totalorder %s157, 0
      %s160 = sadd.s32 %s159, 1
      %s161 = scalar_select %p158, %s159, %s160
      %p164 = pneg %p158
      %p165 = scmp.eq.s32.totalorder %s10, 3
      %p166 = por %p164, %p165
      %p167 = scmp.ne.s32.totalorder %s159, %s162
      %p168 = scmp.eq.s32.totalorder %s10, 0
      %p169 = por %p167, %p168
      %p170 = scmp.ne.s32.totalorder %s159, %s162
      %p171 = scmp.eq.s32.totalorder %s15, 3
      %p172 = por %p170, %p171
      %p173 = scmp.ne.s32.totalorder %s162, %s163
      %p174 = scmp.eq.s32.totalorder %s15, 0
      %p175 = por %p173, %p174
      %p176 = scmp.ne.s32.totalorder %s162, %s163
      %p177 = scmp.eq.s32.totalorder %s16, 3
      %p178 = por %p176, %p177
      %p180 = scmp.ne.s32.totalorder %s163, %s179
      %p181 = scmp.eq.s32.totalorder %s16, 0
      %p182 = por %p180, %p181
      %p183 = scmp.le.s32.totalorder 1, %s10
      %p184 = scmp.lt.s32.totalorder %s10, 5
      %p185 = pnand %p183, %p184
      %p186 = pneg %p185
      // Predicated region
      $region9: #{self_attention_pallas.4} parent=5 // pred_check
        _
      $region10: #{self_attention_pallas.4} parent=5 // pred_check_branch
        %188 = sbr.rel (%p185) target = $region12
      $region11: #{self_attention_pallas.4} parent=5 // pred_region
        %s189 = ssub.s32 %s10, 1
      $region12: #{self_attention_pallas.4} parent=5 // pred_fallthru
        _
      %p190 = scmp.lt.s32.totalorder %s10, 4
      // Predicated region
      $region13: #{self_attention_pallas.4} parent=5 // pred_check
        %p191 = pneg %p190
      $region14: #{self_attention_pallas.4} parent=5 // pred_check_branch
        %193 = sbr.rel (%p191) target = $region16
      $region15: #{self_attention_pallas.4} parent=5 // pred_region
        // Predicated region
        $region17: #{self_attention_pallas.4} parent=15 // pred_check
          %p194 = pneg %p53
        $region18: #{self_attention_pallas.4} parent=15 // pred_check_branch
          %196 = sbr.rel (%p194) target = $region20
        $region19: #{self_attention_pallas.4} parent=15 // pred_region
          %s197 = sand.u32 %s43, 1
          %s198 = sand.u32 %s43, 1
          %s199 = smul.addr %s198, 128
          %s200 = scalar_lea.vmem [#allocation2], %s199
          %s201 = smul.u32 16, %s19
          %s202 = smul.u32 2, %s18
          %s203 = smul.addr %s201, 12
          %s204 = sadd.s32 %s202, %s203
          %s205 = smul.addr %s17, 192
          %s206 = sadd.s32 %s204, %s205
          %s207 = smul.addr %s206, 4
          %s208 = scalar_lea.vmem %s0, %s207
          // Predicated region
          $region21: #{self_attention_pallas.4} parent=19 // pred_check
            _
          $region22: #{self_attention_pallas.4} parent=19 // pred_check_branch
            %210 = sbr.rel (0) target = $region24
          $region23: #{self_attention_pallas.4} parent=19 // pred_region
            // Predicated region
            $region25: #{self_attention_pallas.4} parent=23 // pred_check
              _
            $region26: #{self_attention_pallas.4} parent=23 // pred_check_branch
              %212 = sbr.rel (0) target = $region28
            $region27: #{self_attention_pallas.4} parent=23 // pred_region
              // Predicated region
              $region40: #{self_attention_pallas.4} parent=27 // pred_check
                _
              $region41: #{self_attention_pallas.4} parent=27 // pred_check_branch
                %258 = sbr.rel (0) target = $region43
              $region42: #{self_attention_pallas.4} parent=27 // pred_region
                loop: start=0, step=1, limit=1
                $region44: #{self_attention_pallas.4} parent=42 // loop_pre_header
                  _
                $region45: #{self_attention_pallas.4} parent=42 // loop_header
                  %s260 = sphi 0, %s264
                  %p261 = scmp.ge.s32.totalorder %s260, 1
                  %s265 = sphi %s208, %s208
                  %s266 = sphi %s200, %s200
                $region46: #{self_attention_pallas.4} parent=42 // loop_header_branch
                  %263 = sbr.rel (%p261) target = $region50
                $region47: #{self_attention_pallas.4} parent=42 // loop_body
                  %v267 = vld [vmem:[%s265] sm:$0xff]
                  %268 = vst [vmem:[%s266] sm:$0xff] %v267
                  %v269 = vld [vmem:[%s265 + $0x30] sm:$0xff]
                  %270 = vst [vmem:[%s266 + $0x8] sm:$0xff] %v269
                  %v271 = vld [vmem:[%s265 + $0x60] sm:$0xff]
                  %272 = vst [vmem:[%s266 + $0x10] sm:$0xff] %v271
                  %v273 = vld [vmem:[%s265 + $0x90] sm:$0xff]
                  %274 = vst [vmem:[%s266 + $0x18] sm:$0xff] %v273
                  %v275 = vld [vmem:[%s265 + $0xc0] sm:$0xff]
                  %276 = vst [vmem:[%s266 + $0x20] sm:$0xff] %v275
                  %v277 = vld [vmem:[%s265 + $0xf0] sm:$0xff]
                  %278 = vst [vmem:[%s266 + $0x28] sm:$0xff] %v277
                  %v279 = vld [vmem:[%s265 + $0x120] sm:$0xff]
                  %280 = vst [vmem:[%s266 + $0x30] sm:$0xff] %v279
                  %v281 = vld [vmem:[%s265 + $0x150] sm:$0xff]
                  %282 = vst [vmem:[%s266 + $0x38] sm:$0xff] %v281
                  %v283 = vld [vmem:[%s265 + $0x180] sm:$0xff]
                  %284 = vst [vmem:[%s266 + $0x40] sm:$0xff] %v283
                  %v285 = vld [vmem:[%s265 + $0x1b0] sm:$0xff]
                  %286 = vst [vmem:[%s266 + $0x48] sm:$0xff] %v285
                  %v287 = vld [vmem:[%s265 + $0x1e0] sm:$0xff]
                  %288 = vst [vmem:[%s266 + $0x50] sm:$0xff] %v287
                  %v289 = vld [vmem:[%s265 + $0x210] sm:$0xff]
                  %290 = vst [vmem:[%s266 + $0x58] sm:$0xff] %v289
                  %v291 = vld [vmem:[%s265 + $0x240] sm:$0xff]
                  %292 = vst [vmem:[%s266 + $0x60] sm:$0xff] %v291
                  %v293 = vld [vmem:[%s265 + $0x270] sm:$0xff]
                  %294 = vst [vmem:[%s266 + $0x68] sm:$0xff] %v293
                  %v295 = vld [vmem:[%s265 + $0x2a0] sm:$0xff]
                  %296 = vst [vmem:[%s266 + $0x70] sm:$0xff] %v295
                  %v297 = vld [vmem:[%s265 + $0x2d0] sm:$0xff]
                  %298 = vst [vmem:[%s266 + $0x78] sm:$0xff] %v297
                $region48: #{self_attention_pallas.4} parent=42 // loop_footer
                  %s264 = sadd.s32 1, %s260
                $region49: #{self_attention_pallas.4} parent=42 // loop_footer_branch
                  %259 = sbr.rel target = $region45
                $region50: #{self_attention_pallas.4} parent=42 // loop_exit
                  _
              $region43: #{self_attention_pallas.4} parent=27 // pred_fallthru
                _
              // Predicated region
              $region51: #{self_attention_pallas.4} parent=27 // pred_check
                _
              $region52: #{self_attention_pallas.4} parent=27 // pred_check_branch
                %300 = sbr.rel target = $region54
              $region53: #{self_attention_pallas.4} parent=27 // pred_region
                _
              $region54: #{self_attention_pallas.4} parent=27 // pred_fallthru
                _
            $region28: #{self_attention_pallas.4} parent=23 // pred_fallthru
              _
            // Predicated region
            $region29: #{self_attention_pallas.4} parent=23 // pred_check
              _
            $region30: #{self_attention_pallas.4} parent=23 // pred_check_branch
              %214 = sbr.rel target = $region32
            $region31: #{self_attention_pallas.4} parent=23 // pred_region
              %s216 = ssub.s32 256, 1
              loop: start=0, step=1, limit=1
              $region33: #{self_attention_pallas.4} parent=31 // loop_pre_header
                _
              $region34: #{self_attention_pallas.4} parent=31 // loop_header
                %s218 = sphi 0, %s222
                %p219 = scmp.ge.s32.totalorder %s218, 1
                %s223 = sphi %s208, %s208
                %s224 = sphi %s200, %s200
              $region35: #{self_attention_pallas.4} parent=31 // loop_header_branch
                %221 = sbr.rel (%p219) target = $region39
              $region36: #{self_attention_pallas.4} parent=31 // loop_body
                %v225 = vld [vmem:[%s223] sm:%s216]
                %226 = vst [vmem:[%s224] sm:%s216] %v225
                %v227 = vld [vmem:[%s223 + $0x30] sm:%s216]
                %228 = vst [vmem:[%s224 + $0x8] sm:%s216] %v227
                %v229 = vld [vmem:[%s223 + $0x60] sm:%s216]
                %230 = vst [vmem:[%s224 + $0x10] sm:%s216] %v229
                %v231 = vld [vmem:[%s223 + $0x90] sm:%s216]
                %232 = vst [vmem:[%s224 + $0x18] sm:%s216] %v231
                %v233 = vld [vmem:[%s223 + $0xc0] sm:%s216]
                %234 = vst [vmem:[%s224 + $0x20] sm:%s216] %v233
                %v235 = vld [vmem:[%s223 + $0xf0] sm:%s216]
                %236 = vst [vmem:[%s224 + $0x28] sm:%s216] %v235
                %v237 = vld [vmem:[%s223 + $0x120] sm:%s216]
                %238 = vst [vmem:[%s224 + $0x30] sm:%s216] %v237
                %v239 = vld [vmem:[%s223 + $0x150] sm:%s216]
                %240 = vst [vmem:[%s224 + $0x38] sm:%s216] %v239
                %v241 = vld [vmem:[%s223 + $0x180] sm:%s216]
                %242 = vst [vmem:[%s224 + $0x40] sm:%s216] %v241
                %v243 = vld [vmem:[%s223 + $0x1b0] sm:%s216]
                %244 = vst [vmem:[%s224 + $0x48] sm:%s216] %v243
                %v245 = vld [vmem:[%s223 + $0x1e0] sm:%s216]
                %246 = vst [vmem:[%s224 + $0x50] sm:%s216] %v245
                %v247 = vld [vmem:[%s223 + $0x210] sm:%s216]
                %248 = vst [vmem:[%s224 + $0x58] sm:%s216] %v247
                %v249 = vld [vmem:[%s223 + $0x240] sm:%s216]
                %250 = vst [vmem:[%s224 + $0x60] sm:%s216] %v249
                %v251 = vld [vmem:[%s223 + $0x270] sm:%s216]
                %252 = vst [vmem:[%s224 + $0x68] sm:%s216] %v251
                %v253 = vld [vmem:[%s223 + $0x2a0] sm:%s216]
                %254 = vst [vmem:[%s224 + $0x70] sm:%s216] %v253
                %v255 = vld [vmem:[%s223 + $0x2d0] sm:%s216]
                %256 = vst [vmem:[%s224 + $0x78] sm:%s216] %v255
              $region37: #{self_attention_pallas.4} parent=31 // loop_footer
                %s222 = sadd.s32 1, %s218
              $region38: #{self_attention_pallas.4} parent=31 // loop_footer_branch
                %217 = sbr.rel target = $region34
              $region39: #{self_attention_pallas.4} parent=31 // loop_exit
                _
            $region32: #{self_attention_pallas.4} parent=23 // pred_fallthru
              _
          $region24: #{self_attention_pallas.4} parent=19 // pred_fallthru
            _
          %301 = vnop
        $region20: #{self_attention_pallas.4} parent=15 // pred_fallthru
          _
        // Predicated region
        $region55: #{self_attention_pallas.4} parent=15 // pred_check
          %p302 = pneg %p83
        $region56: #{self_attention_pallas.4} parent=15 // pred_check_branch
          %304 = sbr.rel (%p302) target = $region58
        $region57: #{self_attention_pallas.4} parent=15 // pred_region
          %s305 = sand.u32 %s73, 1
          %s306 = sand.u32 %s73, 1
          %s307 = smul.addr %s306, 128
          %s308 = scalar_lea.vmem [#allocation3], %s307
          %s309 = sadd.s32 %s18, 2
          %s310 = smul.u32 2, %s309
          %s311 = smul.addr %s17, 192
          %s312 = sadd.s32 %s310, %s311
          %s313 = smul.addr %s312, 4
          %s314 = scalar_lea.vmem %s1, %s313
          // Predicated region
          $region59: #{self_attention_pallas.4} parent=57 // pred_check
            _
          $region60: #{self_attention_pallas.4} parent=57 // pred_check_branch
            %316 = sbr.rel (0) target = $region62
          $region61: #{self_attention_pallas.4} parent=57 // pred_region
            // Predicated region
            $region63: #{self_attention_pallas.4} parent=61 // pred_check
              _
            $region64: #{self_attention_pallas.4} parent=61 // pred_check_branch
              %318 = sbr.rel (0) target = $region66
            $region65: #{self_attention_pallas.4} parent=61 // pred_region
              // Predicated region
              $region78: #{self_attention_pallas.4} parent=65 // pred_check
                _
              $region79: #{self_attention_pallas.4} parent=65 // pred_check_branch
                %364 = sbr.rel (0) target = $region81
              $region80: #{self_attention_pallas.4} parent=65 // pred_region
                loop: start=0, step=1, limit=1
                $region82: #{self_attention_pallas.4} parent=80 // loop_pre_header
                  _
                $region83: #{self_attention_pallas.4} parent=80 // loop_header
                  %s366 = sphi 0, %s370
                  %p367 = scmp.ge.s32.totalorder %s366, 1
                  %s371 = sphi %s314, %s314
                  %s372 = sphi %s308, %s308
                $region84: #{self_attention_pallas.4} parent=80 // loop_header_branch
                  %369 = sbr.rel (%p367) target = $region88
                $region85: #{self_attention_pallas.4} parent=80 // loop_body
                  %v373 = vld [vmem:[%s371] sm:$0xff]
                  %374 = vst [vmem:[%s372] sm:$0xff] %v373
                  %v375 = vld [vmem:[%s371 + $0x30] sm:$0xff]
                  %376 = vst [vmem:[%s372 + $0x8] sm:$0xff] %v375
                  %v377 = vld [vmem:[%s371 + $0x60] sm:$0xff]
                  %378 = vst [vmem:[%s372 + $0x10] sm:$0xff] %v377
                  %v379 = vld [vmem:[%s371 + $0x90] sm:$0xff]
                  %380 = vst [vmem:[%s372 + $0x18] sm:$0xff] %v379
                  %v381 = vld [vmem:[%s371 + $0xc0] sm:$0xff]
                  %382 = vst [vmem:[%s372 + $0x20] sm:$0xff] %v381
                  %v383 = vld [vmem:[%s371 + $0xf0] sm:$0xff]
                  %384 = vst [vmem:[%s372 + $0x28] sm:$0xff] %v383
                  %v385 = vld [vmem:[%s371 + $0x120] sm:$0xff]
                  %386 = vst [vmem:[%s372 + $0x30] sm:$0xff] %v385
                  %v387 = vld [vmem:[%s371 + $0x150] sm:$0xff]
                  %388 = vst [vmem:[%s372 + $0x38] sm:$0xff] %v387
                  %v389 = vld [vmem:[%s371 + $0x180] sm:$0xff]
                  %390 = vst [vmem:[%s372 + $0x40] sm:$0xff] %v389
                  %v391 = vld [vmem:[%s371 + $0x1b0] sm:$0xff]
                  %392 = vst [vmem:[%s372 + $0x48] sm:$0xff] %v391
                  %v393 = vld [vmem:[%s371 + $0x1e0] sm:$0xff]
                  %394 = vst [vmem:[%s372 + $0x50] sm:$0xff] %v393
                  %v395 = vld [vmem:[%s371 + $0x210] sm:$0xff]
                  %396 = vst [vmem:[%s372 + $0x58] sm:$0xff] %v395
                  %v397 = vld [vmem:[%s371 + $0x240] sm:$0xff]
                  %398 = vst [vmem:[%s372 + $0x60] sm:$0xff] %v397
                  %v399 = vld [vmem:[%s371 + $0x270] sm:$0xff]
                  %400 = vst [vmem:[%s372 + $0x68] sm:$0xff] %v399
                  %v401 = vld [vmem:[%s371 + $0x2a0] sm:$0xff]
                  %402 = vst [vmem:[%s372 + $0x70] sm:$0xff] %v401
                  %v403 = vld [vmem:[%s371 + $0x2d0] sm:$0xff]
                  %404 = vst [vmem:[%s372 + $0x78] sm:$0xff] %v403
                $region86: #{self_attention_pallas.4} parent=80 // loop_footer
                  %s370 = sadd.s32 1, %s366
                $region87: #{self_attention_pallas.4} parent=80 // loop_footer_branch
                  %365 = sbr.rel target = $region83
                $region88: #{self_attention_pallas.4} parent=80 // loop_exit
                  _
              $region81: #{self_attention_pallas.4} parent=65 // pred_fallthru
                _
              // Predicated region
              $region89: #{self_attention_pallas.4} parent=65 // pred_check
                _
              $region90: #{self_attention_pallas.4} parent=65 // pred_check_branch
                %406 = sbr.rel target = $region92
              $region91: #{self_attention_pallas.4} parent=65 // pred_region
                _
              $region92: #{self_attention_pallas.4} parent=65 // pred_fallthru
                _
            $region66: #{self_attention_pallas.4} parent=61 // pred_fallthru
              _
            // Predicated region
            $region67: #{self_attention_pallas.4} parent=61 // pred_check
              _
            $region68: #{self_attention_pallas.4} parent=61 // pred_check_branch
              %320 = sbr.rel target = $region70
            $region69: #{self_attention_pallas.4} parent=61 // pred_region
              %s322 = ssub.s32 256, 1
              loop: start=0, step=1, limit=1
              $region71: #{self_attention_pallas.4} parent=69 // loop_pre_header
                _
              $region72: #{self_attention_pallas.4} parent=69 // loop_header
                %s324 = sphi 0, %s328
                %p325 = scmp.ge.s32.totalorder %s324, 1
                %s329 = sphi %s314, %s314
                %s330 = sphi %s308, %s308
              $region73: #{self_attention_pallas.4} parent=69 // loop_header_branch
                %327 = sbr.rel (%p325) target = $region77
              $region74: #{self_attention_pallas.4} parent=69 // loop_body
                %v331 = vld [vmem:[%s329] sm:%s322]
                %332 = vst [vmem:[%s330] sm:%s322] %v331
                %v333 = vld [vmem:[%s329 + $0x30] sm:%s322]
                %334 = vst [vmem:[%s330 + $0x8] sm:%s322] %v333
                %v335 = vld [vmem:[%s329 + $0x60] sm:%s322]
                %336 = vst [vmem:[%s330 + $0x10] sm:%s322] %v335
                %v337 = vld [vmem:[%s329 + $0x90] sm:%s322]
                %338 = vst [vmem:[%s330 + $0x18] sm:%s322] %v337
                %v339 = vld [vmem:[%s329 + $0xc0] sm:%s322]
                %340 = vst [vmem:[%s330 + $0x20] sm:%s322] %v339
                %v341 = vld [vmem:[%s329 + $0xf0] sm:%s322]
                %342 = vst [vmem:[%s330 + $0x28] sm:%s322] %v341
                %v343 = vld [vmem:[%s329 + $0x120] sm:%s322]
                %344 = vst [vmem:[%s330 + $0x30] sm:%s322] %v343
                %v345 = vld [vmem:[%s329 + $0x150] sm:%s322]
                %346 = vst [vmem:[%s330 + $0x38] sm:%s322] %v345
                %v347 = vld [vmem:[%s329 + $0x180] sm:%s322]
                %348 = vst [vmem:[%s330 + $0x40] sm:%s322] %v347
                %v349 = vld [vmem:[%s329 + $0x1b0] sm:%s322]
                %350 = vst [vmem:[%s330 + $0x48] sm:%s322] %v349
                %v351 = vld [vmem:[%s329 + $0x1e0] sm:%s322]
                %352 = vst [vmem:[%s330 + $0x50] sm:%s322] %v351
                %v353 = vld [vmem:[%s329 + $0x210] sm:%s322]
                %354 = vst [vmem:[%s330 + $0x58] sm:%s322] %v353
                %v355 = vld [vmem:[%s329 + $0x240] sm:%s322]
                %356 = vst [vmem:[%s330 + $0x60] sm:%s322] %v355
                %v357 = vld [vmem:[%s329 + $0x270] sm:%s322]
                %358 = vst [vmem:[%s330 + $0x68] sm:%s322] %v357
                %v359 = vld [vmem:[%s329 + $0x2a0] sm:%s322]
                %360 = vst [vmem:[%s330 + $0x70] sm:%s322] %v359
                %v361 = vld [vmem:[%s329 + $0x2d0] sm:%s322]
                %362 = vst [vmem:[%s330 + $0x78] sm:%s322] %v361
              $region75: #{self_attention_pallas.4} parent=69 // loop_footer
                %s328 = sadd.s32 1, %s324
              $region76: #{self_attention_pallas.4} parent=69 // loop_footer_branch
                %323 = sbr.rel target = $region72
              $region77: #{self_attention_pallas.4} parent=69 // loop_exit
                _
            $region70: #{self_attention_pallas.4} parent=61 // pred_fallthru
              _
          $region62: #{self_attention_pallas.4} parent=57 // pred_fallthru
            _
          %407 = vnop
        $region58: #{self_attention_pallas.4} parent=15 // pred_fallthru
          _
        // Predicated region
        $region93: #{self_attention_pallas.4} parent=15 // pred_check
          %p408 = pneg %p113
        $region94: #{self_attention_pallas.4} parent=15 // pred_check_branch
          %410 = sbr.rel (%p408) target = $region96
        $region95: #{self_attention_pallas.4} parent=15 // pred_region
          %s411 = sand.u32 %s103, 1
          %s412 = sand.u32 %s103, 1
          %s413 = smul.addr %s412, 128
          %s414 = scalar_lea.vmem [#allocation4], %s413
          %s415 = sadd.s32 %s18, 4
          %s416 = smul.u32 2, %s415
          %s417 = smul.addr %s17, 192
          %s418 = sadd.s32 %s416, %s417
          %s419 = smul.addr %s418, 4
          %s420 = scalar_lea.vmem %s2, %s419
          // Predicated region
          $region97: #{self_attention_pallas.4} parent=95 // pred_check
            _
          $region98: #{self_attention_pallas.4} parent=95 // pred_check_branch
            %422 = sbr.rel (0) target = $region100
          $region99: #{self_attention_pallas.4} parent=95 // pred_region
            // Predicated region
            $region101: #{self_attention_pallas.4} parent=99 // pred_check
              _
            $region102: #{self_attention_pallas.4} parent=99 // pred_check_branch
              %424 = sbr.rel (0) target = $region104
            $region103: #{self_attention_pallas.4} parent=99 // pred_region
              // Predicated region
              $region116: #{self_attention_pallas.4} parent=103 // pred_check
                _
              $region117: #{self_attention_pallas.4} parent=103 // pred_check_branch
                %470 = sbr.rel (0) target = $region119
              $region118: #{self_attention_pallas.4} parent=103 // pred_region
                loop: start=0, step=1, limit=1
                $region120: #{self_attention_pallas.4} parent=118 // loop_pre_header
                  _
                $region121: #{self_attention_pallas.4} parent=118 // loop_header
                  %s472 = sphi 0, %s476
                  %p473 = scmp.ge.s32.totalorder %s472, 1
                  %s477 = sphi %s420, %s420
                  %s478 = sphi %s414, %s414
                $region122: #{self_attention_pallas.4} parent=118 // loop_header_branch
                  %475 = sbr.rel (%p473) target = $region126
                $region123: #{self_attention_pallas.4} parent=118 // loop_body
                  %v479 = vld [vmem:[%s477] sm:$0xff]
                  %480 = vst [vmem:[%s478] sm:$0xff] %v479
                  %v481 = vld [vmem:[%s477 + $0x30] sm:$0xff]
                  %482 = vst [vmem:[%s478 + $0x8] sm:$0xff] %v481
                  %v483 = vld [vmem:[%s477 + $0x60] sm:$0xff]
                  %484 = vst [vmem:[%s478 + $0x10] sm:$0xff] %v483
                  %v485 = vld [vmem:[%s477 + $0x90] sm:$0xff]
                  %486 = vst [vmem:[%s478 + $0x18] sm:$0xff] %v485
                  %v487 = vld [vmem:[%s477 + $0xc0] sm:$0xff]
                  %488 = vst [vmem:[%s478 + $0x20] sm:$0xff] %v487
                  %v489 = vld [vmem:[%s477 + $0xf0] sm:$0xff]
                  %490 = vst [vmem:[%s478 + $0x28] sm:$0xff] %v489
                  %v491 = vld [vmem:[%s477 + $0x120] sm:$0xff]
                  %492 = vst [vmem:[%s478 + $0x30] sm:$0xff] %v491
                  %v493 = vld [vmem:[%s477 + $0x150] sm:$0xff]
                  %494 = vst [vmem:[%s478 + $0x38] sm:$0xff] %v493
                  %v495 = vld [vmem:[%s477 + $0x180] sm:$0xff]
                  %496 = vst [vmem:[%s478 + $0x40] sm:$0xff] %v495
                  %v497 = vld [vmem:[%s477 + $0x1b0] sm:$0xff]
                  %498 = vst [vmem:[%s478 + $0x48] sm:$0xff] %v497
                  %v499 = vld [vmem:[%s477 + $0x1e0] sm:$0xff]
                  %500 = vst [vmem:[%s478 + $0x50] sm:$0xff] %v499
                  %v501 = vld [vmem:[%s477 + $0x210] sm:$0xff]
                  %502 = vst [vmem:[%s478 + $0x58] sm:$0xff] %v501
                  %v503 = vld [vmem:[%s477 + $0x240] sm:$0xff]
                  %504 = vst [vmem:[%s478 + $0x60] sm:$0xff] %v503
                  %v505 = vld [vmem:[%s477 + $0x270] sm:$0xff]
                  %506 = vst [vmem:[%s478 + $0x68] sm:$0xff] %v505
                  %v507 = vld [vmem:[%s477 + $0x2a0] sm:$0xff]
                  %508 = vst [vmem:[%s478 + $0x70] sm:$0xff] %v507
                  %v509 = vld [vmem:[%s477 + $0x2d0] sm:$0xff]
                  %510 = vst [vmem:[%s478 + $0x78] sm:$0xff] %v509
                $region124: #{self_attention_pallas.4} parent=118 // loop_footer
                  %s476 = sadd.s32 1, %s472
                $region125: #{self_attention_pallas.4} parent=118 // loop_footer_branch
                  %471 = sbr.rel target = $region121
                $region126: #{self_attention_pallas.4} parent=118 // loop_exit
                  _
              $region119: #{self_attention_pallas.4} parent=103 // pred_fallthru
                _
              // Predicated region
              $region127: #{self_attention_pallas.4} parent=103 // pred_check
                _
              $region128: #{self_attention_pallas.4} parent=103 // pred_check_branch
                %512 = sbr.rel target = $region130
              $region129: #{self_attention_pallas.4} parent=103 // pred_region
                _
              $region130: #{self_attention_pallas.4} parent=103 // pred_fallthru
                _
            $region104: #{self_attention_pallas.4} parent=99 // pred_fallthru
              _
            // Predicated region
            $region105: #{self_attention_pallas.4} parent=99 // pred_check
              _
            $region106: #{self_attention_pallas.4} parent=99 // pred_check_branch
              %426 = sbr.rel target = $region108
            $region107: #{self_attention_pallas.4} parent=99 // pred_region
              %s428 = ssub.s32 256, 1
              loop: start=0, step=1, limit=1
              $region109: #{self_attention_pallas.4} parent=107 // loop_pre_header
                _
              $region110: #{self_attention_pallas.4} parent=107 // loop_header
                %s430 = sphi 0, %s434
                %p431 = scmp.ge.s32.totalorder %s430, 1
                %s435 = sphi %s420, %s420
                %s436 = sphi %s414, %s414
              $region111: #{self_attention_pallas.4} parent=107 // loop_header_branch
                %433 = sbr.rel (%p431) target = $region115
              $region112: #{self_attention_pallas.4} parent=107 // loop_body
                %v437 = vld [vmem:[%s435] sm:%s428]
                %438 = vst [vmem:[%s436] sm:%s428] %v437
                %v439 = vld [vmem:[%s435 + $0x30] sm:%s428]
                %440 = vst [vmem:[%s436 + $0x8] sm:%s428] %v439
                %v441 = vld [vmem:[%s435 + $0x60] sm:%s428]
                %442 = vst [vmem:[%s436 + $0x10] sm:%s428] %v441
                %v443 = vld [vmem:[%s435 + $0x90] sm:%s428]
                %444 = vst [vmem:[%s436 + $0x18] sm:%s428] %v443
                %v445 = vld [vmem:[%s435 + $0xc0] sm:%s428]
                %446 = vst [vmem:[%s436 + $0x20] sm:%s428] %v445
                %v447 = vld [vmem:[%s435 + $0xf0] sm:%s428]
                %448 = vst [vmem:[%s436 + $0x28] sm:%s428] %v447
                %v449 = vld [vmem:[%s435 + $0x120] sm:%s428]
                %450 = vst [vmem:[%s436 + $0x30] sm:%s428] %v449
                %v451 = vld [vmem:[%s435 + $0x150] sm:%s428]
                %452 = vst [vmem:[%s436 + $0x38] sm:%s428] %v451
                %v453 = vld [vmem:[%s435 + $0x180] sm:%s428]
                %454 = vst [vmem:[%s436 + $0x40] sm:%s428] %v453
                %v455 = vld [vmem:[%s435 + $0x1b0] sm:%s428]
                %456 = vst [vmem:[%s436 + $0x48] sm:%s428] %v455
                %v457 = vld [vmem:[%s435 + $0x1e0] sm:%s428]
                %458 = vst [vmem:[%s436 + $0x50] sm:%s428] %v457
                %v459 = vld [vmem:[%s435 + $0x210] sm:%s428]
                %460 = vst [vmem:[%s436 + $0x58] sm:%s428] %v459
                %v461 = vld [vmem:[%s435 + $0x240] sm:%s428]
                %462 = vst [vmem:[%s436 + $0x60] sm:%s428] %v461
                %v463 = vld [vmem:[%s435 + $0x270] sm:%s428]
                %464 = vst [vmem:[%s436 + $0x68] sm:%s428] %v463
                %v465 = vld [vmem:[%s435 + $0x2a0] sm:%s428]
                %466 = vst [vmem:[%s436 + $0x70] sm:%s428] %v465
                %v467 = vld [vmem:[%s435 + $0x2d0] sm:%s428]
                %468 = vst [vmem:[%s436 + $0x78] sm:%s428] %v467
              $region113: #{self_attention_pallas.4} parent=107 // loop_footer
                %s434 = sadd.s32 1, %s430
              $region114: #{self_attention_pallas.4} parent=107 // loop_footer_branch
                %429 = sbr.rel target = $region110
              $region115: #{self_attention_pallas.4} parent=107 // loop_exit
                _
            $region108: #{self_attention_pallas.4} parent=99 // pred_fallthru
              _
          $region100: #{self_attention_pallas.4} parent=95 // pred_fallthru
            _
          %513 = vnop
        $region96: #{self_attention_pallas.4} parent=15 // pred_fallthru
          _
        // Predicated region
        $region131: #{self_attention_pallas.4} parent=15 // pred_check
          %p514 = pneg %p139
        $region132: #{self_attention_pallas.4} parent=15 // pred_check_branch
          %516 = sbr.rel (%p514) target = $region134
        $region133: #{self_attention_pallas.4} parent=15 // pred_region
          %p517 = scmp.lt.s32.totalorder %s17, 1
          %s518 = scalar_select %p517, %s17, 1
          %s519 = scalar_lea.vmem %s3, %s518
        $region134: #{self_attention_pallas.4} parent=15 // pred_fallthru
          _
      $region16: #{self_attention_pallas.4} parent=5 // pred_fallthru
        _
      %p520 = scmp.le.s32.totalorder 1, %s10
      %p521 = scmp.lt.s32.totalorder %s10, 5
      %p522 = pnand %p520, %p521
      %p523 = pneg %p522
      // Predicated region
      $region135: #{self_attention_pallas.4} parent=5 // pred_check
        _
      $region136: #{self_attention_pallas.4} parent=5 // pred_check_branch
        %525 = sbr.rel (%p522) target = $region138
      $region137: #{self_attention_pallas.4} parent=5 // pred_region
        %s526 = ssub.s32 %s10, 1
        %s527 = sand.u32 %s46, 1
        %s528 = sand.u32 %s46, 1
        %s529 = smul.addr %s528, 128
        %s530 = scalar_lea.vmem [#allocation2], %s529
        // Predicated region
        $region139: #{self_attention_pallas.4} parent=137 // pred_check
          %p531 = pneg %p59
        $region140: #{self_attention_pallas.4} parent=137 // pred_check_branch
          %533 = sbr.rel (%p531) target = $region142
        $region141: #{self_attention_pallas.4} parent=137 // pred_region
          _
        $region142: #{self_attention_pallas.4} parent=137 // pred_fallthru
          _
        %s534 = sand.u32 %s76, 1
        %s535 = sand.u32 %s76, 1
        %s536 = smul.addr %s535, 128
        %s537 = scalar_lea.vmem [#allocation3], %s536
        // Predicated region
        $region143: #{self_attention_pallas.4} parent=137 // pred_check
          %p538 = pneg %p89
        $region144: #{self_attention_pallas.4} parent=137 // pred_check_branch
          %540 = sbr.rel (%p538) target = $region146
        $region145: #{self_attention_pallas.4} parent=137 // pred_region
          _
        $region146: #{self_attention_pallas.4} parent=137 // pred_fallthru
          _
        %s541 = sand.u32 %s106, 1
        %s542 = sand.u32 %s106, 1
        %s543 = smul.addr %s542, 128
        %s544 = scalar_lea.vmem [#allocation4], %s543
        // Predicated region
        $region147: #{self_attention_pallas.4} parent=137 // pred_check
          %p545 = pneg %p119
        $region148: #{self_attention_pallas.4} parent=137 // pred_check_branch
          %547 = sbr.rel (%p545) target = $region150
        $region149: #{self_attention_pallas.4} parent=137 // pred_region
          _
        $region150: #{self_attention_pallas.4} parent=137 // pred_fallthru
          _
        %s548 = sand.u32 %s46, 1
        %s549 = sand.u32 %s46, 1
        %s550 = smul.addr %s549, 128
        %s551 = scalar_lea.vmem [#allocation2], %s550
        %p552 = pneg %p59
        %p553 = pneg %p56
        %s554 = sand.u32 %s76, 1
        %s555 = sand.u32 %s76, 1
        %s556 = smul.addr %s555, 128
        %s557 = scalar_lea.vmem [#allocation3], %s556
        %p558 = pneg %p89
        %p559 = pneg %p86
        %s560 = sand.u32 %s106, 1
        %s561 = sand.u32 %s106, 1
        %s562 = smul.addr %s561, 128
        %s563 = scalar_lea.vmem [#allocation4], %s562
        %p564 = pneg %p119
        %p565 = pneg %p116
        %p566 = scmp.lt.s32.totalorder %s20, 1
        %s567 = scalar_select %p566, %s20, 1
        %s568 = scalar_lea.vmem %s3, %s567
        %p569 = pneg %p145
        %p570 = pneg %p142
        %p571 = pneg %p175
        %p572 = pneg %p172
        %s573 = sand.u32 %s162, 1
        %s574 = sand.u32 %s162, 1
        %s575 = smul.addr %s574, 128
        %s576 = scalar_lea.vmem [#allocation5], %s575
        %s577 = smul.u32 16, %s22
        %s578 = smul.u32 2, %s21
        %s579 = sadd.s32 %s21, 2
        %s580 = smul.u32 2, %s579
        %s581 = sadd.s32 %s21, 4
        %s582 = smul.u32 2, %s581
        %p583 = scmp.lt.s32.totalorder %s20, 1
        %s584 = scalar_select %p583, %s20, 1
        %s585 = scalar_lea.vmem %s3, %s584
        %s586 = smul.u32 16, %s22
        %s587 = smul.u32 2, %s21
        %v588 = vld [vmem:[%s585] sm:$0x1]
        %v589 = vld [vmem:[%s530] sm:$0xf]
        %v590 = vld [vmem:[%s530 + $0x8] sm:$0xf]
        %v591 = vld [vmem:[%s530 + $0x10] sm:$0xf]
        %v592 = vld [vmem:[%s530 + $0x18] sm:$0xf]
        %v593 = vld [vmem:[%s530 + $0x20] sm:$0xf]
        %v594 = vld [vmem:[%s530 + $0x28] sm:$0xf]
        %v595 = vld [vmem:[%s530 + $0x30] sm:$0xf]
        %v596 = vld [vmem:[%s530 + $0x38] sm:$0xf]
        %v597 = vld [vmem:[%s530 + $0x40] sm:$0xf]
        %v598 = vld [vmem:[%s530 + $0x48] sm:$0xf]
        %v599 = vld [vmem:[%s530 + $0x50] sm:$0xf]
        %v600 = vld [vmem:[%s530 + $0x58] sm:$0xf]
        %v601 = vld [vmem:[%s530 + $0x60] sm:$0xf]
        %v602 = vld [vmem:[%s530 + $0x68] sm:$0xf]
        %v603 = vld [vmem:[%s530 + $0x70] sm:$0xf]
        %v604 = vld [vmem:[%s530 + $0x78] sm:$0xf]
        %v605 = vld [vmem:[%s537] sm:$0xf]
        %v606 = vld [vmem:[%s537 + $0x8] sm:$0xf]
        %v607 = vld [vmem:[%s537 + $0x10] sm:$0xf]
        %v608 = vld [vmem:[%s537 + $0x18] sm:$0xf]
        %v609 = vld [vmem:[%s537 + $0x20] sm:$0xf]
        %v610 = vld [vmem:[%s537 + $0x28] sm:$0xf]
        %v611 = vld [vmem:[%s537 + $0x30] sm:$0xf]
        %v612 = vld [vmem:[%s537 + $0x38] sm:$0xf]
        %v613 = vld [vmem:[%s537 + $0x40] sm:$0xf]
        %v614 = vld [vmem:[%s537 + $0x48] sm:$0xf]
        %v615 = vld [vmem:[%s537 + $0x50] sm:$0xf]
        %v616 = vld [vmem:[%s537 + $0x58] sm:$0xf]
        %v617 = vld [vmem:[%s537 + $0x60] sm:$0xf]
        %v618 = vld [vmem:[%s537 + $0x68] sm:$0xf]
        %v619 = vld [vmem:[%s537 + $0x70] sm:$0xf]
        %v620 = vld [vmem:[%s537 + $0x78] sm:$0xf]
        %v621 = vld [vmem:[%s544] sm:$0xf]
        %v622 = vld [vmem:[%s544 + $0x8] sm:$0xf]
        %v623 = vld [vmem:[%s544 + $0x10] sm:$0xf]
        %v624 = vld [vmem:[%s544 + $0x18] sm:$0xf]
        %v625 = vld [vmem:[%s544 + $0x20] sm:$0xf]
        %v626 = vld [vmem:[%s544 + $0x28] sm:$0xf]
        %v627 = vld [vmem:[%s544 + $0x30] sm:$0xf]
        %v628 = vld [vmem:[%s544 + $0x38] sm:$0xf]
        %v629 = vld [vmem:[%s544 + $0x40] sm:$0xf]
        %v630 = vld [vmem:[%s544 + $0x48] sm:$0xf]
        %v631 = vld [vmem:[%s544 + $0x50] sm:$0xf]
        %v632 = vld [vmem:[%s544 + $0x58] sm:$0xf]
        %v633 = vld [vmem:[%s544 + $0x60] sm:$0xf]
        %v634 = vld [vmem:[%s544 + $0x68] sm:$0xf]
        %v635 = vld [vmem:[%s544 + $0x70] sm:$0xf]
        %v636 = vld [vmem:[%s544 + $0x78] sm:$0xf]
        %v638 = vperm.slane %v588, 0
        %v656 = vunpack.c.l.b16 %v589
        %v657 = vunpack.c.l.b16 %v590
        %v658 = vunpack.c.l.b16 %v591
        %v659 = vunpack.c.l.b16 %v592
        %v660 = vunpack.c.l.b16 %v593
        %v661 = vunpack.c.l.b16 %v594
        %v662 = vunpack.c.l.b16 %v595
        %v663 = vunpack.c.l.b16 %v596
        %v664 = vunpack.c.l.b16 %v597
        %v665 = vunpack.c.l.b16 %v598
        %v666 = vunpack.c.l.b16 %v599
        %v667 = vunpack.c.l.b16 %v600
        %v668 = vunpack.c.l.b16 %v601
        %v669 = vunpack.c.l.b16 %v602
        %v670 = vunpack.c.l.b16 %v603
        %v671 = vunpack.c.l.b16 %v604
        %v672 = vpack.c.b16 %v657, %v656
        %v673 = vpack.c.b16 %v659, %v658
        %v674 = vpack.c.b16 %v661, %v660
        %v675 = vpack.c.b16 %v663, %v662
        %v676 = vpack.c.b16 %v665, %v664
        %v677 = vpack.c.b16 %v667, %v666
        %v678 = vpack.c.b16 %v669, %v668
        %v679 = vpack.c.b16 %v671, %v670
        %v704 = vunpack.c.l.b16 %v605
        %v705 = vunpack.c.l.b16 %v606
        %v706 = vunpack.c.l.b16 %v607
        %v707 = vunpack.c.l.b16 %v608
        %v708 = vunpack.c.l.b16 %v609
        %v709 = vunpack.c.l.b16 %v610
        %v710 = vunpack.c.l.b16 %v611
        %v711 = vunpack.c.l.b16 %v612
        %v712 = vunpack.c.l.b16 %v613
        %v713 = vunpack.c.l.b16 %v614
        %v714 = vunpack.c.l.b16 %v615
        %v715 = vunpack.c.l.b16 %v616
        %v716 = vunpack.c.l.b16 %v617
        %v717 = vunpack.c.l.b16 %v618
        %v718 = vunpack.c.l.b16 %v619
        %v719 = vunpack.c.l.b16 %v620
        %v720 = vpack.c.b16 %v705, %v704
        %v721 = vpack.c.b16 %v707, %v706
        %v722 = vpack.c.b16 %v709, %v708
        %v723 = vpack.c.b16 %v711, %v710
        %v724 = vpack.c.b16 %v713, %v712
        %v725 = vpack.c.b16 %v715, %v714
        %v726 = vpack.c.b16 %v717, %v716
        %v727 = vpack.c.b16 %v719, %v718
        %736 = vmatpush.bf16.xpose.msra.mxu0 %v727
        %737 = vmatpush.bf16.xpose.msra.mxu0 %v726
        %738 = vmatpush.bf16.xpose.msra.mxu0 %v725
        %739 = vmatpush.bf16.xpose.msra.mxu0 %v724
        %740 = vmatpush.bf16.xpose.msra.mxu0 %v723
        %741 = vmatpush.bf16.xpose.msra.mxu0 %v722
        %742 = vmatpush.bf16.xpose.msra.mxu0 %v721
        %743 = vmatpush.bf16.xpose.msra.mxu0 %v720
        %744 = vmatmul.bf16.gmra.mxu0 %v672
        %v745 = vpop.f32.mrf.mxu0
        %v746 = vadd.f32 %v638, %v745
        %v747 = vpop.f32.mrf.mxu0
        %v748 = vadd.f32 %v638, %v747
        %749 = vmatmul.bf16.gmra.mxu0 %v673
        %v750 = vpop.f32.mrf.mxu0
        %v751 = vadd.f32 %v638, %v750
        %v752 = vpop.f32.mrf.mxu0
        %v753 = vadd.f32 %v638, %v752
        %754 = vmatmul.bf16.gmra.mxu0 %v674
        %v755 = vpop.f32.mrf.mxu0
        %v756 = vadd.f32 %v638, %v755
        %v757 = vpop.f32.mrf.mxu0
        %v758 = vadd.f32 %v638, %v757
        %759 = vmatmul.bf16.gmra.mxu0 %v675
        %v760 = vpop.f32.mrf.mxu0
        %v761 = vadd.f32 %v638, %v760
        %v762 = vpop.f32.mrf.mxu0
        %v763 = vadd.f32 %v638, %v762
        %764 = vmatmul.bf16.gmra.mxu0 %v676
        %v765 = vpop.f32.mrf.mxu0
        %v766 = vadd.f32 %v638, %v765
        %v767 = vpop.f32.mrf.mxu0
        %v768 = vadd.f32 %v638, %v767
        %769 = vmatmul.bf16.gmra.mxu0 %v677
        %v770 = vpop.f32.mrf.mxu0
        %v771 = vadd.f32 %v638, %v770
        %v772 = vpop.f32.mrf.mxu0
        %v773 = vadd.f32 %v638, %v772
        %774 = vmatmul.bf16.gmra.mxu0 %v678
        %v775 = vpop.f32.mrf.mxu0
        %v776 = vadd.f32 %v638, %v775
        %v777 = vpop.f32.mrf.mxu0
        %v778 = vadd.f32 %v638, %v777
        %779 = vmatmul.bf16.gmra.mxu0 %v679
        %v780 = vpop.f32.mrf.mxu0
        %v781 = vadd.f32 %v638, %v780
        %v782 = vpop.f32.mrf.mxu0
        %v783 = vadd.f32 %v638, %v782
        %784 = vdwg.mxu0
        %785 = vmax.xlane.f32.xlu0 %v746
        %v786 = vpop.xlane.xlu0 %785
        %787 = vmax.xlane.f32.xlu0 %v748
        %v788 = vpop.xlane.xlu0 %787
        %789 = vmax.xlane.f32.xlu0 %v751
        %v790 = vpop.xlane.xlu0 %789
        %791 = vmax.xlane.f32.xlu0 %v753
        %v792 = vpop.xlane.xlu0 %791
        %793 = vmax.xlane.f32.xlu0 %v756
        %v794 = vpop.xlane.xlu0 %793
        %795 = vmax.xlane.f32.xlu0 %v758
        %v796 = vpop.xlane.xlu0 %795
        %797 = vmax.xlane.f32.xlu0 %v761
        %v798 = vpop.xlane.xlu0 %797
        %799 = vmax.xlane.f32.xlu0 %v763
        %v800 = vpop.xlane.xlu0 %799
        %801 = vmax.xlane.f32.xlu0 %v766
        %v802 = vpop.xlane.xlu0 %801
        %803 = vmax.xlane.f32.xlu0 %v768
        %v804 = vpop.xlane.xlu0 %803
        %805 = vmax.xlane.f32.xlu0 %v771
        %v806 = vpop.xlane.xlu0 %805
        %807 = vmax.xlane.f32.xlu0 %v773
        %v808 = vpop.xlane.xlu0 %807
        %809 = vmax.xlane.f32.xlu0 %v776
        %v810 = vpop.xlane.xlu0 %809
        %811 = vmax.xlane.f32.xlu0 %v778
        %v812 = vpop.xlane.xlu0 %811
        %813 = vmax.xlane.f32.xlu0 %v781
        %v814 = vpop.xlane.xlu0 %813
        %815 = vmax.xlane.f32.xlu0 %v783
        %v816 = vpop.xlane.xlu0 %815
        %v817 = vsub.f32 %v746, %v786
        %v818 = vsub.f32 %v748, %v788
        %v819 = vsub.f32 %v751, %v790
        %v820 = vsub.f32 %v753, %v792
        %v821 = vsub.f32 %v756, %v794
        %v822 = vsub.f32 %v758, %v796
        %v823 = vsub.f32 %v761, %v798
        %v824 = vsub.f32 %v763, %v800
        %v825 = vsub.f32 %v766, %v802
        %v826 = vsub.f32 %v768, %v804
        %v827 = vsub.f32 %v771, %v806
        %v828 = vsub.f32 %v773, %v808
        %v829 = vsub.f32 %v776, %v810
        %v830 = vsub.f32 %v778, %v812
        %v831 = vsub.f32 %v781, %v814
        %v832 = vsub.f32 %v783, %v816
        %v833 = vmul.f32 %v817, 1.442695
        %v834 = vpow.pop %v833
        %v835 = vmul.f32 %v818, 1.442695
        %v836 = vpow.pop %v835
        %v837 = vmul.f32 %v819, 1.442695
        %v838 = vpow.pop %v837
        %v839 = vmul.f32 %v820, 1.442695
        %v840 = vpow.pop %v839
        %v841 = vmul.f32 %v821, 1.442695
        %v842 = vpow.pop %v841
        %v843 = vmul.f32 %v822, 1.442695
        %v844 = vpow.pop %v843
        %v845 = vmul.f32 %v823, 1.442695
        %v846 = vpow.pop %v845
        %v847 = vmul.f32 %v824, 1.442695
        %v848 = vpow.pop %v847
        %v849 = vmul.f32 %v825, 1.442695
        %v850 = vpow.pop %v849
        %v851 = vmul.f32 %v826, 1.442695
        %v852 = vpow.pop %v851
        %v853 = vmul.f32 %v827, 1.442695
        %v854 = vpow.pop %v853
        %v855 = vmul.f32 %v828, 1.442695
        %v856 = vpow.pop %v855
        %v857 = vmul.f32 %v829, 1.442695
        %v858 = vpow.pop %v857
        %v859 = vmul.f32 %v830, 1.442695
        %v860 = vpow.pop %v859
        %v861 = vmul.f32 %v831, 1.442695
        %v862 = vpow.pop %v861
        %v863 = vmul.f32 %v832, 1.442695
        %v864 = vpow.pop %v863
        %865 = vadd.xlane.f32.xlu0 %v834
        %v866 = vpop.xlane.xlu0 %865
        %867 = vadd.xlane.f32.xlu0 %v836
        %v868 = vpop.xlane.xlu0 %867
        %869 = vadd.xlane.f32.xlu0 %v838
        %v870 = vpop.xlane.xlu0 %869
        %871 = vadd.xlane.f32.xlu0 %v840
        %v872 = vpop.xlane.xlu0 %871
        %873 = vadd.xlane.f32.xlu0 %v842
        %v874 = vpop.xlane.xlu0 %873
        %875 = vadd.xlane.f32.xlu0 %v844
        %v876 = vpop.xlane.xlu0 %875
        %877 = vadd.xlane.f32.xlu0 %v846
        %v878 = vpop.xlane.xlu0 %877
        %879 = vadd.xlane.f32.xlu0 %v848
        %v880 = vpop.xlane.xlu0 %879
        %881 = vadd.xlane.f32.xlu0 %v850
        %v882 = vpop.xlane.xlu0 %881
        %883 = vadd.xlane.f32.xlu0 %v852
        %v884 = vpop.xlane.xlu0 %883
        %885 = vadd.xlane.f32.xlu0 %v854
        %v886 = vpop.xlane.xlu0 %885
        %887 = vadd.xlane.f32.xlu0 %v856
        %v888 = vpop.xlane.xlu0 %887
        %889 = vadd.xlane.f32.xlu0 %v858
        %v890 = vpop.xlane.xlu0 %889
        %891 = vadd.xlane.f32.xlu0 %v860
        %v892 = vpop.xlane.xlu0 %891
        %893 = vadd.xlane.f32.xlu0 %v862
        %v894 = vpop.xlane.xlu0 %893
        %895 = vadd.xlane.f32.xlu0 %v864
        %v896 = vpop.xlane.xlu0 %895
        %v897 = vrcp.pop %v866
        %v898 = vrcp.pop %v868
        %v899 = vrcp.pop %v870
        %v900 = vrcp.pop %v872
        %v901 = vrcp.pop %v874
        %v902 = vrcp.pop %v876
        %v903 = vrcp.pop %v878
        %v904 = vrcp.pop %v880
        %v905 = vrcp.pop %v882
        %v906 = vrcp.pop %v884
        %v907 = vrcp.pop %v886
        %v908 = vrcp.pop %v888
        %v909 = vrcp.pop %v890
        %v910 = vrcp.pop %v892
        %v911 = vrcp.pop %v894
        %v912 = vrcp.pop %v896
        %v913 = vmul.f32 %v834, %v897
        %v914 = vmul.f32 %v836, %v898
        %v915 = vmul.f32 %v838, %v899
        %v916 = vmul.f32 %v840, %v900
        %v917 = vmul.f32 %v842, %v901
        %v918 = vmul.f32 %v844, %v902
        %v919 = vmul.f32 %v846, %v903
        %v920 = vmul.f32 %v848, %v904
        %v921 = vmul.f32 %v850, %v905
        %v922 = vmul.f32 %v852, %v906
        %v923 = vmul.f32 %v854, %v907
        %v924 = vmul.f32 %v856, %v908
        %v925 = vmul.f32 %v858, %v909
        %v926 = vmul.f32 %v860, %v910
        %v927 = vmul.f32 %v862, %v911
        %v928 = vmul.f32 %v864, %v912
        %v929 = vpack.c.bf16 %v914, %v913
        %v930 = vpack.c.bf16 %v916, %v915
        %v931 = vpack.c.bf16 %v918, %v917
        %v932 = vpack.c.bf16 %v920, %v919
        %v933 = vpack.c.bf16 %v922, %v921
        %v934 = vpack.c.bf16 %v924, %v923
        %v935 = vpack.c.bf16 %v926, %v925
        %v936 = vpack.c.bf16 %v928, %v927
        %v953 = vunpack.c.l.b16 %v621
        %v954 = vunpack.c.l.b16 %v622
        %v955 = vunpack.c.l.b16 %v623
        %v956 = vunpack.c.l.b16 %v624
        %v957 = vunpack.c.l.b16 %v625
        %v958 = vunpack.c.l.b16 %v626
        %v959 = vunpack.c.l.b16 %v627
        %v960 = vunpack.c.l.b16 %v628
        %v961 = vunpack.c.l.b16 %v629
        %v962 = vunpack.c.l.b16 %v630
        %v963 = vunpack.c.l.b16 %v631
        %v964 = vunpack.c.l.b16 %v632
        %v965 = vunpack.c.l.b16 %v633
        %v966 = vunpack.c.l.b16 %v634
        %v967 = vunpack.c.l.b16 %v635
        %v968 = vunpack.c.l.b16 %v636
        %v969 = vpack.c.b16 %v954, %v953
        %v970 = vpack.c.b16 %v956, %v955
        %v971 = vpack.c.b16 %v958, %v957
        %v972 = vpack.c.b16 %v960, %v959
        %v973 = vpack.c.b16 %v962, %v961
        %v974 = vpack.c.b16 %v964, %v963
        %v975 = vpack.c.b16 %v966, %v965
        %v976 = vpack.c.b16 %v968, %v967
        %985 = vmatpush.bf16.msra.mxu0 %v976
        %986 = vmatpush.bf16.msra.mxu0 %v975
        %987 = vmatpush.bf16.msra.mxu0 %v974
        %988 = vmatpush.bf16.msra.mxu0 %v973
        %989 = vmatpush.bf16.msra.mxu0 %v972
        %990 = vmatpush.bf16.msra.mxu0 %v971
        %991 = vmatpush.bf16.msra.mxu0 %v970
        %992 = vmatpush.bf16.msra.mxu0 %v969
        %993 = vmatmul.bf16.gmra.mxu0 %v929
        %v994 = vpop.f32.mrf.mxu0
        %v995 = vadd.f32 0.0, %v994
        %v996 = vpop.f32.mrf.mxu0
        %v997 = vadd.f32 0.0, %v996
        %998 = vmatmul.bf16.gmra.mxu0 %v930
        %v999 = vpop.f32.mrf.mxu0
        %v1000 = vadd.f32 0.0, %v999
        %v1001 = vpop.f32.mrf.mxu0
        %v1002 = vadd.f32 0.0, %v1001
        %1003 = vmatmul.bf16.gmra.mxu0 %v931
        %v1004 = vpop.f32.mrf.mxu0
        %v1005 = vadd.f32 0.0, %v1004
        %v1006 = vpop.f32.mrf.mxu0
        %v1007 = vadd.f32 0.0, %v1006
        %1008 = vmatmul.bf16.gmra.mxu0 %v932
        %v1009 = vpop.f32.mrf.mxu0
        %v1010 = vadd.f32 0.0, %v1009
        %v1011 = vpop.f32.mrf.mxu0
        %v1012 = vadd.f32 0.0, %v1011
        %1013 = vmatmul.bf16.gmra.mxu0 %v933
        %v1014 = vpop.f32.mrf.mxu0
        %v1015 = vadd.f32 0.0, %v1014
        %v1016 = vpop.f32.mrf.mxu0
        %v1017 = vadd.f32 0.0, %v1016
        %1018 = vmatmul.bf16.gmra.mxu0 %v934
        %v1019 = vpop.f32.mrf.mxu0
        %v1020 = vadd.f32 0.0, %v1019
        %v1021 = vpop.f32.mrf.mxu0
        %v1022 = vadd.f32 0.0, %v1021
        %1023 = vmatmul.bf16.gmra.mxu0 %v935
        %v1024 = vpop.f32.mrf.mxu0
        %v1025 = vadd.f32 0.0, %v1024
        %v1026 = vpop.f32.mrf.mxu0
        %v1027 = vadd.f32 0.0, %v1026
        %1028 = vmatmul.bf16.gmra.mxu0 %v936
        %v1029 = vpop.f32.mrf.mxu0
        %v1030 = vadd.f32 0.0, %v1029
        %v1031 = vpop.f32.mrf.mxu0
        %v1032 = vadd.f32 0.0, %v1031
        %1033 = vdwg.mxu0
        %v1034 = vpack.c.bf16 %v995, %v995
        %v1035 = vpack.c.bf16 %v997, %v997
        %v1036 = vpack.c.bf16 %v1000, %v1000
        %v1037 = vpack.c.bf16 %v1002, %v1002
        %v1038 = vpack.c.bf16 %v1005, %v1005
        %v1039 = vpack.c.bf16 %v1007, %v1007
        %v1040 = vpack.c.bf16 %v1010, %v1010
        %v1041 = vpack.c.bf16 %v1012, %v1012
        %v1042 = vpack.c.bf16 %v1015, %v1015
        %v1043 = vpack.c.bf16 %v1017, %v1017
        %v1044 = vpack.c.bf16 %v1020, %v1020
        %v1045 = vpack.c.bf16 %v1022, %v1022
        %v1046 = vpack.c.bf16 %v1025, %v1025
        %v1047 = vpack.c.bf16 %v1027, %v1027
        %v1048 = vpack.c.bf16 %v1030, %v1030
        %v1049 = vpack.c.bf16 %v1032, %v1032
        %1050 = vst [vmem:[%s576] sm:$0xf] %v1034
        %1051 = vst [vmem:[%s576 + $0x8] sm:$0xf] %v1035
        %1052 = vst [vmem:[%s576 + $0x10] sm:$0xf] %v1036
        %1053 = vst [vmem:[%s576 + $0x18] sm:$0xf] %v1037
        %1054 = vst [vmem:[%s576 + $0x20] sm:$0xf] %v1038
        %1055 = vst [vmem:[%s576 + $0x28] sm:$0xf] %v1039
        %1056 = vst [vmem:[%s576 + $0x30] sm:$0xf] %v1040
        %1057 = vst [vmem:[%s576 + $0x38] sm:$0xf] %v1041
        %1058 = vst [vmem:[%s576 + $0x40] sm:$0xf] %v1042
        %1059 = vst [vmem:[%s576 + $0x48] sm:$0xf] %v1043
        %1060 = vst [vmem:[%s576 + $0x50] sm:$0xf] %v1044
        %1061 = vst [vmem:[%s576 + $0x58] sm:$0xf] %v1045
        %1062 = vst [vmem:[%s576 + $0x60] sm:$0xf] %v1046
        %1063 = vst [vmem:[%s576 + $0x68] sm:$0xf] %v1047
        %1064 = vst [vmem:[%s576 + $0x70] sm:$0xf] %v1048
        %1065 = vst [vmem:[%s576 + $0x78] sm:$0xf] %v1049
        %v1066 = vld [vmem:[%s530 + $0x4] sm:$0xf]
        %v1067 = vld [vmem:[%s530 + $0xc] sm:$0xf]
        %v1068 = vld [vmem:[%s530 + $0x14] sm:$0xf]
        %v1069 = vld [vmem:[%s530 + $0x1c] sm:$0xf]
        %v1070 = vld [vmem:[%s530 + $0x24] sm:$0xf]
        %v1071 = vld [vmem:[%s530 + $0x2c] sm:$0xf]
        %v1072 = vld [vmem:[%s530 + $0x34] sm:$0xf]
        %v1073 = vld [vmem:[%s530 + $0x3c] sm:$0xf]
        %v1074 = vld [vmem:[%s530 + $0x44] sm:$0xf]
        %v1075 = vld [vmem:[%s530 + $0x4c] sm:$0xf]
        %v1076 = vld [vmem:[%s530 + $0x54] sm:$0xf]
        %v1077 = vld [vmem:[%s530 + $0x5c] sm:$0xf]
        %v1078 = vld [vmem:[%s530 + $0x64] sm:$0xf]
        %v1079 = vld [vmem:[%s530 + $0x6c] sm:$0xf]
        %v1080 = vld [vmem:[%s530 + $0x74] sm:$0xf]
        %v1081 = vld [vmem:[%s530 + $0x7c] sm:$0xf]
        %v1082 = vld [vmem:[%s537 + $0x4] sm:$0xf]
        %v1083 = vld [vmem:[%s537 + $0xc] sm:$0xf]
        %v1084 = vld [vmem:[%s537 + $0x14] sm:$0xf]
        %v1085 = vld [vmem:[%s537 + $0x1c] sm:$0xf]
        %v1086 = vld [vmem:[%s537 + $0x24] sm:$0xf]
        %v1087 = vld [vmem:[%s537 + $0x2c] sm:$0xf]
        %v1088 = vld [vmem:[%s537 + $0x34] sm:$0xf]
        %v1089 = vld [vmem:[%s537 + $0x3c] sm:$0xf]
        %v1090 = vld [vmem:[%s537 + $0x44] sm:$0xf]
        %v1091 = vld [vmem:[%s537 + $0x4c] sm:$0xf]
        %v1092 = vld [vmem:[%s537 + $0x54] sm:$0xf]
        %v1093 = vld [vmem:[%s537 + $0x5c] sm:$0xf]
        %v1094 = vld [vmem:[%s537 + $0x64] sm:$0xf]
        %v1095 = vld [vmem:[%s537 + $0x6c] sm:$0xf]
        %v1096 = vld [vmem:[%s537 + $0x74] sm:$0xf]
        %v1097 = vld [vmem:[%s537 + $0x7c] sm:$0xf]
        %v1098 = vld [vmem:[%s544 + $0x4] sm:$0xf]
        %v1099 = vld [vmem:[%s544 + $0xc] sm:$0xf]
        %v1100 = vld [vmem:[%s544 + $0x14] sm:$0xf]
        %v1101 = vld [vmem:[%s544 + $0x1c] sm:$0xf]
        %v1102 = vld [vmem:[%s544 + $0x24] sm:$0xf]
        %v1103 = vld [vmem:[%s544 + $0x2c] sm:$0xf]
        %v1104 = vld [vmem:[%s544 + $0x34] sm:$0xf]
        %v1105 = vld [vmem:[%s544 + $0x3c] sm:$0xf]
        %v1106 = vld [vmem:[%s544 + $0x44] sm:$0xf]
        %v1107 = vld [vmem:[%s544 + $0x4c] sm:$0xf]
        %v1108 = vld [vmem:[%s544 + $0x54] sm:$0xf]
        %v1109 = vld [vmem:[%s544 + $0x5c] sm:$0xf]
        %v1110 = vld [vmem:[%s544 + $0x64] sm:$0xf]
        %v1111 = vld [vmem:[%s544 + $0x6c] sm:$0xf]
        %v1112 = vld [vmem:[%s544 + $0x74] sm:$0xf]
        %v1113 = vld [vmem:[%s544 + $0x7c] sm:$0xf]
        %v1130 = vunpack.c.l.b16 %v1066
        %v1131 = vunpack.c.l.b16 %v1067
        %v1132 = vunpack.c.l.b16 %v1068
        %v1133 = vunpack.c.l.b16 %v1069
        %v1134 = vunpack.c.l.b16 %v1070
        %v1135 = vunpack.c.l.b16 %v1071
        %v1136 = vunpack.c.l.b16 %v1072
        %v1137 = vunpack.c.l.b16 %v1073
        %v1138 = vunpack.c.l.b16 %v1074
        %v1139 = vunpack.c.l.b16 %v1075
        %v1140 = vunpack.c.l.b16 %v1076
        %v1141 = vunpack.c.l.b16 %v1077
        %v1142 = vunpack.c.l.b16 %v1078
        %v1143 = vunpack.c.l.b16 %v1079
        %v1144 = vunpack.c.l.b16 %v1080
        %v1145 = vunpack.c.l.b16 %v1081
        %v1146 = vpack.c.b16 %v1131, %v1130
        %v1147 = vpack.c.b16 %v1133, %v1132
        %v1148 = vpack.c.b16 %v1135, %v1134
        %v1149 = vpack.c.b16 %v1137, %v1136
        %v1150 = vpack.c.b16 %v1139, %v1138
        %v1151 = vpack.c.b16 %v1141, %v1140
        %v1152 = vpack.c.b16 %v1143, %v1142
        %v1153 = vpack.c.b16 %v1145, %v1144
        %v1178 = vunpack.c.l.b16 %v1082
        %v1179 = vunpack.c.l.b16 %v1083
        %v1180 = vunpack.c.l.b16 %v1084
        %v1181 = vunpack.c.l.b16 %v1085
        %v1182 = vunpack.c.l.b16 %v1086
        %v1183 = vunpack.c.l.b16 %v1087
        %v1184 = vunpack.c.l.b16 %v1088
        %v1185 = vunpack.c.l.b16 %v1089
        %v1186 = vunpack.c.l.b16 %v1090
        %v1187 = vunpack.c.l.b16 %v1091
        %v1188 = vunpack.c.l.b16 %v1092
        %v1189 = vunpack.c.l.b16 %v1093
        %v1190 = vunpack.c.l.b16 %v1094
        %v1191 = vunpack.c.l.b16 %v1095
        %v1192 = vunpack.c.l.b16 %v1096
        %v1193 = vunpack.c.l.b16 %v1097
        %v1194 = vpack.c.b16 %v1179, %v1178
        %v1195 = vpack.c.b16 %v1181, %v1180
        %v1196 = vpack.c.b16 %v1183, %v1182
        %v1197 = vpack.c.b16 %v1185, %v1184
        %v1198 = vpack.c.b16 %v1187, %v1186
        %v1199 = vpack.c.b16 %v1189, %v1188
        %v1200 = vpack.c.b16 %v1191, %v1190
        %v1201 = vpack.c.b16 %v1193, %v1192
        %1210 = vmatpush.bf16.xpose.msra.mxu0 %v1201
        %1211 = vmatpush.bf16.xpose.msra.mxu0 %v1200
        %1212 = vmatpush.bf16.xpose.msra.mxu0 %v1199
        %1213 = vmatpush.bf16.xpose.msra.mxu0 %v1198
        %1214 = vmatpush.bf16.xpose.msra.mxu0 %v1197
        %1215 = vmatpush.bf16.xpose.msra.mxu0 %v1196
        %1216 = vmatpush.bf16.xpose.msra.mxu0 %v1195
        %1217 = vmatpush.bf16.xpose.msra.mxu0 %v1194
        %1218 = vmatmul.bf16.gmra.mxu0 %v1146
        %v1219 = vpop.f32.mrf.mxu0
        %v1220 = vadd.f32 %v638, %v1219
        %v1221 = vpop.f32.mrf.mxu0
        %v1222 = vadd.f32 %v638, %v1221
        %1223 = vmatmul.bf16.gmra.mxu0 %v1147
        %v1224 = vpop.f32.mrf.mxu0
        %v1225 = vadd.f32 %v638, %v1224
        %v1226 = vpop.f32.mrf.mxu0
        %v1227 = vadd.f32 %v638, %v1226
        %1228 = vmatmul.bf16.gmra.mxu0 %v1148
        %v1229 = vpop.f32.mrf.mxu0
        %v1230 = vadd.f32 %v638, %v1229
        %v1231 = vpop.f32.mrf.mxu0
        %v1232 = vadd.f32 %v638, %v1231
        %1233 = vmatmul.bf16.gmra.mxu0 %v1149
        %v1234 = vpop.f32.mrf.mxu0
        %v1235 = vadd.f32 %v638, %v1234
        %v1236 = vpop.f32.mrf.mxu0
        %v1237 = vadd.f32 %v638, %v1236
        %1238 = vmatmul.bf16.gmra.mxu0 %v1150
        %v1239 = vpop.f32.mrf.mxu0
        %v1240 = vadd.f32 %v638, %v1239
        %v1241 = vpop.f32.mrf.mxu0
        %v1242 = vadd.f32 %v638, %v1241
        %1243 = vmatmul.bf16.gmra.mxu0 %v1151
        %v1244 = vpop.f32.mrf.mxu0
        %v1245 = vadd.f32 %v638, %v1244
        %v1246 = vpop.f32.mrf.mxu0
        %v1247 = vadd.f32 %v638, %v1246
        %1248 = vmatmul.bf16.gmra.mxu0 %v1152
        %v1249 = vpop.f32.mrf.mxu0
        %v1250 = vadd.f32 %v638, %v1249
        %v1251 = vpop.f32.mrf.mxu0
        %v1252 = vadd.f32 %v638, %v1251
        %1253 = vmatmul.bf16.gmra.mxu0 %v1153
        %v1254 = vpop.f32.mrf.mxu0
        %v1255 = vadd.f32 %v638, %v1254
        %v1256 = vpop.f32.mrf.mxu0
        %v1257 = vadd.f32 %v638, %v1256
        %1258 = vdwg.mxu0
        %1259 = vmax.xlane.f32.xlu0 %v1220
        %v1260 = vpop.xlane.xlu0 %1259
        %1261 = vmax.xlane.f32.xlu0 %v1222
        %v1262 = vpop.xlane.xlu0 %1261
        %1263 = vmax.xlane.f32.xlu0 %v1225
        %v1264 = vpop.xlane.xlu0 %1263
        %1265 = vmax.xlane.f32.xlu0 %v1227
        %v1266 = vpop.xlane.xlu0 %1265
        %1267 = vmax.xlane.f32.xlu0 %v1230
        %v1268 = vpop.xlane.xlu0 %1267
        %1269 = vmax.xlane.f32.xlu0 %v1232
        %v1270 = vpop.xlane.xlu0 %1269
        %1271 = vmax.xlane.f32.xlu0 %v1235
        %v1272 = vpop.xlane.xlu0 %1271
        %1273 = vmax.xlane.f32.xlu0 %v1237
        %v1274 = vpop.xlane.xlu0 %1273
        %1275 = vmax.xlane.f32.xlu0 %v1240
        %v1276 = vpop.xlane.xlu0 %1275
        %1277 = vmax.xlane.f32.xlu0 %v1242
        %v1278 = vpop.xlane.xlu0 %1277
        %1279 = vmax.xlane.f32.xlu0 %v1245
        %v1280 = vpop.xlane.xlu0 %1279
        %1281 = vmax.xlane.f32.xlu0 %v1247
        %v1282 = vpop.xlane.xlu0 %1281
        %1283 = vmax.xlane.f32.xlu0 %v1250
        %v1284 = vpop.xlane.xlu0 %1283
        %1285 = vmax.xlane.f32.xlu0 %v1252
        %v1286 = vpop.xlane.xlu0 %1285
        %1287 = vmax.xlane.f32.xlu0 %v1255
        %v1288 = vpop.xlane.xlu0 %1287
        %1289 = vmax.xlane.f32.xlu0 %v1257
        %v1290 = vpop.xlane.xlu0 %1289
        %v1291 = vsub.f32 %v1220, %v1260
        %v1292 = vsub.f32 %v1222, %v1262
        %v1293 = vsub.f32 %v1225, %v1264
        %v1294 = vsub.f32 %v1227, %v1266
        %v1295 = vsub.f32 %v1230, %v1268
        %v1296 = vsub.f32 %v1232, %v1270
        %v1297 = vsub.f32 %v1235, %v1272
        %v1298 = vsub.f32 %v1237, %v1274
        %v1299 = vsub.f32 %v1240, %v1276
        %v1300 = vsub.f32 %v1242, %v1278
        %v1301 = vsub.f32 %v1245, %v1280
        %v1302 = vsub.f32 %v1247, %v1282
        %v1303 = vsub.f32 %v1250, %v1284
        %v1304 = vsub.f32 %v1252, %v1286
        %v1305 = vsub.f32 %v1255, %v1288
        %v1306 = vsub.f32 %v1257, %v1290
        %v1307 = vmul.f32 %v1291, 1.442695
        %v1308 = vpow.pop %v1307
        %v1309 = vmul.f32 %v1292, 1.442695
        %v1310 = vpow.pop %v1309
        %v1311 = vmul.f32 %v1293, 1.442695
        %v1312 = vpow.pop %v1311
        %v1313 = vmul.f32 %v1294, 1.442695
        %v1314 = vpow.pop %v1313
        %v1315 = vmul.f32 %v1295, 1.442695
        %v1316 = vpow.pop %v1315
        %v1317 = vmul.f32 %v1296, 1.442695
        %v1318 = vpow.pop %v1317
        %v1319 = vmul.f32 %v1297, 1.442695
        %v1320 = vpow.pop %v1319
        %v1321 = vmul.f32 %v1298, 1.442695
        %v1322 = vpow.pop %v1321
        %v1323 = vmul.f32 %v1299, 1.442695
        %v1324 = vpow.pop %v1323
        %v1325 = vmul.f32 %v1300, 1.442695
        %v1326 = vpow.pop %v1325
        %v1327 = vmul.f32 %v1301, 1.442695
        %v1328 = vpow.pop %v1327
        %v1329 = vmul.f32 %v1302, 1.442695
        %v1330 = vpow.pop %v1329
        %v1331 = vmul.f32 %v1303, 1.442695
        %v1332 = vpow.pop %v1331
        %v1333 = vmul.f32 %v1304, 1.442695
        %v1334 = vpow.pop %v1333
        %v1335 = vmul.f32 %v1305, 1.442695
        %v1336 = vpow.pop %v1335
        %v1337 = vmul.f32 %v1306, 1.442695
        %v1338 = vpow.pop %v1337
        %1339 = vadd.xlane.f32.xlu0 %v1308
        %v1340 = vpop.xlane.xlu0 %1339
        %1341 = vadd.xlane.f32.xlu0 %v1310
        %v1342 = vpop.xlane.xlu0 %1341
        %1343 = vadd.xlane.f32.xlu0 %v1312
        %v1344 = vpop.xlane.xlu0 %1343
        %1345 = vadd.xlane.f32.xlu0 %v1314
        %v1346 = vpop.xlane.xlu0 %1345
        %1347 = vadd.xlane.f32.xlu0 %v1316
        %v1348 = vpop.xlane.xlu0 %1347
        %1349 = vadd.xlane.f32.xlu0 %v1318
        %v1350 = vpop.xlane.xlu0 %1349
        %1351 = vadd.xlane.f32.xlu0 %v1320
        %v1352 = vpop.xlane.xlu0 %1351
        %1353 = vadd.xlane.f32.xlu0 %v1322
        %v1354 = vpop.xlane.xlu0 %1353
        %1355 = vadd.xlane.f32.xlu0 %v1324
        %v1356 = vpop.xlane.xlu0 %1355
        %1357 = vadd.xlane.f32.xlu0 %v1326
        %v1358 = vpop.xlane.xlu0 %1357
        %1359 = vadd.xlane.f32.xlu0 %v1328
        %v1360 = vpop.xlane.xlu0 %1359
        %1361 = vadd.xlane.f32.xlu0 %v1330
        %v1362 = vpop.xlane.xlu0 %1361
        %1363 = vadd.xlane.f32.xlu0 %v1332
        %v1364 = vpop.xlane.xlu0 %1363
        %1365 = vadd.xlane.f32.xlu0 %v1334
        %v1366 = vpop.xlane.xlu0 %1365
        %1367 = vadd.xlane.f32.xlu0 %v1336
        %v1368 = vpop.xlane.xlu0 %1367
        %1369 = vadd.xlane.f32.xlu0 %v1338
        %v1370 = vpop.xlane.xlu0 %1369
        %v1371 = vrcp.pop %v1340
        %v1372 = vrcp.pop %v1342
        %v1373 = vrcp.pop %v1344
        %v1374 = vrcp.pop %v1346
        %v1375 = vrcp.pop %v1348
        %v1376 = vrcp.pop %v1350
        %v1377 = vrcp.pop %v1352
        %v1378 = vrcp.pop %v1354
        %v1379 = vrcp.pop %v1356
        %v1380 = vrcp.pop %v1358
        %v1381 = vrcp.pop %v1360
        %v1382 = vrcp.pop %v1362
        %v1383 = vrcp.pop %v1364
        %v1384 = vrcp.pop %v1366
        %v1385 = vrcp.pop %v1368
        %v1386 = vrcp.pop %v1370
        %v1387 = vmul.f32 %v1308, %v1371
        %v1388 = vmul.f32 %v1310, %v1372
        %v1389 = vmul.f32 %v1312, %v1373
        %v1390 = vmul.f32 %v1314, %v1374
        %v1391 = vmul.f32 %v1316, %v1375
        %v1392 = vmul.f32 %v1318, %v1376
        %v1393 = vmul.f32 %v1320, %v1377
        %v1394 = vmul.f32 %v1322, %v1378
        %v1395 = vmul.f32 %v1324, %v1379
        %v1396 = vmul.f32 %v1326, %v1380
        %v1397 = vmul.f32 %v1328, %v1381
        %v1398 = vmul.f32 %v1330, %v1382
        %v1399 = vmul.f32 %v1332, %v1383
        %v1400 = vmul.f32 %v1334, %v1384
        %v1401 = vmul.f32 %v1336, %v1385
        %v1402 = vmul.f32 %v1338, %v1386
        %v1403 = vpack.c.bf16 %v1388, %v1387
        %v1404 = vpack.c.bf16 %v1390, %v1389
        %v1405 = vpack.c.bf16 %v1392, %v1391
        %v1406 = vpack.c.bf16 %v1394, %v1393
        %v1407 = vpack.c.bf16 %v1396, %v1395
        %v1408 = vpack.c.bf16 %v1398, %v1397
        %v1409 = vpack.c.bf16 %v1400, %v1399
        %v1410 = vpack.c.bf16 %v1402, %v1401
        %v1427 = vunpack.c.l.b16 %v1098
        %v1428 = vunpack.c.l.b16 %v1099
        %v1429 = vunpack.c.l.b16 %v1100
        %v1430 = vunpack.c.l.b16 %v1101
        %v1431 = vunpack.c.l.b16 %v1102
        %v1432 = vunpack.c.l.b16 %v1103
        %v1433 = vunpack.c.l.b16 %v1104
        %v1434 = vunpack.c.l.b16 %v1105
        %v1435 = vunpack.c.l.b16 %v1106
        %v1436 = vunpack.c.l.b16 %v1107
        %v1437 = vunpack.c.l.b16 %v1108
        %v1438 = vunpack.c.l.b16 %v1109
        %v1439 = vunpack.c.l.b16 %v1110
        %v1440 = vunpack.c.l.b16 %v1111
        %v1441 = vunpack.c.l.b16 %v1112
        %v1442 = vunpack.c.l.b16 %v1113
        %v1443 = vpack.c.b16 %v1428, %v1427
        %v1444 = vpack.c.b16 %v1430, %v1429
        %v1445 = vpack.c.b16 %v1432, %v1431
        %v1446 = vpack.c.b16 %v1434, %v1433
        %v1447 = vpack.c.b16 %v1436, %v1435
        %v1448 = vpack.c.b16 %v1438, %v1437
        %v1449 = vpack.c.b16 %v1440, %v1439
        %v1450 = vpack.c.b16 %v1442, %v1441
        %1459 = vmatpush.bf16.msra.mxu0 %v1450
        %1460 = vmatpush.bf16.msra.mxu0 %v1449
        %1461 = vmatpush.bf16.msra.mxu0 %v1448
        %1462 = vmatpush.bf16.msra.mxu0 %v1447
        %1463 = vmatpush.bf16.msra.mxu0 %v1446
        %1464 = vmatpush.bf16.msra.mxu0 %v1445
        %1465 = vmatpush.bf16.msra.mxu0 %v1444
        %1466 = vmatpush.bf16.msra.mxu0 %v1443
        %1467 = vmatmul.bf16.gmra.mxu0 %v1403
        %v1468 = vpop.f32.mrf.mxu0
        %v1469 = vadd.f32 0.0, %v1468
        %v1470 = vpop.f32.mrf.mxu0
        %v1471 = vadd.f32 0.0, %v1470
        %1472 = vmatmul.bf16.gmra.mxu0 %v1404
        %v1473 = vpop.f32.mrf.mxu0
        %v1474 = vadd.f32 0.0, %v1473
        %v1475 = vpop.f32.mrf.mxu0
        %v1476 = vadd.f32 0.0, %v1475
        %1477 = vmatmul.bf16.gmra.mxu0 %v1405
        %v1478 = vpop.f32.mrf.mxu0
        %v1479 = vadd.f32 0.0, %v1478
        %v1480 = vpop.f32.mrf.mxu0
        %v1481 = vadd.f32 0.0, %v1480
        %1482 = vmatmul.bf16.gmra.mxu0 %v1406
        %v1483 = vpop.f32.mrf.mxu0
        %v1484 = vadd.f32 0.0, %v1483
        %v1485 = vpop.f32.mrf.mxu0
        %v1486 = vadd.f32 0.0, %v1485
        %1487 = vmatmul.bf16.gmra.mxu0 %v1407
        %v1488 = vpop.f32.mrf.mxu0
        %v1489 = vadd.f32 0.0, %v1488
        %v1490 = vpop.f32.mrf.mxu0
        %v1491 = vadd.f32 0.0, %v1490
        %1492 = vmatmul.bf16.gmra.mxu0 %v1408
        %v1493 = vpop.f32.mrf.mxu0
        %v1494 = vadd.f32 0.0, %v1493
        %v1495 = vpop.f32.mrf.mxu0
        %v1496 = vadd.f32 0.0, %v1495
        %1497 = vmatmul.bf16.gmra.mxu0 %v1409
        %v1498 = vpop.f32.mrf.mxu0
        %v1499 = vadd.f32 0.0, %v1498
        %v1500 = vpop.f32.mrf.mxu0
        %v1501 = vadd.f32 0.0, %v1500
        %1502 = vmatmul.bf16.gmra.mxu0 %v1410
        %v1503 = vpop.f32.mrf.mxu0
        %v1504 = vadd.f32 0.0, %v1503
        %v1505 = vpop.f32.mrf.mxu0
        %v1506 = vadd.f32 0.0, %v1505
        %1507 = vdwg.mxu0
        %v1508 = vpack.c.bf16 %v1469, %v1469
        %v1509 = vpack.c.bf16 %v1471, %v1471
        %v1510 = vpack.c.bf16 %v1474, %v1474
        %v1511 = vpack.c.bf16 %v1476, %v1476
        %v1512 = vpack.c.bf16 %v1479, %v1479
        %v1513 = vpack.c.bf16 %v1481, %v1481
        %v1514 = vpack.c.bf16 %v1484, %v1484
        %v1515 = vpack.c.bf16 %v1486, %v1486
        %v1516 = vpack.c.bf16 %v1489, %v1489
        %v1517 = vpack.c.bf16 %v1491, %v1491
        %v1518 = vpack.c.bf16 %v1494, %v1494
        %v1519 = vpack.c.bf16 %v1496, %v1496
        %v1520 = vpack.c.bf16 %v1499, %v1499
        %v1521 = vpack.c.bf16 %v1501, %v1501
        %v1522 = vpack.c.bf16 %v1504, %v1504
        %v1523 = vpack.c.bf16 %v1506, %v1506
        %1524 = vst [vmem:[%s576 + $0x4] sm:$0xf] %v1508
        %1525 = vst [vmem:[%s576 + $0xc] sm:$0xf] %v1509
        %1526 = vst [vmem:[%s576 + $0x14] sm:$0xf] %v1510
        %1527 = vst [vmem:[%s576 + $0x1c] sm:$0xf] %v1511
        %1528 = vst [vmem:[%s576 + $0x24] sm:$0xf] %v1512
        %1529 = vst [vmem:[%s576 + $0x2c] sm:$0xf] %v1513
        %1530 = vst [vmem:[%s576 + $0x34] sm:$0xf] %v1514
        %1531 = vst [vmem:[%s576 + $0x3c] sm:$0xf] %v1515
        %1532 = vst [vmem:[%s576 + $0x44] sm:$0xf] %v1516
        %1533 = vst [vmem:[%s576 + $0x4c] sm:$0xf] %v1517
        %1534 = vst [vmem:[%s576 + $0x54] sm:$0xf] %v1518
        %1535 = vst [vmem:[%s576 + $0x5c] sm:$0xf] %v1519
        %1536 = vst [vmem:[%s576 + $0x64] sm:$0xf] %v1520
        %1537 = vst [vmem:[%s576 + $0x6c] sm:$0xf] %v1521
        %1538 = vst [vmem:[%s576 + $0x74] sm:$0xf] %v1522
        %1539 = vst [vmem:[%s576 + $0x7c] sm:$0xf] %v1523
        %s1540 = sand.u32 %s162, 1
        %s1541 = sand.u32 %s162, 1
        %s1542 = smul.addr %s1541, 128
        %s1543 = scalar_lea.vmem [#allocation5], %s1542
        // Predicated region
        $region151: #{self_attention_pallas.4} parent=137 // pred_check
          %p1544 = pneg %p172
        $region152: #{self_attention_pallas.4} parent=137 // pred_check_branch
          %1546 = sbr.rel (%p1544) target = $region154
        $region153: #{self_attention_pallas.4} parent=137 // pred_region
          %s1547 = smul.u32 16, %s22
          %s1548 = smul.u32 2, %s21
          %s1549 = smul.addr %s1547, 4
          %s1550 = sadd.s32 %s1548, %s1549
          %s1551 = smul.addr %s20, 64
          %s1552 = sadd.s32 %s1550, %s1551
          %s1553 = smul.addr %s1552, 4
          %s1554 = scalar_lea.vmem %s4, %s1553
          // Predicated region
          $region155: #{self_attention_pallas.4} parent=153 // pred_check
            _
          $region156: #{self_attention_pallas.4} parent=153 // pred_check_branch
            %1556 = sbr.rel (0) target = $region158
          $region157: #{self_attention_pallas.4} parent=153 // pred_region
            // Predicated region
            $region159: #{self_attention_pallas.4} parent=157 // pred_check
              _
            $region160: #{self_attention_pallas.4} parent=157 // pred_check_branch
              %1558 = sbr.rel (0) target = $region162
            $region161: #{self_attention_pallas.4} parent=157 // pred_region
              // Predicated region
              $region174: #{self_attention_pallas.4} parent=161 // pred_check
                _
              $region175: #{self_attention_pallas.4} parent=161 // pred_check_branch
                %1604 = sbr.rel (0) target = $region177
              $region176: #{self_attention_pallas.4} parent=161 // pred_region
                loop: start=0, step=1, limit=1
                $region178: #{self_attention_pallas.4} parent=176 // loop_pre_header
                  _
                $region179: #{self_attention_pallas.4} parent=176 // loop_header
                  %s1606 = sphi 0, %s1610
                  %p1607 = scmp.ge.s32.totalorder %s1606, 1
                  %s1611 = sphi %s1543, %s1543
                  %s1612 = sphi %s1554, %s1554
                $region180: #{self_attention_pallas.4} parent=176 // loop_header_branch
                  %1609 = sbr.rel (%p1607) target = $region184
                $region181: #{self_attention_pallas.4} parent=176 // loop_body
                  %v1613 = vld [vmem:[%s1611] sm:$0xff]
                  %1614 = vst [vmem:[%s1612] sm:$0xff] %v1613
                  %v1615 = vld [vmem:[%s1611 + $0x8] sm:$0xff]
                  %1616 = vst [vmem:[%s1612 + $0x10] sm:$0xff] %v1615
                  %v1617 = vld [vmem:[%s1611 + $0x10] sm:$0xff]
                  %1618 = vst [vmem:[%s1612 + $0x20] sm:$0xff] %v1617
                  %v1619 = vld [vmem:[%s1611 + $0x18] sm:$0xff]
                  %1620 = vst [vmem:[%s1612 + $0x30] sm:$0xff] %v1619
                  %v1621 = vld [vmem:[%s1611 + $0x20] sm:$0xff]
                  %1622 = vst [vmem:[%s1612 + $0x40] sm:$0xff] %v1621
                  %v1623 = vld [vmem:[%s1611 + $0x28] sm:$0xff]
                  %1624 = vst [vmem:[%s1612 + $0x50] sm:$0xff] %v1623
                  %v1625 = vld [vmem:[%s1611 + $0x30] sm:$0xff]
                  %1626 = vst [vmem:[%s1612 + $0x60] sm:$0xff] %v1625
                  %v1627 = vld [vmem:[%s1611 + $0x38] sm:$0xff]
                  %1628 = vst [vmem:[%s1612 + $0x70] sm:$0xff] %v1627
                  %v1629 = vld [vmem:[%s1611 + $0x40] sm:$0xff]
                  %1630 = vst [vmem:[%s1612 + $0x80] sm:$0xff] %v1629
                  %v1631 = vld [vmem:[%s1611 + $0x48] sm:$0xff]
                  %1632 = vst [vmem:[%s1612 + $0x90] sm:$0xff] %v1631
                  %v1633 = vld [vmem:[%s1611 + $0x50] sm:$0xff]
                  %1634 = vst [vmem:[%s1612 + $0xa0] sm:$0xff] %v1633
                  %v1635 = vld [vmem:[%s1611 + $0x58] sm:$0xff]
                  %1636 = vst [vmem:[%s1612 + $0xb0] sm:$0xff] %v1635
                  %v1637 = vld [vmem:[%s1611 + $0x60] sm:$0xff]
                  %1638 = vst [vmem:[%s1612 + $0xc0] sm:$0xff] %v1637
                  %v1639 = vld [vmem:[%s1611 + $0x68] sm:$0xff]
                  %1640 = vst [vmem:[%s1612 + $0xd0] sm:$0xff] %v1639
                  %v1641 = vld [vmem:[%s1611 + $0x70] sm:$0xff]
                  %1642 = vst [vmem:[%s1612 + $0xe0] sm:$0xff] %v1641
                  %v1643 = vld [vmem:[%s1611 + $0x78] sm:$0xff]
                  %1644 = vst [vmem:[%s1612 + $0xf0] sm:$0xff] %v1643
                $region182: #{self_attention_pallas.4} parent=176 // loop_footer
                  %s1610 = sadd.s32 1, %s1606
                $region183: #{self_attention_pallas.4} parent=176 // loop_footer_branch
                  %1605 = sbr.rel target = $region179
                $region184: #{self_attention_pallas.4} parent=176 // loop_exit
                  _
              $region177: #{self_attention_pallas.4} parent=161 // pred_fallthru
                _
              // Predicated region
              $region185: #{self_attention_pallas.4} parent=161 // pred_check
                _
              $region186: #{self_attention_pallas.4} parent=161 // pred_check_branch
                %1646 = sbr.rel target = $region188
              $region187: #{self_attention_pallas.4} parent=161 // pred_region
                _
              $region188: #{self_attention_pallas.4} parent=161 // pred_fallthru
                _
            $region162: #{self_attention_pallas.4} parent=157 // pred_fallthru
              _
            // Predicated region
            $region163: #{self_attention_pallas.4} parent=157 // pred_check
              _
            $region164: #{self_attention_pallas.4} parent=157 // pred_check_branch
              %1560 = sbr.rel target = $region166
            $region165: #{self_attention_pallas.4} parent=157 // pred_region
              %s1562 = ssub.s32 256, 1
              loop: start=0, step=1, limit=1
              $region167: #{self_attention_pallas.4} parent=165 // loop_pre_header
                _
              $region168: #{self_attention_pallas.4} parent=165 // loop_header
                %s1564 = sphi 0, %s1568
                %p1565 = scmp.ge.s32.totalorder %s1564, 1
                %s1569 = sphi %s1543, %s1543
                %s1570 = sphi %s1554, %s1554
              $region169: #{self_attention_pallas.4} parent=165 // loop_header_branch
                %1567 = sbr.rel (%p1565) target = $region173
              $region170: #{self_attention_pallas.4} parent=165 // loop_body
                %v1571 = vld [vmem:[%s1569] sm:%s1562]
                %1572 = vst [vmem:[%s1570] sm:%s1562] %v1571
                %v1573 = vld [vmem:[%s1569 + $0x8] sm:%s1562]
                %1574 = vst [vmem:[%s1570 + $0x10] sm:%s1562] %v1573
                %v1575 = vld [vmem:[%s1569 + $0x10] sm:%s1562]
                %1576 = vst [vmem:[%s1570 + $0x20] sm:%s1562] %v1575
                %v1577 = vld [vmem:[%s1569 + $0x18] sm:%s1562]
                %1578 = vst [vmem:[%s1570 + $0x30] sm:%s1562] %v1577
                %v1579 = vld [vmem:[%s1569 + $0x20] sm:%s1562]
                %1580 = vst [vmem:[%s1570 + $0x40] sm:%s1562] %v1579
                %v1581 = vld [vmem:[%s1569 + $0x28] sm:%s1562]
                %1582 = vst [vmem:[%s1570 + $0x50] sm:%s1562] %v1581
                %v1583 = vld [vmem:[%s1569 + $0x30] sm:%s1562]
                %1584 = vst [vmem:[%s1570 + $0x60] sm:%s1562] %v1583
                %v1585 = vld [vmem:[%s1569 + $0x38] sm:%s1562]
                %1586 = vst [vmem:[%s1570 + $0x70] sm:%s1562] %v1585
                %v1587 = vld [vmem:[%s1569 + $0x40] sm:%s1562]
                %1588 = vst [vmem:[%s1570 + $0x80] sm:%s1562] %v1587
                %v1589 = vld [vmem:[%s1569 + $0x48] sm:%s1562]
                %1590 = vst [vmem:[%s1570 + $0x90] sm:%s1562] %v1589
                %v1591 = vld [vmem:[%s1569 + $0x50] sm:%s1562]
                %1592 = vst [vmem:[%s1570 + $0xa0] sm:%s1562] %v1591
                %v1593 = vld [vmem:[%s1569 + $0x58] sm:%s1562]
                %1594 = vst [vmem:[%s1570 + $0xb0] sm:%s1562] %v1593
                %v1595 = vld [vmem:[%s1569 + $0x60] sm:%s1562]
                %1596 = vst [vmem:[%s1570 + $0xc0] sm:%s1562] %v1595
                %v1597 = vld [vmem:[%s1569 + $0x68] sm:%s1562]
                %1598 = vst [vmem:[%s1570 + $0xd0] sm:%s1562] %v1597
                %v1599 = vld [vmem:[%s1569 + $0x70] sm:%s1562]
                %1600 = vst [vmem:[%s1570 + $0xe0] sm:%s1562] %v1599
                %v1601 = vld [vmem:[%s1569 + $0x78] sm:%s1562]
                %1602 = vst [vmem:[%s1570 + $0xf0] sm:%s1562] %v1601
              $region171: #{self_attention_pallas.4} parent=165 // loop_footer
                %s1568 = sadd.s32 1, %s1564
              $region172: #{self_attention_pallas.4} parent=165 // loop_footer_branch
                %1563 = sbr.rel target = $region168
              $region173: #{self_attention_pallas.4} parent=165 // loop_exit
                _
            $region166: #{self_attention_pallas.4} parent=157 // pred_fallthru
              _
          $region158: #{self_attention_pallas.4} parent=153 // pred_fallthru
            _
          %1647 = vnop
        $region154: #{self_attention_pallas.4} parent=137 // pred_fallthru
          _
      $region138: #{self_attention_pallas.4} parent=5 // pred_fallthru
        _
      %p1648 = scmp.le.s32.totalorder 2, %s10
      // Predicated region
      $region189: #{self_attention_pallas.4} parent=5 // pred_check
        %p1649 = pneg %p1648
      $region190: #{self_attention_pallas.4} parent=5 // pred_check_branch
        %1651 = sbr.rel (%p1649) target = $region192
      $region191: #{self_attention_pallas.4} parent=5 // pred_region
        %s1652 = ssub.s32 %s10, 2
        // Predicated region
        $region193: #{self_attention_pallas.4} parent=191 // pred_check
          %p1653 = pneg %p178
        $region194: #{self_attention_pallas.4} parent=191 // pred_check_branch
          %1655 = sbr.rel (%p1653) target = $region196
        $region195: #{self_attention_pallas.4} parent=191 // pred_region
          %s1656 = sand.u32 %s163, 1
          %s1657 = sand.u32 %s163, 1
          %s1658 = smul.addr %s1657, 128
          %s1659 = scalar_lea.vmem [#allocation5], %s1658
        $region196: #{self_attention_pallas.4} parent=191 // pred_fallthru
          _
      $region192: #{self_attention_pallas.4} parent=5 // pred_fallthru
        _
    $region6: #{self_attention_pallas.4} parent=1 // loop_footer
      %s14 = sadd.s32 1, %s10
    $region7: #{self_attention_pallas.4} parent=1 // loop_footer_branch
      %9 = sbr.rel target = $region3
    $region8: #{self_attention_pallas.4} parent=1 // loop_exit
      _

// kernel: self_attention_pallas.5
$region0: #{self_attention_pallas.5}
  #allocation0 [shape = 'u32[]', space=smem, size = 0x4, offset = 0x4, fixed_abs, tag = 'smem constant byte address 0x4 - core index']
  #allocation1 [shape = 'u32[72,128]{1,0:T(1,128)}', space=vmem, size = 0x9000, scoped, tag = 'internal scratch']
  %s0 = inlined_call_operand.vmem [shape: bf16[256,512], index: 0, kind: input, shape index: {}]
  %s1 = inlined_call_operand.vmem [shape: bf16[512,512], index: 1, kind: input, shape index: {}]
  %s2 = inlined_call_operand.vmem [shape: f32[1,512], index: 2, kind: input, shape index: {}]
  %s3 = inlined_call_operand.vmem [shape: f32[256,512], index: 3, kind: output, shape index: {}]
  %s4 = sld [smem:[#allocation0]]
  $region22: #{self_attention_pallas.5} parent=0
    _
  %s6 = ssub.s32 1, %s4
  %s7 = scalar_select 0, %s6, %s4
  // Predicated region
  $region2: #{self_attention_pallas.5} parent=0 // pred_check
    _
  $region3: #{self_attention_pallas.5} parent=0 // pred_check_branch
    %9 = sbr.rel (0) target = $region5
  $region4: #{self_attention_pallas.5} parent=0 // pred_region
    _
  $region5: #{self_attention_pallas.5} parent=0 // pred_fallthru
    _
  // Predicated region
  $region6: #{self_attention_pallas.5} parent=0 // pred_check
    _
  $region7: #{self_attention_pallas.5} parent=0 // pred_check_branch
    %11 = sbr.rel (0) target = $region9
  $region8: #{self_attention_pallas.5} parent=0 // pred_region
    _
  $region9: #{self_attention_pallas.5} parent=0 // pred_fallthru
    _
  // Predicated region
  $region10: #{self_attention_pallas.5} parent=0 // pred_check
    _
  $region11: #{self_attention_pallas.5} parent=0 // pred_check_branch
    %13 = sbr.rel (0) target = $region13
  $region12: #{self_attention_pallas.5} parent=0 // pred_region
    _
  $region13: #{self_attention_pallas.5} parent=0 // pred_fallthru
    _
  %v14 = vld [vmem:[%s0] sm:$0xff]
  %v15 = vld [vmem:[%s0 + $0x8] sm:$0xff]
  %v16 = vld [vmem:[%s0 + $0x10] sm:$0xff]
  %v17 = vld [vmem:[%s0 + $0x18] sm:$0xff]
  %v18 = vld [vmem:[%s0 + $0x20] sm:$0xff]
  %v19 = vld [vmem:[%s0 + $0x28] sm:$0xff]
  %v20 = vld [vmem:[%s0 + $0x30] sm:$0xff]
  %v21 = vld [vmem:[%s0 + $0x38] sm:$0xff]
  %v22 = vld [vmem:[%s0 + $0x40] sm:$0xff]
  %v23 = vld [vmem:[%s0 + $0x48] sm:$0xff]
  %v24 = vld [vmem:[%s0 + $0x50] sm:$0xff]
  %v25 = vld [vmem:[%s0 + $0x58] sm:$0xff]
  %v26 = vld [vmem:[%s0 + $0x60] sm:$0xff]
  %v27 = vld [vmem:[%s0 + $0x68] sm:$0xff]
  %v28 = vld [vmem:[%s0 + $0x70] sm:$0xff]
  %v29 = vld [vmem:[%s0 + $0x78] sm:$0xff]
  %v30 = vld [vmem:[%s0 + $0x80] sm:$0xff]
  %v31 = vld [vmem:[%s0 + $0x88] sm:$0xff]
  %v32 = vld [vmem:[%s0 + $0x90] sm:$0xff]
  %v33 = vld [vmem:[%s0 + $0x98] sm:$0xff]
  %v34 = vld [vmem:[%s0 + $0xa0] sm:$0xff]
  %v35 = vld [vmem:[%s0 + $0xa8] sm:$0xff]
  %v36 = vld [vmem:[%s0 + $0xb0] sm:$0xff]
  %v37 = vld [vmem:[%s0 + $0xb8] sm:$0xff]
  %v38 = vld [vmem:[%s0 + $0xc0] sm:$0xff]
  %v39 = vld [vmem:[%s0 + $0xc8] sm:$0xff]
  %v40 = vld [vmem:[%s0 + $0xd0] sm:$0xff]
  %v41 = vld [vmem:[%s0 + $0xd8] sm:$0xff]
  %v42 = vld [vmem:[%s0 + $0xe0] sm:$0xff]
  %v43 = vld [vmem:[%s0 + $0xe8] sm:$0xff]
  %v44 = vld [vmem:[%s0 + $0xf0] sm:$0xff]
  %v45 = vld [vmem:[%s0 + $0xf8] sm:$0xff]
  %v46 = vld [vmem:[%s0 + $0x100] sm:$0xff]
  %v47 = vld [vmem:[%s0 + $0x108] sm:$0xff]
  %v48 = vld [vmem:[%s0 + $0x110] sm:$0xff]
  %v49 = vld [vmem:[%s0 + $0x118] sm:$0xff]
  %v50 = vld [vmem:[%s0 + $0x120] sm:$0xff]
  %v51 = vld [vmem:[%s0 + $0x128] sm:$0xff]
  %v52 = vld [vmem:[%s0 + $0x130] sm:$0xff]
  %v53 = vld [vmem:[%s0 + $0x138] sm:$0xff]
  %v54 = vld [vmem:[%s0 + $0x140] sm:$0xff]
  %v55 = vld [vmem:[%s0 + $0x148] sm:$0xff]
  %v56 = vld [vmem:[%s0 + $0x150] sm:$0xff]
  %v57 = vld [vmem:[%s0 + $0x158] sm:$0xff]
  %v58 = vld [vmem:[%s0 + $0x160] sm:$0xff]
  %v59 = vld [vmem:[%s0 + $0x168] sm:$0xff]
  %v60 = vld [vmem:[%s0 + $0x170] sm:$0xff]
  %v61 = vld [vmem:[%s0 + $0x178] sm:$0xff]
  %v62 = vld [vmem:[%s0 + $0x180] sm:$0xff]
  %v63 = vld [vmem:[%s0 + $0x188] sm:$0xff]
  %v64 = vld [vmem:[%s0 + $0x190] sm:$0xff]
  %v65 = vld [vmem:[%s0 + $0x198] sm:$0xff]
  %v66 = vld [vmem:[%s0 + $0x1a0] sm:$0xff]
  %v67 = vld [vmem:[%s0 + $0x1a8] sm:$0xff]
  %v68 = vld [vmem:[%s0 + $0x1b0] sm:$0xff]
  %v69 = vld [vmem:[%s0 + $0x1b8] sm:$0xff]
  %v70 = vld [vmem:[%s0 + $0x1c0] sm:$0xff]
  %v71 = vld [vmem:[%s0 + $0x1c8] sm:$0xff]
  %v72 = vld [vmem:[%s0 + $0x1d0] sm:$0xff]
  %v73 = vld [vmem:[%s0 + $0x1d8] sm:$0xff]
  %v74 = vld [vmem:[%s0 + $0x1e0] sm:$0xff]
  %v75 = vld [vmem:[%s0 + $0x1e8] sm:$0xff]
  %v76 = vld [vmem:[%s0 + $0x1f0] sm:$0xff]
  %v77 = vld [vmem:[%s0 + $0x1f8] sm:$0xff]
  %v78 = vld [vmem:[%s1] sm:$0xff]
  %v79 = vld [vmem:[%s1 + $0x8] sm:$0xff]
  %v80 = vld [vmem:[%s1 + $0x10] sm:$0xff]
  %v81 = vld [vmem:[%s1 + $0x18] sm:$0xff]
  %v82 = vld [vmem:[%s1 + $0x20] sm:$0xff]
  %v83 = vld [vmem:[%s1 + $0x28] sm:$0xff]
  %v84 = vld [vmem:[%s1 + $0x30] sm:$0xff]
  %v85 = vld [vmem:[%s1 + $0x38] sm:$0xff]
  %v86 = vld [vmem:[%s1 + $0x40] sm:$0xff]
  %v87 = vld [vmem:[%s1 + $0x48] sm:$0xff]
  %v88 = vld [vmem:[%s1 + $0x50] sm:$0xff]
  %v89 = vld [vmem:[%s1 + $0x58] sm:$0xff]
  %v90 = vld [vmem:[%s1 + $0x60] sm:$0xff]
  %v91 = vld [vmem:[%s1 + $0x68] sm:$0xff]
  %v92 = vld [vmem:[%s1 + $0x70] sm:$0xff]
  %v93 = vld [vmem:[%s1 + $0x78] sm:$0xff]
  %v94 = vld [vmem:[%s1 + $0x80] sm:$0xff]
  %v95 = vld [vmem:[%s1 + $0x88] sm:$0xff]
  %v96 = vld [vmem:[%s1 + $0x90] sm:$0xff]
  %v97 = vld [vmem:[%s1 + $0x98] sm:$0xff]
  %v98 = vld [vmem:[%s1 + $0xa0] sm:$0xff]
  %v99 = vld [vmem:[%s1 + $0xa8] sm:$0xff]
  %v100 = vld [vmem:[%s1 + $0xb0] sm:$0xff]
  %v101 = vld [vmem:[%s1 + $0xb8] sm:$0xff]
  %v102 = vld [vmem:[%s1 + $0xc0] sm:$0xff]
  %v103 = vld [vmem:[%s1 + $0xc8] sm:$0xff]
  %v104 = vld [vmem:[%s1 + $0xd0] sm:$0xff]
  %v105 = vld [vmem:[%s1 + $0xd8] sm:$0xff]
  %v106 = vld [vmem:[%s1 + $0xe0] sm:$0xff]
  %v107 = vld [vmem:[%s1 + $0xe8] sm:$0xff]
  %v108 = vld [vmem:[%s1 + $0xf0] sm:$0xff]
  %v109 = vld [vmem:[%s1 + $0xf8] sm:$0xff]
  %v110 = vld [vmem:[%s1 + $0x100] sm:$0xff]
  %v111 = vld [vmem:[%s1 + $0x108] sm:$0xff]
  %v112 = vld [vmem:[%s1 + $0x110] sm:$0xff]
  %v113 = vld [vmem:[%s1 + $0x118] sm:$0xff]
  %v114 = vld [vmem:[%s1 + $0x120] sm:$0xff]
  %v115 = vld [vmem:[%s1 + $0x128] sm:$0xff]
  %v116 = vld [vmem:[%s1 + $0x130] sm:$0xff]
  %v117 = vld [vmem:[%s1 + $0x138] sm:$0xff]
  %v118 = vld [vmem:[%s1 + $0x140] sm:$0xff]
  %v119 = vld [vmem:[%s1 + $0x148] sm:$0xff]
  %v120 = vld [vmem:[%s1 + $0x150] sm:$0xff]
  %v121 = vld [vmem:[%s1 + $0x158] sm:$0xff]
  %v122 = vld [vmem:[%s1 + $0x160] sm:$0xff]
  %v123 = vld [vmem:[%s1 + $0x168] sm:$0xff]
  %v124 = vld [vmem:[%s1 + $0x170] sm:$0xff]
  %v125 = vld [vmem:[%s1 + $0x178] sm:$0xff]
  %v126 = vld [vmem:[%s1 + $0x180] sm:$0xff]
  %v127 = vld [vmem:[%s1 + $0x188] sm:$0xff]
  %v128 = vld [vmem:[%s1 + $0x190] sm:$0xff]
  %v129 = vld [vmem:[%s1 + $0x198] sm:$0xff]
  %v130 = vld [vmem:[%s1 + $0x1a0] sm:$0xff]
  %v131 = vld [vmem:[%s1 + $0x1a8] sm:$0xff]
  %v132 = vld [vmem:[%s1 + $0x1b0] sm:$0xff]
  %v133 = vld [vmem:[%s1 + $0x1b8] sm:$0xff]
  %v134 = vld [vmem:[%s1 + $0x1c0] sm:$0xff]
  %v135 = vld [vmem:[%s1 + $0x1c8] sm:$0xff]
  %v136 = vld [vmem:[%s1 + $0x1d0] sm:$0xff]
  %v137 = vld [vmem:[%s1 + $0x1d8] sm:$0xff]
  %v138 = vld [vmem:[%s1 + $0x1e0] sm:$0xff]
  %v139 = vld [vmem:[%s1 + $0x1e8] sm:$0xff]
  %v140 = vld [vmem:[%s1 + $0x1f0] sm:$0xff]
  %v141 = vld [vmem:[%s1 + $0x1f8] sm:$0xff]
  %v142 = vld [vmem:[%s1 + $0x200] sm:$0xff]
  %v143 = vld [vmem:[%s1 + $0x208] sm:$0xff]
  %v144 = vld [vmem:[%s1 + $0x210] sm:$0xff]
  %v145 = vld [vmem:[%s1 + $0x218] sm:$0xff]
  %v146 = vld [vmem:[%s1 + $0x220] sm:$0xff]
  %v147 = vld [vmem:[%s1 + $0x228] sm:$0xff]
  %v148 = vld [vmem:[%s1 + $0x230] sm:$0xff]
  %v149 = vld [vmem:[%s1 + $0x238] sm:$0xff]
  %v150 = vld [vmem:[%s1 + $0x240] sm:$0xff]
  %v151 = vld [vmem:[%s1 + $0x248] sm:$0xff]
  %v152 = vld [vmem:[%s1 + $0x250] sm:$0xff]
  %v153 = vld [vmem:[%s1 + $0x258] sm:$0xff]
  %v154 = vld [vmem:[%s1 + $0x260] sm:$0xff]
  %v155 = vld [vmem:[%s1 + $0x268] sm:$0xff]
  %v156 = vld [vmem:[%s1 + $0x270] sm:$0xff]
  %v157 = vld [vmem:[%s1 + $0x278] sm:$0xff]
  %v158 = vld [vmem:[%s1 + $0x280] sm:$0xff]
  %v159 = vld [vmem:[%s1 + $0x288] sm:$0xff]
  %v160 = vld [vmem:[%s1 + $0x290] sm:$0xff]
  %v161 = vld [vmem:[%s1 + $0x298] sm:$0xff]
  %v162 = vld [vmem:[%s1 + $0x2a0] sm:$0xff]
  %v163 = vld [vmem:[%s1 + $0x2a8] sm:$0xff]
  %v164 = vld [vmem:[%s1 + $0x2b0] sm:$0xff]
  %v165 = vld [vmem:[%s1 + $0x2b8] sm:$0xff]
  %v166 = vld [vmem:[%s1 + $0x2c0] sm:$0xff]
  %v167 = vld [vmem:[%s1 + $0x2c8] sm:$0xff]
  %v168 = vld [vmem:[%s1 + $0x2d0] sm:$0xff]
  %v169 = vld [vmem:[%s1 + $0x2d8] sm:$0xff]
  %v170 = vld [vmem:[%s1 + $0x2e0] sm:$0xff]
  %v171 = vld [vmem:[%s1 + $0x2e8] sm:$0xff]
  %v172 = vld [vmem:[%s1 + $0x2f0] sm:$0xff]
  %v173 = vld [vmem:[%s1 + $0x2f8] sm:$0xff]
  %v174 = vld [vmem:[%s1 + $0x300] sm:$0xff]
  %v175 = vld [vmem:[%s1 + $0x308] sm:$0xff]
  %v176 = vld [vmem:[%s1 + $0x310] sm:$0xff]
  %v177 = vld [vmem:[%s1 + $0x318] sm:$0xff]
  %v178 = vld [vmem:[%s1 + $0x320] sm:$0xff]
  %v179 = vld [vmem:[%s1 + $0x328] sm:$0xff]
  %v180 = vld [vmem:[%s1 + $0x330] sm:$0xff]
  %v181 = vld [vmem:[%s1 + $0x338] sm:$0xff]
  %v182 = vld [vmem:[%s1 + $0x340] sm:$0xff]
  %v183 = vld [vmem:[%s1 + $0x348] sm:$0xff]
  %v184 = vld [vmem:[%s1 + $0x350] sm:$0xff]
  %v185 = vld [vmem:[%s1 + $0x358] sm:$0xff]
  %v186 = vld [vmem:[%s1 + $0x360] sm:$0xff]
  %v187 = vld [vmem:[%s1 + $0x368] sm:$0xff]
  %v188 = vld [vmem:[%s1 + $0x370] sm:$0xff]
  %v189 = vld [vmem:[%s1 + $0x378] sm:$0xff]
  %v190 = vld [vmem:[%s1 + $0x380] sm:$0xff]
  %v191 = vld [vmem:[%s1 + $0x388] sm:$0xff]
  %v192 = vld [vmem:[%s1 + $0x390] sm:$0xff]
  %v193 = vld [vmem:[%s1 + $0x398] sm:$0xff]
  %v194 = vld [vmem:[%s1 + $0x3a0] sm:$0xff]
  %v195 = vld [vmem:[%s1 + $0x3a8] sm:$0xff]
  %v196 = vld [vmem:[%s1 + $0x3b0] sm:$0xff]
  %v197 = vld [vmem:[%s1 + $0x3b8] sm:$0xff]
  %v198 = vld [vmem:[%s1 + $0x3c0] sm:$0xff]
  %v199 = vld [vmem:[%s1 + $0x3c8] sm:$0xff]
  %v200 = vld [vmem:[%s1 + $0x3d0] sm:$0xff]
  %v201 = vld [vmem:[%s1 + $0x3d8] sm:$0xff]
  %v202 = vld [vmem:[%s1 + $0x3e0] sm:$0xff]
  %v203 = vld [vmem:[%s1 + $0x3e8] sm:$0xff]
  %v204 = vld [vmem:[%s1 + $0x3f0] sm:$0xff]
  %v205 = vld [vmem:[%s1 + $0x3f8] sm:$0xff]
  %v206 = vld [vmem:[%s2] sm:$0xf]
  %v208 = vperm.slane %v206, 0
  %v209 = vperm.slane %v206, 1
  %v210 = vperm.slane %v206, 2
  %v211 = vperm.slane %v206, 3
  %v280 = vunpack.c.l.b16 %v14
  %v281 = vunpack.c.h.b16 %v14
  %v282 = vunpack.c.l.b16 %v15
  %v283 = vunpack.c.h.b16 %v15
  %v284 = vunpack.c.l.b16 %v16
  %v285 = vunpack.c.h.b16 %v16
  %v286 = vunpack.c.l.b16 %v17
  %v287 = vunpack.c.h.b16 %v17
  %v288 = vunpack.c.l.b16 %v18
  %v289 = vunpack.c.h.b16 %v18
  %v290 = vunpack.c.l.b16 %v19
  %v291 = vunpack.c.h.b16 %v19
  %v292 = vunpack.c.l.b16 %v20
  %v293 = vunpack.c.h.b16 %v20
  %v294 = vunpack.c.l.b16 %v21
  %v295 = vunpack.c.h.b16 %v21
  %v296 = vunpack.c.l.b16 %v22
  %v297 = vunpack.c.h.b16 %v22
  %v298 = vunpack.c.l.b16 %v23
  %v299 = vunpack.c.h.b16 %v23
  %v300 = vunpack.c.l.b16 %v24
  %v301 = vunpack.c.h.b16 %v24
  %v302 = vunpack.c.l.b16 %v25
  %v303 = vunpack.c.h.b16 %v25
  %v304 = vunpack.c.l.b16 %v26
  %v305 = vunpack.c.h.b16 %v26
  %v306 = vunpack.c.l.b16 %v27
  %v307 = vunpack.c.h.b16 %v27
  %v308 = vunpack.c.l.b16 %v28
  %v309 = vunpack.c.h.b16 %v28
  %v310 = vunpack.c.l.b16 %v29
  %v311 = vunpack.c.h.b16 %v29
  %v312 = vunpack.c.l.b16 %v30
  %v313 = vunpack.c.h.b16 %v30
  %v314 = vunpack.c.l.b16 %v31
  %v315 = vunpack.c.h.b16 %v31
  %v316 = vunpack.c.l.b16 %v32
  %v317 = vunpack.c.h.b16 %v32
  %v318 = vunpack.c.l.b16 %v33
  %v319 = vunpack.c.h.b16 %v33
  %v320 = vunpack.c.l.b16 %v34
  %v321 = vunpack.c.h.b16 %v34
  %v322 = vunpack.c.l.b16 %v35
  %v323 = vunpack.c.h.b16 %v35
  %v324 = vunpack.c.l.b16 %v36
  %v325 = vunpack.c.h.b16 %v36
  %v326 = vunpack.c.l.b16 %v37
  %v327 = vunpack.c.h.b16 %v37
  %v328 = vunpack.c.l.b16 %v38
  %v329 = vunpack.c.h.b16 %v38
  %v330 = vunpack.c.l.b16 %v39
  %v331 = vunpack.c.h.b16 %v39
  %v332 = vunpack.c.l.b16 %v40
  %v333 = vunpack.c.h.b16 %v40
  %v334 = vunpack.c.l.b16 %v41
  %v335 = vunpack.c.h.b16 %v41
  %v336 = vunpack.c.l.b16 %v42
  %v337 = vunpack.c.h.b16 %v42
  %v338 = vunpack.c.l.b16 %v43
  %v339 = vunpack.c.h.b16 %v43
  %v340 = vunpack.c.l.b16 %v44
  %v341 = vunpack.c.h.b16 %v44
  %v342 = vunpack.c.l.b16 %v45
  %v343 = vunpack.c.h.b16 %v45
  %v344 = vunpack.c.l.b16 %v46
  %v345 = vunpack.c.h.b16 %v46
  %v346 = vunpack.c.l.b16 %v47
  %v347 = vunpack.c.h.b16 %v47
  %v348 = vunpack.c.l.b16 %v48
  %v349 = vunpack.c.h.b16 %v48
  %v350 = vunpack.c.l.b16 %v49
  %v351 = vunpack.c.h.b16 %v49
  %v352 = vunpack.c.l.b16 %v50
  %v353 = vunpack.c.h.b16 %v50
  %v354 = vunpack.c.l.b16 %v51
  %v355 = vunpack.c.h.b16 %v51
  %v356 = vunpack.c.l.b16 %v52
  %v357 = vunpack.c.h.b16 %v52
  %v358 = vunpack.c.l.b16 %v53
  %v359 = vunpack.c.h.b16 %v53
  %v360 = vunpack.c.l.b16 %v54
  %v361 = vunpack.c.h.b16 %v54
  %v362 = vunpack.c.l.b16 %v55
  %v363 = vunpack.c.h.b16 %v55
  %v364 = vunpack.c.l.b16 %v56
  %v365 = vunpack.c.h.b16 %v56
  %v366 = vunpack.c.l.b16 %v57
  %v367 = vunpack.c.h.b16 %v57
  %v368 = vunpack.c.l.b16 %v58
  %v369 = vunpack.c.h.b16 %v58
  %v370 = vunpack.c.l.b16 %v59
  %v371 = vunpack.c.h.b16 %v59
  %v372 = vunpack.c.l.b16 %v60
  %v373 = vunpack.c.h.b16 %v60
  %v374 = vunpack.c.l.b16 %v61
  %v375 = vunpack.c.h.b16 %v61
  %v376 = vunpack.c.l.b16 %v62
  %v377 = vunpack.c.h.b16 %v62
  %v378 = vunpack.c.l.b16 %v63
  %v379 = vunpack.c.h.b16 %v63
  %v380 = vunpack.c.l.b16 %v64
  %v381 = vunpack.c.h.b16 %v64
  %v382 = vunpack.c.l.b16 %v65
  %v383 = vunpack.c.h.b16 %v65
  %v384 = vunpack.c.l.b16 %v66
  %v385 = vunpack.c.h.b16 %v66
  %v386 = vunpack.c.l.b16 %v67
  %v387 = vunpack.c.h.b16 %v67
  %v388 = vunpack.c.l.b16 %v68
  %v389 = vunpack.c.h.b16 %v68
  %v390 = vunpack.c.l.b16 %v69
  %v391 = vunpack.c.h.b16 %v69
  %v392 = vunpack.c.l.b16 %v70
  %v393 = vunpack.c.h.b16 %v70
  %v394 = vunpack.c.l.b16 %v71
  %v395 = vunpack.c.h.b16 %v71
  %v396 = vunpack.c.l.b16 %v72
  %v397 = vunpack.c.h.b16 %v72
  %v398 = vunpack.c.l.b16 %v73
  %v399 = vunpack.c.h.b16 %v73
  %v400 = vunpack.c.l.b16 %v74
  %v401 = vunpack.c.h.b16 %v74
  %v402 = vunpack.c.l.b16 %v75
  %v403 = vunpack.c.h.b16 %v75
  %v404 = vunpack.c.l.b16 %v76
  %v405 = vunpack.c.h.b16 %v76
  %v406 = vunpack.c.l.b16 %v77
  %v407 = vunpack.c.h.b16 %v77
  %v408 = vpack.c.b16 %v284, %v280
  %v409 = vpack.c.b16 %v285, %v281
  %v410 = vpack.c.b16 %v286, %v282
  %v411 = vpack.c.b16 %v287, %v283
  %v412 = vpack.c.b16 %v292, %v288
  %v413 = vpack.c.b16 %v293, %v289
  %v414 = vpack.c.b16 %v294, %v290
  %v415 = vpack.c.b16 %v295, %v291
  %v416 = vpack.c.b16 %v300, %v296
  %v417 = vpack.c.b16 %v301, %v297
  %v418 = vpack.c.b16 %v302, %v298
  %v419 = vpack.c.b16 %v303, %v299
  %v420 = vpack.c.b16 %v308, %v304
  %v421 = vpack.c.b16 %v309, %v305
  %v422 = vpack.c.b16 %v310, %v306
  %v423 = vpack.c.b16 %v311, %v307
  %v424 = vpack.c.b16 %v316, %v312
  %v425 = vpack.c.b16 %v317, %v313
  %v426 = vpack.c.b16 %v318, %v314
  %v427 = vpack.c.b16 %v319, %v315
  %v428 = vpack.c.b16 %v324, %v320
  %v429 = vpack.c.b16 %v325, %v321
  %v430 = vpack.c.b16 %v326, %v322
  %v431 = vpack.c.b16 %v327, %v323
  %v432 = vpack.c.b16 %v332, %v328
  %v433 = vpack.c.b16 %v333, %v329
  %v434 = vpack.c.b16 %v334, %v330
  %v435 = vpack.c.b16 %v335, %v331
  %v436 = vpack.c.b16 %v340, %v336
  %v437 = vpack.c.b16 %v341, %v337
  %v438 = vpack.c.b16 %v342, %v338
  %v439 = vpack.c.b16 %v343, %v339
  %v440 = vpack.c.b16 %v348, %v344
  %v441 = vpack.c.b16 %v349, %v345
  %v442 = vpack.c.b16 %v350, %v346
  %v443 = vpack.c.b16 %v351, %v347
  %v444 = vpack.c.b16 %v356, %v352
  %v445 = vpack.c.b16 %v357, %v353
  %v446 = vpack.c.b16 %v358, %v354
  %v447 = vpack.c.b16 %v359, %v355
  %v448 = vpack.c.b16 %v364, %v360
  %v449 = vpack.c.b16 %v365, %v361
  %v450 = vpack.c.b16 %v366, %v362
  %v451 = vpack.c.b16 %v367, %v363
  %v452 = vpack.c.b16 %v372, %v368
  %v453 = vpack.c.b16 %v373, %v369
  %v454 = vpack.c.b16 %v374, %v370
  %v455 = vpack.c.b16 %v375, %v371
  %v456 = vpack.c.b16 %v380, %v376
  %v457 = vpack.c.b16 %v381, %v377
  %v458 = vpack.c.b16 %v382, %v378
  %v459 = vpack.c.b16 %v383, %v379
  %v460 = vpack.c.b16 %v388, %v384
  %v461 = vpack.c.b16 %v389, %v385
  %v462 = vpack.c.b16 %v390, %v386
  %v463 = vpack.c.b16 %v391, %v387
  %v464 = vpack.c.b16 %v396, %v392
  %v465 = vpack.c.b16 %v397, %v393
  %v466 = vpack.c.b16 %v398, %v394
  %v467 = vpack.c.b16 %v399, %v395
  %v468 = vpack.c.b16 %v404, %v400
  %v469 = vpack.c.b16 %v405, %v401
  %v470 = vpack.c.b16 %v406, %v402
  %v471 = vpack.c.b16 %v407, %v403
  %v664 = vunpack.c.l.b16 %v78
  %v665 = vunpack.c.h.b16 %v78
  %v666 = vunpack.c.l.b16 %v79
  %v667 = vunpack.c.h.b16 %v79
  %v668 = vunpack.c.l.b16 %v80
  %v669 = vunpack.c.h.b16 %v80
  %v670 = vunpack.c.l.b16 %v81
  %v671 = vunpack.c.h.b16 %v81
  %v672 = vunpack.c.l.b16 %v82
  %v673 = vunpack.c.h.b16 %v82
  %v674 = vunpack.c.l.b16 %v83
  %v675 = vunpack.c.h.b16 %v83
  %v676 = vunpack.c.l.b16 %v84
  %v677 = vunpack.c.h.b16 %v84
  %v678 = vunpack.c.l.b16 %v85
  %v679 = vunpack.c.h.b16 %v85
  %v680 = vunpack.c.l.b16 %v86
  %v681 = vunpack.c.h.b16 %v86
  %v682 = vunpack.c.l.b16 %v87
  %v683 = vunpack.c.h.b16 %v87
  %v684 = vunpack.c.l.b16 %v88
  %v685 = vunpack.c.h.b16 %v88
  %v686 = vunpack.c.l.b16 %v89
  %v687 = vunpack.c.h.b16 %v89
  %v688 = vunpack.c.l.b16 %v90
  %v689 = vunpack.c.h.b16 %v90
  %v690 = vunpack.c.l.b16 %v91
  %v691 = vunpack.c.h.b16 %v91
  %v692 = vunpack.c.l.b16 %v92
  %v693 = vunpack.c.h.b16 %v92
  %v694 = vunpack.c.l.b16 %v93
  %v695 = vunpack.c.h.b16 %v93
  %v696 = vunpack.c.l.b16 %v94
  %v697 = vunpack.c.h.b16 %v94
  %v698 = vunpack.c.l.b16 %v95
  %v699 = vunpack.c.h.b16 %v95
  %v700 = vunpack.c.l.b16 %v96
  %v701 = vunpack.c.h.b16 %v96
  %v702 = vunpack.c.l.b16 %v97
  %v703 = vunpack.c.h.b16 %v97
  %v704 = vunpack.c.l.b16 %v98
  %v705 = vunpack.c.h.b16 %v98
  %v706 = vunpack.c.l.b16 %v99
  %v707 = vunpack.c.h.b16 %v99
  %v708 = vunpack.c.l.b16 %v100
  %v709 = vunpack.c.h.b16 %v100
  %v710 = vunpack.c.l.b16 %v101
  %v711 = vunpack.c.h.b16 %v101
  %v712 = vunpack.c.l.b16 %v102
  %v713 = vunpack.c.h.b16 %v102
  %v714 = vunpack.c.l.b16 %v103
  %v715 = vunpack.c.h.b16 %v103
  %v716 = vunpack.c.l.b16 %v104
  %v717 = vunpack.c.h.b16 %v104
  %v718 = vunpack.c.l.b16 %v105
  %v719 = vunpack.c.h.b16 %v105
  %v720 = vunpack.c.l.b16 %v106
  %v721 = vunpack.c.h.b16 %v106
  %v722 = vunpack.c.l.b16 %v107
  %v723 = vunpack.c.h.b16 %v107
  %v724 = vunpack.c.l.b16 %v108
  %v725 = vunpack.c.h.b16 %v108
  %v726 = vunpack.c.l.b16 %v109
  %v727 = vunpack.c.h.b16 %v109
  %v728 = vunpack.c.l.b16 %v110
  %v729 = vunpack.c.h.b16 %v110
  %v730 = vunpack.c.l.b16 %v111
  %v731 = vunpack.c.h.b16 %v111
  %v732 = vunpack.c.l.b16 %v112
  %v733 = vunpack.c.h.b16 %v112
  %v734 = vunpack.c.l.b16 %v113
  %v735 = vunpack.c.h.b16 %v113
  %v736 = vunpack.c.l.b16 %v114
  %v737 = vunpack.c.h.b16 %v114
  %v738 = vunpack.c.l.b16 %v115
  %v739 = vunpack.c.h.b16 %v115
  %v740 = vunpack.c.l.b16 %v116
  %v741 = vunpack.c.h.b16 %v116
  %v742 = vunpack.c.l.b16 %v117
  %v743 = vunpack.c.h.b16 %v117
  %v744 = vunpack.c.l.b16 %v118
  %v745 = vunpack.c.h.b16 %v118
  %v746 = vunpack.c.l.b16 %v119
  %v747 = vunpack.c.h.b16 %v119
  %v748 = vunpack.c.l.b16 %v120
  %v749 = vunpack.c.h.b16 %v120
  %v750 = vunpack.c.l.b16 %v121
  %v751 = vunpack.c.h.b16 %v121
  %v752 = vunpack.c.l.b16 %v122
  %v753 = vunpack.c.h.b16 %v122
  %v754 = vunpack.c.l.b16 %v123
  %v755 = vunpack.c.h.b16 %v123
  %v756 = vunpack.c.l.b16 %v124
  %v757 = vunpack.c.h.b16 %v124
  %v758 = vunpack.c.l.b16 %v125
  %v759 = vunpack.c.h.b16 %v125
  %v760 = vunpack.c.l.b16 %v126
  %v761 = vunpack.c.h.b16 %v126
  %v762 = vunpack.c.l.b16 %v127
  %v763 = vunpack.c.h.b16 %v127
  %v764 = vunpack.c.l.b16 %v128
  %v765 = vunpack.c.h.b16 %v128
  %v766 = vunpack.c.l.b16 %v129
  %v767 = vunpack.c.h.b16 %v129
  %v768 = vunpack.c.l.b16 %v130
  %v769 = vunpack.c.h.b16 %v130
  %v770 = vunpack.c.l.b16 %v131
  %v771 = vunpack.c.h.b16 %v131
  %v772 = vunpack.c.l.b16 %v132
  %v773 = vunpack.c.h.b16 %v132
  %v774 = vunpack.c.l.b16 %v133
  %v775 = vunpack.c.h.b16 %v133
  %v776 = vunpack.c.l.b16 %v134
  %v777 = vunpack.c.h.b16 %v134
  %v778 = vunpack.c.l.b16 %v135
  %v779 = vunpack.c.h.b16 %v135
  %v780 = vunpack.c.l.b16 %v136
  %v781 = vunpack.c.h.b16 %v136
  %v782 = vunpack.c.l.b16 %v137
  %v783 = vunpack.c.h.b16 %v137
  %v784 = vunpack.c.l.b16 %v138
  %v785 = vunpack.c.h.b16 %v138
  %v786 = vunpack.c.l.b16 %v139
  %v787 = vunpack.c.h.b16 %v139
  %v788 = vunpack.c.l.b16 %v140
  %v789 = vunpack.c.h.b16 %v140
  %v790 = vunpack.c.l.b16 %v141
  %v791 = vunpack.c.h.b16 %v141
  %v792 = vunpack.c.l.b16 %v142
  %v793 = vunpack.c.h.b16 %v142
  %v794 = vunpack.c.l.b16 %v143
  %v795 = vunpack.c.h.b16 %v143
  %v796 = vunpack.c.l.b16 %v144
  %v797 = vunpack.c.h.b16 %v144
  %v798 = vunpack.c.l.b16 %v145
  %v799 = vunpack.c.h.b16 %v145
  %v800 = vunpack.c.l.b16 %v146
  %v801 = vunpack.c.h.b16 %v146
  %v802 = vunpack.c.l.b16 %v147
  %v803 = vunpack.c.h.b16 %v147
  %v804 = vunpack.c.l.b16 %v148
  %v805 = vunpack.c.h.b16 %v148
  %v806 = vunpack.c.l.b16 %v149
  %v807 = vunpack.c.h.b16 %v149
  %v808 = vunpack.c.l.b16 %v150
  %v809 = vunpack.c.h.b16 %v150
  %v810 = vunpack.c.l.b16 %v151
  %v811 = vunpack.c.h.b16 %v151
  %v812 = vunpack.c.l.b16 %v152
  %v813 = vunpack.c.h.b16 %v152
  %v814 = vunpack.c.l.b16 %v153
  %v815 = vunpack.c.h.b16 %v153
  %v816 = vunpack.c.l.b16 %v154
  %v817 = vunpack.c.h.b16 %v154
  %v818 = vunpack.c.l.b16 %v155
  %v819 = vunpack.c.h.b16 %v155
  %v820 = vunpack.c.l.b16 %v156
  %v821 = vunpack.c.h.b16 %v156
  %v822 = vunpack.c.l.b16 %v157
  %v823 = vunpack.c.h.b16 %v157
  %v824 = vunpack.c.l.b16 %v158
  %v825 = vunpack.c.h.b16 %v158
  %v826 = vunpack.c.l.b16 %v159
  %v827 = vunpack.c.h.b16 %v159
  %v828 = vunpack.c.l.b16 %v160
  %v829 = vunpack.c.h.b16 %v160
  %v830 = vunpack.c.l.b16 %v161
  %v831 = vunpack.c.h.b16 %v161
  %v832 = vunpack.c.l.b16 %v162
  %v833 = vunpack.c.h.b16 %v162
  %v834 = vunpack.c.l.b16 %v163
  %v835 = vunpack.c.h.b16 %v163
  %v836 = vunpack.c.l.b16 %v164
  %v837 = vunpack.c.h.b16 %v164
  %v838 = vunpack.c.l.b16 %v165
  %v839 = vunpack.c.h.b16 %v165
  %v840 = vunpack.c.l.b16 %v166
  %v841 = vunpack.c.h.b16 %v166
  %v842 = vunpack.c.l.b16 %v167
  %v843 = vunpack.c.h.b16 %v167
  %v844 = vunpack.c.l.b16 %v168
  %v845 = vunpack.c.h.b16 %v168
  %v846 = vunpack.c.l.b16 %v169
  %v847 = vunpack.c.h.b16 %v169
  %v848 = vunpack.c.l.b16 %v170
  %v849 = vunpack.c.h.b16 %v170
  %v850 = vunpack.c.l.b16 %v171
  %v851 = vunpack.c.h.b16 %v171
  %v852 = vunpack.c.l.b16 %v172
  %v853 = vunpack.c.h.b16 %v172
  %v854 = vunpack.c.l.b16 %v173
  %v855 = vunpack.c.h.b16 %v173
  %v856 = vunpack.c.l.b16 %v174
  %v857 = vunpack.c.h.b16 %v174
  %v858 = vunpack.c.l.b16 %v175
  %v859 = vunpack.c.h.b16 %v175
  %v860 = vunpack.c.l.b16 %v176
  %v861 = vunpack.c.h.b16 %v176
  %v862 = vunpack.c.l.b16 %v177
  %v863 = vunpack.c.h.b16 %v177
  %v864 = vunpack.c.l.b16 %v178
  %v865 = vunpack.c.h.b16 %v178
  %v866 = vunpack.c.l.b16 %v179
  %v867 = vunpack.c.h.b16 %v179
  %v868 = vunpack.c.l.b16 %v180
  %v869 = vunpack.c.h.b16 %v180
  %v870 = vunpack.c.l.b16 %v181
  %v871 = vunpack.c.h.b16 %v181
  %v872 = vunpack.c.l.b16 %v182
  %v873 = vunpack.c.h.b16 %v182
  %v874 = vunpack.c.l.b16 %v183
  %v875 = vunpack.c.h.b16 %v183
  %v876 = vunpack.c.l.b16 %v184
  %v877 = vunpack.c.h.b16 %v184
  %v878 = vunpack.c.l.b16 %v185
  %v879 = vunpack.c.h.b16 %v185
  %v880 = vunpack.c.l.b16 %v186
  %v881 = vunpack.c.h.b16 %v186
  %v882 = vunpack.c.l.b16 %v187
  %v883 = vunpack.c.h.b16 %v187
  %v884 = vunpack.c.l.b16 %v188
  %v885 = vunpack.c.h.b16 %v188
  %v886 = vunpack.c.l.b16 %v189
  %v887 = vunpack.c.h.b16 %v189
  %v888 = vunpack.c.l.b16 %v190
  %v889 = vunpack.c.h.b16 %v190
  %v890 = vunpack.c.l.b16 %v191
  %v891 = vunpack.c.h.b16 %v191
  %v892 = vunpack.c.l.b16 %v192
  %v893 = vunpack.c.h.b16 %v192
  %v894 = vunpack.c.l.b16 %v193
  %v895 = vunpack.c.h.b16 %v193
  %v896 = vunpack.c.l.b16 %v194
  %v897 = vunpack.c.h.b16 %v194
  %v898 = vunpack.c.l.b16 %v195
  %v899 = vunpack.c.h.b16 %v195
  %v900 = vunpack.c.l.b16 %v196
  %v901 = vunpack.c.h.b16 %v196
  %v902 = vunpack.c.l.b16 %v197
  %v903 = vunpack.c.h.b16 %v197
  %v904 = vunpack.c.l.b16 %v198
  %v905 = vunpack.c.h.b16 %v198
  %v906 = vunpack.c.l.b16 %v199
  %v907 = vunpack.c.h.b16 %v199
  %v908 = vunpack.c.l.b16 %v200
  %v909 = vunpack.c.h.b16 %v200
  %v910 = vunpack.c.l.b16 %v201
  %v911 = vunpack.c.h.b16 %v201
  %v912 = vunpack.c.l.b16 %v202
  %v913 = vunpack.c.h.b16 %v202
  %v914 = vunpack.c.l.b16 %v203
  %v915 = vunpack.c.h.b16 %v203
  %v916 = vunpack.c.l.b16 %v204
  %v917 = vunpack.c.h.b16 %v204
  %v918 = vunpack.c.l.b16 %v205
  %v919 = vunpack.c.h.b16 %v205
  %v920 = vpack.c.b16 %v668, %v664
  %v921 = vpack.c.b16 %v669, %v665
  %v922 = vpack.c.b16 %v670, %v666
  %v923 = vpack.c.b16 %v671, %v667
  %v924 = vpack.c.b16 %v676, %v672
  %v925 = vpack.c.b16 %v677, %v673
  %v926 = vpack.c.b16 %v678, %v674
  %v927 = vpack.c.b16 %v679, %v675
  %v928 = vpack.c.b16 %v684, %v680
  %v929 = vpack.c.b16 %v685, %v681
  %v930 = vpack.c.b16 %v686, %v682
  %v931 = vpack.c.b16 %v687, %v683
  %v932 = vpack.c.b16 %v692, %v688
  %v933 = vpack.c.b16 %v693, %v689
  %v934 = vpack.c.b16 %v694, %v690
  %v935 = vpack.c.b16 %v695, %v691
  %v936 = vpack.c.b16 %v700, %v696
  %v937 = vpack.c.b16 %v701, %v697
  %v938 = vpack.c.b16 %v702, %v698
  %v939 = vpack.c.b16 %v703, %v699
  %v940 = vpack.c.b16 %v708, %v704
  %v941 = vpack.c.b16 %v709, %v705
  %v942 = vpack.c.b16 %v710, %v706
  %v943 = vpack.c.b16 %v711, %v707
  %v944 = vpack.c.b16 %v716, %v712
  %v945 = vpack.c.b16 %v717, %v713
  %v946 = vpack.c.b16 %v718, %v714
  %v947 = vpack.c.b16 %v719, %v715
  %v948 = vpack.c.b16 %v724, %v720
  %v949 = vpack.c.b16 %v725, %v721
  %v950 = vpack.c.b16 %v726, %v722
  %v951 = vpack.c.b16 %v727, %v723
  %v952 = vpack.c.b16 %v732, %v728
  %v953 = vpack.c.b16 %v733, %v729
  %v954 = vpack.c.b16 %v734, %v730
  %v955 = vpack.c.b16 %v735, %v731
  %v956 = vpack.c.b16 %v740, %v736
  %v957 = vpack.c.b16 %v741, %v737
  %v958 = vpack.c.b16 %v742, %v738
  %v959 = vpack.c.b16 %v743, %v739
  %v960 = vpack.c.b16 %v748, %v744
  %v961 = vpack.c.b16 %v749, %v745
  %v962 = vpack.c.b16 %v750, %v746
  %v963 = vpack.c.b16 %v751, %v747
  %v964 = vpack.c.b16 %v756, %v752
  %v965 = vpack.c.b16 %v757, %v753
  %v966 = vpack.c.b16 %v758, %v754
  %v967 = vpack.c.b16 %v759, %v755
  %v968 = vpack.c.b16 %v764, %v760
  %v969 = vpack.c.b16 %v765, %v761
  %v970 = vpack.c.b16 %v766, %v762
  %v971 = vpack.c.b16 %v767, %v763
  %v972 = vpack.c.b16 %v772, %v768
  %v973 = vpack.c.b16 %v773, %v769
  %v974 = vpack.c.b16 %v774, %v770
  %v975 = vpack.c.b16 %v775, %v771
  %v976 = vpack.c.b16 %v780, %v776
  %v977 = vpack.c.b16 %v781, %v777
  %v978 = vpack.c.b16 %v782, %v778
  %v979 = vpack.c.b16 %v783, %v779
  %v980 = vpack.c.b16 %v788, %v784
  %v981 = vpack.c.b16 %v789, %v785
  %v982 = vpack.c.b16 %v790, %v786
  %v983 = vpack.c.b16 %v791, %v787
  %v984 = vpack.c.b16 %v796, %v792
  %v985 = vpack.c.b16 %v797, %v793
  %v986 = vpack.c.b16 %v798, %v794
  %v987 = vpack.c.b16 %v799, %v795
  %v988 = vpack.c.b16 %v804, %v800
  %v989 = vpack.c.b16 %v805, %v801
  %v990 = vpack.c.b16 %v806, %v802
  %v991 = vpack.c.b16 %v807, %v803
  %v992 = vpack.c.b16 %v812, %v808
  %v993 = vpack.c.b16 %v813, %v809
  %v994 = vpack.c.b16 %v814, %v810
  %v995 = vpack.c.b16 %v815, %v811
  %v996 = vpack.c.b16 %v820, %v816
  %v997 = vpack.c.b16 %v821, %v817
  %v998 = vpack.c.b16 %v822, %v818
  %v999 = vpack.c.b16 %v823, %v819
  %v1000 = vpack.c.b16 %v828, %v824
  %v1001 = vpack.c.b16 %v829, %v825
  %v1002 = vpack.c.b16 %v830, %v826
  %v1003 = vpack.c.b16 %v831, %v827
  %v1004 = vpack.c.b16 %v836, %v832
  %v1005 = vpack.c.b16 %v837, %v833
  %v1006 = vpack.c.b16 %v838, %v834
  %v1007 = vpack.c.b16 %v839, %v835
  %v1008 = vpack.c.b16 %v844, %v840
  %v1009 = vpack.c.b16 %v845, %v841
  %v1010 = vpack.c.b16 %v846, %v842
  %v1011 = vpack.c.b16 %v847, %v843
  %v1012 = vpack.c.b16 %v852, %v848
  %v1013 = vpack.c.b16 %v853, %v849
  %v1014 = vpack.c.b16 %v854, %v850
  %v1015 = vpack.c.b16 %v855, %v851
  %v1016 = vpack.c.b16 %v860, %v856
  %v1017 = vpack.c.b16 %v861, %v857
  %v1018 = vpack.c.b16 %v862, %v858
  %v1019 = vpack.c.b16 %v863, %v859
  %v1020 = vpack.c.b16 %v868, %v864
  %v1021 = vpack.c.b16 %v869, %v865
  %v1022 = vpack.c.b16 %v870, %v866
  %v1023 = vpack.c.b16 %v871, %v867
  %v1024 = vpack.c.b16 %v876, %v872
  %v1025 = vpack.c.b16 %v877, %v873
  %v1026 = vpack.c.b16 %v878, %v874
  %v1027 = vpack.c.b16 %v879, %v875
  %v1028 = vpack.c.b16 %v884, %v880
  %v1029 = vpack.c.b16 %v885, %v881
  %v1030 = vpack.c.b16 %v886, %v882
  %v1031 = vpack.c.b16 %v887, %v883
  %v1032 = vpack.c.b16 %v892, %v888
  %v1033 = vpack.c.b16 %v893, %v889
  %v1034 = vpack.c.b16 %v894, %v890
  %v1035 = vpack.c.b16 %v895, %v891
  %v1036 = vpack.c.b16 %v900, %v896
  %v1037 = vpack.c.b16 %v901, %v897
  %v1038 = vpack.c.b16 %v902, %v898
  %v1039 = vpack.c.b16 %v903, %v899
  %v1040 = vpack.c.b16 %v908, %v904
  %v1041 = vpack.c.b16 %v909, %v905
  %v1042 = vpack.c.b16 %v910, %v906
  %v1043 = vpack.c.b16 %v911, %v907
  %v1044 = vpack.c.b16 %v916, %v912
  %v1045 = vpack.c.b16 %v917, %v913
  %v1046 = vpack.c.b16 %v918, %v914
  %v1047 = vpack.c.b16 %v919, %v915
  %1176 = vmatpush.bf16.msra.mxu0 %v948
  %1177 = vmatpush.bf16.msra.mxu0 %v944
  %1178 = vmatpush.bf16.msra.mxu0 %v940
  %1179 = vmatpush.bf16.msra.mxu0 %v936
  %1180 = vmatpush.bf16.msra.mxu0 %v932
  %1181 = vmatpush.bf16.msra.mxu0 %v928
  %1182 = vmatpush.bf16.msra.mxu0 %v924
  %1183 = vmatpush.bf16.msra.mxu0 %v920
  %1184 = vmatmul.bf16.gmra.mxu0 %v408
  %v1185 = vpop.f32.mrf.mxu0
  %v1186 = vadd.f32 %v208, %v1185
  %v1187 = vpop.f32.mrf.mxu0
  %v1188 = vadd.f32 %v208, %v1187
  %1189 = vmatmul.bf16.gmra.mxu0 %v412
  %v1190 = vpop.f32.mrf.mxu0
  %v1191 = vadd.f32 %v208, %v1190
  %v1192 = vpop.f32.mrf.mxu0
  %v1193 = vadd.f32 %v208, %v1192
  %1194 = vmatmul.bf16.gmra.mxu0 %v416
  %v1195 = vpop.f32.mrf.mxu0
  %v1196 = vadd.f32 %v208, %v1195
  %v1197 = vpop.f32.mrf.mxu0
  %v1198 = vadd.f32 %v208, %v1197
  %1199 = vmatmul.bf16.gmra.mxu0 %v420
  %v1200 = vpop.f32.mrf.mxu0
  %v1201 = vadd.f32 %v208, %v1200
  %v1202 = vpop.f32.mrf.mxu0
  %v1203 = vadd.f32 %v208, %v1202
  %1204 = vmatmul.bf16.gmra.mxu0 %v424
  %v1205 = vpop.f32.mrf.mxu0
  %v1206 = vadd.f32 %v208, %v1205
  %v1207 = vpop.f32.mrf.mxu0
  %v1208 = vadd.f32 %v208, %v1207
  %1209 = vmatmul.bf16.gmra.mxu0 %v428
  %v1210 = vpop.f32.mrf.mxu0
  %v1211 = vadd.f32 %v208, %v1210
  %v1212 = vpop.f32.mrf.mxu0
  %v1213 = vadd.f32 %v208, %v1212
  %1214 = vmatmul.bf16.gmra.mxu0 %v432
  %v1215 = vpop.f32.mrf.mxu0
  %v1216 = vadd.f32 %v208, %v1215
  %v1217 = vpop.f32.mrf.mxu0
  %v1218 = vadd.f32 %v208, %v1217
  %1219 = vmatmul.bf16.gmra.mxu0 %v436
  %v1220 = vpop.f32.mrf.mxu0
  %v1221 = vadd.f32 %v208, %v1220
  %v1222 = vpop.f32.mrf.mxu0
  %v1223 = vadd.f32 %v208, %v1222
  %1224 = vmatmul.bf16.gmra.mxu0 %v440
  %v1225 = vpop.f32.mrf.mxu0
  %v1226 = vadd.f32 %v208, %v1225
  %v1227 = vpop.f32.mrf.mxu0
  %v1228 = vadd.f32 %v208, %v1227
  %1229 = vmatmul.bf16.gmra.mxu0 %v444
  %v1230 = vpop.f32.mrf.mxu0
  %v1231 = vadd.f32 %v208, %v1230
  %v1232 = vpop.f32.mrf.mxu0
  %v1233 = vadd.f32 %v208, %v1232
  %1234 = vmatmul.bf16.gmra.mxu0 %v448
  %v1235 = vpop.f32.mrf.mxu0
  %v1236 = vadd.f32 %v208, %v1235
  %v1237 = vpop.f32.mrf.mxu0
  %v1238 = vadd.f32 %v208, %v1237
  %1239 = vmatmul.bf16.gmra.mxu0 %v452
  %v1240 = vpop.f32.mrf.mxu0
  %v1241 = vadd.f32 %v208, %v1240
  %v1242 = vpop.f32.mrf.mxu0
  %v1243 = vadd.f32 %v208, %v1242
  %1244 = vmatmul.bf16.gmra.mxu0 %v456
  %v1245 = vpop.f32.mrf.mxu0
  %v1246 = vadd.f32 %v208, %v1245
  %v1247 = vpop.f32.mrf.mxu0
  %v1248 = vadd.f32 %v208, %v1247
  %1249 = vmatmul.bf16.gmra.mxu0 %v460
  %v1250 = vpop.f32.mrf.mxu0
  %v1251 = vadd.f32 %v208, %v1250
  %v1252 = vpop.f32.mrf.mxu0
  %v1253 = vadd.f32 %v208, %v1252
  %1254 = vmatmul.bf16.gmra.mxu0 %v464
  %v1255 = vpop.f32.mrf.mxu0
  %v1256 = vadd.f32 %v208, %v1255
  %v1257 = vpop.f32.mrf.mxu0
  %v1258 = vadd.f32 %v208, %v1257
  %1259 = vmatmul.bf16.gmra.mxu0 %v468
  %v1260 = vpop.f32.mrf.mxu0
  %v1261 = vadd.f32 %v208, %v1260
  %v1262 = vpop.f32.mrf.mxu0
  %v1263 = vadd.f32 %v208, %v1262
  %1264 = vdwg.mxu0
  %1265 = vmatpush.bf16.msra.mxu0 %v980
  %1266 = vmatpush.bf16.msra.mxu0 %v976
  %1267 = vmatpush.bf16.msra.mxu0 %v972
  %1268 = vmatpush.bf16.msra.mxu0 %v968
  %1269 = vmatpush.bf16.msra.mxu0 %v964
  %1270 = vmatpush.bf16.msra.mxu0 %v960
  %1271 = vmatpush.bf16.msra.mxu0 %v956
  %1272 = vmatpush.bf16.msra.mxu0 %v952
  %1273 = vmatmul.bf16.gmra.mxu0 %v409
  %v1274 = vpop.f32.mrf.mxu0
  %v1275 = vadd.f32 %v1186, %v1274
  %v1276 = vpop.f32.mrf.mxu0
  %v1277 = vadd.f32 %v1188, %v1276
  %1278 = vmatmul.bf16.gmra.mxu0 %v413
  %v1279 = vpop.f32.mrf.mxu0
  %v1280 = vadd.f32 %v1191, %v1279
  %v1281 = vpop.f32.mrf.mxu0
  %v1282 = vadd.f32 %v1193, %v1281
  %1283 = vmatmul.bf16.gmra.mxu0 %v417
  %v1284 = vpop.f32.mrf.mxu0
  %v1285 = vadd.f32 %v1196, %v1284
  %v1286 = vpop.f32.mrf.mxu0
  %v1287 = vadd.f32 %v1198, %v1286
  %1288 = vmatmul.bf16.gmra.mxu0 %v421
  %v1289 = vpop.f32.mrf.mxu0
  %v1290 = vadd.f32 %v1201, %v1289
  %v1291 = vpop.f32.mrf.mxu0
  %v1292 = vadd.f32 %v1203, %v1291
  %1293 = vmatmul.bf16.gmra.mxu0 %v425
  %v1294 = vpop.f32.mrf.mxu0
  %v1295 = vadd.f32 %v1206, %v1294
  %v1296 = vpop.f32.mrf.mxu0
  %v1297 = vadd.f32 %v1208, %v1296
  %1298 = vmatmul.bf16.gmra.mxu0 %v429
  %v1299 = vpop.f32.mrf.mxu0
  %v1300 = vadd.f32 %v1211, %v1299
  %v1301 = vpop.f32.mrf.mxu0
  %v1302 = vadd.f32 %v1213, %v1301
  %1303 = vmatmul.bf16.gmra.mxu0 %v433
  %v1304 = vpop.f32.mrf.mxu0
  %v1305 = vadd.f32 %v1216, %v1304
  %v1306 = vpop.f32.mrf.mxu0
  %v1307 = vadd.f32 %v1218, %v1306
  %1308 = vmatmul.bf16.gmra.mxu0 %v437
  %v1309 = vpop.f32.mrf.mxu0
  %v1310 = vadd.f32 %v1221, %v1309
  %v1311 = vpop.f32.mrf.mxu0
  %v1312 = vadd.f32 %v1223, %v1311
  %1313 = vmatmul.bf16.gmra.mxu0 %v441
  %v1314 = vpop.f32.mrf.mxu0
  %v1315 = vadd.f32 %v1226, %v1314
  %v1316 = vpop.f32.mrf.mxu0
  %v1317 = vadd.f32 %v1228, %v1316
  %1318 = vmatmul.bf16.gmra.mxu0 %v445
  %v1319 = vpop.f32.mrf.mxu0
  %v1320 = vadd.f32 %v1231, %v1319
  %v1321 = vpop.f32.mrf.mxu0
  %v1322 = vadd.f32 %v1233, %v1321
  %1323 = vmatmul.bf16.gmra.mxu0 %v449
  %v1324 = vpop.f32.mrf.mxu0
  %v1325 = vadd.f32 %v1236, %v1324
  %v1326 = vpop.f32.mrf.mxu0
  %v1327 = vadd.f32 %v1238, %v1326
  %1328 = vmatmul.bf16.gmra.mxu0 %v453
  %v1329 = vpop.f32.mrf.mxu0
  %v1330 = vadd.f32 %v1241, %v1329
  %v1331 = vpop.f32.mrf.mxu0
  %v1332 = vadd.f32 %v1243, %v1331
  %1333 = vmatmul.bf16.gmra.mxu0 %v457
  %v1334 = vpop.f32.mrf.mxu0
  %v1335 = vadd.f32 %v1246, %v1334
  %v1336 = vpop.f32.mrf.mxu0
  %v1337 = vadd.f32 %v1248, %v1336
  %1338 = vmatmul.bf16.gmra.mxu0 %v461
  %v1339 = vpop.f32.mrf.mxu0
  %v1340 = vadd.f32 %v1251, %v1339
  %v1341 = vpop.f32.mrf.mxu0
  %v1342 = vadd.f32 %v1253, %v1341
  %1343 = vmatmul.bf16.gmra.mxu0 %v465
  %v1344 = vpop.f32.mrf.mxu0
  %v1345 = vadd.f32 %v1256, %v1344
  %v1346 = vpop.f32.mrf.mxu0
  %v1347 = vadd.f32 %v1258, %v1346
  %1348 = vmatmul.bf16.gmra.mxu0 %v469
  %v1349 = vpop.f32.mrf.mxu0
  %v1350 = vadd.f32 %v1261, %v1349
  %v1351 = vpop.f32.mrf.mxu0
  %v1352 = vadd.f32 %v1263, %v1351
  %1353 = vdwg.mxu0
  %1354 = vmatpush.bf16.msra.mxu0 %v1012
  %1355 = vmatpush.bf16.msra.mxu0 %v1008
  %1356 = vmatpush.bf16.msra.mxu0 %v1004
  %1357 = vmatpush.bf16.msra.mxu0 %v1000
  %1358 = vmatpush.bf16.msra.mxu0 %v996
  %1359 = vmatpush.bf16.msra.mxu0 %v992
  %1360 = vmatpush.bf16.msra.mxu0 %v988
  %1361 = vmatpush.bf16.msra.mxu0 %v984
  %1362 = vmatmul.bf16.gmra.mxu0 %v410
  %v1363 = vpop.f32.mrf.mxu0
  %v1364 = vadd.f32 %v1275, %v1363
  %v1365 = vpop.f32.mrf.mxu0
  %v1366 = vadd.f32 %v1277, %v1365
  %1367 = vmatmul.bf16.gmra.mxu0 %v414
  %v1368 = vpop.f32.mrf.mxu0
  %v1369 = vadd.f32 %v1280, %v1368
  %v1370 = vpop.f32.mrf.mxu0
  %v1371 = vadd.f32 %v1282, %v1370
  %1372 = vmatmul.bf16.gmra.mxu0 %v418
  %v1373 = vpop.f32.mrf.mxu0
  %v1374 = vadd.f32 %v1285, %v1373
  %v1375 = vpop.f32.mrf.mxu0
  %v1376 = vadd.f32 %v1287, %v1375
  %1377 = vmatmul.bf16.gmra.mxu0 %v422
  %v1378 = vpop.f32.mrf.mxu0
  %v1379 = vadd.f32 %v1290, %v1378
  %v1380 = vpop.f32.mrf.mxu0
  %v1381 = vadd.f32 %v1292, %v1380
  %1382 = vmatmul.bf16.gmra.mxu0 %v426
  %v1383 = vpop.f32.mrf.mxu0
  %v1384 = vadd.f32 %v1295, %v1383
  %v1385 = vpop.f32.mrf.mxu0
  %v1386 = vadd.f32 %v1297, %v1385
  %1387 = vmatmul.bf16.gmra.mxu0 %v430
  %v1388 = vpop.f32.mrf.mxu0
  %v1389 = vadd.f32 %v1300, %v1388
  %v1390 = vpop.f32.mrf.mxu0
  %v1391 = vadd.f32 %v1302, %v1390
  %1392 = vmatmul.bf16.gmra.mxu0 %v434
  %v1393 = vpop.f32.mrf.mxu0
  %v1394 = vadd.f32 %v1305, %v1393
  %v1395 = vpop.f32.mrf.mxu0
  %v1396 = vadd.f32 %v1307, %v1395
  %1397 = vmatmul.bf16.gmra.mxu0 %v438
  %v1398 = vpop.f32.mrf.mxu0
  %v1399 = vadd.f32 %v1310, %v1398
  %v1400 = vpop.f32.mrf.mxu0
  %v1401 = vadd.f32 %v1312, %v1400
  %1402 = vmatmul.bf16.gmra.mxu0 %v442
  %v1403 = vpop.f32.mrf.mxu0
  %v1404 = vadd.f32 %v1315, %v1403
  %v1405 = vpop.f32.mrf.mxu0
  %v1406 = vadd.f32 %v1317, %v1405
  %1407 = vmatmul.bf16.gmra.mxu0 %v446
  %v1408 = vpop.f32.mrf.mxu0
  %v1409 = vadd.f32 %v1320, %v1408
  %v1410 = vpop.f32.mrf.mxu0
  %v1411 = vadd.f32 %v1322, %v1410
  %1412 = vmatmul.bf16.gmra.mxu0 %v450
  %v1413 = vpop.f32.mrf.mxu0
  %v1414 = vadd.f32 %v1325, %v1413
  %v1415 = vpop.f32.mrf.mxu0
  %v1416 = vadd.f32 %v1327, %v1415
  %1417 = vmatmul.bf16.gmra.mxu0 %v454
  %v1418 = vpop.f32.mrf.mxu0
  %v1419 = vadd.f32 %v1330, %v1418
  %v1420 = vpop.f32.mrf.mxu0
  %v1421 = vadd.f32 %v1332, %v1420
  %1422 = vmatmul.bf16.gmra.mxu0 %v458
  %v1423 = vpop.f32.mrf.mxu0
  %v1424 = vadd.f32 %v1335, %v1423
  %v1425 = vpop.f32.mrf.mxu0
  %v1426 = vadd.f32 %v1337, %v1425
  %1427 = vmatmul.bf16.gmra.mxu0 %v462
  %v1428 = vpop.f32.mrf.mxu0
  %v1429 = vadd.f32 %v1340, %v1428
  %v1430 = vpop.f32.mrf.mxu0
  %v1431 = vadd.f32 %v1342, %v1430
  %1432 = vmatmul.bf16.gmra.mxu0 %v466
  %v1433 = vpop.f32.mrf.mxu0
  %v1434 = vadd.f32 %v1345, %v1433
  %v1435 = vpop.f32.mrf.mxu0
  %v1436 = vadd.f32 %v1347, %v1435
  %1437 = vmatmul.bf16.gmra.mxu0 %v470
  %v1438 = vpop.f32.mrf.mxu0
  %v1439 = vadd.f32 %v1350, %v1438
  %v1440 = vpop.f32.mrf.mxu0
  %v1441 = vadd.f32 %v1352, %v1440
  %1442 = vdwg.mxu0
  %1443 = vmatpush.bf16.msra.mxu0 %v1044
  %1444 = vmatpush.bf16.msra.mxu0 %v1040
  %1445 = vmatpush.bf16.msra.mxu0 %v1036
  %1446 = vmatpush.bf16.msra.mxu0 %v1032
  %1447 = vmatpush.bf16.msra.mxu0 %v1028
  %1448 = vmatpush.bf16.msra.mxu0 %v1024
  %1449 = vmatpush.bf16.msra.mxu0 %v1020
  %1450 = vmatpush.bf16.msra.mxu0 %v1016
  %1451 = vmatmul.bf16.gmra.mxu0 %v411
  %v1452 = vpop.f32.mrf.mxu0
  %v1453 = vadd.f32 %v1364, %v1452
  %v1454 = vpop.f32.mrf.mxu0
  %v1455 = vadd.f32 %v1366, %v1454
  %1456 = vmatmul.bf16.gmra.mxu0 %v415
  %v1457 = vpop.f32.mrf.mxu0
  %v1458 = vadd.f32 %v1369, %v1457
  %v1459 = vpop.f32.mrf.mxu0
  %v1460 = vadd.f32 %v1371, %v1459
  %1461 = vmatmul.bf16.gmra.mxu0 %v419
  %v1462 = vpop.f32.mrf.mxu0
  %v1463 = vadd.f32 %v1374, %v1462
  %v1464 = vpop.f32.mrf.mxu0
  %v1465 = vadd.f32 %v1376, %v1464
  %1466 = vmatmul.bf16.gmra.mxu0 %v423
  %v1467 = vpop.f32.mrf.mxu0
  %v1468 = vadd.f32 %v1379, %v1467
  %v1469 = vpop.f32.mrf.mxu0
  %v1470 = vadd.f32 %v1381, %v1469
  %1471 = vmatmul.bf16.gmra.mxu0 %v427
  %v1472 = vpop.f32.mrf.mxu0
  %v1473 = vadd.f32 %v1384, %v1472
  %v1474 = vpop.f32.mrf.mxu0
  %v1475 = vadd.f32 %v1386, %v1474
  %1476 = vmatmul.bf16.gmra.mxu0 %v431
  %v1477 = vpop.f32.mrf.mxu0
  %v1478 = vadd.f32 %v1389, %v1477
  %v1479 = vpop.f32.mrf.mxu0
  %v1480 = vadd.f32 %v1391, %v1479
  %1481 = vmatmul.bf16.gmra.mxu0 %v435
  %v1482 = vpop.f32.mrf.mxu0
  %v1483 = vadd.f32 %v1394, %v1482
  %v1484 = vpop.f32.mrf.mxu0
  %v1485 = vadd.f32 %v1396, %v1484
  %1486 = vmatmul.bf16.gmra.mxu0 %v439
  %v1487 = vpop.f32.mrf.mxu0
  %v1488 = vadd.f32 %v1399, %v1487
  %v1489 = vpop.f32.mrf.mxu0
  %v1490 = vadd.f32 %v1401, %v1489
  %1491 = vmatmul.bf16.gmra.mxu0 %v443
  %v1492 = vpop.f32.mrf.mxu0
  %v1493 = vadd.f32 %v1404, %v1492
  %v1494 = vpop.f32.mrf.mxu0
  %v1495 = vadd.f32 %v1406, %v1494
  %1496 = vmatmul.bf16.gmra.mxu0 %v447
  %v1497 = vpop.f32.mrf.mxu0
  %v1498 = vadd.f32 %v1409, %v1497
  %v1499 = vpop.f32.mrf.mxu0
  %v1500 = vadd.f32 %v1411, %v1499
  %1501 = vmatmul.bf16.gmra.mxu0 %v451
  %v1502 = vpop.f32.mrf.mxu0
  %v1503 = vadd.f32 %v1414, %v1502
  %v1504 = vpop.f32.mrf.mxu0
  %v1505 = vadd.f32 %v1416, %v1504
  %1506 = vmatmul.bf16.gmra.mxu0 %v455
  %v1507 = vpop.f32.mrf.mxu0
  %v1508 = vadd.f32 %v1419, %v1507
  %v1509 = vpop.f32.mrf.mxu0
  %v1510 = vadd.f32 %v1421, %v1509
  %1511 = vmatmul.bf16.gmra.mxu0 %v459
  %v1512 = vpop.f32.mrf.mxu0
  %v1513 = vadd.f32 %v1424, %v1512
  %v1514 = vpop.f32.mrf.mxu0
  %v1515 = vadd.f32 %v1426, %v1514
  %1516 = vmatmul.bf16.gmra.mxu0 %v463
  %v1517 = vpop.f32.mrf.mxu0
  %v1518 = vadd.f32 %v1429, %v1517
  %v1519 = vpop.f32.mrf.mxu0
  %v1520 = vadd.f32 %v1431, %v1519
  %1521 = vmatmul.bf16.gmra.mxu0 %v467
  %v1522 = vpop.f32.mrf.mxu0
  %v1523 = vadd.f32 %v1434, %v1522
  %v1524 = vpop.f32.mrf.mxu0
  %v1525 = vadd.f32 %v1436, %v1524
  %1526 = vmatmul.bf16.gmra.mxu0 %v471
  %v1527 = vpop.f32.mrf.mxu0
  %v1528 = vadd.f32 %v1439, %v1527
  %v1529 = vpop.f32.mrf.mxu0
  %v1530 = vadd.f32 %v1441, %v1529
  %1531 = vdwg.mxu0
  %1532 = vmatpush.bf16.msra.mxu0 %v949
  %1533 = vmatpush.bf16.msra.mxu0 %v945
  %1534 = vmatpush.bf16.msra.mxu0 %v941
  %1535 = vmatpush.bf16.msra.mxu0 %v937
  %1536 = vmatpush.bf16.msra.mxu0 %v933
  %1537 = vmatpush.bf16.msra.mxu0 %v929
  %1538 = vmatpush.bf16.msra.mxu0 %v925
  %1539 = vmatpush.bf16.msra.mxu0 %v921
  %1540 = vmatmul.bf16.gmra.mxu0 %v408
  %v1541 = vpop.f32.mrf.mxu0
  %v1542 = vadd.f32 %v209, %v1541
  %v1543 = vpop.f32.mrf.mxu0
  %v1544 = vadd.f32 %v209, %v1543
  %1545 = vmatmul.bf16.gmra.mxu0 %v412
  %v1546 = vpop.f32.mrf.mxu0
  %v1547 = vadd.f32 %v209, %v1546
  %v1548 = vpop.f32.mrf.mxu0
  %v1549 = vadd.f32 %v209, %v1548
  %1550 = vmatmul.bf16.gmra.mxu0 %v416
  %v1551 = vpop.f32.mrf.mxu0
  %v1552 = vadd.f32 %v209, %v1551
  %v1553 = vpop.f32.mrf.mxu0
  %v1554 = vadd.f32 %v209, %v1553
  %1555 = vmatmul.bf16.gmra.mxu0 %v420
  %v1556 = vpop.f32.mrf.mxu0
  %v1557 = vadd.f32 %v209, %v1556
  %v1558 = vpop.f32.mrf.mxu0
  %v1559 = vadd.f32 %v209, %v1558
  %1560 = vmatmul.bf16.gmra.mxu0 %v424
  %v1561 = vpop.f32.mrf.mxu0
  %v1562 = vadd.f32 %v209, %v1561
  %v1563 = vpop.f32.mrf.mxu0
  %v1564 = vadd.f32 %v209, %v1563
  %1565 = vmatmul.bf16.gmra.mxu0 %v428
  %v1566 = vpop.f32.mrf.mxu0
  %v1567 = vadd.f32 %v209, %v1566
  %v1568 = vpop.f32.mrf.mxu0
  %v1569 = vadd.f32 %v209, %v1568
  %1570 = vmatmul.bf16.gmra.mxu0 %v432
  %v1571 = vpop.f32.mrf.mxu0
  %v1572 = vadd.f32 %v209, %v1571
  %v1573 = vpop.f32.mrf.mxu0
  %v1574 = vadd.f32 %v209, %v1573
  %1575 = vmatmul.bf16.gmra.mxu0 %v436
  %v1576 = vpop.f32.mrf.mxu0
  %v1577 = vadd.f32 %v209, %v1576
  %v1578 = vpop.f32.mrf.mxu0
  %v1579 = vadd.f32 %v209, %v1578
  %1580 = vmatmul.bf16.gmra.mxu0 %v440
  %v1581 = vpop.f32.mrf.mxu0
  %v1582 = vadd.f32 %v209, %v1581
  %v1583 = vpop.f32.mrf.mxu0
  %v1584 = vadd.f32 %v209, %v1583
  %1585 = vmatmul.bf16.gmra.mxu0 %v444
  %v1586 = vpop.f32.mrf.mxu0
  %v1587 = vadd.f32 %v209, %v1586
  %v1588 = vpop.f32.mrf.mxu0
  %v1589 = vadd.f32 %v209, %v1588
  %1590 = vmatmul.bf16.gmra.mxu0 %v448
  %v1591 = vpop.f32.mrf.mxu0
  %v1592 = vadd.f32 %v209, %v1591
  %v1593 = vpop.f32.mrf.mxu0
  %v1594 = vadd.f32 %v209, %v1593
  %1595 = vmatmul.bf16.gmra.mxu0 %v452
  %v1596 = vpop.f32.mrf.mxu0
  %v1597 = vadd.f32 %v209, %v1596
  %v1598 = vpop.f32.mrf.mxu0
  %v1599 = vadd.f32 %v209, %v1598
  %1600 = vmatmul.bf16.gmra.mxu0 %v456
  %v1601 = vpop.f32.mrf.mxu0
  %v1602 = vadd.f32 %v209, %v1601
  %v1603 = vpop.f32.mrf.mxu0
  %v1604 = vadd.f32 %v209, %v1603
  %1605 = vmatmul.bf16.gmra.mxu0 %v460
  %v1606 = vpop.f32.mrf.mxu0
  %v1607 = vadd.f32 %v209, %v1606
  %v1608 = vpop.f32.mrf.mxu0
  %v1609 = vadd.f32 %v209, %v1608
  %1610 = vmatmul.bf16.gmra.mxu0 %v464
  %v1611 = vpop.f32.mrf.mxu0
  %v1612 = vadd.f32 %v209, %v1611
  %v1613 = vpop.f32.mrf.mxu0
  %v1614 = vadd.f32 %v209, %v1613
  %1615 = vmatmul.bf16.gmra.mxu0 %v468
  %v1616 = vpop.f32.mrf.mxu0
  %v1617 = vadd.f32 %v209, %v1616
  %v1618 = vpop.f32.mrf.mxu0
  %v1619 = vadd.f32 %v209, %v1618
  %1620 = vdwg.mxu0
  %1621 = vmatpush.bf16.msra.mxu0 %v981
  %1622 = vmatpush.bf16.msra.mxu0 %v977
  %1623 = vmatpush.bf16.msra.mxu0 %v973
  %1624 = vmatpush.bf16.msra.mxu0 %v969
  %1625 = vmatpush.bf16.msra.mxu0 %v965
  %1626 = vmatpush.bf16.msra.mxu0 %v961
  %1627 = vmatpush.bf16.msra.mxu0 %v957
  %1628 = vmatpush.bf16.msra.mxu0 %v953
  %1629 = vmatmul.bf16.gmra.mxu0 %v409
  %v1630 = vpop.f32.mrf.mxu0
  %v1631 = vadd.f32 %v1542, %v1630
  %v1632 = vpop.f32.mrf.mxu0
  %v1633 = vadd.f32 %v1544, %v1632
  %1634 = vmatmul.bf16.gmra.mxu0 %v413
  %v1635 = vpop.f32.mrf.mxu0
  %v1636 = vadd.f32 %v1547, %v1635
  %v1637 = vpop.f32.mrf.mxu0
  %v1638 = vadd.f32 %v1549, %v1637
  %1639 = vmatmul.bf16.gmra.mxu0 %v417
  %v1640 = vpop.f32.mrf.mxu0
  %v1641 = vadd.f32 %v1552, %v1640
  %v1642 = vpop.f32.mrf.mxu0
  %v1643 = vadd.f32 %v1554, %v1642
  %1644 = vmatmul.bf16.gmra.mxu0 %v421
  %v1645 = vpop.f32.mrf.mxu0
  %v1646 = vadd.f32 %v1557, %v1645
  %v1647 = vpop.f32.mrf.mxu0
  %v1648 = vadd.f32 %v1559, %v1647
  %1649 = vmatmul.bf16.gmra.mxu0 %v425
  %v1650 = vpop.f32.mrf.mxu0
  %v1651 = vadd.f32 %v1562, %v1650
  %v1652 = vpop.f32.mrf.mxu0
  %v1653 = vadd.f32 %v1564, %v1652
  %1654 = vmatmul.bf16.gmra.mxu0 %v429
  %v1655 = vpop.f32.mrf.mxu0
  %v1656 = vadd.f32 %v1567, %v1655
  %v1657 = vpop.f32.mrf.mxu0
  %v1658 = vadd.f32 %v1569, %v1657
  %1659 = vmatmul.bf16.gmra.mxu0 %v433
  %v1660 = vpop.f32.mrf.mxu0
  %v1661 = vadd.f32 %v1572, %v1660
  %v1662 = vpop.f32.mrf.mxu0
  %v1663 = vadd.f32 %v1574, %v1662
  %1664 = vmatmul.bf16.gmra.mxu0 %v437
  %v1665 = vpop.f32.mrf.mxu0
  %v1666 = vadd.f32 %v1577, %v1665
  %v1667 = vpop.f32.mrf.mxu0
  %v1668 = vadd.f32 %v1579, %v1667
  %1669 = vmatmul.bf16.gmra.mxu0 %v441
  %v1670 = vpop.f32.mrf.mxu0
  %v1671 = vadd.f32 %v1582, %v1670
  %v1672 = vpop.f32.mrf.mxu0
  %v1673 = vadd.f32 %v1584, %v1672
  %1674 = vmatmul.bf16.gmra.mxu0 %v445
  %v1675 = vpop.f32.mrf.mxu0
  %v1676 = vadd.f32 %v1587, %v1675
  %v1677 = vpop.f32.mrf.mxu0
  %v1678 = vadd.f32 %v1589, %v1677
  %1679 = vmatmul.bf16.gmra.mxu0 %v449
  %v1680 = vpop.f32.mrf.mxu0
  %v1681 = vadd.f32 %v1592, %v1680
  %v1682 = vpop.f32.mrf.mxu0
  %v1683 = vadd.f32 %v1594, %v1682
  %1684 = vmatmul.bf16.gmra.mxu0 %v453
  %v1685 = vpop.f32.mrf.mxu0
  %v1686 = vadd.f32 %v1597, %v1685
  %v1687 = vpop.f32.mrf.mxu0
  %v1688 = vadd.f32 %v1599, %v1687
  %1689 = vmatmul.bf16.gmra.mxu0 %v457
  %v1690 = vpop.f32.mrf.mxu0
  %v1691 = vadd.f32 %v1602, %v1690
  %v1692 = vpop.f32.mrf.mxu0
  %v1693 = vadd.f32 %v1604, %v1692
  %1694 = vmatmul.bf16.gmra.mxu0 %v461
  %v1695 = vpop.f32.mrf.mxu0
  %v1696 = vadd.f32 %v1607, %v1695
  %v1697 = vpop.f32.mrf.mxu0
  %v1698 = vadd.f32 %v1609, %v1697
  %1699 = vmatmul.bf16.gmra.mxu0 %v465
  %v1700 = vpop.f32.mrf.mxu0
  %v1701 = vadd.f32 %v1612, %v1700
  %v1702 = vpop.f32.mrf.mxu0
  %v1703 = vadd.f32 %v1614, %v1702
  %1704 = vmatmul.bf16.gmra.mxu0 %v469
  %v1705 = vpop.f32.mrf.mxu0
  %v1706 = vadd.f32 %v1617, %v1705
  %v1707 = vpop.f32.mrf.mxu0
  %v1708 = vadd.f32 %v1619, %v1707
  %1709 = vdwg.mxu0
  %1710 = vmatpush.bf16.msra.mxu0 %v1013
  %1711 = vmatpush.bf16.msra.mxu0 %v1009
  %1712 = vmatpush.bf16.msra.mxu0 %v1005
  %1713 = vmatpush.bf16.msra.mxu0 %v1001
  %1714 = vmatpush.bf16.msra.mxu0 %v997
  %1715 = vmatpush.bf16.msra.mxu0 %v993
  %1716 = vmatpush.bf16.msra.mxu0 %v989
  %1717 = vmatpush.bf16.msra.mxu0 %v985
  %1718 = vmatmul.bf16.gmra.mxu0 %v410
  %v1719 = vpop.f32.mrf.mxu0
  %v1720 = vadd.f32 %v1631, %v1719
  %v1721 = vpop.f32.mrf.mxu0
  %v1722 = vadd.f32 %v1633, %v1721
  %1723 = vmatmul.bf16.gmra.mxu0 %v414
  %v1724 = vpop.f32.mrf.mxu0
  %v1725 = vadd.f32 %v1636, %v1724
  %v1726 = vpop.f32.mrf.mxu0
  %v1727 = vadd.f32 %v1638, %v1726
  %1728 = vmatmul.bf16.gmra.mxu0 %v418
  %v1729 = vpop.f32.mrf.mxu0
  %v1730 = vadd.f32 %v1641, %v1729
  %v1731 = vpop.f32.mrf.mxu0
  %v1732 = vadd.f32 %v1643, %v1731
  %1733 = vmatmul.bf16.gmra.mxu0 %v422
  %v1734 = vpop.f32.mrf.mxu0
  %v1735 = vadd.f32 %v1646, %v1734
  %v1736 = vpop.f32.mrf.mxu0
  %v1737 = vadd.f32 %v1648, %v1736
  %1738 = vmatmul.bf16.gmra.mxu0 %v426
  %v1739 = vpop.f32.mrf.mxu0
  %v1740 = vadd.f32 %v1651, %v1739
  %v1741 = vpop.f32.mrf.mxu0
  %v1742 = vadd.f32 %v1653, %v1741
  %1743 = vmatmul.bf16.gmra.mxu0 %v430
  %v1744 = vpop.f32.mrf.mxu0
  %v1745 = vadd.f32 %v1656, %v1744
  %v1746 = vpop.f32.mrf.mxu0
  %v1747 = vadd.f32 %v1658, %v1746
  %1748 = vmatmul.bf16.gmra.mxu0 %v434
  %v1749 = vpop.f32.mrf.mxu0
  %v1750 = vadd.f32 %v1661, %v1749
  %v1751 = vpop.f32.mrf.mxu0
  %v1752 = vadd.f32 %v1663, %v1751
  %1753 = vmatmul.bf16.gmra.mxu0 %v438
  %v1754 = vpop.f32.mrf.mxu0
  %v1755 = vadd.f32 %v1666, %v1754
  %v1756 = vpop.f32.mrf.mxu0
  %v1757 = vadd.f32 %v1668, %v1756
  %1758 = vmatmul.bf16.gmra.mxu0 %v442
  %v1759 = vpop.f32.mrf.mxu0
  %v1760 = vadd.f32 %v1671, %v1759
  %v1761 = vpop.f32.mrf.mxu0
  %v1762 = vadd.f32 %v1673, %v1761
  %1763 = vmatmul.bf16.gmra.mxu0 %v446
  %v1764 = vpop.f32.mrf.mxu0
  %v1765 = vadd.f32 %v1676, %v1764
  %v1766 = vpop.f32.mrf.mxu0
  %v1767 = vadd.f32 %v1678, %v1766
  %1768 = vmatmul.bf16.gmra.mxu0 %v450
  %v1769 = vpop.f32.mrf.mxu0
  %v1770 = vadd.f32 %v1681, %v1769
  %v1771 = vpop.f32.mrf.mxu0
  %v1772 = vadd.f32 %v1683, %v1771
  %1773 = vmatmul.bf16.gmra.mxu0 %v454
  %v1774 = vpop.f32.mrf.mxu0
  %v1775 = vadd.f32 %v1686, %v1774
  %v1776 = vpop.f32.mrf.mxu0
  %v1777 = vadd.f32 %v1688, %v1776
  %1778 = vmatmul.bf16.gmra.mxu0 %v458
  %v1779 = vpop.f32.mrf.mxu0
  %v1780 = vadd.f32 %v1691, %v1779
  %v1781 = vpop.f32.mrf.mxu0
  %v1782 = vadd.f32 %v1693, %v1781
  %1783 = vmatmul.bf16.gmra.mxu0 %v462
  %v1784 = vpop.f32.mrf.mxu0
  %v1785 = vadd.f32 %v1696, %v1784
  %v1786 = vpop.f32.mrf.mxu0
  %v1787 = vadd.f32 %v1698, %v1786
  %1788 = vmatmul.bf16.gmra.mxu0 %v466
  %v1789 = vpop.f32.mrf.mxu0
  %v1790 = vadd.f32 %v1701, %v1789
  %v1791 = vpop.f32.mrf.mxu0
  %v1792 = vadd.f32 %v1703, %v1791
  %1793 = vmatmul.bf16.gmra.mxu0 %v470
  %v1794 = vpop.f32.mrf.mxu0
  %v1795 = vadd.f32 %v1706, %v1794
  %v1796 = vpop.f32.mrf.mxu0
  %v1797 = vadd.f32 %v1708, %v1796
  %1798 = vdwg.mxu0
  %1799 = vmatpush.bf16.msra.mxu0 %v1045
  %1800 = vmatpush.bf16.msra.mxu0 %v1041
  %1801 = vmatpush.bf16.msra.mxu0 %v1037
  %1802 = vmatpush.bf16.msra.mxu0 %v1033
  %1803 = vmatpush.bf16.msra.mxu0 %v1029
  %1804 = vmatpush.bf16.msra.mxu0 %v1025
  %1805 = vmatpush.bf16.msra.mxu0 %v1021
  %1806 = vmatpush.bf16.msra.mxu0 %v1017
  %1807 = vmatmul.bf16.gmra.mxu0 %v411
  %v1808 = vpop.f32.mrf.mxu0
  %v1809 = vadd.f32 %v1720, %v1808
  %v1810 = vpop.f32.mrf.mxu0
  %v1811 = vadd.f32 %v1722, %v1810
  %1812 = vmatmul.bf16.gmra.mxu0 %v415
  %v1813 = vpop.f32.mrf.mxu0
  %v1814 = vadd.f32 %v1725, %v1813
  %v1815 = vpop.f32.mrf.mxu0
  %v1816 = vadd.f32 %v1727, %v1815
  %1817 = vmatmul.bf16.gmra.mxu0 %v419
  %v1818 = vpop.f32.mrf.mxu0
  %v1819 = vadd.f32 %v1730, %v1818
  %v1820 = vpop.f32.mrf.mxu0
  %v1821 = vadd.f32 %v1732, %v1820
  %1822 = vmatmul.bf16.gmra.mxu0 %v423
  %v1823 = vpop.f32.mrf.mxu0
  %v1824 = vadd.f32 %v1735, %v1823
  %v1825 = vpop.f32.mrf.mxu0
  %v1826 = vadd.f32 %v1737, %v1825
  %1827 = vmatmul.bf16.gmra.mxu0 %v427
  %v1828 = vpop.f32.mrf.mxu0
  %v1829 = vadd.f32 %v1740, %v1828
  %v1830 = vpop.f32.mrf.mxu0
  %v1831 = vadd.f32 %v1742, %v1830
  %1832 = vmatmul.bf16.gmra.mxu0 %v431
  %v1833 = vpop.f32.mrf.mxu0
  %v1834 = vadd.f32 %v1745, %v1833
  %v1835 = vpop.f32.mrf.mxu0
  %v1836 = vadd.f32 %v1747, %v1835
  %1837 = vmatmul.bf16.gmra.mxu0 %v435
  %v1838 = vpop.f32.mrf.mxu0
  %v1839 = vadd.f32 %v1750, %v1838
  %v1840 = vpop.f32.mrf.mxu0
  %v1841 = vadd.f32 %v1752, %v1840
  %1842 = vmatmul.bf16.gmra.mxu0 %v439
  %v1843 = vpop.f32.mrf.mxu0
  %v1844 = vadd.f32 %v1755, %v1843
  %v1845 = vpop.f32.mrf.mxu0
  %v1846 = vadd.f32 %v1757, %v1845
  %1847 = vmatmul.bf16.gmra.mxu0 %v443
  %v1848 = vpop.f32.mrf.mxu0
  %v1849 = vadd.f32 %v1760, %v1848
  %v1850 = vpop.f32.mrf.mxu0
  %v1851 = vadd.f32 %v1762, %v1850
  %1852 = vmatmul.bf16.gmra.mxu0 %v447
  %v1853 = vpop.f32.mrf.mxu0
  %v1854 = vadd.f32 %v1765, %v1853
  %v1855 = vpop.f32.mrf.mxu0
  %v1856 = vadd.f32 %v1767, %v1855
  %1857 = vmatmul.bf16.gmra.mxu0 %v451
  %v1858 = vpop.f32.mrf.mxu0
  %v1859 = vadd.f32 %v1770, %v1858
  %v1860 = vpop.f32.mrf.mxu0
  %v1861 = vadd.f32 %v1772, %v1860
  %1862 = vmatmul.bf16.gmra.mxu0 %v455
  %v1863 = vpop.f32.mrf.mxu0
  %v1864 = vadd.f32 %v1775, %v1863
  %v1865 = vpop.f32.mrf.mxu0
  %v1866 = vadd.f32 %v1777, %v1865
  %1867 = vmatmul.bf16.gmra.mxu0 %v459
  %v1868 = vpop.f32.mrf.mxu0
  %v1869 = vadd.f32 %v1780, %v1868
  %v1870 = vpop.f32.mrf.mxu0
  %v1871 = vadd.f32 %v1782, %v1870
  %1872 = vmatmul.bf16.gmra.mxu0 %v463
  %v1873 = vpop.f32.mrf.mxu0
  %v1874 = vadd.f32 %v1785, %v1873
  %v1875 = vpop.f32.mrf.mxu0
  %v1876 = vadd.f32 %v1787, %v1875
  %1877 = vmatmul.bf16.gmra.mxu0 %v467
  %v1878 = vpop.f32.mrf.mxu0
  %v1879 = vadd.f32 %v1790, %v1878
  %v1880 = vpop.f32.mrf.mxu0
  %v1881 = vadd.f32 %v1792, %v1880
  %1882 = vmatmul.bf16.gmra.mxu0 %v471
  %v1883 = vpop.f32.mrf.mxu0
  %v1884 = vadd.f32 %v1795, %v1883
  %v1885 = vpop.f32.mrf.mxu0
  %v1886 = vadd.f32 %v1797, %v1885
  %1887 = vdwg.mxu0
  %1888 = vmatpush.bf16.msra.mxu0 %v950
  %1889 = vmatpush.bf16.msra.mxu0 %v946
  %1890 = vmatpush.bf16.msra.mxu0 %v942
  %1891 = vmatpush.bf16.msra.mxu0 %v938
  %1892 = vmatpush.bf16.msra.mxu0 %v934
  %1893 = vmatpush.bf16.msra.mxu0 %v930
  %1894 = vmatpush.bf16.msra.mxu0 %v926
  %1895 = vmatpush.bf16.msra.mxu0 %v922
  %1896 = vmatmul.bf16.gmra.mxu0 %v408
  %v1897 = vpop.f32.mrf.mxu0
  %v1898 = vadd.f32 %v210, %v1897
  %v1899 = vpop.f32.mrf.mxu0
  %v1900 = vadd.f32 %v210, %v1899
  %1901 = vmatmul.bf16.gmra.mxu0 %v412
  %v1902 = vpop.f32.mrf.mxu0
  %v1903 = vadd.f32 %v210, %v1902
  %v1904 = vpop.f32.mrf.mxu0
  %v1905 = vadd.f32 %v210, %v1904
  %1906 = vmatmul.bf16.gmra.mxu0 %v416
  %v1907 = vpop.f32.mrf.mxu0
  %v1908 = vadd.f32 %v210, %v1907
  %v1909 = vpop.f32.mrf.mxu0
  %v1910 = vadd.f32 %v210, %v1909
  %1911 = vmatmul.bf16.gmra.mxu0 %v420
  %v1912 = vpop.f32.mrf.mxu0
  %v1913 = vadd.f32 %v210, %v1912
  %v1914 = vpop.f32.mrf.mxu0
  %v1915 = vadd.f32 %v210, %v1914
  %1916 = vmatmul.bf16.gmra.mxu0 %v424
  %v1917 = vpop.f32.mrf.mxu0
  %v1918 = vadd.f32 %v210, %v1917
  %v1919 = vpop.f32.mrf.mxu0
  %v1920 = vadd.f32 %v210, %v1919
  %1921 = vmatmul.bf16.gmra.mxu0 %v428
  %v1922 = vpop.f32.mrf.mxu0
  %v1923 = vadd.f32 %v210, %v1922
  %v1924 = vpop.f32.mrf.mxu0
  %v1925 = vadd.f32 %v210, %v1924
  %1926 = vmatmul.bf16.gmra.mxu0 %v432
  %v1927 = vpop.f32.mrf.mxu0
  %v1928 = vadd.f32 %v210, %v1927
  %v1929 = vpop.f32.mrf.mxu0
  %v1930 = vadd.f32 %v210, %v1929
  %1931 = vmatmul.bf16.gmra.mxu0 %v436
  %v1932 = vpop.f32.mrf.mxu0
  %v1933 = vadd.f32 %v210, %v1932
  %v1934 = vpop.f32.mrf.mxu0
  %v1935 = vadd.f32 %v210, %v1934
  %1936 = vmatmul.bf16.gmra.mxu0 %v440
  %v1937 = vpop.f32.mrf.mxu0
  %v1938 = vadd.f32 %v210, %v1937
  %v1939 = vpop.f32.mrf.mxu0
  %v1940 = vadd.f32 %v210, %v1939
  %1941 = vmatmul.bf16.gmra.mxu0 %v444
  %v1942 = vpop.f32.mrf.mxu0
  %v1943 = vadd.f32 %v210, %v1942
  %v1944 = vpop.f32.mrf.mxu0
  %v1945 = vadd.f32 %v210, %v1944
  %1946 = vmatmul.bf16.gmra.mxu0 %v448
  %v1947 = vpop.f32.mrf.mxu0
  %v1948 = vadd.f32 %v210, %v1947
  %v1949 = vpop.f32.mrf.mxu0
  %v1950 = vadd.f32 %v210, %v1949
  %1951 = vmatmul.bf16.gmra.mxu0 %v452
  %v1952 = vpop.f32.mrf.mxu0
  %v1953 = vadd.f32 %v210, %v1952
  %v1954 = vpop.f32.mrf.mxu0
  %v1955 = vadd.f32 %v210, %v1954
  %1956 = vmatmul.bf16.gmra.mxu0 %v456
  %v1957 = vpop.f32.mrf.mxu0
  %v1958 = vadd.f32 %v210, %v1957
  %v1959 = vpop.f32.mrf.mxu0
  %v1960 = vadd.f32 %v210, %v1959
  %1961 = vmatmul.bf16.gmra.mxu0 %v460
  %v1962 = vpop.f32.mrf.mxu0
  %v1963 = vadd.f32 %v210, %v1962
  %v1964 = vpop.f32.mrf.mxu0
  %v1965 = vadd.f32 %v210, %v1964
  %1966 = vmatmul.bf16.gmra.mxu0 %v464
  %v1967 = vpop.f32.mrf.mxu0
  %v1968 = vadd.f32 %v210, %v1967
  %v1969 = vpop.f32.mrf.mxu0
  %v1970 = vadd.f32 %v210, %v1969
  %1971 = vmatmul.bf16.gmra.mxu0 %v468
  %v1972 = vpop.f32.mrf.mxu0
  %v1973 = vadd.f32 %v210, %v1972
  %v1974 = vpop.f32.mrf.mxu0
  %v1975 = vadd.f32 %v210, %v1974
  %1976 = vdwg.mxu0
  %1977 = vmatpush.bf16.msra.mxu0 %v982
  %1978 = vmatpush.bf16.msra.mxu0 %v978
  %1979 = vmatpush.bf16.msra.mxu0 %v974
  %1980 = vmatpush.bf16.msra.mxu0 %v970
  %1981 = vmatpush.bf16.msra.mxu0 %v966
  %1982 = vmatpush.bf16.msra.mxu0 %v962
  %1983 = vmatpush.bf16.msra.mxu0 %v958
  %1984 = vmatpush.bf16.msra.mxu0 %v954
  %1985 = vmatmul.bf16.gmra.mxu0 %v409
  %v1986 = vpop.f32.mrf.mxu0
  %v1987 = vadd.f32 %v1898, %v1986
  %v1988 = vpop.f32.mrf.mxu0
  %v1989 = vadd.f32 %v1900, %v1988
  %1990 = vmatmul.bf16.gmra.mxu0 %v413
  %v1991 = vpop.f32.mrf.mxu0
  %v1992 = vadd.f32 %v1903, %v1991
  %v1993 = vpop.f32.mrf.mxu0
  %v1994 = vadd.f32 %v1905, %v1993
  %1995 = vmatmul.bf16.gmra.mxu0 %v417
  %v1996 = vpop.f32.mrf.mxu0
  %v1997 = vadd.f32 %v1908, %v1996
  %v1998 = vpop.f32.mrf.mxu0
  %v1999 = vadd.f32 %v1910, %v1998
  %2000 = vmatmul.bf16.gmra.mxu0 %v421
  %v2001 = vpop.f32.mrf.mxu0
  %v2002 = vadd.f32 %v1913, %v2001
  %v2003 = vpop.f32.mrf.mxu0
  %v2004 = vadd.f32 %v1915, %v2003
  %2005 = vmatmul.bf16.gmra.mxu0 %v425
  %v2006 = vpop.f32.mrf.mxu0
  %v2007 = vadd.f32 %v1918, %v2006
  %v2008 = vpop.f32.mrf.mxu0
  %v2009 = vadd.f32 %v1920, %v2008
  %2010 = vmatmul.bf16.gmra.mxu0 %v429
  %v2011 = vpop.f32.mrf.mxu0
  %v2012 = vadd.f32 %v1923, %v2011
  %v2013 = vpop.f32.mrf.mxu0
  %v2014 = vadd.f32 %v1925, %v2013
  %2015 = vmatmul.bf16.gmra.mxu0 %v433
  %v2016 = vpop.f32.mrf.mxu0
  %v2017 = vadd.f32 %v1928, %v2016
  %v2018 = vpop.f32.mrf.mxu0
  %v2019 = vadd.f32 %v1930, %v2018
  %2020 = vmatmul.bf16.gmra.mxu0 %v437
  %v2021 = vpop.f32.mrf.mxu0
  %v2022 = vadd.f32 %v1933, %v2021
  %v2023 = vpop.f32.mrf.mxu0
  %v2024 = vadd.f32 %v1935, %v2023
  %2025 = vmatmul.bf16.gmra.mxu0 %v441
  %v2026 = vpop.f32.mrf.mxu0
  %v2027 = vadd.f32 %v1938, %v2026
  %v2028 = vpop.f32.mrf.mxu0
  %v2029 = vadd.f32 %v1940, %v2028
  %2030 = vmatmul.bf16.gmra.mxu0 %v445
  %v2031 = vpop.f32.mrf.mxu0
  %v2032 = vadd.f32 %v1943, %v2031
  %v2033 = vpop.f32.mrf.mxu0
  %v2034 = vadd.f32 %v1945, %v2033
  %2035 = vmatmul.bf16.gmra.mxu0 %v449
  %v2036 = vpop.f32.mrf.mxu0
  %v2037 = vadd.f32 %v1948, %v2036
  %v2038 = vpop.f32.mrf.mxu0
  %v2039 = vadd.f32 %v1950, %v2038
  %2040 = vmatmul.bf16.gmra.mxu0 %v453
  %v2041 = vpop.f32.mrf.mxu0
  %v2042 = vadd.f32 %v1953, %v2041
  %v2043 = vpop.f32.mrf.mxu0
  %v2044 = vadd.f32 %v1955, %v2043
  %2045 = vmatmul.bf16.gmra.mxu0 %v457
  %v2046 = vpop.f32.mrf.mxu0
  %v2047 = vadd.f32 %v1958, %v2046
  %v2048 = vpop.f32.mrf.mxu0
  %v2049 = vadd.f32 %v1960, %v2048
  %2050 = vmatmul.bf16.gmra.mxu0 %v461
  %v2051 = vpop.f32.mrf.mxu0
  %v2052 = vadd.f32 %v1963, %v2051
  %v2053 = vpop.f32.mrf.mxu0
  %v2054 = vadd.f32 %v1965, %v2053
  %2055 = vmatmul.bf16.gmra.mxu0 %v465
  %v2056 = vpop.f32.mrf.mxu0
  %v2057 = vadd.f32 %v1968, %v2056
  %v2058 = vpop.f32.mrf.mxu0
  %v2059 = vadd.f32 %v1970, %v2058
  %2060 = vmatmul.bf16.gmra.mxu0 %v469
  %v2061 = vpop.f32.mrf.mxu0
  %v2062 = vadd.f32 %v1973, %v2061
  %v2063 = vpop.f32.mrf.mxu0
  %v2064 = vadd.f32 %v1975, %v2063
  %2065 = vdwg.mxu0
  %2066 = vmatpush.bf16.msra.mxu0 %v1014
  %2067 = vmatpush.bf16.msra.mxu0 %v1010
  %2068 = vmatpush.bf16.msra.mxu0 %v1006
  %2069 = vmatpush.bf16.msra.mxu0 %v1002
  %2070 = vmatpush.bf16.msra.mxu0 %v998
  %2071 = vmatpush.bf16.msra.mxu0 %v994
  %2072 = vmatpush.bf16.msra.mxu0 %v990
  %2073 = vmatpush.bf16.msra.mxu0 %v986
  %2074 = vmatmul.bf16.gmra.mxu0 %v410
  %v2075 = vpop.f32.mrf.mxu0
  %v2076 = vadd.f32 %v1987, %v2075
  %v2077 = vpop.f32.mrf.mxu0
  %v2078 = vadd.f32 %v1989, %v2077
  %2079 = vmatmul.bf16.gmra.mxu0 %v414
  %v2080 = vpop.f32.mrf.mxu0
  %v2081 = vadd.f32 %v1992, %v2080
  %v2082 = vpop.f32.mrf.mxu0
  %v2083 = vadd.f32 %v1994, %v2082
  %2084 = vmatmul.bf16.gmra.mxu0 %v418
  %v2085 = vpop.f32.mrf.mxu0
  %v2086 = vadd.f32 %v1997, %v2085
  %v2087 = vpop.f32.mrf.mxu0
  %v2088 = vadd.f32 %v1999, %v2087
  %2089 = vmatmul.bf16.gmra.mxu0 %v422
  %v2090 = vpop.f32.mrf.mxu0
  %v2091 = vadd.f32 %v2002, %v2090
  %v2092 = vpop.f32.mrf.mxu0
  %v2093 = vadd.f32 %v2004, %v2092
  %2094 = vmatmul.bf16.gmra.mxu0 %v426
  %v2095 = vpop.f32.mrf.mxu0
  %v2096 = vadd.f32 %v2007, %v2095
  %v2097 = vpop.f32.mrf.mxu0
  %v2098 = vadd.f32 %v2009, %v2097
  %2099 = vmatmul.bf16.gmra.mxu0 %v430
  %v2100 = vpop.f32.mrf.mxu0
  %v2101 = vadd.f32 %v2012, %v2100
  %v2102 = vpop.f32.mrf.mxu0
  %v2103 = vadd.f32 %v2014, %v2102
  %2104 = vmatmul.bf16.gmra.mxu0 %v434
  %v2105 = vpop.f32.mrf.mxu0
  %v2106 = vadd.f32 %v2017, %v2105
  %v2107 = vpop.f32.mrf.mxu0
  %v2108 = vadd.f32 %v2019, %v2107
  %2109 = vmatmul.bf16.gmra.mxu0 %v438
  %v2110 = vpop.f32.mrf.mxu0
  %v2111 = vadd.f32 %v2022, %v2110
  %v2112 = vpop.f32.mrf.mxu0
  %v2113 = vadd.f32 %v2024, %v2112
  %2114 = vmatmul.bf16.gmra.mxu0 %v442
  %v2115 = vpop.f32.mrf.mxu0
  %v2116 = vadd.f32 %v2027, %v2115
  %v2117 = vpop.f32.mrf.mxu0
  %v2118 = vadd.f32 %v2029, %v2117
  %2119 = vmatmul.bf16.gmra.mxu0 %v446
  %v2120 = vpop.f32.mrf.mxu0
  %v2121 = vadd.f32 %v2032, %v2120
  %v2122 = vpop.f32.mrf.mxu0
  %v2123 = vadd.f32 %v2034, %v2122
  %2124 = vmatmul.bf16.gmra.mxu0 %v450
  %v2125 = vpop.f32.mrf.mxu0
  %v2126 = vadd.f32 %v2037, %v2125
  %v2127 = vpop.f32.mrf.mxu0
  %v2128 = vadd.f32 %v2039, %v2127
  %2129 = vmatmul.bf16.gmra.mxu0 %v454
  %v2130 = vpop.f32.mrf.mxu0
  %v2131 = vadd.f32 %v2042, %v2130
  %v2132 = vpop.f32.mrf.mxu0
  %v2133 = vadd.f32 %v2044, %v2132
  %2134 = vmatmul.bf16.gmra.mxu0 %v458
  %v2135 = vpop.f32.mrf.mxu0
  %v2136 = vadd.f32 %v2047, %v2135
  %v2137 = vpop.f32.mrf.mxu0
  %v2138 = vadd.f32 %v2049, %v2137
  %2139 = vmatmul.bf16.gmra.mxu0 %v462
  %v2140 = vpop.f32.mrf.mxu0
  %v2141 = vadd.f32 %v2052, %v2140
  %v2142 = vpop.f32.mrf.mxu0
  %v2143 = vadd.f32 %v2054, %v2142
  %2144 = vmatmul.bf16.gmra.mxu0 %v466
  %v2145 = vpop.f32.mrf.mxu0
  %v2146 = vadd.f32 %v2057, %v2145
  %v2147 = vpop.f32.mrf.mxu0
  %v2148 = vadd.f32 %v2059, %v2147
  %2149 = vmatmul.bf16.gmra.mxu0 %v470
  %v2150 = vpop.f32.mrf.mxu0
  %v2151 = vadd.f32 %v2062, %v2150
  %v2152 = vpop.f32.mrf.mxu0
  %v2153 = vadd.f32 %v2064, %v2152
  %2154 = vdwg.mxu0
  %2155 = vmatpush.bf16.msra.mxu0 %v1046
  %2156 = vmatpush.bf16.msra.mxu0 %v1042
  %2157 = vmatpush.bf16.msra.mxu0 %v1038
  %2158 = vmatpush.bf16.msra.mxu0 %v1034
  %2159 = vmatpush.bf16.msra.mxu0 %v1030
  %2160 = vmatpush.bf16.msra.mxu0 %v1026
  %2161 = vmatpush.bf16.msra.mxu0 %v1022
  %2162 = vmatpush.bf16.msra.mxu0 %v1018
  %2163 = vmatmul.bf16.gmra.mxu0 %v411
  %v2164 = vpop.f32.mrf.mxu0
  %v2165 = vadd.f32 %v2076, %v2164
  %v2166 = vpop.f32.mrf.mxu0
  %v2167 = vadd.f32 %v2078, %v2166
  %2168 = vmatmul.bf16.gmra.mxu0 %v415
  %v2169 = vpop.f32.mrf.mxu0
  %v2170 = vadd.f32 %v2081, %v2169
  %v2171 = vpop.f32.mrf.mxu0
  %v2172 = vadd.f32 %v2083, %v2171
  %2173 = vmatmul.bf16.gmra.mxu0 %v419
  %v2174 = vpop.f32.mrf.mxu0
  %v2175 = vadd.f32 %v2086, %v2174
  %v2176 = vpop.f32.mrf.mxu0
  %v2177 = vadd.f32 %v2088, %v2176
  %2178 = vmatmul.bf16.gmra.mxu0 %v423
  %v2179 = vpop.f32.mrf.mxu0
  %v2180 = vadd.f32 %v2091, %v2179
  %v2181 = vpop.f32.mrf.mxu0
  %v2182 = vadd.f32 %v2093, %v2181
  %2183 = vmatmul.bf16.gmra.mxu0 %v427
  %v2184 = vpop.f32.mrf.mxu0
  %v2185 = vadd.f32 %v2096, %v2184
  %v2186 = vpop.f32.mrf.mxu0
  %v2187 = vadd.f32 %v2098, %v2186
  %2188 = vmatmul.bf16.gmra.mxu0 %v431
  %v2189 = vpop.f32.mrf.mxu0
  %v2190 = vadd.f32 %v2101, %v2189
  %v2191 = vpop.f32.mrf.mxu0
  %v2192 = vadd.f32 %v2103, %v2191
  %2193 = vmatmul.bf16.gmra.mxu0 %v435
  %v2194 = vpop.f32.mrf.mxu0
  %v2195 = vadd.f32 %v2106, %v2194
  %v2196 = vpop.f32.mrf.mxu0
  %v2197 = vadd.f32 %v2108, %v2196
  %2198 = vmatmul.bf16.gmra.mxu0 %v439
  %v2199 = vpop.f32.mrf.mxu0
  %v2200 = vadd.f32 %v2111, %v2199
  %v2201 = vpop.f32.mrf.mxu0
  %v2202 = vadd.f32 %v2113, %v2201
  %2203 = vmatmul.bf16.gmra.mxu0 %v443
  %v2204 = vpop.f32.mrf.mxu0
  %v2205 = vadd.f32 %v2116, %v2204
  %v2206 = vpop.f32.mrf.mxu0
  %v2207 = vadd.f32 %v2118, %v2206
  %2208 = vmatmul.bf16.gmra.mxu0 %v447
  %v2209 = vpop.f32.mrf.mxu0
  %v2210 = vadd.f32 %v2121, %v2209
  %v2211 = vpop.f32.mrf.mxu0
  %v2212 = vadd.f32 %v2123, %v2211
  %2213 = vmatmul.bf16.gmra.mxu0 %v451
  %v2214 = vpop.f32.mrf.mxu0
  %v2215 = vadd.f32 %v2126, %v2214
  %v2216 = vpop.f32.mrf.mxu0
  %v2217 = vadd.f32 %v2128, %v2216
  %2218 = vmatmul.bf16.gmra.mxu0 %v455
  %v2219 = vpop.f32.mrf.mxu0
  %v2220 = vadd.f32 %v2131, %v2219
  %v2221 = vpop.f32.mrf.mxu0
  %v2222 = vadd.f32 %v2133, %v2221
  %2223 = vmatmul.bf16.gmra.mxu0 %v459
  %v2224 = vpop.f32.mrf.mxu0
  %v2225 = vadd.f32 %v2136, %v2224
  %v2226 = vpop.f32.mrf.mxu0
  %v2227 = vadd.f32 %v2138, %v2226
  %2228 = vmatmul.bf16.gmra.mxu0 %v463
  %v2229 = vpop.f32.mrf.mxu0
  %v2230 = vadd.f32 %v2141, %v2229
  %v2231 = vpop.f32.mrf.mxu0
  %v2232 = vadd.f32 %v2143, %v2231
  %2233 = vmatmul.bf16.gmra.mxu0 %v467
  %v2234 = vpop.f32.mrf.mxu0
  %v2235 = vadd.f32 %v2146, %v2234
  %v2236 = vpop.f32.mrf.mxu0
  %v2237 = vadd.f32 %v2148, %v2236
  %2238 = vmatmul.bf16.gmra.mxu0 %v471
  %v2239 = vpop.f32.mrf.mxu0
  %v2240 = vadd.f32 %v2151, %v2239
  %v2241 = vpop.f32.mrf.mxu0
  %v2242 = vadd.f32 %v2153, %v2241
  %2243 = vdwg.mxu0
  %2244 = vmatpush.bf16.msra.mxu0 %v951
  %2245 = vmatpush.bf16.msra.mxu0 %v947
  %2246 = vmatpush.bf16.msra.mxu0 %v943
  %2247 = vmatpush.bf16.msra.mxu0 %v939
  %2248 = vmatpush.bf16.msra.mxu0 %v935
  %2249 = vmatpush.bf16.msra.mxu0 %v931
  %2250 = vmatpush.bf16.msra.mxu0 %v927
  %2251 = vmatpush.bf16.msra.mxu0 %v923
  %2252 = vmatmul.bf16.gmra.mxu0 %v408
  %v2253 = vpop.f32.mrf.mxu0
  %v2254 = vadd.f32 %v211, %v2253
  %v2255 = vpop.f32.mrf.mxu0
  %v2256 = vadd.f32 %v211, %v2255
  %2257 = vmatmul.bf16.gmra.mxu0 %v412
  %v2258 = vpop.f32.mrf.mxu0
  %v2259 = vadd.f32 %v211, %v2258
  %v2260 = vpop.f32.mrf.mxu0
  %v2261 = vadd.f32 %v211, %v2260
  %2262 = vmatmul.bf16.gmra.mxu0 %v416
  %v2263 = vpop.f32.mrf.mxu0
  %v2264 = vadd.f32 %v211, %v2263
  %v2265 = vpop.f32.mrf.mxu0
  %v2266 = vadd.f32 %v211, %v2265
  %2267 = vmatmul.bf16.gmra.mxu0 %v420
  %v2268 = vpop.f32.mrf.mxu0
  %v2269 = vadd.f32 %v211, %v2268
  %v2270 = vpop.f32.mrf.mxu0
  %v2271 = vadd.f32 %v211, %v2270
  %2272 = vmatmul.bf16.gmra.mxu0 %v424
  %v2273 = vpop.f32.mrf.mxu0
  %v2274 = vadd.f32 %v211, %v2273
  %v2275 = vpop.f32.mrf.mxu0
  %v2276 = vadd.f32 %v211, %v2275
  %2277 = vmatmul.bf16.gmra.mxu0 %v428
  %v2278 = vpop.f32.mrf.mxu0
  %v2279 = vadd.f32 %v211, %v2278
  %v2280 = vpop.f32.mrf.mxu0
  %v2281 = vadd.f32 %v211, %v2280
  %2282 = vmatmul.bf16.gmra.mxu0 %v432
  %v2283 = vpop.f32.mrf.mxu0
  %v2284 = vadd.f32 %v211, %v2283
  %v2285 = vpop.f32.mrf.mxu0
  %v2286 = vadd.f32 %v211, %v2285
  %2287 = vmatmul.bf16.gmra.mxu0 %v436
  %v2288 = vpop.f32.mrf.mxu0
  %v2289 = vadd.f32 %v211, %v2288
  %v2290 = vpop.f32.mrf.mxu0
  %v2291 = vadd.f32 %v211, %v2290
  %2292 = vmatmul.bf16.gmra.mxu0 %v440
  %v2293 = vpop.f32.mrf.mxu0
  %v2294 = vadd.f32 %v211, %v2293
  %v2295 = vpop.f32.mrf.mxu0
  %v2296 = vadd.f32 %v211, %v2295
  %2297 = vmatmul.bf16.gmra.mxu0 %v444
  %v2298 = vpop.f32.mrf.mxu0
  %v2299 = vadd.f32 %v211, %v2298
  %v2300 = vpop.f32.mrf.mxu0
  %v2301 = vadd.f32 %v211, %v2300
  %2302 = vmatmul.bf16.gmra.mxu0 %v448
  %v2303 = vpop.f32.mrf.mxu0
  %v2304 = vadd.f32 %v211, %v2303
  %v2305 = vpop.f32.mrf.mxu0
  %v2306 = vadd.f32 %v211, %v2305
  %2307 = vmatmul.bf16.gmra.mxu0 %v452
  %v2308 = vpop.f32.mrf.mxu0
  %v2309 = vadd.f32 %v211, %v2308
  %v2310 = vpop.f32.mrf.mxu0
  %v2311 = vadd.f32 %v211, %v2310
  %2312 = vmatmul.bf16.gmra.mxu0 %v456
  %v2313 = vpop.f32.mrf.mxu0
  %v2314 = vadd.f32 %v211, %v2313
  %v2315 = vpop.f32.mrf.mxu0
  %v2316 = vadd.f32 %v211, %v2315
  %2317 = vmatmul.bf16.gmra.mxu0 %v460
  %v2318 = vpop.f32.mrf.mxu0
  %v2319 = vadd.f32 %v211, %v2318
  %v2320 = vpop.f32.mrf.mxu0
  %v2321 = vadd.f32 %v211, %v2320
  %2322 = vmatmul.bf16.gmra.mxu0 %v464
  %v2323 = vpop.f32.mrf.mxu0
  %v2324 = vadd.f32 %v211, %v2323
  %v2325 = vpop.f32.mrf.mxu0
  %v2326 = vadd.f32 %v211, %v2325
  %2327 = vmatmul.bf16.gmra.mxu0 %v468
  %v2328 = vpop.f32.mrf.mxu0
  %v2329 = vadd.f32 %v211, %v2328
  %v2330 = vpop.f32.mrf.mxu0
  %v2331 = vadd.f32 %v211, %v2330
  %2332 = vdwg.mxu0
  %2333 = vmatpush.bf16.msra.mxu0 %v983
  %2334 = vmatpush.bf16.msra.mxu0 %v979
  %2335 = vmatpush.bf16.msra.mxu0 %v975
  %2336 = vmatpush.bf16.msra.mxu0 %v971
  %2337 = vmatpush.bf16.msra.mxu0 %v967
  %2338 = vmatpush.bf16.msra.mxu0 %v963
  %2339 = vmatpush.bf16.msra.mxu0 %v959
  %2340 = vmatpush.bf16.msra.mxu0 %v955
  %2341 = vmatmul.bf16.gmra.mxu0 %v409
  %v2342 = vpop.f32.mrf.mxu0
  %v2343 = vadd.f32 %v2254, %v2342
  %v2344 = vpop.f32.mrf.mxu0
  %v2345 = vadd.f32 %v2256, %v2344
  %2346 = vmatmul.bf16.gmra.mxu0 %v413
  %v2347 = vpop.f32.mrf.mxu0
  %v2348 = vadd.f32 %v2259, %v2347
  %v2349 = vpop.f32.mrf.mxu0
  %v2350 = vadd.f32 %v2261, %v2349
  %2351 = vmatmul.bf16.gmra.mxu0 %v417
  %v2352 = vpop.f32.mrf.mxu0
  %v2353 = vadd.f32 %v2264, %v2352
  %v2354 = vpop.f32.mrf.mxu0
  %v2355 = vadd.f32 %v2266, %v2354
  %2356 = vmatmul.bf16.gmra.mxu0 %v421
  %v2357 = vpop.f32.mrf.mxu0
  %v2358 = vadd.f32 %v2269, %v2357
  %v2359 = vpop.f32.mrf.mxu0
  %v2360 = vadd.f32 %v2271, %v2359
  %2361 = vmatmul.bf16.gmra.mxu0 %v425
  %v2362 = vpop.f32.mrf.mxu0
  %v2363 = vadd.f32 %v2274, %v2362
  %v2364 = vpop.f32.mrf.mxu0
  %v2365 = vadd.f32 %v2276, %v2364
  %2366 = vmatmul.bf16.gmra.mxu0 %v429
  %v2367 = vpop.f32.mrf.mxu0
  %v2368 = vadd.f32 %v2279, %v2367
  %v2369 = vpop.f32.mrf.mxu0
  %v2370 = vadd.f32 %v2281, %v2369
  %2371 = vmatmul.bf16.gmra.mxu0 %v433
  %v2372 = vpop.f32.mrf.mxu0
  %v2373 = vadd.f32 %v2284, %v2372
  %v2374 = vpop.f32.mrf.mxu0
  %v2375 = vadd.f32 %v2286, %v2374
  %2376 = vmatmul.bf16.gmra.mxu0 %v437
  %v2377 = vpop.f32.mrf.mxu0
  %v2378 = vadd.f32 %v2289, %v2377
  %v2379 = vpop.f32.mrf.mxu0
  %v2380 = vadd.f32 %v2291, %v2379
  %2381 = vmatmul.bf16.gmra.mxu0 %v441
  %v2382 = vpop.f32.mrf.mxu0
  %v2383 = vadd.f32 %v2294, %v2382
  %v2384 = vpop.f32.mrf.mxu0
  %v2385 = vadd.f32 %v2296, %v2384
  %2386 = vmatmul.bf16.gmra.mxu0 %v445
  %v2387 = vpop.f32.mrf.mxu0
  %v2388 = vadd.f32 %v2299, %v2387
  %v2389 = vpop.f32.mrf.mxu0
  %v2390 = vadd.f32 %v2301, %v2389
  %2391 = vmatmul.bf16.gmra.mxu0 %v449
  %v2392 = vpop.f32.mrf.mxu0
  %v2393 = vadd.f32 %v2304, %v2392
  %v2394 = vpop.f32.mrf.mxu0
  %v2395 = vadd.f32 %v2306, %v2394
  %2396 = vmatmul.bf16.gmra.mxu0 %v453
  %v2397 = vpop.f32.mrf.mxu0
  %v2398 = vadd.f32 %v2309, %v2397
  %v2399 = vpop.f32.mrf.mxu0
  %v2400 = vadd.f32 %v2311, %v2399
  %2401 = vmatmul.bf16.gmra.mxu0 %v457
  %v2402 = vpop.f32.mrf.mxu0
  %v2403 = vadd.f32 %v2314, %v2402
  %v2404 = vpop.f32.mrf.mxu0
  %v2405 = vadd.f32 %v2316, %v2404
  %2406 = vmatmul.bf16.gmra.mxu0 %v461
  %v2407 = vpop.f32.mrf.mxu0
  %v2408 = vadd.f32 %v2319, %v2407
  %v2409 = vpop.f32.mrf.mxu0
  %v2410 = vadd.f32 %v2321, %v2409
  %2411 = vmatmul.bf16.gmra.mxu0 %v465
  %v2412 = vpop.f32.mrf.mxu0
  %v2413 = vadd.f32 %v2324, %v2412
  %v2414 = vpop.f32.mrf.mxu0
  %v2415 = vadd.f32 %v2326, %v2414
  %2416 = vmatmul.bf16.gmra.mxu0 %v469
  %v2417 = vpop.f32.mrf.mxu0
  %v2418 = vadd.f32 %v2329, %v2417
  %v2419 = vpop.f32.mrf.mxu0
  %v2420 = vadd.f32 %v2331, %v2419
  %2421 = vdwg.mxu0
  %2422 = vmatpush.bf16.msra.mxu0 %v1015
  %2423 = vmatpush.bf16.msra.mxu0 %v1011
  %2424 = vmatpush.bf16.msra.mxu0 %v1007
  %2425 = vmatpush.bf16.msra.mxu0 %v1003
  %2426 = vmatpush.bf16.msra.mxu0 %v999
  %2427 = vmatpush.bf16.msra.mxu0 %v995
  %2428 = vmatpush.bf16.msra.mxu0 %v991
  %2429 = vmatpush.bf16.msra.mxu0 %v987
  %2430 = vmatmul.bf16.gmra.mxu0 %v410
  %v2431 = vpop.f32.mrf.mxu0
  %v2432 = vadd.f32 %v2343, %v2431
  %v2433 = vpop.f32.mrf.mxu0
  %v2434 = vadd.f32 %v2345, %v2433
  %2435 = vmatmul.bf16.gmra.mxu0 %v414
  %v2436 = vpop.f32.mrf.mxu0
  %v2437 = vadd.f32 %v2348, %v2436
  %v2438 = vpop.f32.mrf.mxu0
  %v2439 = vadd.f32 %v2350, %v2438
  %2440 = vmatmul.bf16.gmra.mxu0 %v418
  %v2441 = vpop.f32.mrf.mxu0
  %v2442 = vadd.f32 %v2353, %v2441
  %v2443 = vpop.f32.mrf.mxu0
  %v2444 = vadd.f32 %v2355, %v2443
  %2445 = vmatmul.bf16.gmra.mxu0 %v422
  %v2446 = vpop.f32.mrf.mxu0
  %v2447 = vadd.f32 %v2358, %v2446
  %v2448 = vpop.f32.mrf.mxu0
  %v2449 = vadd.f32 %v2360, %v2448
  %2450 = vmatmul.bf16.gmra.mxu0 %v426
  %v2451 = vpop.f32.mrf.mxu0
  %v2452 = vadd.f32 %v2363, %v2451
  %v2453 = vpop.f32.mrf.mxu0
  %v2454 = vadd.f32 %v2365, %v2453
  %2455 = vmatmul.bf16.gmra.mxu0 %v430
  %v2456 = vpop.f32.mrf.mxu0
  %v2457 = vadd.f32 %v2368, %v2456
  %v2458 = vpop.f32.mrf.mxu0
  %v2459 = vadd.f32 %v2370, %v2458
  %2460 = vmatmul.bf16.gmra.mxu0 %v434
  %v2461 = vpop.f32.mrf.mxu0
  %v2462 = vadd.f32 %v2373, %v2461
  %v2463 = vpop.f32.mrf.mxu0
  %v2464 = vadd.f32 %v2375, %v2463
  %2465 = vmatmul.bf16.gmra.mxu0 %v438
  %v2466 = vpop.f32.mrf.mxu0
  %v2467 = vadd.f32 %v2378, %v2466
  %v2468 = vpop.f32.mrf.mxu0
  %v2469 = vadd.f32 %v2380, %v2468
  %2470 = vmatmul.bf16.gmra.mxu0 %v442
  %v2471 = vpop.f32.mrf.mxu0
  %v2472 = vadd.f32 %v2383, %v2471
  %v2473 = vpop.f32.mrf.mxu0
  %v2474 = vadd.f32 %v2385, %v2473
  %2475 = vmatmul.bf16.gmra.mxu0 %v446
  %v2476 = vpop.f32.mrf.mxu0
  %v2477 = vadd.f32 %v2388, %v2476
  %v2478 = vpop.f32.mrf.mxu0
  %v2479 = vadd.f32 %v2390, %v2478
  %2480 = vmatmul.bf16.gmra.mxu0 %v450
  %v2481 = vpop.f32.mrf.mxu0
  %v2482 = vadd.f32 %v2393, %v2481
  %v2483 = vpop.f32.mrf.mxu0
  %v2484 = vadd.f32 %v2395, %v2483
  %2485 = vmatmul.bf16.gmra.mxu0 %v454
  %v2486 = vpop.f32.mrf.mxu0
  %v2487 = vadd.f32 %v2398, %v2486
  %v2488 = vpop.f32.mrf.mxu0
  %v2489 = vadd.f32 %v2400, %v2488
  %2490 = vmatmul.bf16.gmra.mxu0 %v458
  %v2491 = vpop.f32.mrf.mxu0
  %v2492 = vadd.f32 %v2403, %v2491
  %v2493 = vpop.f32.mrf.mxu0
  %v2494 = vadd.f32 %v2405, %v2493
  %2495 = vmatmul.bf16.gmra.mxu0 %v462
  %v2496 = vpop.f32.mrf.mxu0
  %v2497 = vadd.f32 %v2408, %v2496
  %v2498 = vpop.f32.mrf.mxu0
  %v2499 = vadd.f32 %v2410, %v2498
  %2500 = vmatmul.bf16.gmra.mxu0 %v466
  %v2501 = vpop.f32.mrf.mxu0
  %v2502 = vadd.f32 %v2413, %v2501
  %v2503 = vpop.f32.mrf.mxu0
  %v2504 = vadd.f32 %v2415, %v2503
  %2505 = vmatmul.bf16.gmra.mxu0 %v470
  %v2506 = vpop.f32.mrf.mxu0
  %v2507 = vadd.f32 %v2418, %v2506
  %v2508 = vpop.f32.mrf.mxu0
  %v2509 = vadd.f32 %v2420, %v2508
  %2510 = vdwg.mxu0
  %2511 = vmatpush.bf16.msra.mxu0 %v1047
  %2512 = vmatpush.bf16.msra.mxu0 %v1043
  %2513 = vmatpush.bf16.msra.mxu0 %v1039
  %2514 = vmatpush.bf16.msra.mxu0 %v1035
  %2515 = vmatpush.bf16.msra.mxu0 %v1031
  %2516 = vmatpush.bf16.msra.mxu0 %v1027
  %2517 = vmatpush.bf16.msra.mxu0 %v1023
  %2518 = vmatpush.bf16.msra.mxu0 %v1019
  %2519 = vmatmul.bf16.gmra.mxu0 %v411
  %v2520 = vpop.f32.mrf.mxu0
  %v2521 = vadd.f32 %v2432, %v2520
  %v2522 = vpop.f32.mrf.mxu0
  %v2523 = vadd.f32 %v2434, %v2522
  %2524 = vmatmul.bf16.gmra.mxu0 %v415
  %v2525 = vpop.f32.mrf.mxu0
  %v2526 = vadd.f32 %v2437, %v2525
  %v2527 = vpop.f32.mrf.mxu0
  %v2528 = vadd.f32 %v2439, %v2527
  %2529 = vmatmul.bf16.gmra.mxu0 %v419
  %v2530 = vpop.f32.mrf.mxu0
  %v2531 = vadd.f32 %v2442, %v2530
  %v2532 = vpop.f32.mrf.mxu0
  %v2533 = vadd.f32 %v2444, %v2532
  %2534 = vmatmul.bf16.gmra.mxu0 %v423
  %v2535 = vpop.f32.mrf.mxu0
  %v2536 = vadd.f32 %v2447, %v2535
  %v2537 = vpop.f32.mrf.mxu0
  %v2538 = vadd.f32 %v2449, %v2537
  %2539 = vmatmul.bf16.gmra.mxu0 %v427
  %v2540 = vpop.f32.mrf.mxu0
  %v2541 = vadd.f32 %v2452, %v2540
  %v2542 = vpop.f32.mrf.mxu0
  %v2543 = vadd.f32 %v2454, %v2542
  %2544 = vmatmul.bf16.gmra.mxu0 %v431
  %v2545 = vpop.f32.mrf.mxu0
  %v2546 = vadd.f32 %v2457, %v2545
  %v2547 = vpop.f32.mrf.mxu0
  %v2548 = vadd.f32 %v2459, %v2547
  %2549 = vmatmul.bf16.gmra.mxu0 %v435
  %v2550 = vpop.f32.mrf.mxu0
  %v2551 = vadd.f32 %v2462, %v2550
  %v2552 = vpop.f32.mrf.mxu0
  %v2553 = vadd.f32 %v2464, %v2552
  %2554 = vmatmul.bf16.gmra.mxu0 %v439
  %v2555 = vpop.f32.mrf.mxu0
  %v2556 = vadd.f32 %v2467, %v2555
  %v2557 = vpop.f32.mrf.mxu0
  %v2558 = vadd.f32 %v2469, %v2557
  %2559 = vmatmul.bf16.gmra.mxu0 %v443
  %v2560 = vpop.f32.mrf.mxu0
  %v2561 = vadd.f32 %v2472, %v2560
  %v2562 = vpop.f32.mrf.mxu0
  %v2563 = vadd.f32 %v2474, %v2562
  %2564 = vmatmul.bf16.gmra.mxu0 %v447
  %v2565 = vpop.f32.mrf.mxu0
  %v2566 = vadd.f32 %v2477, %v2565
  %v2567 = vpop.f32.mrf.mxu0
  %v2568 = vadd.f32 %v2479, %v2567
  %2569 = vmatmul.bf16.gmra.mxu0 %v451
  %v2570 = vpop.f32.mrf.mxu0
  %v2571 = vadd.f32 %v2482, %v2570
  %v2572 = vpop.f32.mrf.mxu0
  %v2573 = vadd.f32 %v2484, %v2572
  %2574 = vmatmul.bf16.gmra.mxu0 %v455
  %v2575 = vpop.f32.mrf.mxu0
  %v2576 = vadd.f32 %v2487, %v2575
  %v2577 = vpop.f32.mrf.mxu0
  %v2578 = vadd.f32 %v2489, %v2577
  %2579 = vmatmul.bf16.gmra.mxu0 %v459
  %v2580 = vpop.f32.mrf.mxu0
  %v2581 = vadd.f32 %v2492, %v2580
  %v2582 = vpop.f32.mrf.mxu0
  %v2583 = vadd.f32 %v2494, %v2582
  %2584 = vmatmul.bf16.gmra.mxu0 %v463
  %v2585 = vpop.f32.mrf.mxu0
  %v2586 = vadd.f32 %v2497, %v2585
  %v2587 = vpop.f32.mrf.mxu0
  %v2588 = vadd.f32 %v2499, %v2587
  %2589 = vmatmul.bf16.gmra.mxu0 %v467
  %v2590 = vpop.f32.mrf.mxu0
  %v2591 = vadd.f32 %v2502, %v2590
  %v2592 = vpop.f32.mrf.mxu0
  %v2593 = vadd.f32 %v2504, %v2592
  %2594 = vmatmul.bf16.gmra.mxu0 %v471
  %v2595 = vpop.f32.mrf.mxu0
  %v2596 = vadd.f32 %v2507, %v2595
  %v2597 = vpop.f32.mrf.mxu0
  %v2598 = vadd.f32 %v2509, %v2597
  %2599 = vdwg.mxu0
  %2600 = vst [vmem:[%s3] sm:$0xff] %v1453
  %2601 = vst [vmem:[%s3 + $0x8] sm:$0xff] %v1809
  %2602 = vst [vmem:[%s3 + $0x10] sm:$0xff] %v2165
  %2603 = vst [vmem:[%s3 + $0x18] sm:$0xff] %v2521
  %2604 = vst [vmem:[%s3 + $0x20] sm:$0xff] %v1455
  %2605 = vst [vmem:[%s3 + $0x28] sm:$0xff] %v1811
  %2606 = vst [vmem:[%s3 + $0x30] sm:$0xff] %v2167
  %2607 = vst [vmem:[%s3 + $0x38] sm:$0xff] %v2523
  %2608 = vst [vmem:[%s3 + $0x40] sm:$0xff] %v1458
  %2609 = vst [vmem:[%s3 + $0x48] sm:$0xff] %v1814
  %2610 = vst [vmem:[%s3 + $0x50] sm:$0xff] %v2170
  %2611 = vst [vmem:[%s3 + $0x58] sm:$0xff] %v2526
  %2612 = vst [vmem:[%s3 + $0x60] sm:$0xff] %v1460
  %2613 = vst [vmem:[%s3 + $0x68] sm:$0xff] %v1816
  %2614 = vst [vmem:[%s3 + $0x70] sm:$0xff] %v2172
  %2615 = vst [vmem:[%s3 + $0x78] sm:$0xff] %v2528
  %2616 = vst [vmem:[%s3 + $0x80] sm:$0xff] %v1463
  %2617 = vst [vmem:[%s3 + $0x88] sm:$0xff] %v1819
  %2618 = vst [vmem:[%s3 + $0x90] sm:$0xff] %v2175
  %2619 = vst [vmem:[%s3 + $0x98] sm:$0xff] %v2531
  %2620 = vst [vmem:[%s3 + $0xa0] sm:$0xff] %v1465
  %2621 = vst [vmem:[%s3 + $0xa8] sm:$0xff] %v1821
  %2622 = vst [vmem:[%s3 + $0xb0] sm:$0xff] %v2177
  %2623 = vst [vmem:[%s3 + $0xb8] sm:$0xff] %v2533
  %2624 = vst [vmem:[%s3 + $0xc0] sm:$0xff] %v1468
  %2625 = vst [vmem:[%s3 + $0xc8] sm:$0xff] %v1824
  %2626 = vst [vmem:[%s3 + $0xd0] sm:$0xff] %v2180
  %2627 = vst [vmem:[%s3 + $0xd8] sm:$0xff] %v2536
  %2628 = vst [vmem:[%s3 + $0xe0] sm:$0xff] %v1470
  %2629 = vst [vmem:[%s3 + $0xe8] sm:$0xff] %v1826
  %2630 = vst [vmem:[%s3 + $0xf0] sm:$0xff] %v2182
  %2631 = vst [vmem:[%s3 + $0xf8] sm:$0xff] %v2538
  %2632 = vst [vmem:[%s3 + $0x100] sm:$0xff] %v1473
  %2633 = vst [vmem:[%s3 + $0x108] sm:$0xff] %v1829
  %2634 = vst [vmem:[%s3 + $0x110] sm:$0xff] %v2185
  %2635 = vst [vmem:[%s3 + $0x118] sm:$0xff] %v2541
  %2636 = vst [vmem:[%s3 + $0x120] sm:$0xff] %v1475
  %2637 = vst [vmem:[%s3 + $0x128] sm:$0xff] %v1831
  %2638 = vst [vmem:[%s3 + $0x130] sm:$0xff] %v2187
  %2639 = vst [vmem:[%s3 + $0x138] sm:$0xff] %v2543
  %2640 = vst [vmem:[%s3 + $0x140] sm:$0xff] %v1478
  %2641 = vst [vmem:[%s3 + $0x148] sm:$0xff] %v1834
  %2642 = vst [vmem:[%s3 + $0x150] sm:$0xff] %v2190
  %2643 = vst [vmem:[%s3 + $0x158] sm:$0xff] %v2546
  %2644 = vst [vmem:[%s3 + $0x160] sm:$0xff] %v1480
  %2645 = vst [vmem:[%s3 + $0x168] sm:$0xff] %v1836
  %2646 = vst [vmem:[%s3 + $0x170] sm:$0xff] %v2192
  %2647 = vst [vmem:[%s3 + $0x178] sm:$0xff] %v2548
  %2648 = vst [vmem:[%s3 + $0x180] sm:$0xff] %v1483
  %2649 = vst [vmem:[%s3 + $0x188] sm:$0xff] %v1839
  %2650 = vst [vmem:[%s3 + $0x190] sm:$0xff] %v2195
  %2651 = vst [vmem:[%s3 + $0x198] sm:$0xff] %v2551
  %2652 = vst [vmem:[%s3 + $0x1a0] sm:$0xff] %v1485
  %2653 = vst [vmem:[%s3 + $0x1a8] sm:$0xff] %v1841
  %2654 = vst [vmem:[%s3 + $0x1b0] sm:$0xff] %v2197
  %2655 = vst [vmem:[%s3 + $0x1b8] sm:$0xff] %v2553
  %2656 = vst [vmem:[%s3 + $0x1c0] sm:$0xff] %v1488
  %2657 = vst [vmem:[%s3 + $0x1c8] sm:$0xff] %v1844
  %2658 = vst [vmem:[%s3 + $0x1d0] sm:$0xff] %v2200
  %2659 = vst [vmem:[%s3 + $0x1d8] sm:$0xff] %v2556
  %2660 = vst [vmem:[%s3 + $0x1e0] sm:$0xff] %v1490
  %2661 = vst [vmem:[%s3 + $0x1e8] sm:$0xff] %v1846
  %2662 = vst [vmem:[%s3 + $0x1f0] sm:$0xff] %v2202
  %2663 = vst [vmem:[%s3 + $0x1f8] sm:$0xff] %v2558
  %2664 = vst [vmem:[%s3 + $0x200] sm:$0xff] %v1493
  %2665 = vst [vmem:[%s3 + $0x208] sm:$0xff] %v1849
  %2666 = vst [vmem:[%s3 + $0x210] sm:$0xff] %v2205
  %2667 = vst [vmem:[%s3 + $0x218] sm:$0xff] %v2561
  %2668 = vst [vmem:[%s3 + $0x220] sm:$0xff] %v1495
  %2669 = vst [vmem:[%s3 + $0x228] sm:$0xff] %v1851
  %2670 = vst [vmem:[%s3 + $0x230] sm:$0xff] %v2207
  %2671 = vst [vmem:[%s3 + $0x238] sm:$0xff] %v2563
  %2672 = vst [vmem:[%s3 + $0x240] sm:$0xff] %v1498
  %2673 = vst [vmem:[%s3 + $0x248] sm:$0xff] %v1854
  %2674 = vst [vmem:[%s3 + $0x250] sm:$0xff] %v2210
  %2675 = vst [vmem:[%s3 + $0x258] sm:$0xff] %v2566
  %2676 = vst [vmem:[%s3 + $0x260] sm:$0xff] %v1500
  %2677 = vst [vmem:[%s3 + $0x268] sm:$0xff] %v1856
  %2678 = vst [vmem:[%s3 + $0x270] sm:$0xff] %v2212
  %2679 = vst [vmem:[%s3 + $0x278] sm:$0xff] %v2568
  %2680 = vst [vmem:[%s3 + $0x280] sm:$0xff] %v1503
  %2681 = vst [vmem:[%s3 + $0x288] sm:$0xff] %v1859
  %2682 = vst [vmem:[%s3 + $0x290] sm:$0xff] %v2215
  %2683 = vst [vmem:[%s3 + $0x298] sm:$0xff] %v2571
  %2684 = vst [vmem:[%s3 + $0x2a0] sm:$0xff] %v1505
  %2685 = vst [vmem:[%s3 + $0x2a8] sm:$0xff] %v1861
  %2686 = vst [vmem:[%s3 + $0x2b0] sm:$0xff] %v2217
  %2687 = vst [vmem:[%s3 + $0x2b8] sm:$0xff] %v2573
  %2688 = vst [vmem:[%s3 + $0x2c0] sm:$0xff] %v1508
  %2689 = vst [vmem:[%s3 + $0x2c8] sm:$0xff] %v1864
  %2690 = vst [vmem:[%s3 + $0x2d0] sm:$0xff] %v2220
  %2691 = vst [vmem:[%s3 + $0x2d8] sm:$0xff] %v2576
  %2692 = vst [vmem:[%s3 + $0x2e0] sm:$0xff] %v1510
  %2693 = vst [vmem:[%s3 + $0x2e8] sm:$0xff] %v1866
  %2694 = vst [vmem:[%s3 + $0x2f0] sm:$0xff] %v2222
  %2695 = vst [vmem:[%s3 + $0x2f8] sm:$0xff] %v2578
  %2696 = vst [vmem:[%s3 + $0x300] sm:$0xff] %v1513
  %2697 = vst [vmem:[%s3 + $0x308] sm:$0xff] %v1869
  %2698 = vst [vmem:[%s3 + $0x310] sm:$0xff] %v2225
  %2699 = vst [vmem:[%s3 + $0x318] sm:$0xff] %v2581
  %2700 = vst [vmem:[%s3 + $0x320] sm:$0xff] %v1515
  %2701 = vst [vmem:[%s3 + $0x328] sm:$0xff] %v1871
  %2702 = vst [vmem:[%s3 + $0x330] sm:$0xff] %v2227
  %2703 = vst [vmem:[%s3 + $0x338] sm:$0xff] %v2583
  %2704 = vst [vmem:[%s3 + $0x340] sm:$0xff] %v1518
  %2705 = vst [vmem:[%s3 + $0x348] sm:$0xff] %v1874
  %2706 = vst [vmem:[%s3 + $0x350] sm:$0xff] %v2230
  %2707 = vst [vmem:[%s3 + $0x358] sm:$0xff] %v2586
  %2708 = vst [vmem:[%s3 + $0x360] sm:$0xff] %v1520
  %2709 = vst [vmem:[%s3 + $0x368] sm:$0xff] %v1876
  %2710 = vst [vmem:[%s3 + $0x370] sm:$0xff] %v2232
  %2711 = vst [vmem:[%s3 + $0x378] sm:$0xff] %v2588
  %2712 = vst [vmem:[%s3 + $0x380] sm:$0xff] %v1523
  %2713 = vst [vmem:[%s3 + $0x388] sm:$0xff] %v1879
  %2714 = vst [vmem:[%s3 + $0x390] sm:$0xff] %v2235
  %2715 = vst [vmem:[%s3 + $0x398] sm:$0xff] %v2591
  %2716 = vst [vmem:[%s3 + $0x3a0] sm:$0xff] %v1525
  %2717 = vst [vmem:[%s3 + $0x3a8] sm:$0xff] %v1881
  %2718 = vst [vmem:[%s3 + $0x3b0] sm:$0xff] %v2237
  %2719 = vst [vmem:[%s3 + $0x3b8] sm:$0xff] %v2593
  %2720 = vst [vmem:[%s3 + $0x3c0] sm:$0xff] %v1528
  %2721 = vst [vmem:[%s3 + $0x3c8] sm:$0xff] %v1884
  %2722 = vst [vmem:[%s3 + $0x3d0] sm:$0xff] %v2240
  %2723 = vst [vmem:[%s3 + $0x3d8] sm:$0xff] %v2596
  %2724 = vst [vmem:[%s3 + $0x3e0] sm:$0xff] %v1530
  %2725 = vst [vmem:[%s3 + $0x3e8] sm:$0xff] %v1886
  %2726 = vst [vmem:[%s3 + $0x3f0] sm:$0xff] %v2242
  %2727 = vst [vmem:[%s3 + $0x3f8] sm:$0xff] %v2598
  // Predicated region
  $region14: #{self_attention_pallas.5} parent=0 // pred_check
    _
  $region15: #{self_attention_pallas.5} parent=0 // pred_check_branch
    %2729 = sbr.rel (0) target = $region17
  $region16: #{self_attention_pallas.5} parent=0 // pred_region
    _
  $region17: #{self_attention_pallas.5} parent=0 // pred_fallthru
    _
  // Predicated region
  $region18: #{self_attention_pallas.5} parent=0 // pred_check
    _
  $region19: #{self_attention_pallas.5} parent=0 // pred_check_branch
    %2731 = sbr.rel (0) target = $region21
  $region20: #{self_attention_pallas.5} parent=0 // pred_region
    _
  $region21: #{self_attention_pallas.5} parent=0 // pred_fallthru
    _

// kernel: self_attention_pallas.3
$region0: #{self_attention_pallas.3}
  #allocation0 [shape = 'u32[]', space=smem, size = 0x4, offset = 0x4, fixed_abs, tag = 'smem constant byte address 0x4 - core index']
  #allocation1 [shape = 'u32[72,128]{1,0:T(1,128)}', space=vmem, size = 0x9000, scoped, tag = 'internal scratch']
  %s0 = inlined_call_operand.vmem [shape: bf16[256,512], index: 0, kind: input, shape index: {}]
  %s1 = inlined_call_operand.hbm [shape: bf16[512,1536], index: 1, kind: input, shape index: {}]
  %s2 = inlined_call_operand.hbm [shape: f32[1,1536], index: 2, kind: input, shape index: {}]
  %s3 = inlined_call_operand.vmem [shape: bf16[256,1536], index: 3, kind: output, shape index: {}]
  %s4 = sld [smem:[#allocation0]]
  $region30: #{self_attention_pallas.3} parent=0
    _
  %s6 = ssub.s32 1, %s4
  %s7 = scalar_select 0, %s6, %s4
  $region1: #{self_attention_pallas.3} parent=0
    #allocation2 [shape = 'u8[1572864]{0}', space=vmem, size = 0x180000, scoped, tag = 'input window, operand 1, single buffered']
    #allocation3 [shape = 's32[1]{0}', space=sflag, size = 0x4, scoped, tag = 'scoped memory for self_attention_pallas.3']
    #allocation4 [shape = 'u8[6144]{0}', space=vmem, size = 0x1800, scoped, tag = 'input window, operand 2, single buffered']
    #allocation5 [shape = 's32[1]{0}', space=sflag, size = 0x4, scoped, tag = 'scoped memory for self_attention_pallas.3']
    %8 = vsyncpa [#allocation3], 0
    %9 = vsyncpa [#allocation5], 0
    // Predicated region
    $region2: #{self_attention_pallas.3} parent=1 // pred_check
      _
    $region3: #{self_attention_pallas.3} parent=1 // pred_check_branch
      %11 = sbr.rel (0) target = $region5
    $region4: #{self_attention_pallas.3} parent=1 // pred_region
      _
    $region5: #{self_attention_pallas.3} parent=1 // pred_fallthru
      _
    // Predicated region
    $region6: #{self_attention_pallas.3} parent=1 // pred_check
      _
    $region7: #{self_attention_pallas.3} parent=1 // pred_check_branch
      %13 = sbr.rel (0) target = $region9
    $region8: #{self_attention_pallas.3} parent=1 // pred_region
      %15 = vsyncadd [#allocation3], 0
      %s16 = sshll.u32 %s1, 4
      %s17 = int_to_ptr.hbm [resolvable:$true] %s16
      %s18 = sshll.u32 [#allocation2], 4
      %s19 = int_to_ptr.vmem [resolvable:$true] %s18
      %24 = dma.hbm_to_vmem [thread:$0]  %s17, 49152, %s19, [#allocation3], 768, 768, 48
    $region9: #{self_attention_pallas.3} parent=1 // pred_fallthru
      _
    // Predicated region
    $region10: #{self_attention_pallas.3} parent=1 // pred_check
      _
    $region11: #{self_attention_pallas.3} parent=1 // pred_check_branch
      %26 = sbr.rel (0) target = $region13
    $region12: #{self_attention_pallas.3} parent=1 // pred_region
      %28 = vsyncadd [#allocation5], 0
      %s30 = sshll.u32 %s2, 4
      %s31 = int_to_ptr.hbm [resolvable:$true] %s30
      %s32 = sshll.u32 [#allocation4], 4
      %s33 = int_to_ptr.vmem [resolvable:$true] %s32
      %35 = dma.hbm_to_vmem [thread:$0]  %s31, 192, %s33, [#allocation5]
    $region13: #{self_attention_pallas.3} parent=1 // pred_fallthru
      _
    // Predicated region
    $region14: #{self_attention_pallas.3} parent=1 // pred_check
      _
    $region15: #{self_attention_pallas.3} parent=1 // pred_check_branch
      %37 = sbr.rel (0) target = $region17
    $region16: #{self_attention_pallas.3} parent=1 // pred_region
      %39 = dma.done [#allocation3], 49152
    $region17: #{self_attention_pallas.3} parent=1 // pred_fallthru
      _
    // Predicated region
    $region18: #{self_attention_pallas.3} parent=1 // pred_check
      _
    $region19: #{self_attention_pallas.3} parent=1 // pred_check_branch
      %41 = sbr.rel (0) target = $region21
    $region20: #{self_attention_pallas.3} parent=1 // pred_region
      %43 = dma.done [#allocation5], 192
    $region21: #{self_attention_pallas.3} parent=1 // pred_fallthru
      _
    %v44 = vld [vmem:[%s0] sm:$0xff]
    %v45 = vld [vmem:[%s0 + $0x8] sm:$0xff]
    %v46 = vld [vmem:[%s0 + $0x10] sm:$0xff]
    %v47 = vld [vmem:[%s0 + $0x18] sm:$0xff]
    %v48 = vld [vmem:[%s0 + $0x20] sm:$0xff]
    %v49 = vld [vmem:[%s0 + $0x28] sm:$0xff]
    %v50 = vld [vmem:[%s0 + $0x30] sm:$0xff]
    %v51 = vld [vmem:[%s0 + $0x38] sm:$0xff]
    %v52 = vld [vmem:[%s0 + $0x40] sm:$0xff]
    %v53 = vld [vmem:[%s0 + $0x48] sm:$0xff]
    %v54 = vld [vmem:[%s0 + $0x50] sm:$0xff]
    %v55 = vld [vmem:[%s0 + $0x58] sm:$0xff]
    %v56 = vld [vmem:[%s0 + $0x60] sm:$0xff]
    %v57 = vld [vmem:[%s0 + $0x68] sm:$0xff]
    %v58 = vld [vmem:[%s0 + $0x70] sm:$0xff]
    %v59 = vld [vmem:[%s0 + $0x78] sm:$0xff]
    %v60 = vld [vmem:[%s0 + $0x80] sm:$0xff]
    %v61 = vld [vmem:[%s0 + $0x88] sm:$0xff]
    %v62 = vld [vmem:[%s0 + $0x90] sm:$0xff]
    %v63 = vld [vmem:[%s0 + $0x98] sm:$0xff]
    %v64 = vld [vmem:[%s0 + $0xa0] sm:$0xff]
    %v65 = vld [vmem:[%s0 + $0xa8] sm:$0xff]
    %v66 = vld [vmem:[%s0 + $0xb0] sm:$0xff]
    %v67 = vld [vmem:[%s0 + $0xb8] sm:$0xff]
    %v68 = vld [vmem:[%s0 + $0xc0] sm:$0xff]
    %v69 = vld [vmem:[%s0 + $0xc8] sm:$0xff]
    %v70 = vld [vmem:[%s0 + $0xd0] sm:$0xff]
    %v71 = vld [vmem:[%s0 + $0xd8] sm:$0xff]
    %v72 = vld [vmem:[%s0 + $0xe0] sm:$0xff]
    %v73 = vld [vmem:[%s0 + $0xe8] sm:$0xff]
    %v74 = vld [vmem:[%s0 + $0xf0] sm:$0xff]
    %v75 = vld [vmem:[%s0 + $0xf8] sm:$0xff]
    %v76 = vld [vmem:[%s0 + $0x100] sm:$0xff]
    %v77 = vld [vmem:[%s0 + $0x108] sm:$0xff]
    %v78 = vld [vmem:[%s0 + $0x110] sm:$0xff]
    %v79 = vld [vmem:[%s0 + $0x118] sm:$0xff]
    %v80 = vld [vmem:[%s0 + $0x120] sm:$0xff]
    %v81 = vld [vmem:[%s0 + $0x128] sm:$0xff]
    %v82 = vld [vmem:[%s0 + $0x130] sm:$0xff]
    %v83 = vld [vmem:[%s0 + $0x138] sm:$0xff]
    %v84 = vld [vmem:[%s0 + $0x140] sm:$0xff]
    %v85 = vld [vmem:[%s0 + $0x148] sm:$0xff]
    %v86 = vld [vmem:[%s0 + $0x150] sm:$0xff]
    %v87 = vld [vmem:[%s0 + $0x158] sm:$0xff]
    %v88 = vld [vmem:[%s0 + $0x160] sm:$0xff]
    %v89 = vld [vmem:[%s0 + $0x168] sm:$0xff]
    %v90 = vld [vmem:[%s0 + $0x170] sm:$0xff]
    %v91 = vld [vmem:[%s0 + $0x178] sm:$0xff]
    %v92 = vld [vmem:[%s0 + $0x180] sm:$0xff]
    %v93 = vld [vmem:[%s0 + $0x188] sm:$0xff]
    %v94 = vld [vmem:[%s0 + $0x190] sm:$0xff]
    %v95 = vld [vmem:[%s0 + $0x198] sm:$0xff]
    %v96 = vld [vmem:[%s0 + $0x1a0] sm:$0xff]
    %v97 = vld [vmem:[%s0 + $0x1a8] sm:$0xff]
    %v98 = vld [vmem:[%s0 + $0x1b0] sm:$0xff]
    %v99 = vld [vmem:[%s0 + $0x1b8] sm:$0xff]
    %v100 = vld [vmem:[%s0 + $0x1c0] sm:$0xff]
    %v101 = vld [vmem:[%s0 + $0x1c8] sm:$0xff]
    %v102 = vld [vmem:[%s0 + $0x1d0] sm:$0xff]
    %v103 = vld [vmem:[%s0 + $0x1d8] sm:$0xff]
    %v104 = vld [vmem:[%s0 + $0x1e0] sm:$0xff]
    %v105 = vld [vmem:[%s0 + $0x1e8] sm:$0xff]
    %v106 = vld [vmem:[%s0 + $0x1f0] sm:$0xff]
    %v107 = vld [vmem:[%s0 + $0x1f8] sm:$0xff]
    %v108 = vld [vmem:[#allocation2] sm:$0xff]
    %v109 = vld [vmem:[#allocation2 + $0x8] sm:$0xff]
    %v110 = vld [vmem:[#allocation2 + $0x10] sm:$0xff]
    %v111 = vld [vmem:[#allocation2 + $0x18] sm:$0xff]
    %v112 = vld [vmem:[#allocation2 + $0x20] sm:$0xff]
    %v113 = vld [vmem:[#allocation2 + $0x28] sm:$0xff]
    %v114 = vld [vmem:[#allocation2 + $0x30] sm:$0xff]
    %v115 = vld [vmem:[#allocation2 + $0x38] sm:$0xff]
    %v116 = vld [vmem:[#allocation2 + $0x40] sm:$0xff]
    %v117 = vld [vmem:[#allocation2 + $0x48] sm:$0xff]
    %v118 = vld [vmem:[#allocation2 + $0x50] sm:$0xff]
    %v119 = vld [vmem:[#allocation2 + $0x58] sm:$0xff]
    %v120 = vld [vmem:[#allocation2 + $0x60] sm:$0xff]
    %v121 = vld [vmem:[#allocation2 + $0x68] sm:$0xff]
    %v122 = vld [vmem:[#allocation2 + $0x70] sm:$0xff]
    %v123 = vld [vmem:[#allocation2 + $0x78] sm:$0xff]
    %v124 = vld [vmem:[#allocation2 + $0x80] sm:$0xff]
    %v125 = vld [vmem:[#allocation2 + $0x88] sm:$0xff]
    %v126 = vld [vmem:[#allocation2 + $0x90] sm:$0xff]
    %v127 = vld [vmem:[#allocation2 + $0x98] sm:$0xff]
    %v128 = vld [vmem:[#allocation2 + $0xa0] sm:$0xff]
    %v129 = vld [vmem:[#allocation2 + $0xa8] sm:$0xff]
    %v130 = vld [vmem:[#allocation2 + $0xb0] sm:$0xff]
    %v131 = vld [vmem:[#allocation2 + $0xb8] sm:$0xff]
    %v132 = vld [vmem:[#allocation2 + $0xc0] sm:$0xff]
    %v133 = vld [vmem:[#allocation2 + $0xc8] sm:$0xff]
    %v134 = vld [vmem:[#allocation2 + $0xd0] sm:$0xff]
    %v135 = vld [vmem:[#allocation2 + $0xd8] sm:$0xff]
    %v136 = vld [vmem:[#allocation2 + $0xe0] sm:$0xff]
    %v137 = vld [vmem:[#allocation2 + $0xe8] sm:$0xff]
    %v138 = vld [vmem:[#allocation2 + $0xf0] sm:$0xff]
    %v139 = vld [vmem:[#allocation2 + $0xf8] sm:$0xff]
    %v140 = vld [vmem:[#allocation2 + $0x100] sm:$0xff]
    %v141 = vld [vmem:[#allocation2 + $0x108] sm:$0xff]
    %v142 = vld [vmem:[#allocation2 + $0x110] sm:$0xff]
    %v143 = vld [vmem:[#allocation2 + $0x118] sm:$0xff]
    %v144 = vld [vmem:[#allocation2 + $0x120] sm:$0xff]
    %v145 = vld [vmem:[#allocation2 + $0x128] sm:$0xff]
    %v146 = vld [vmem:[#allocation2 + $0x130] sm:$0xff]
    %v147 = vld [vmem:[#allocation2 + $0x138] sm:$0xff]
    %v148 = vld [vmem:[#allocation2 + $0x140] sm:$0xff]
    %v149 = vld [vmem:[#allocation2 + $0x148] sm:$0xff]
    %v150 = vld [vmem:[#allocation2 + $0x150] sm:$0xff]
    %v151 = vld [vmem:[#allocation2 + $0x158] sm:$0xff]
    %v152 = vld [vmem:[#allocation2 + $0x160] sm:$0xff]
    %v153 = vld [vmem:[#allocation2 + $0x168] sm:$0xff]
    %v154 = vld [vmem:[#allocation2 + $0x170] sm:$0xff]
    %v155 = vld [vmem:[#allocation2 + $0x178] sm:$0xff]
    %v156 = vld [vmem:[#allocation2 + $0x180] sm:$0xff]
    %v157 = vld [vmem:[#allocation2 + $0x188] sm:$0xff]
    %v158 = vld [vmem:[#allocation2 + $0x190] sm:$0xff]
    %v159 = vld [vmem:[#allocation2 + $0x198] sm:$0xff]
    %v160 = vld [vmem:[#allocation2 + $0x1a0] sm:$0xff]
    %v161 = vld [vmem:[#allocation2 + $0x1a8] sm:$0xff]
    %v162 = vld [vmem:[#allocation2 + $0x1b0] sm:$0xff]
    %v163 = vld [vmem:[#allocation2 + $0x1b8] sm:$0xff]
    %v164 = vld [vmem:[#allocation2 + $0x1c0] sm:$0xff]
    %v165 = vld [vmem:[#allocation2 + $0x1c8] sm:$0xff]
    %v166 = vld [vmem:[#allocation2 + $0x1d0] sm:$0xff]
    %v167 = vld [vmem:[#allocation2 + $0x1d8] sm:$0xff]
    %v168 = vld [vmem:[#allocation2 + $0x1e0] sm:$0xff]
    %v169 = vld [vmem:[#allocation2 + $0x1e8] sm:$0xff]
    %v170 = vld [vmem:[#allocation2 + $0x1f0] sm:$0xff]
    %v171 = vld [vmem:[#allocation2 + $0x1f8] sm:$0xff]
    %v172 = vld [vmem:[#allocation2 + $0x200] sm:$0xff]
    %v173 = vld [vmem:[#allocation2 + $0x208] sm:$0xff]
    %v174 = vld [vmem:[#allocation2 + $0x210] sm:$0xff]
    %v175 = vld [vmem:[#allocation2 + $0x218] sm:$0xff]
    %v176 = vld [vmem:[#allocation2 + $0x220] sm:$0xff]
    %v177 = vld [vmem:[#allocation2 + $0x228] sm:$0xff]
    %v178 = vld [vmem:[#allocation2 + $0x230] sm:$0xff]
    %v179 = vld [vmem:[#allocation2 + $0x238] sm:$0xff]
    %v180 = vld [vmem:[#allocation2 + $0x240] sm:$0xff]
    %v181 = vld [vmem:[#allocation2 + $0x248] sm:$0xff]
    %v182 = vld [vmem:[#allocation2 + $0x250] sm:$0xff]
    %v183 = vld [vmem:[#allocation2 + $0x258] sm:$0xff]
    %v184 = vld [vmem:[#allocation2 + $0x260] sm:$0xff]
    %v185 = vld [vmem:[#allocation2 + $0x268] sm:$0xff]
    %v186 = vld [vmem:[#allocation2 + $0x270] sm:$0xff]
    %v187 = vld [vmem:[#allocation2 + $0x278] sm:$0xff]
    %v188 = vld [vmem:[#allocation2 + $0x280] sm:$0xff]
    %v189 = vld [vmem:[#allocation2 + $0x288] sm:$0xff]
    %v190 = vld [vmem:[#allocation2 + $0x290] sm:$0xff]
    %v191 = vld [vmem:[#allocation2 + $0x298] sm:$0xff]
    %v192 = vld [vmem:[#allocation2 + $0x2a0] sm:$0xff]
    %v193 = vld [vmem:[#allocation2 + $0x2a8] sm:$0xff]
    %v194 = vld [vmem:[#allocation2 + $0x2b0] sm:$0xff]
    %v195 = vld [vmem:[#allocation2 + $0x2b8] sm:$0xff]
    %v196 = vld [vmem:[#allocation2 + $0x2c0] sm:$0xff]
    %v197 = vld [vmem:[#allocation2 + $0x2c8] sm:$0xff]
    %v198 = vld [vmem:[#allocation2 + $0x2d0] sm:$0xff]
    %v199 = vld [vmem:[#allocation2 + $0x2d8] sm:$0xff]
    %v200 = vld [vmem:[#allocation2 + $0x2e0] sm:$0xff]
    %v201 = vld [vmem:[#allocation2 + $0x2e8] sm:$0xff]
    %v202 = vld [vmem:[#allocation2 + $0x2f0] sm:$0xff]
    %v203 = vld [vmem:[#allocation2 + $0x2f8] sm:$0xff]
    %v204 = vld [vmem:[#allocation2 + $0x300] sm:$0xff]
    %v205 = vld [vmem:[#allocation2 + $0x308] sm:$0xff]
    %v206 = vld [vmem:[#allocation2 + $0x310] sm:$0xff]
    %v207 = vld [vmem:[#allocation2 + $0x318] sm:$0xff]
    %v208 = vld [vmem:[#allocation2 + $0x320] sm:$0xff]
    %v209 = vld [vmem:[#allocation2 + $0x328] sm:$0xff]
    %v210 = vld [vmem:[#allocation2 + $0x330] sm:$0xff]
    %v211 = vld [vmem:[#allocation2 + $0x338] sm:$0xff]
    %v212 = vld [vmem:[#allocation2 + $0x340] sm:$0xff]
    %v213 = vld [vmem:[#allocation2 + $0x348] sm:$0xff]
    %v214 = vld [vmem:[#allocation2 + $0x350] sm:$0xff]
    %v215 = vld [vmem:[#allocation2 + $0x358] sm:$0xff]
    %v216 = vld [vmem:[#allocation2 + $0x360] sm:$0xff]
    %v217 = vld [vmem:[#allocation2 + $0x368] sm:$0xff]
    %v218 = vld [vmem:[#allocation2 + $0x370] sm:$0xff]
    %v219 = vld [vmem:[#allocation2 + $0x378] sm:$0xff]
    %v220 = vld [vmem:[#allocation2 + $0x380] sm:$0xff]
    %v221 = vld [vmem:[#allocation2 + $0x388] sm:$0xff]
    %v222 = vld [vmem:[#allocation2 + $0x390] sm:$0xff]
    %v223 = vld [vmem:[#allocation2 + $0x398] sm:$0xff]
    %v224 = vld [vmem:[#allocation2 + $0x3a0] sm:$0xff]
    %v225 = vld [vmem:[#allocation2 + $0x3a8] sm:$0xff]
    %v226 = vld [vmem:[#allocation2 + $0x3b0] sm:$0xff]
    %v227 = vld [vmem:[#allocation2 + $0x3b8] sm:$0xff]
    %v228 = vld [vmem:[#allocation2 + $0x3c0] sm:$0xff]
    %v229 = vld [vmem:[#allocation2 + $0x3c8] sm:$0xff]
    %v230 = vld [vmem:[#allocation2 + $0x3d0] sm:$0xff]
    %v231 = vld [vmem:[#allocation2 + $0x3d8] sm:$0xff]
    %v232 = vld [vmem:[#allocation2 + $0x3e0] sm:$0xff]
    %v233 = vld [vmem:[#allocation2 + $0x3e8] sm:$0xff]
    %v234 = vld [vmem:[#allocation2 + $0x3f0] sm:$0xff]
    %v235 = vld [vmem:[#allocation2 + $0x3f8] sm:$0xff]
    %v236 = vld [vmem:[#allocation2 + $0x400] sm:$0xff]
    %v237 = vld [vmem:[#allocation2 + $0x408] sm:$0xff]
    %v238 = vld [vmem:[#allocation2 + $0x410] sm:$0xff]
    %v239 = vld [vmem:[#allocation2 + $0x418] sm:$0xff]
    %v240 = vld [vmem:[#allocation2 + $0x420] sm:$0xff]
    %v241 = vld [vmem:[#allocation2 + $0x428] sm:$0xff]
    %v242 = vld [vmem:[#allocation2 + $0x430] sm:$0xff]
    %v243 = vld [vmem:[#allocation2 + $0x438] sm:$0xff]
    %v244 = vld [vmem:[#allocation2 + $0x440] sm:$0xff]
    %v245 = vld [vmem:[#allocation2 + $0x448] sm:$0xff]
    %v246 = vld [vmem:[#allocation2 + $0x450] sm:$0xff]
    %v247 = vld [vmem:[#allocation2 + $0x458] sm:$0xff]
    %v248 = vld [vmem:[#allocation2 + $0x460] sm:$0xff]
    %v249 = vld [vmem:[#allocation2 + $0x468] sm:$0xff]
    %v250 = vld [vmem:[#allocation2 + $0x470] sm:$0xff]
    %v251 = vld [vmem:[#allocation2 + $0x478] sm:$0xff]
    %v252 = vld [vmem:[#allocation2 + $0x480] sm:$0xff]
    %v253 = vld [vmem:[#allocation2 + $0x488] sm:$0xff]
    %v254 = vld [vmem:[#allocation2 + $0x490] sm:$0xff]
    %v255 = vld [vmem:[#allocation2 + $0x498] sm:$0xff]
    %v256 = vld [vmem:[#allocation2 + $0x4a0] sm:$0xff]
    %v257 = vld [vmem:[#allocation2 + $0x4a8] sm:$0xff]
    %v258 = vld [vmem:[#allocation2 + $0x4b0] sm:$0xff]
    %v259 = vld [vmem:[#allocation2 + $0x4b8] sm:$0xff]
    %v260 = vld [vmem:[#allocation2 + $0x4c0] sm:$0xff]
    %v261 = vld [vmem:[#allocation2 + $0x4c8] sm:$0xff]
    %v262 = vld [vmem:[#allocation2 + $0x4d0] sm:$0xff]
    %v263 = vld [vmem:[#allocation2 + $0x4d8] sm:$0xff]
    %v264 = vld [vmem:[#allocation2 + $0x4e0] sm:$0xff]
    %v265 = vld [vmem:[#allocation2 + $0x4e8] sm:$0xff]
    %v266 = vld [vmem:[#allocation2 + $0x4f0] sm:$0xff]
    %v267 = vld [vmem:[#allocation2 + $0x4f8] sm:$0xff]
    %v268 = vld [vmem:[#allocation2 + $0x500] sm:$0xff]
    %v269 = vld [vmem:[#allocation2 + $0x508] sm:$0xff]
    %v270 = vld [vmem:[#allocation2 + $0x510] sm:$0xff]
    %v271 = vld [vmem:[#allocation2 + $0x518] sm:$0xff]
    %v272 = vld [vmem:[#allocation2 + $0x520] sm:$0xff]
    %v273 = vld [vmem:[#allocation2 + $0x528] sm:$0xff]
    %v274 = vld [vmem:[#allocation2 + $0x530] sm:$0xff]
    %v275 = vld [vmem:[#allocation2 + $0x538] sm:$0xff]
    %v276 = vld [vmem:[#allocation2 + $0x540] sm:$0xff]
    %v277 = vld [vmem:[#allocation2 + $0x548] sm:$0xff]
    %v278 = vld [vmem:[#allocation2 + $0x550] sm:$0xff]
    %v279 = vld [vmem:[#allocation2 + $0x558] sm:$0xff]
    %v280 = vld [vmem:[#allocation2 + $0x560] sm:$0xff]
    %v281 = vld [vmem:[#allocation2 + $0x568] sm:$0xff]
    %v282 = vld [vmem:[#allocation2 + $0x570] sm:$0xff]
    %v283 = vld [vmem:[#allocation2 + $0x578] sm:$0xff]
    %v284 = vld [vmem:[#allocation2 + $0x580] sm:$0xff]
    %v285 = vld [vmem:[#allocation2 + $0x588] sm:$0xff]
    %v286 = vld [vmem:[#allocation2 + $0x590] sm:$0xff]
    %v287 = vld [vmem:[#allocation2 + $0x598] sm:$0xff]
    %v288 = vld [vmem:[#allocation2 + $0x5a0] sm:$0xff]
    %v289 = vld [vmem:[#allocation2 + $0x5a8] sm:$0xff]
    %v290 = vld [vmem:[#allocation2 + $0x5b0] sm:$0xff]
    %v291 = vld [vmem:[#allocation2 + $0x5b8] sm:$0xff]
    %v292 = vld [vmem:[#allocation2 + $0x5c0] sm:$0xff]
    %v293 = vld [vmem:[#allocation2 + $0x5c8] sm:$0xff]
    %v294 = vld [vmem:[#allocation2 + $0x5d0] sm:$0xff]
    %v295 = vld [vmem:[#allocation2 + $0x5d8] sm:$0xff]
    %v296 = vld [vmem:[#allocation2 + $0x5e0] sm:$0xff]
    %v297 = vld [vmem:[#allocation2 + $0x5e8] sm:$0xff]
    %v298 = vld [vmem:[#allocation2 + $0x5f0] sm:$0xff]
    %v299 = vld [vmem:[#allocation2 + $0x5f8] sm:$0xff]
    %v300 = vld [vmem:[#allocation2 + $0x600] sm:$0xff]
    %v301 = vld [vmem:[#allocation2 + $0x608] sm:$0xff]
    %v302 = vld [vmem:[#allocation2 + $0x610] sm:$0xff]
    %v303 = vld [vmem:[#allocation2 + $0x618] sm:$0xff]
    %v304 = vld [vmem:[#allocation2 + $0x620] sm:$0xff]
    %v305 = vld [vmem:[#allocation2 + $0x628] sm:$0xff]
    %v306 = vld [vmem:[#allocation2 + $0x630] sm:$0xff]
    %v307 = vld [vmem:[#allocation2 + $0x638] sm:$0xff]
    %v308 = vld [vmem:[#allocation2 + $0x640] sm:$0xff]
    %v309 = vld [vmem:[#allocation2 + $0x648] sm:$0xff]
    %v310 = vld [vmem:[#allocation2 + $0x650] sm:$0xff]
    %v311 = vld [vmem:[#allocation2 + $0x658] sm:$0xff]
    %v312 = vld [vmem:[#allocation2 + $0x660] sm:$0xff]
    %v313 = vld [vmem:[#allocation2 + $0x668] sm:$0xff]
    %v314 = vld [vmem:[#allocation2 + $0x670] sm:$0xff]
    %v315 = vld [vmem:[#allocation2 + $0x678] sm:$0xff]
    %v316 = vld [vmem:[#allocation2 + $0x680] sm:$0xff]
    %v317 = vld [vmem:[#allocation2 + $0x688] sm:$0xff]
    %v318 = vld [vmem:[#allocation2 + $0x690] sm:$0xff]
    %v319 = vld [vmem:[#allocation2 + $0x698] sm:$0xff]
    %v320 = vld [vmem:[#allocation2 + $0x6a0] sm:$0xff]
    %v321 = vld [vmem:[#allocation2 + $0x6a8] sm:$0xff]
    %v322 = vld [vmem:[#allocation2 + $0x6b0] sm:$0xff]
    %v323 = vld [vmem:[#allocation2 + $0x6b8] sm:$0xff]
    %v324 = vld [vmem:[#allocation2 + $0x6c0] sm:$0xff]
    %v325 = vld [vmem:[#allocation2 + $0x6c8] sm:$0xff]
    %v326 = vld [vmem:[#allocation2 + $0x6d0] sm:$0xff]
    %v327 = vld [vmem:[#allocation2 + $0x6d8] sm:$0xff]
    %v328 = vld [vmem:[#allocation2 + $0x6e0] sm:$0xff]
    %v329 = vld [vmem:[#allocation2 + $0x6e8] sm:$0xff]
    %v330 = vld [vmem:[#allocation2 + $0x6f0] sm:$0xff]
    %v331 = vld [vmem:[#allocation2 + $0x6f8] sm:$0xff]
    %v332 = vld [vmem:[#allocation2 + $0x700] sm:$0xff]
    %v333 = vld [vmem:[#allocation2 + $0x708] sm:$0xff]
    %v334 = vld [vmem:[#allocation2 + $0x710] sm:$0xff]
    %v335 = vld [vmem:[#allocation2 + $0x718] sm:$0xff]
    %v336 = vld [vmem:[#allocation2 + $0x720] sm:$0xff]
    %v337 = vld [vmem:[#allocation2 + $0x728] sm:$0xff]
    %v338 = vld [vmem:[#allocation2 + $0x730] sm:$0xff]
    %v339 = vld [vmem:[#allocation2 + $0x738] sm:$0xff]
    %v340 = vld [vmem:[#allocation2 + $0x740] sm:$0xff]
    %v341 = vld [vmem:[#allocation2 + $0x748] sm:$0xff]
    %v342 = vld [vmem:[#allocation2 + $0x750] sm:$0xff]
    %v343 = vld [vmem:[#allocation2 + $0x758] sm:$0xff]
    %v344 = vld [vmem:[#allocation2 + $0x760] sm:$0xff]
    %v345 = vld [vmem:[#allocation2 + $0x768] sm:$0xff]
    %v346 = vld [vmem:[#allocation2 + $0x770] sm:$0xff]
    %v347 = vld [vmem:[#allocation2 + $0x778] sm:$0xff]
    %v348 = vld [vmem:[#allocation2 + $0x780] sm:$0xff]
    %v349 = vld [vmem:[#allocation2 + $0x788] sm:$0xff]
    %v350 = vld [vmem:[#allocation2 + $0x790] sm:$0xff]
    %v351 = vld [vmem:[#allocation2 + $0x798] sm:$0xff]
    %v352 = vld [vmem:[#allocation2 + $0x7a0] sm:$0xff]
    %v353 = vld [vmem:[#allocation2 + $0x7a8] sm:$0xff]
    %v354 = vld [vmem:[#allocation2 + $0x7b0] sm:$0xff]
    %v355 = vld [vmem:[#allocation2 + $0x7b8] sm:$0xff]
    %v356 = vld [vmem:[#allocation2 + $0x7c0] sm:$0xff]
    %v357 = vld [vmem:[#allocation2 + $0x7c8] sm:$0xff]
    %v358 = vld [vmem:[#allocation2 + $0x7d0] sm:$0xff]
    %v359 = vld [vmem:[#allocation2 + $0x7d8] sm:$0xff]
    %v360 = vld [vmem:[#allocation2 + $0x7e0] sm:$0xff]
    %v361 = vld [vmem:[#allocation2 + $0x7e8] sm:$0xff]
    %v362 = vld [vmem:[#allocation2 + $0x7f0] sm:$0xff]
    %v363 = vld [vmem:[#allocation2 + $0x7f8] sm:$0xff]
    %v364 = vld [vmem:[#allocation2 + $0x800] sm:$0xff]
    %v365 = vld [vmem:[#allocation2 + $0x808] sm:$0xff]
    %v366 = vld [vmem:[#allocation2 + $0x810] sm:$0xff]
    %v367 = vld [vmem:[#allocation2 + $0x818] sm:$0xff]
    %v368 = vld [vmem:[#allocation2 + $0x820] sm:$0xff]
    %v369 = vld [vmem:[#allocation2 + $0x828] sm:$0xff]
    %v370 = vld [vmem:[#allocation2 + $0x830] sm:$0xff]
    %v371 = vld [vmem:[#allocation2 + $0x838] sm:$0xff]
    %v372 = vld [vmem:[#allocation2 + $0x840] sm:$0xff]
    %v373 = vld [vmem:[#allocation2 + $0x848] sm:$0xff]
    %v374 = vld [vmem:[#allocation2 + $0x850] sm:$0xff]
    %v375 = vld [vmem:[#allocation2 + $0x858] sm:$0xff]
    %v376 = vld [vmem:[#allocation2 + $0x860] sm:$0xff]
    %v377 = vld [vmem:[#allocation2 + $0x868] sm:$0xff]
    %v378 = vld [vmem:[#allocation2 + $0x870] sm:$0xff]
    %v379 = vld [vmem:[#allocation2 + $0x878] sm:$0xff]
    %v380 = vld [vmem:[#allocation2 + $0x880] sm:$0xff]
    %v381 = vld [vmem:[#allocation2 + $0x888] sm:$0xff]
    %v382 = vld [vmem:[#allocation2 + $0x890] sm:$0xff]
    %v383 = vld [vmem:[#allocation2 + $0x898] sm:$0xff]
    %v384 = vld [vmem:[#allocation2 + $0x8a0] sm:$0xff]
    %v385 = vld [vmem:[#allocation2 + $0x8a8] sm:$0xff]
    %v386 = vld [vmem:[#allocation2 + $0x8b0] sm:$0xff]
    %v387 = vld [vmem:[#allocation2 + $0x8b8] sm:$0xff]
    %v388 = vld [vmem:[#allocation2 + $0x8c0] sm:$0xff]
    %v389 = vld [vmem:[#allocation2 + $0x8c8] sm:$0xff]
    %v390 = vld [vmem:[#allocation2 + $0x8d0] sm:$0xff]
    %v391 = vld [vmem:[#allocation2 + $0x8d8] sm:$0xff]
    %v392 = vld [vmem:[#allocation2 + $0x8e0] sm:$0xff]
    %v393 = vld [vmem:[#allocation2 + $0x8e8] sm:$0xff]
    %v394 = vld [vmem:[#allocation2 + $0x8f0] sm:$0xff]
    %v395 = vld [vmem:[#allocation2 + $0x8f8] sm:$0xff]
    %v396 = vld [vmem:[#allocation2 + $0x900] sm:$0xff]
    %v397 = vld [vmem:[#allocation2 + $0x908] sm:$0xff]
    %v398 = vld [vmem:[#allocation2 + $0x910] sm:$0xff]
    %v399 = vld [vmem:[#allocation2 + $0x918] sm:$0xff]
    %v400 = vld [vmem:[#allocation2 + $0x920] sm:$0xff]
    %v401 = vld [vmem:[#allocation2 + $0x928] sm:$0xff]
    %v402 = vld [vmem:[#allocation2 + $0x930] sm:$0xff]
    %v403 = vld [vmem:[#allocation2 + $0x938] sm:$0xff]
    %v404 = vld [vmem:[#allocation2 + $0x940] sm:$0xff]
    %v405 = vld [vmem:[#allocation2 + $0x948] sm:$0xff]
    %v406 = vld [vmem:[#allocation2 + $0x950] sm:$0xff]
    %v407 = vld [vmem:[#allocation2 + $0x958] sm:$0xff]
    %v408 = vld [vmem:[#allocation2 + $0x960] sm:$0xff]
    %v409 = vld [vmem:[#allocation2 + $0x968] sm:$0xff]
    %v410 = vld [vmem:[#allocation2 + $0x970] sm:$0xff]
    %v411 = vld [vmem:[#allocation2 + $0x978] sm:$0xff]
    %v412 = vld [vmem:[#allocation2 + $0x980] sm:$0xff]
    %v413 = vld [vmem:[#allocation2 + $0x988] sm:$0xff]
    %v414 = vld [vmem:[#allocation2 + $0x990] sm:$0xff]
    %v415 = vld [vmem:[#allocation2 + $0x998] sm:$0xff]
    %v416 = vld [vmem:[#allocation2 + $0x9a0] sm:$0xff]
    %v417 = vld [vmem:[#allocation2 + $0x9a8] sm:$0xff]
    %v418 = vld [vmem:[#allocation2 + $0x9b0] sm:$0xff]
    %v419 = vld [vmem:[#allocation2 + $0x9b8] sm:$0xff]
    %v420 = vld [vmem:[#allocation2 + $0x9c0] sm:$0xff]
    %v421 = vld [vmem:[#allocation2 + $0x9c8] sm:$0xff]
    %v422 = vld [vmem:[#allocation2 + $0x9d0] sm:$0xff]
    %v423 = vld [vmem:[#allocation2 + $0x9d8] sm:$0xff]
    %v424 = vld [vmem:[#allocation2 + $0x9e0] sm:$0xff]
    %v425 = vld [vmem:[#allocation2 + $0x9e8] sm:$0xff]
    %v426 = vld [vmem:[#allocation2 + $0x9f0] sm:$0xff]
    %v427 = vld [vmem:[#allocation2 + $0x9f8] sm:$0xff]
    %v428 = vld [vmem:[#allocation2 + $0xa00] sm:$0xff]
    %v429 = vld [vmem:[#allocation2 + $0xa08] sm:$0xff]
    %v430 = vld [vmem:[#allocation2 + $0xa10] sm:$0xff]
    %v431 = vld [vmem:[#allocation2 + $0xa18] sm:$0xff]
    %v432 = vld [vmem:[#allocation2 + $0xa20] sm:$0xff]
    %v433 = vld [vmem:[#allocation2 + $0xa28] sm:$0xff]
    %v434 = vld [vmem:[#allocation2 + $0xa30] sm:$0xff]
    %v435 = vld [vmem:[#allocation2 + $0xa38] sm:$0xff]
    %v436 = vld [vmem:[#allocation2 + $0xa40] sm:$0xff]
    %v437 = vld [vmem:[#allocation2 + $0xa48] sm:$0xff]
    %v438 = vld [vmem:[#allocation2 + $0xa50] sm:$0xff]
    %v439 = vld [vmem:[#allocation2 + $0xa58] sm:$0xff]
    %v440 = vld [vmem:[#allocation2 + $0xa60] sm:$0xff]
    %v441 = vld [vmem:[#allocation2 + $0xa68] sm:$0xff]
    %v442 = vld [vmem:[#allocation2 + $0xa70] sm:$0xff]
    %v443 = vld [vmem:[#allocation2 + $0xa78] sm:$0xff]
    %v444 = vld [vmem:[#allocation2 + $0xa80] sm:$0xff]
    %v445 = vld [vmem:[#allocation2 + $0xa88] sm:$0xff]
    %v446 = vld [vmem:[#allocation2 + $0xa90] sm:$0xff]
    %v447 = vld [vmem:[#allocation2 + $0xa98] sm:$0xff]
    %v448 = vld [vmem:[#allocation2 + $0xaa0] sm:$0xff]
    %v449 = vld [vmem:[#allocation2 + $0xaa8] sm:$0xff]
    %v450 = vld [vmem:[#allocation2 + $0xab0] sm:$0xff]
    %v451 = vld [vmem:[#allocation2 + $0xab8] sm:$0xff]
    %v452 = vld [vmem:[#allocation2 + $0xac0] sm:$0xff]
    %v453 = vld [vmem:[#allocation2 + $0xac8] sm:$0xff]
    %v454 = vld [vmem:[#allocation2 + $0xad0] sm:$0xff]
    %v455 = vld [vmem:[#allocation2 + $0xad8] sm:$0xff]
    %v456 = vld [vmem:[#allocation2 + $0xae0] sm:$0xff]
    %v457 = vld [vmem:[#allocation2 + $0xae8] sm:$0xff]
    %v458 = vld [vmem:[#allocation2 + $0xaf0] sm:$0xff]
    %v459 = vld [vmem:[#allocation2 + $0xaf8] sm:$0xff]
    %v460 = vld [vmem:[#allocation2 + $0xb00] sm:$0xff]
    %v461 = vld [vmem:[#allocation2 + $0xb08] sm:$0xff]
    %v462 = vld [vmem:[#allocation2 + $0xb10] sm:$0xff]
    %v463 = vld [vmem:[#allocation2 + $0xb18] sm:$0xff]
    %v464 = vld [vmem:[#allocation2 + $0xb20] sm:$0xff]
    %v465 = vld [vmem:[#allocation2 + $0xb28] sm:$0xff]
    %v466 = vld [vmem:[#allocation2 + $0xb30] sm:$0xff]
    %v467 = vld [vmem:[#allocation2 + $0xb38] sm:$0xff]
    %v468 = vld [vmem:[#allocation2 + $0xb40] sm:$0xff]
    %v469 = vld [vmem:[#allocation2 + $0xb48] sm:$0xff]
    %v470 = vld [vmem:[#allocation2 + $0xb50] sm:$0xff]
    %v471 = vld [vmem:[#allocation2 + $0xb58] sm:$0xff]
    %v472 = vld [vmem:[#allocation2 + $0xb60] sm:$0xff]
    %v473 = vld [vmem:[#allocation2 + $0xb68] sm:$0xff]
    %v474 = vld [vmem:[#allocation2 + $0xb70] sm:$0xff]
    %v475 = vld [vmem:[#allocation2 + $0xb78] sm:$0xff]
    %v476 = vld [vmem:[#allocation2 + $0xb80] sm:$0xff]
    %v477 = vld [vmem:[#allocation2 + $0xb88] sm:$0xff]
    %v478 = vld [vmem:[#allocation2 + $0xb90] sm:$0xff]
    %v479 = vld [vmem:[#allocation2 + $0xb98] sm:$0xff]
    %v480 = vld [vmem:[#allocation2 + $0xba0] sm:$0xff]
    %v481 = vld [vmem:[#allocation2 + $0xba8] sm:$0xff]
    %v482 = vld [vmem:[#allocation2 + $0xbb0] sm:$0xff]
    %v483 = vld [vmem:[#allocation2 + $0xbb8] sm:$0xff]
    %v484 = vld [vmem:[#allocation2 + $0xbc0] sm:$0xff]
    %v485 = vld [vmem:[#allocation2 + $0xbc8] sm:$0xff]
    %v486 = vld [vmem:[#allocation2 + $0xbd0] sm:$0xff]
    %v487 = vld [vmem:[#allocation2 + $0xbd8] sm:$0xff]
    %v488 = vld [vmem:[#allocation2 + $0xbe0] sm:$0xff]
    %v489 = vld [vmem:[#allocation2 + $0xbe8] sm:$0xff]
    %v490 = vld [vmem:[#allocation2 + $0xbf0] sm:$0xff]
    %v491 = vld [vmem:[#allocation2 + $0xbf8] sm:$0xff]
    %v492 = vld [vmem:[#allocation4] sm:$0xff]
    %v493 = vld [vmem:[#allocation4 + $0x8] sm:$0xf]
    %v496 = vperm.slane %v492, 0
    %v497 = vperm.slane %v492, 1
    %v498 = vperm.slane %v492, 2
    %v499 = vperm.slane %v492, 3
    %v500 = vperm.slane %v492, 4
    %v501 = vperm.slane %v492, 5
    %v502 = vperm.slane %v492, 6
    %v503 = vperm.slane %v492, 7
    %v504 = vperm.slane %v493, 0
    %v505 = vperm.slane %v493, 1
    %v506 = vperm.slane %v493, 2
    %v507 = vperm.slane %v493, 3
    %v584 = vunpack.c.l.b16 %v44
    %v585 = vunpack.c.h.b16 %v44
    %v586 = vunpack.c.l.b16 %v45
    %v587 = vunpack.c.h.b16 %v45
    %v588 = vunpack.c.l.b16 %v46
    %v589 = vunpack.c.h.b16 %v46
    %v590 = vunpack.c.l.b16 %v47
    %v591 = vunpack.c.h.b16 %v47
    %v592 = vunpack.c.l.b16 %v48
    %v593 = vunpack.c.h.b16 %v48
    %v594 = vunpack.c.l.b16 %v49
    %v595 = vunpack.c.h.b16 %v49
    %v596 = vunpack.c.l.b16 %v50
    %v597 = vunpack.c.h.b16 %v50
    %v598 = vunpack.c.l.b16 %v51
    %v599 = vunpack.c.h.b16 %v51
    %v600 = vunpack.c.l.b16 %v52
    %v601 = vunpack.c.h.b16 %v52
    %v602 = vunpack.c.l.b16 %v53
    %v603 = vunpack.c.h.b16 %v53
    %v604 = vunpack.c.l.b16 %v54
    %v605 = vunpack.c.h.b16 %v54
    %v606 = vunpack.c.l.b16 %v55
    %v607 = vunpack.c.h.b16 %v55
    %v608 = vunpack.c.l.b16 %v56
    %v609 = vunpack.c.h.b16 %v56
    %v610 = vunpack.c.l.b16 %v57
    %v611 = vunpack.c.h.b16 %v57
    %v612 = vunpack.c.l.b16 %v58
    %v613 = vunpack.c.h.b16 %v58
    %v614 = vunpack.c.l.b16 %v59
    %v615 = vunpack.c.h.b16 %v59
    %v616 = vunpack.c.l.b16 %v60
    %v617 = vunpack.c.h.b16 %v60
    %v618 = vunpack.c.l.b16 %v61
    %v619 = vunpack.c.h.b16 %v61
    %v620 = vunpack.c.l.b16 %v62
    %v621 = vunpack.c.h.b16 %v62
    %v622 = vunpack.c.l.b16 %v63
    %v623 = vunpack.c.h.b16 %v63
    %v624 = vunpack.c.l.b16 %v64
    %v625 = vunpack.c.h.b16 %v64
    %v626 = vunpack.c.l.b16 %v65
    %v627 = vunpack.c.h.b16 %v65
    %v628 = vunpack.c.l.b16 %v66
    %v629 = vunpack.c.h.b16 %v66
    %v630 = vunpack.c.l.b16 %v67
    %v631 = vunpack.c.h.b16 %v67
    %v632 = vunpack.c.l.b16 %v68
    %v633 = vunpack.c.h.b16 %v68
    %v634 = vunpack.c.l.b16 %v69
    %v635 = vunpack.c.h.b16 %v69
    %v636 = vunpack.c.l.b16 %v70
    %v637 = vunpack.c.h.b16 %v70
    %v638 = vunpack.c.l.b16 %v71
    %v639 = vunpack.c.h.b16 %v71
    %v640 = vunpack.c.l.b16 %v72
    %v641 = vunpack.c.h.b16 %v72
    %v642 = vunpack.c.l.b16 %v73
    %v643 = vunpack.c.h.b16 %v73
    %v644 = vunpack.c.l.b16 %v74
    %v645 = vunpack.c.h.b16 %v74
    %v646 = vunpack.c.l.b16 %v75
    %v647 = vunpack.c.h.b16 %v75
    %v648 = vunpack.c.l.b16 %v76
    %v649 = vunpack.c.h.b16 %v76
    %v650 = vunpack.c.l.b16 %v77
    %v651 = vunpack.c.h.b16 %v77
    %v652 = vunpack.c.l.b16 %v78
    %v653 = vunpack.c.h.b16 %v78
    %v654 = vunpack.c.l.b16 %v79
    %v655 = vunpack.c.h.b16 %v79
    %v656 = vunpack.c.l.b16 %v80
    %v657 = vunpack.c.h.b16 %v80
    %v658 = vunpack.c.l.b16 %v81
    %v659 = vunpack.c.h.b16 %v81
    %v660 = vunpack.c.l.b16 %v82
    %v661 = vunpack.c.h.b16 %v82
    %v662 = vunpack.c.l.b16 %v83
    %v663 = vunpack.c.h.b16 %v83
    %v664 = vunpack.c.l.b16 %v84
    %v665 = vunpack.c.h.b16 %v84
    %v666 = vunpack.c.l.b16 %v85
    %v667 = vunpack.c.h.b16 %v85
    %v668 = vunpack.c.l.b16 %v86
    %v669 = vunpack.c.h.b16 %v86
    %v670 = vunpack.c.l.b16 %v87
    %v671 = vunpack.c.h.b16 %v87
    %v672 = vunpack.c.l.b16 %v88
    %v673 = vunpack.c.h.b16 %v88
    %v674 = vunpack.c.l.b16 %v89
    %v675 = vunpack.c.h.b16 %v89
    %v676 = vunpack.c.l.b16 %v90
    %v677 = vunpack.c.h.b16 %v90
    %v678 = vunpack.c.l.b16 %v91
    %v679 = vunpack.c.h.b16 %v91
    %v680 = vunpack.c.l.b16 %v92
    %v681 = vunpack.c.h.b16 %v92
    %v682 = vunpack.c.l.b16 %v93
    %v683 = vunpack.c.h.b16 %v93
    %v684 = vunpack.c.l.b16 %v94
    %v685 = vunpack.c.h.b16 %v94
    %v686 = vunpack.c.l.b16 %v95
    %v687 = vunpack.c.h.b16 %v95
    %v688 = vunpack.c.l.b16 %v96
    %v689 = vunpack.c.h.b16 %v96
    %v690 = vunpack.c.l.b16 %v97
    %v691 = vunpack.c.h.b16 %v97
    %v692 = vunpack.c.l.b16 %v98
    %v693 = vunpack.c.h.b16 %v98
    %v694 = vunpack.c.l.b16 %v99
    %v695 = vunpack.c.h.b16 %v99
    %v696 = vunpack.c.l.b16 %v100
    %v697 = vunpack.c.h.b16 %v100
    %v698 = vunpack.c.l.b16 %v101
    %v699 = vunpack.c.h.b16 %v101
    %v700 = vunpack.c.l.b16 %v102
    %v701 = vunpack.c.h.b16 %v102
    %v702 = vunpack.c.l.b16 %v103
    %v703 = vunpack.c.h.b16 %v103
    %v704 = vunpack.c.l.b16 %v104
    %v705 = vunpack.c.h.b16 %v104
    %v706 = vunpack.c.l.b16 %v105
    %v707 = vunpack.c.h.b16 %v105
    %v708 = vunpack.c.l.b16 %v106
    %v709 = vunpack.c.h.b16 %v106
    %v710 = vunpack.c.l.b16 %v107
    %v711 = vunpack.c.h.b16 %v107
    %v712 = vpack.c.b16 %v588, %v584
    %v713 = vpack.c.b16 %v589, %v585
    %v714 = vpack.c.b16 %v590, %v586
    %v715 = vpack.c.b16 %v591, %v587
    %v716 = vpack.c.b16 %v596, %v592
    %v717 = vpack.c.b16 %v597, %v593
    %v718 = vpack.c.b16 %v598, %v594
    %v719 = vpack.c.b16 %v599, %v595
    %v720 = vpack.c.b16 %v604, %v600
    %v721 = vpack.c.b16 %v605, %v601
    %v722 = vpack.c.b16 %v606, %v602
    %v723 = vpack.c.b16 %v607, %v603
    %v724 = vpack.c.b16 %v612, %v608
    %v725 = vpack.c.b16 %v613, %v609
    %v726 = vpack.c.b16 %v614, %v610
    %v727 = vpack.c.b16 %v615, %v611
    %v728 = vpack.c.b16 %v620, %v616
    %v729 = vpack.c.b16 %v621, %v617
    %v730 = vpack.c.b16 %v622, %v618
    %v731 = vpack.c.b16 %v623, %v619
    %v732 = vpack.c.b16 %v628, %v624
    %v733 = vpack.c.b16 %v629, %v625
    %v734 = vpack.c.b16 %v630, %v626
    %v735 = vpack.c.b16 %v631, %v627
    %v736 = vpack.c.b16 %v636, %v632
    %v737 = vpack.c.b16 %v637, %v633
    %v738 = vpack.c.b16 %v638, %v634
    %v739 = vpack.c.b16 %v639, %v635
    %v740 = vpack.c.b16 %v644, %v640
    %v741 = vpack.c.b16 %v645, %v641
    %v742 = vpack.c.b16 %v646, %v642
    %v743 = vpack.c.b16 %v647, %v643
    %v744 = vpack.c.b16 %v652, %v648
    %v745 = vpack.c.b16 %v653, %v649
    %v746 = vpack.c.b16 %v654, %v650
    %v747 = vpack.c.b16 %v655, %v651
    %v748 = vpack.c.b16 %v660, %v656
    %v749 = vpack.c.b16 %v661, %v657
    %v750 = vpack.c.b16 %v662, %v658
    %v751 = vpack.c.b16 %v663, %v659
    %v752 = vpack.c.b16 %v668, %v664
    %v753 = vpack.c.b16 %v669, %v665
    %v754 = vpack.c.b16 %v670, %v666
    %v755 = vpack.c.b16 %v671, %v667
    %v756 = vpack.c.b16 %v676, %v672
    %v757 = vpack.c.b16 %v677, %v673
    %v758 = vpack.c.b16 %v678, %v674
    %v759 = vpack.c.b16 %v679, %v675
    %v760 = vpack.c.b16 %v684, %v680
    %v761 = vpack.c.b16 %v685, %v681
    %v762 = vpack.c.b16 %v686, %v682
    %v763 = vpack.c.b16 %v687, %v683
    %v764 = vpack.c.b16 %v692, %v688
    %v765 = vpack.c.b16 %v693, %v689
    %v766 = vpack.c.b16 %v694, %v690
    %v767 = vpack.c.b16 %v695, %v691
    %v768 = vpack.c.b16 %v700, %v696
    %v769 = vpack.c.b16 %v701, %v697
    %v770 = vpack.c.b16 %v702, %v698
    %v771 = vpack.c.b16 %v703, %v699
    %v772 = vpack.c.b16 %v708, %v704
    %v773 = vpack.c.b16 %v709, %v705
    %v774 = vpack.c.b16 %v710, %v706
    %v775 = vpack.c.b16 %v711, %v707
    %v1224 = vunpack.c.l.b16 %v108
    %v1225 = vunpack.c.h.b16 %v108
    %v1226 = vunpack.c.l.b16 %v109
    %v1227 = vunpack.c.h.b16 %v109
    %v1228 = vunpack.c.l.b16 %v110
    %v1229 = vunpack.c.h.b16 %v110
    %v1230 = vunpack.c.l.b16 %v111
    %v1231 = vunpack.c.h.b16 %v111
    %v1232 = vunpack.c.l.b16 %v112
    %v1233 = vunpack.c.h.b16 %v112
    %v1234 = vunpack.c.l.b16 %v113
    %v1235 = vunpack.c.h.b16 %v113
    %v1236 = vunpack.c.l.b16 %v114
    %v1237 = vunpack.c.h.b16 %v114
    %v1238 = vunpack.c.l.b16 %v115
    %v1239 = vunpack.c.h.b16 %v115
    %v1240 = vunpack.c.l.b16 %v116
    %v1241 = vunpack.c.h.b16 %v116
    %v1242 = vunpack.c.l.b16 %v117
    %v1243 = vunpack.c.h.b16 %v117
    %v1244 = vunpack.c.l.b16 %v118
    %v1245 = vunpack.c.h.b16 %v118
    %v1246 = vunpack.c.l.b16 %v119
    %v1247 = vunpack.c.h.b16 %v119
    %v1248 = vunpack.c.l.b16 %v120
    %v1249 = vunpack.c.h.b16 %v120
    %v1250 = vunpack.c.l.b16 %v121
    %v1251 = vunpack.c.h.b16 %v121
    %v1252 = vunpack.c.l.b16 %v122
    %v1253 = vunpack.c.h.b16 %v122
    %v1254 = vunpack.c.l.b16 %v123
    %v1255 = vunpack.c.h.b16 %v123
    %v1256 = vunpack.c.l.b16 %v124
    %v1257 = vunpack.c.h.b16 %v124
    %v1258 = vunpack.c.l.b16 %v125
    %v1259 = vunpack.c.h.b16 %v125
    %v1260 = vunpack.c.l.b16 %v126
    %v1261 = vunpack.c.h.b16 %v126
    %v1262 = vunpack.c.l.b16 %v127
    %v1263 = vunpack.c.h.b16 %v127
    %v1264 = vunpack.c.l.b16 %v128
    %v1265 = vunpack.c.h.b16 %v128
    %v1266 = vunpack.c.l.b16 %v129
    %v1267 = vunpack.c.h.b16 %v129
    %v1268 = vunpack.c.l.b16 %v130
    %v1269 = vunpack.c.h.b16 %v130
    %v1270 = vunpack.c.l.b16 %v131
    %v1271 = vunpack.c.h.b16 %v131
    %v1272 = vunpack.c.l.b16 %v132
    %v1273 = vunpack.c.h.b16 %v132
    %v1274 = vunpack.c.l.b16 %v133
    %v1275 = vunpack.c.h.b16 %v133
    %v1276 = vunpack.c.l.b16 %v134
    %v1277 = vunpack.c.h.b16 %v134
    %v1278 = vunpack.c.l.b16 %v135
    %v1279 = vunpack.c.h.b16 %v135
    %v1280 = vunpack.c.l.b16 %v136
    %v1281 = vunpack.c.h.b16 %v136
    %v1282 = vunpack.c.l.b16 %v137
    %v1283 = vunpack.c.h.b16 %v137
    %v1284 = vunpack.c.l.b16 %v138
    %v1285 = vunpack.c.h.b16 %v138
    %v1286 = vunpack.c.l.b16 %v139
    %v1287 = vunpack.c.h.b16 %v139
    %v1288 = vunpack.c.l.b16 %v140
    %v1289 = vunpack.c.h.b16 %v140
    %v1290 = vunpack.c.l.b16 %v141
    %v1291 = vunpack.c.h.b16 %v141
    %v1292 = vunpack.c.l.b16 %v142
    %v1293 = vunpack.c.h.b16 %v142
    %v1294 = vunpack.c.l.b16 %v143
    %v1295 = vunpack.c.h.b16 %v143
    %v1296 = vunpack.c.l.b16 %v144
    %v1297 = vunpack.c.h.b16 %v144
    %v1298 = vunpack.c.l.b16 %v145
    %v1299 = vunpack.c.h.b16 %v145
    %v1300 = vunpack.c.l.b16 %v146
    %v1301 = vunpack.c.h.b16 %v146
    %v1302 = vunpack.c.l.b16 %v147
    %v1303 = vunpack.c.h.b16 %v147
    %v1304 = vunpack.c.l.b16 %v148
    %v1305 = vunpack.c.h.b16 %v148
    %v1306 = vunpack.c.l.b16 %v149
    %v1307 = vunpack.c.h.b16 %v149
    %v1308 = vunpack.c.l.b16 %v150
    %v1309 = vunpack.c.h.b16 %v150
    %v1310 = vunpack.c.l.b16 %v151
    %v1311 = vunpack.c.h.b16 %v151
    %v1312 = vunpack.c.l.b16 %v152
    %v1313 = vunpack.c.h.b16 %v152
    %v1314 = vunpack.c.l.b16 %v153
    %v1315 = vunpack.c.h.b16 %v153
    %v1316 = vunpack.c.l.b16 %v154
    %v1317 = vunpack.c.h.b16 %v154
    %v1318 = vunpack.c.l.b16 %v155
    %v1319 = vunpack.c.h.b16 %v155
    %v1320 = vunpack.c.l.b16 %v156
    %v1321 = vunpack.c.h.b16 %v156
    %v1322 = vunpack.c.l.b16 %v157
    %v1323 = vunpack.c.h.b16 %v157
    %v1324 = vunpack.c.l.b16 %v158
    %v1325 = vunpack.c.h.b16 %v158
    %v1326 = vunpack.c.l.b16 %v159
    %v1327 = vunpack.c.h.b16 %v159
    %v1328 = vunpack.c.l.b16 %v160
    %v1329 = vunpack.c.h.b16 %v160
    %v1330 = vunpack.c.l.b16 %v161
    %v1331 = vunpack.c.h.b16 %v161
    %v1332 = vunpack.c.l.b16 %v162
    %v1333 = vunpack.c.h.b16 %v162
    %v1334 = vunpack.c.l.b16 %v163
    %v1335 = vunpack.c.h.b16 %v163
    %v1336 = vunpack.c.l.b16 %v164
    %v1337 = vunpack.c.h.b16 %v164
    %v1338 = vunpack.c.l.b16 %v165
    %v1339 = vunpack.c.h.b16 %v165
    %v1340 = vunpack.c.l.b16 %v166
    %v1341 = vunpack.c.h.b16 %v166
    %v1342 = vunpack.c.l.b16 %v167
    %v1343 = vunpack.c.h.b16 %v167
    %v1344 = vunpack.c.l.b16 %v168
    %v1345 = vunpack.c.h.b16 %v168
    %v1346 = vunpack.c.l.b16 %v169
    %v1347 = vunpack.c.h.b16 %v169
    %v1348 = vunpack.c.l.b16 %v170
    %v1349 = vunpack.c.h.b16 %v170
    %v1350 = vunpack.c.l.b16 %v171
    %v1351 = vunpack.c.h.b16 %v171
    %v1352 = vunpack.c.l.b16 %v172
    %v1353 = vunpack.c.h.b16 %v172
    %v1354 = vunpack.c.l.b16 %v173
    %v1355 = vunpack.c.h.b16 %v173
    %v1356 = vunpack.c.l.b16 %v174
    %v1357 = vunpack.c.h.b16 %v174
    %v1358 = vunpack.c.l.b16 %v175
    %v1359 = vunpack.c.h.b16 %v175
    %v1360 = vunpack.c.l.b16 %v176
    %v1361 = vunpack.c.h.b16 %v176
    %v1362 = vunpack.c.l.b16 %v177
    %v1363 = vunpack.c.h.b16 %v177
    %v1364 = vunpack.c.l.b16 %v178
    %v1365 = vunpack.c.h.b16 %v178
    %v1366 = vunpack.c.l.b16 %v179
    %v1367 = vunpack.c.h.b16 %v179
    %v1368 = vunpack.c.l.b16 %v180
    %v1369 = vunpack.c.h.b16 %v180
    %v1370 = vunpack.c.l.b16 %v181
    %v1371 = vunpack.c.h.b16 %v181
    %v1372 = vunpack.c.l.b16 %v182
    %v1373 = vunpack.c.h.b16 %v182
    %v1374 = vunpack.c.l.b16 %v183
    %v1375 = vunpack.c.h.b16 %v183
    %v1376 = vunpack.c.l.b16 %v184
    %v1377 = vunpack.c.h.b16 %v184
    %v1378 = vunpack.c.l.b16 %v185
    %v1379 = vunpack.c.h.b16 %v185
    %v1380 = vunpack.c.l.b16 %v186
    %v1381 = vunpack.c.h.b16 %v186
    %v1382 = vunpack.c.l.b16 %v187
    %v1383 = vunpack.c.h.b16 %v187
    %v1384 = vunpack.c.l.b16 %v188
    %v1385 = vunpack.c.h.b16 %v188
    %v1386 = vunpack.c.l.b16 %v189
    %v1387 = vunpack.c.h.b16 %v189
    %v1388 = vunpack.c.l.b16 %v190
    %v1389 = vunpack.c.h.b16 %v190
    %v1390 = vunpack.c.l.b16 %v191
    %v1391 = vunpack.c.h.b16 %v191
    %v1392 = vunpack.c.l.b16 %v192
    %v1393 = vunpack.c.h.b16 %v192
    %v1394 = vunpack.c.l.b16 %v193
    %v1395 = vunpack.c.h.b16 %v193
    %v1396 = vunpack.c.l.b16 %v194
    %v1397 = vunpack.c.h.b16 %v194
    %v1398 = vunpack.c.l.b16 %v195
    %v1399 = vunpack.c.h.b16 %v195
    %v1400 = vunpack.c.l.b16 %v196
    %v1401 = vunpack.c.h.b16 %v196
    %v1402 = vunpack.c.l.b16 %v197
    %v1403 = vunpack.c.h.b16 %v197
    %v1404 = vunpack.c.l.b16 %v198
    %v1405 = vunpack.c.h.b16 %v198
    %v1406 = vunpack.c.l.b16 %v199
    %v1407 = vunpack.c.h.b16 %v199
    %v1408 = vunpack.c.l.b16 %v200
    %v1409 = vunpack.c.h.b16 %v200
    %v1410 = vunpack.c.l.b16 %v201
    %v1411 = vunpack.c.h.b16 %v201
    %v1412 = vunpack.c.l.b16 %v202
    %v1413 = vunpack.c.h.b16 %v202
    %v1414 = vunpack.c.l.b16 %v203
    %v1415 = vunpack.c.h.b16 %v203
    %v1416 = vunpack.c.l.b16 %v204
    %v1417 = vunpack.c.h.b16 %v204
    %v1418 = vunpack.c.l.b16 %v205
    %v1419 = vunpack.c.h.b16 %v205
    %v1420 = vunpack.c.l.b16 %v206
    %v1421 = vunpack.c.h.b16 %v206
    %v1422 = vunpack.c.l.b16 %v207
    %v1423 = vunpack.c.h.b16 %v207
    %v1424 = vunpack.c.l.b16 %v208
    %v1425 = vunpack.c.h.b16 %v208
    %v1426 = vunpack.c.l.b16 %v209
    %v1427 = vunpack.c.h.b16 %v209
    %v1428 = vunpack.c.l.b16 %v210
    %v1429 = vunpack.c.h.b16 %v210
    %v1430 = vunpack.c.l.b16 %v211
    %v1431 = vunpack.c.h.b16 %v211
    %v1432 = vunpack.c.l.b16 %v212
    %v1433 = vunpack.c.h.b16 %v212
    %v1434 = vunpack.c.l.b16 %v213
    %v1435 = vunpack.c.h.b16 %v213
    %v1436 = vunpack.c.l.b16 %v214
    %v1437 = vunpack.c.h.b16 %v214
    %v1438 = vunpack.c.l.b16 %v215
    %v1439 = vunpack.c.h.b16 %v215
    %v1440 = vunpack.c.l.b16 %v216
    %v1441 = vunpack.c.h.b16 %v216
    %v1442 = vunpack.c.l.b16 %v217
    %v1443 = vunpack.c.h.b16 %v217
    %v1444 = vunpack.c.l.b16 %v218
    %v1445 = vunpack.c.h.b16 %v218
    %v1446 = vunpack.c.l.b16 %v219
    %v1447 = vunpack.c.h.b16 %v219
    %v1448 = vunpack.c.l.b16 %v220
    %v1449 = vunpack.c.h.b16 %v220
    %v1450 = vunpack.c.l.b16 %v221
    %v1451 = vunpack.c.h.b16 %v221
    %v1452 = vunpack.c.l.b16 %v222
    %v1453 = vunpack.c.h.b16 %v222
    %v1454 = vunpack.c.l.b16 %v223
    %v1455 = vunpack.c.h.b16 %v223
    %v1456 = vunpack.c.l.b16 %v224
    %v1457 = vunpack.c.h.b16 %v224
    %v1458 = vunpack.c.l.b16 %v225
    %v1459 = vunpack.c.h.b16 %v225
    %v1460 = vunpack.c.l.b16 %v226
    %v1461 = vunpack.c.h.b16 %v226
    %v1462 = vunpack.c.l.b16 %v227
    %v1463 = vunpack.c.h.b16 %v227
    %v1464 = vunpack.c.l.b16 %v228
    %v1465 = vunpack.c.h.b16 %v228
    %v1466 = vunpack.c.l.b16 %v229
    %v1467 = vunpack.c.h.b16 %v229
    %v1468 = vunpack.c.l.b16 %v230
    %v1469 = vunpack.c.h.b16 %v230
    %v1470 = vunpack.c.l.b16 %v231
    %v1471 = vunpack.c.h.b16 %v231
    %v1472 = vunpack.c.l.b16 %v232
    %v1473 = vunpack.c.h.b16 %v232
    %v1474 = vunpack.c.l.b16 %v233
    %v1475 = vunpack.c.h.b16 %v233
    %v1476 = vunpack.c.l.b16 %v234
    %v1477 = vunpack.c.h.b16 %v234
    %v1478 = vunpack.c.l.b16 %v235
    %v1479 = vunpack.c.h.b16 %v235
    %v1480 = vunpack.c.l.b16 %v236
    %v1481 = vunpack.c.h.b16 %v236
    %v1482 = vunpack.c.l.b16 %v237
    %v1483 = vunpack.c.h.b16 %v237
    %v1484 = vunpack.c.l.b16 %v238
    %v1485 = vunpack.c.h.b16 %v238
    %v1486 = vunpack.c.l.b16 %v239
    %v1487 = vunpack.c.h.b16 %v239
    %v1488 = vunpack.c.l.b16 %v240
    %v1489 = vunpack.c.h.b16 %v240
    %v1490 = vunpack.c.l.b16 %v241
    %v1491 = vunpack.c.h.b16 %v241
    %v1492 = vunpack.c.l.b16 %v242
    %v1493 = vunpack.c.h.b16 %v242
    %v1494 = vunpack.c.l.b16 %v243
    %v1495 = vunpack.c.h.b16 %v243
    %v1496 = vunpack.c.l.b16 %v244
    %v1497 = vunpack.c.h.b16 %v244
    %v1498 = vunpack.c.l.b16 %v245
    %v1499 = vunpack.c.h.b16 %v245
    %v1500 = vunpack.c.l.b16 %v246
    %v1501 = vunpack.c.h.b16 %v246
    %v1502 = vunpack.c.l.b16 %v247
    %v1503 = vunpack.c.h.b16 %v247
    %v1504 = vunpack.c.l.b16 %v248
    %v1505 = vunpack.c.h.b16 %v248
    %v1506 = vunpack.c.l.b16 %v249
    %v1507 = vunpack.c.h.b16 %v249
    %v1508 = vunpack.c.l.b16 %v250
    %v1509 = vunpack.c.h.b16 %v250
    %v1510 = vunpack.c.l.b16 %v251
    %v1511 = vunpack.c.h.b16 %v251
    %v1512 = vunpack.c.l.b16 %v252
    %v1513 = vunpack.c.h.b16 %v252
    %v1514 = vunpack.c.l.b16 %v253
    %v1515 = vunpack.c.h.b16 %v253
    %v1516 = vunpack.c.l.b16 %v254
    %v1517 = vunpack.c.h.b16 %v254
    %v1518 = vunpack.c.l.b16 %v255
    %v1519 = vunpack.c.h.b16 %v255
    %v1520 = vunpack.c.l.b16 %v256
    %v1521 = vunpack.c.h.b16 %v256
    %v1522 = vunpack.c.l.b16 %v257
    %v1523 = vunpack.c.h.b16 %v257
    %v1524 = vunpack.c.l.b16 %v258
    %v1525 = vunpack.c.h.b16 %v258
    %v1526 = vunpack.c.l.b16 %v259
    %v1527 = vunpack.c.h.b16 %v259
    %v1528 = vunpack.c.l.b16 %v260
    %v1529 = vunpack.c.h.b16 %v260
    %v1530 = vunpack.c.l.b16 %v261
    %v1531 = vunpack.c.h.b16 %v261
    %v1532 = vunpack.c.l.b16 %v262
    %v1533 = vunpack.c.h.b16 %v262
    %v1534 = vunpack.c.l.b16 %v263
    %v1535 = vunpack.c.h.b16 %v263
    %v1536 = vunpack.c.l.b16 %v264
    %v1537 = vunpack.c.h.b16 %v264
    %v1538 = vunpack.c.l.b16 %v265
    %v1539 = vunpack.c.h.b16 %v265
    %v1540 = vunpack.c.l.b16 %v266
    %v1541 = vunpack.c.h.b16 %v266
    %v1542 = vunpack.c.l.b16 %v267
    %v1543 = vunpack.c.h.b16 %v267
    %v1544 = vunpack.c.l.b16 %v268
    %v1545 = vunpack.c.h.b16 %v268
    %v1546 = vunpack.c.l.b16 %v269
    %v1547 = vunpack.c.h.b16 %v269
    %v1548 = vunpack.c.l.b16 %v270
    %v1549 = vunpack.c.h.b16 %v270
    %v1550 = vunpack.c.l.b16 %v271
    %v1551 = vunpack.c.h.b16 %v271
    %v1552 = vunpack.c.l.b16 %v272
    %v1553 = vunpack.c.h.b16 %v272
    %v1554 = vunpack.c.l.b16 %v273
    %v1555 = vunpack.c.h.b16 %v273
    %v1556 = vunpack.c.l.b16 %v274
    %v1557 = vunpack.c.h.b16 %v274
    %v1558 = vunpack.c.l.b16 %v275
    %v1559 = vunpack.c.h.b16 %v275
    %v1560 = vunpack.c.l.b16 %v276
    %v1561 = vunpack.c.h.b16 %v276
    %v1562 = vunpack.c.l.b16 %v277
    %v1563 = vunpack.c.h.b16 %v277
    %v1564 = vunpack.c.l.b16 %v278
    %v1565 = vunpack.c.h.b16 %v278
    %v1566 = vunpack.c.l.b16 %v279
    %v1567 = vunpack.c.h.b16 %v279
    %v1568 = vunpack.c.l.b16 %v280
    %v1569 = vunpack.c.h.b16 %v280
    %v1570 = vunpack.c.l.b16 %v281
    %v1571 = vunpack.c.h.b16 %v281
    %v1572 = vunpack.c.l.b16 %v282
    %v1573 = vunpack.c.h.b16 %v282
    %v1574 = vunpack.c.l.b16 %v283
    %v1575 = vunpack.c.h.b16 %v283
    %v1576 = vunpack.c.l.b16 %v284
    %v1577 = vunpack.c.h.b16 %v284
    %v1578 = vunpack.c.l.b16 %v285
    %v1579 = vunpack.c.h.b16 %v285
    %v1580 = vunpack.c.l.b16 %v286
    %v1581 = vunpack.c.h.b16 %v286
    %v1582 = vunpack.c.l.b16 %v287
    %v1583 = vunpack.c.h.b16 %v287
    %v1584 = vunpack.c.l.b16 %v288
    %v1585 = vunpack.c.h.b16 %v288
    %v1586 = vunpack.c.l.b16 %v289
    %v1587 = vunpack.c.h.b16 %v289
    %v1588 = vunpack.c.l.b16 %v290
    %v1589 = vunpack.c.h.b16 %v290
    %v1590 = vunpack.c.l.b16 %v291
    %v1591 = vunpack.c.h.b16 %v291
    %v1592 = vunpack.c.l.b16 %v292
    %v1593 = vunpack.c.h.b16 %v292
    %v1594 = vunpack.c.l.b16 %v293
    %v1595 = vunpack.c.h.b16 %v293
    %v1596 = vunpack.c.l.b16 %v294
    %v1597 = vunpack.c.h.b16 %v294
    %v1598 = vunpack.c.l.b16 %v295
    %v1599 = vunpack.c.h.b16 %v295
    %v1600 = vunpack.c.l.b16 %v296
    %v1601 = vunpack.c.h.b16 %v296
    %v1602 = vunpack.c.l.b16 %v297
    %v1603 = vunpack.c.h.b16 %v297
    %v1604 = vunpack.c.l.b16 %v298
    %v1605 = vunpack.c.h.b16 %v298
    %v1606 = vunpack.c.l.b16 %v299
    %v1607 = vunpack.c.h.b16 %v299
    %v1608 = vunpack.c.l.b16 %v300
    %v1609 = vunpack.c.h.b16 %v300
    %v1610 = vunpack.c.l.b16 %v301
    %v1611 = vunpack.c.h.b16 %v301
    %v1612 = vunpack.c.l.b16 %v302
    %v1613 = vunpack.c.h.b16 %v302
    %v1614 = vunpack.c.l.b16 %v303
    %v1615 = vunpack.c.h.b16 %v303
    %v1616 = vunpack.c.l.b16 %v304
    %v1617 = vunpack.c.h.b16 %v304
    %v1618 = vunpack.c.l.b16 %v305
    %v1619 = vunpack.c.h.b16 %v305
    %v1620 = vunpack.c.l.b16 %v306
    %v1621 = vunpack.c.h.b16 %v306
    %v1622 = vunpack.c.l.b16 %v307
    %v1623 = vunpack.c.h.b16 %v307
    %v1624 = vunpack.c.l.b16 %v308
    %v1625 = vunpack.c.h.b16 %v308
    %v1626 = vunpack.c.l.b16 %v309
    %v1627 = vunpack.c.h.b16 %v309
    %v1628 = vunpack.c.l.b16 %v310
    %v1629 = vunpack.c.h.b16 %v310
    %v1630 = vunpack.c.l.b16 %v311
    %v1631 = vunpack.c.h.b16 %v311
    %v1632 = vunpack.c.l.b16 %v312
    %v1633 = vunpack.c.h.b16 %v312
    %v1634 = vunpack.c.l.b16 %v313
    %v1635 = vunpack.c.h.b16 %v313
    %v1636 = vunpack.c.l.b16 %v314
    %v1637 = vunpack.c.h.b16 %v314
    %v1638 = vunpack.c.l.b16 %v315
    %v1639 = vunpack.c.h.b16 %v315
    %v1640 = vunpack.c.l.b16 %v316
    %v1641 = vunpack.c.h.b16 %v316
    %v1642 = vunpack.c.l.b16 %v317
    %v1643 = vunpack.c.h.b16 %v317
    %v1644 = vunpack.c.l.b16 %v318
    %v1645 = vunpack.c.h.b16 %v318
    %v1646 = vunpack.c.l.b16 %v319
    %v1647 = vunpack.c.h.b16 %v319
    %v1648 = vunpack.c.l.b16 %v320
    %v1649 = vunpack.c.h.b16 %v320
    %v1650 = vunpack.c.l.b16 %v321
    %v1651 = vunpack.c.h.b16 %v321
    %v1652 = vunpack.c.l.b16 %v322
    %v1653 = vunpack.c.h.b16 %v322
    %v1654 = vunpack.c.l.b16 %v323
    %v1655 = vunpack.c.h.b16 %v323
    %v1656 = vunpack.c.l.b16 %v324
    %v1657 = vunpack.c.h.b16 %v324
    %v1658 = vunpack.c.l.b16 %v325
    %v1659 = vunpack.c.h.b16 %v325
    %v1660 = vunpack.c.l.b16 %v326
    %v1661 = vunpack.c.h.b16 %v326
    %v1662 = vunpack.c.l.b16 %v327
    %v1663 = vunpack.c.h.b16 %v327
    %v1664 = vunpack.c.l.b16 %v328
    %v1665 = vunpack.c.h.b16 %v328
    %v1666 = vunpack.c.l.b16 %v329
    %v1667 = vunpack.c.h.b16 %v329
    %v1668 = vunpack.c.l.b16 %v330
    %v1669 = vunpack.c.h.b16 %v330
    %v1670 = vunpack.c.l.b16 %v331
    %v1671 = vunpack.c.h.b16 %v331
    %v1672 = vunpack.c.l.b16 %v332
    %v1673 = vunpack.c.h.b16 %v332
    %v1674 = vunpack.c.l.b16 %v333
    %v1675 = vunpack.c.h.b16 %v333
    %v1676 = vunpack.c.l.b16 %v334
    %v1677 = vunpack.c.h.b16 %v334
    %v1678 = vunpack.c.l.b16 %v335
    %v1679 = vunpack.c.h.b16 %v335
    %v1680 = vunpack.c.l.b16 %v336
    %v1681 = vunpack.c.h.b16 %v336
    %v1682 = vunpack.c.l.b16 %v337
    %v1683 = vunpack.c.h.b16 %v337
    %v1684 = vunpack.c.l.b16 %v338
    %v1685 = vunpack.c.h.b16 %v338
    %v1686 = vunpack.c.l.b16 %v339
    %v1687 = vunpack.c.h.b16 %v339
    %v1688 = vunpack.c.l.b16 %v340
    %v1689 = vunpack.c.h.b16 %v340
    %v1690 = vunpack.c.l.b16 %v341
    %v1691 = vunpack.c.h.b16 %v341
    %v1692 = vunpack.c.l.b16 %v342
    %v1693 = vunpack.c.h.b16 %v342
    %v1694 = vunpack.c.l.b16 %v343
    %v1695 = vunpack.c.h.b16 %v343
    %v1696 = vunpack.c.l.b16 %v344
    %v1697 = vunpack.c.h.b16 %v344
    %v1698 = vunpack.c.l.b16 %v345
    %v1699 = vunpack.c.h.b16 %v345
    %v1700 = vunpack.c.l.b16 %v346
    %v1701 = vunpack.c.h.b16 %v346
    %v1702 = vunpack.c.l.b16 %v347
    %v1703 = vunpack.c.h.b16 %v347
    %v1704 = vunpack.c.l.b16 %v348
    %v1705 = vunpack.c.h.b16 %v348
    %v1706 = vunpack.c.l.b16 %v349
    %v1707 = vunpack.c.h.b16 %v349
    %v1708 = vunpack.c.l.b16 %v350
    %v1709 = vunpack.c.h.b16 %v350
    %v1710 = vunpack.c.l.b16 %v351
    %v1711 = vunpack.c.h.b16 %v351
    %v1712 = vunpack.c.l.b16 %v352
    %v1713 = vunpack.c.h.b16 %v352
    %v1714 = vunpack.c.l.b16 %v353
    %v1715 = vunpack.c.h.b16 %v353
    %v1716 = vunpack.c.l.b16 %v354
    %v1717 = vunpack.c.h.b16 %v354
    %v1718 = vunpack.c.l.b16 %v355
    %v1719 = vunpack.c.h.b16 %v355
    %v1720 = vunpack.c.l.b16 %v356
    %v1721 = vunpack.c.h.b16 %v356
    %v1722 = vunpack.c.l.b16 %v357
    %v1723 = vunpack.c.h.b16 %v357
    %v1724 = vunpack.c.l.b16 %v358
    %v1725 = vunpack.c.h.b16 %v358
    %v1726 = vunpack.c.l.b16 %v359
    %v1727 = vunpack.c.h.b16 %v359
    %v1728 = vunpack.c.l.b16 %v360
    %v1729 = vunpack.c.h.b16 %v360
    %v1730 = vunpack.c.l.b16 %v361
    %v1731 = vunpack.c.h.b16 %v361
    %v1732 = vunpack.c.l.b16 %v362
    %v1733 = vunpack.c.h.b16 %v362
    %v1734 = vunpack.c.l.b16 %v363
    %v1735 = vunpack.c.h.b16 %v363
    %v1736 = vunpack.c.l.b16 %v364
    %v1737 = vunpack.c.h.b16 %v364
    %v1738 = vunpack.c.l.b16 %v365
    %v1739 = vunpack.c.h.b16 %v365
    %v1740 = vunpack.c.l.b16 %v366
    %v1741 = vunpack.c.h.b16 %v366
    %v1742 = vunpack.c.l.b16 %v367
    %v1743 = vunpack.c.h.b16 %v367
    %v1744 = vunpack.c.l.b16 %v368
    %v1745 = vunpack.c.h.b16 %v368
    %v1746 = vunpack.c.l.b16 %v369
    %v1747 = vunpack.c.h.b16 %v369
    %v1748 = vunpack.c.l.b16 %v370
    %v1749 = vunpack.c.h.b16 %v370
    %v1750 = vunpack.c.l.b16 %v371
    %v1751 = vunpack.c.h.b16 %v371
    %v1752 = vunpack.c.l.b16 %v372
    %v1753 = vunpack.c.h.b16 %v372
    %v1754 = vunpack.c.l.b16 %v373
    %v1755 = vunpack.c.h.b16 %v373
    %v1756 = vunpack.c.l.b16 %v374
    %v1757 = vunpack.c.h.b16 %v374
    %v1758 = vunpack.c.l.b16 %v375
    %v1759 = vunpack.c.h.b16 %v375
    %v1760 = vunpack.c.l.b16 %v376
    %v1761 = vunpack.c.h.b16 %v376
    %v1762 = vunpack.c.l.b16 %v377
    %v1763 = vunpack.c.h.b16 %v377
    %v1764 = vunpack.c.l.b16 %v378
    %v1765 = vunpack.c.h.b16 %v378
    %v1766 = vunpack.c.l.b16 %v379
    %v1767 = vunpack.c.h.b16 %v379
    %v1768 = vunpack.c.l.b16 %v380
    %v1769 = vunpack.c.h.b16 %v380
    %v1770 = vunpack.c.l.b16 %v381
    %v1771 = vunpack.c.h.b16 %v381
    %v1772 = vunpack.c.l.b16 %v382
    %v1773 = vunpack.c.h.b16 %v382
    %v1774 = vunpack.c.l.b16 %v383
    %v1775 = vunpack.c.h.b16 %v383
    %v1776 = vunpack.c.l.b16 %v384
    %v1777 = vunpack.c.h.b16 %v384
    %v1778 = vunpack.c.l.b16 %v385
    %v1779 = vunpack.c.h.b16 %v385
    %v1780 = vunpack.c.l.b16 %v386
    %v1781 = vunpack.c.h.b16 %v386
    %v1782 = vunpack.c.l.b16 %v387
    %v1783 = vunpack.c.h.b16 %v387
    %v1784 = vunpack.c.l.b16 %v388
    %v1785 = vunpack.c.h.b16 %v388
    %v1786 = vunpack.c.l.b16 %v389
    %v1787 = vunpack.c.h.b16 %v389
    %v1788 = vunpack.c.l.b16 %v390
    %v1789 = vunpack.c.h.b16 %v390
    %v1790 = vunpack.c.l.b16 %v391
    %v1791 = vunpack.c.h.b16 %v391
    %v1792 = vunpack.c.l.b16 %v392
    %v1793 = vunpack.c.h.b16 %v392
    %v1794 = vunpack.c.l.b16 %v393
    %v1795 = vunpack.c.h.b16 %v393
    %v1796 = vunpack.c.l.b16 %v394
    %v1797 = vunpack.c.h.b16 %v394
    %v1798 = vunpack.c.l.b16 %v395
    %v1799 = vunpack.c.h.b16 %v395
    %v1800 = vunpack.c.l.b16 %v396
    %v1801 = vunpack.c.h.b16 %v396
    %v1802 = vunpack.c.l.b16 %v397
    %v1803 = vunpack.c.h.b16 %v397
    %v1804 = vunpack.c.l.b16 %v398
    %v1805 = vunpack.c.h.b16 %v398
    %v1806 = vunpack.c.l.b16 %v399
    %v1807 = vunpack.c.h.b16 %v399
    %v1808 = vunpack.c.l.b16 %v400
    %v1809 = vunpack.c.h.b16 %v400
    %v1810 = vunpack.c.l.b16 %v401
    %v1811 = vunpack.c.h.b16 %v401
    %v1812 = vunpack.c.l.b16 %v402
    %v1813 = vunpack.c.h.b16 %v402
    %v1814 = vunpack.c.l.b16 %v403
    %v1815 = vunpack.c.h.b16 %v403
    %v1816 = vunpack.c.l.b16 %v404
    %v1817 = vunpack.c.h.b16 %v404
    %v1818 = vunpack.c.l.b16 %v405
    %v1819 = vunpack.c.h.b16 %v405
    %v1820 = vunpack.c.l.b16 %v406
    %v1821 = vunpack.c.h.b16 %v406
    %v1822 = vunpack.c.l.b16 %v407
    %v1823 = vunpack.c.h.b16 %v407
    %v1824 = vunpack.c.l.b16 %v408
    %v1825 = vunpack.c.h.b16 %v408
    %v1826 = vunpack.c.l.b16 %v409
    %v1827 = vunpack.c.h.b16 %v409
    %v1828 = vunpack.c.l.b16 %v410
    %v1829 = vunpack.c.h.b16 %v410
    %v1830 = vunpack.c.l.b16 %v411
    %v1831 = vunpack.c.h.b16 %v411
    %v1832 = vunpack.c.l.b16 %v412
    %v1833 = vunpack.c.h.b16 %v412
    %v1834 = vunpack.c.l.b16 %v413
    %v1835 = vunpack.c.h.b16 %v413
    %v1836 = vunpack.c.l.b16 %v414
    %v1837 = vunpack.c.h.b16 %v414
    %v1838 = vunpack.c.l.b16 %v415
    %v1839 = vunpack.c.h.b16 %v415
    %v1840 = vunpack.c.l.b16 %v416
    %v1841 = vunpack.c.h.b16 %v416
    %v1842 = vunpack.c.l.b16 %v417
    %v1843 = vunpack.c.h.b16 %v417
    %v1844 = vunpack.c.l.b16 %v418
    %v1845 = vunpack.c.h.b16 %v418
    %v1846 = vunpack.c.l.b16 %v419
    %v1847 = vunpack.c.h.b16 %v419
    %v1848 = vunpack.c.l.b16 %v420
    %v1849 = vunpack.c.h.b16 %v420
    %v1850 = vunpack.c.l.b16 %v421
    %v1851 = vunpack.c.h.b16 %v421
    %v1852 = vunpack.c.l.b16 %v422
    %v1853 = vunpack.c.h.b16 %v422
    %v1854 = vunpack.c.l.b16 %v423
    %v1855 = vunpack.c.h.b16 %v423
    %v1856 = vunpack.c.l.b16 %v424
    %v1857 = vunpack.c.h.b16 %v424
    %v1858 = vunpack.c.l.b16 %v425
    %v1859 = vunpack.c.h.b16 %v425
    %v1860 = vunpack.c.l.b16 %v426
    %v1861 = vunpack.c.h.b16 %v426
    %v1862 = vunpack.c.l.b16 %v427
    %v1863 = vunpack.c.h.b16 %v427
    %v1864 = vunpack.c.l.b16 %v428
    %v1865 = vunpack.c.h.b16 %v428
    %v1866 = vunpack.c.l.b16 %v429
    %v1867 = vunpack.c.h.b16 %v429
    %v1868 = vunpack.c.l.b16 %v430
    %v1869 = vunpack.c.h.b16 %v430
    %v1870 = vunpack.c.l.b16 %v431
    %v1871 = vunpack.c.h.b16 %v431
    %v1872 = vunpack.c.l.b16 %v432
    %v1873 = vunpack.c.h.b16 %v432
    %v1874 = vunpack.c.l.b16 %v433
    %v1875 = vunpack.c.h.b16 %v433
    %v1876 = vunpack.c.l.b16 %v434
    %v1877 = vunpack.c.h.b16 %v434
    %v1878 = vunpack.c.l.b16 %v435
    %v1879 = vunpack.c.h.b16 %v435
    %v1880 = vunpack.c.l.b16 %v436
    %v1881 = vunpack.c.h.b16 %v436
    %v1882 = vunpack.c.l.b16 %v437
    %v1883 = vunpack.c.h.b16 %v437
    %v1884 = vunpack.c.l.b16 %v438
    %v1885 = vunpack.c.h.b16 %v438
    %v1886 = vunpack.c.l.b16 %v439
    %v1887 = vunpack.c.h.b16 %v439
    %v1888 = vunpack.c.l.b16 %v440
    %v1889 = vunpack.c.h.b16 %v440
    %v1890 = vunpack.c.l.b16 %v441
    %v1891 = vunpack.c.h.b16 %v441
    %v1892 = vunpack.c.l.b16 %v442
    %v1893 = vunpack.c.h.b16 %v442
    %v1894 = vunpack.c.l.b16 %v443
    %v1895 = vunpack.c.h.b16 %v443
    %v1896 = vunpack.c.l.b16 %v444
    %v1897 = vunpack.c.h.b16 %v444
    %v1898 = vunpack.c.l.b16 %v445
    %v1899 = vunpack.c.h.b16 %v445
    %v1900 = vunpack.c.l.b16 %v446
    %v1901 = vunpack.c.h.b16 %v446
    %v1902 = vunpack.c.l.b16 %v447
    %v1903 = vunpack.c.h.b16 %v447
    %v1904 = vunpack.c.l.b16 %v448
    %v1905 = vunpack.c.h.b16 %v448
    %v1906 = vunpack.c.l.b16 %v449
    %v1907 = vunpack.c.h.b16 %v449
    %v1908 = vunpack.c.l.b16 %v450
    %v1909 = vunpack.c.h.b16 %v450
    %v1910 = vunpack.c.l.b16 %v451
    %v1911 = vunpack.c.h.b16 %v451
    %v1912 = vunpack.c.l.b16 %v452
    %v1913 = vunpack.c.h.b16 %v452
    %v1914 = vunpack.c.l.b16 %v453
    %v1915 = vunpack.c.h.b16 %v453
    %v1916 = vunpack.c.l.b16 %v454
    %v1917 = vunpack.c.h.b16 %v454
    %v1918 = vunpack.c.l.b16 %v455
    %v1919 = vunpack.c.h.b16 %v455
    %v1920 = vunpack.c.l.b16 %v456
    %v1921 = vunpack.c.h.b16 %v456
    %v1922 = vunpack.c.l.b16 %v457
    %v1923 = vunpack.c.h.b16 %v457
    %v1924 = vunpack.c.l.b16 %v458
    %v1925 = vunpack.c.h.b16 %v458
    %v1926 = vunpack.c.l.b16 %v459
    %v1927 = vunpack.c.h.b16 %v459
    %v1928 = vunpack.c.l.b16 %v460
    %v1929 = vunpack.c.h.b16 %v460
    %v1930 = vunpack.c.l.b16 %v461
    %v1931 = vunpack.c.h.b16 %v461
    %v1932 = vunpack.c.l.b16 %v462
    %v1933 = vunpack.c.h.b16 %v462
    %v1934 = vunpack.c.l.b16 %v463
    %v1935 = vunpack.c.h.b16 %v463
    %v1936 = vunpack.c.l.b16 %v464
    %v1937 = vunpack.c.h.b16 %v464
    %v1938 = vunpack.c.l.b16 %v465
    %v1939 = vunpack.c.h.b16 %v465
    %v1940 = vunpack.c.l.b16 %v466
    %v1941 = vunpack.c.h.b16 %v466
    %v1942 = vunpack.c.l.b16 %v467
    %v1943 = vunpack.c.h.b16 %v467
    %v1944 = vunpack.c.l.b16 %v468
    %v1945 = vunpack.c.h.b16 %v468
    %v1946 = vunpack.c.l.b16 %v469
    %v1947 = vunpack.c.h.b16 %v469
    %v1948 = vunpack.c.l.b16 %v470
    %v1949 = vunpack.c.h.b16 %v470
    %v1950 = vunpack.c.l.b16 %v471
    %v1951 = vunpack.c.h.b16 %v471
    %v1952 = vunpack.c.l.b16 %v472
    %v1953 = vunpack.c.h.b16 %v472
    %v1954 = vunpack.c.l.b16 %v473
    %v1955 = vunpack.c.h.b16 %v473
    %v1956 = vunpack.c.l.b16 %v474
    %v1957 = vunpack.c.h.b16 %v474
    %v1958 = vunpack.c.l.b16 %v475
    %v1959 = vunpack.c.h.b16 %v475
    %v1960 = vunpack.c.l.b16 %v476
    %v1961 = vunpack.c.h.b16 %v476
    %v1962 = vunpack.c.l.b16 %v477
    %v1963 = vunpack.c.h.b16 %v477
    %v1964 = vunpack.c.l.b16 %v478
    %v1965 = vunpack.c.h.b16 %v478
    %v1966 = vunpack.c.l.b16 %v479
    %v1967 = vunpack.c.h.b16 %v479
    %v1968 = vunpack.c.l.b16 %v480
    %v1969 = vunpack.c.h.b16 %v480
    %v1970 = vunpack.c.l.b16 %v481
    %v1971 = vunpack.c.h.b16 %v481
    %v1972 = vunpack.c.l.b16 %v482
    %v1973 = vunpack.c.h.b16 %v482
    %v1974 = vunpack.c.l.b16 %v483
    %v1975 = vunpack.c.h.b16 %v483
    %v1976 = vunpack.c.l.b16 %v484
    %v1977 = vunpack.c.h.b16 %v484
    %v1978 = vunpack.c.l.b16 %v485
    %v1979 = vunpack.c.h.b16 %v485
    %v1980 = vunpack.c.l.b16 %v486
    %v1981 = vunpack.c.h.b16 %v486
    %v1982 = vunpack.c.l.b16 %v487
    %v1983 = vunpack.c.h.b16 %v487
    %v1984 = vunpack.c.l.b16 %v488
    %v1985 = vunpack.c.h.b16 %v488
    %v1986 = vunpack.c.l.b16 %v489
    %v1987 = vunpack.c.h.b16 %v489
    %v1988 = vunpack.c.l.b16 %v490
    %v1989 = vunpack.c.h.b16 %v490
    %v1990 = vunpack.c.l.b16 %v491
    %v1991 = vunpack.c.h.b16 %v491
    %v1992 = vpack.c.b16 %v1236, %v1224
    %v1993 = vpack.c.b16 %v1237, %v1225
    %v1994 = vpack.c.b16 %v1238, %v1226
    %v1995 = vpack.c.b16 %v1239, %v1227
    %v1996 = vpack.c.b16 %v1240, %v1228
    %v1997 = vpack.c.b16 %v1241, %v1229
    %v1998 = vpack.c.b16 %v1242, %v1230
    %v1999 = vpack.c.b16 %v1243, %v1231
    %v2000 = vpack.c.b16 %v1244, %v1232
    %v2001 = vpack.c.b16 %v1245, %v1233
    %v2002 = vpack.c.b16 %v1246, %v1234
    %v2003 = vpack.c.b16 %v1247, %v1235
    %v2004 = vpack.c.b16 %v1260, %v1248
    %v2005 = vpack.c.b16 %v1261, %v1249
    %v2006 = vpack.c.b16 %v1262, %v1250
    %v2007 = vpack.c.b16 %v1263, %v1251
    %v2008 = vpack.c.b16 %v1264, %v1252
    %v2009 = vpack.c.b16 %v1265, %v1253
    %v2010 = vpack.c.b16 %v1266, %v1254
    %v2011 = vpack.c.b16 %v1267, %v1255
    %v2012 = vpack.c.b16 %v1268, %v1256
    %v2013 = vpack.c.b16 %v1269, %v1257
    %v2014 = vpack.c.b16 %v1270, %v1258
    %v2015 = vpack.c.b16 %v1271, %v1259
    %v2016 = vpack.c.b16 %v1284, %v1272
    %v2017 = vpack.c.b16 %v1285, %v1273
    %v2018 = vpack.c.b16 %v1286, %v1274
    %v2019 = vpack.c.b16 %v1287, %v1275
    %v2020 = vpack.c.b16 %v1288, %v1276
    %v2021 = vpack.c.b16 %v1289, %v1277
    %v2022 = vpack.c.b16 %v1290, %v1278
    %v2023 = vpack.c.b16 %v1291, %v1279
    %v2024 = vpack.c.b16 %v1292, %v1280
    %v2025 = vpack.c.b16 %v1293, %v1281
    %v2026 = vpack.c.b16 %v1294, %v1282
    %v2027 = vpack.c.b16 %v1295, %v1283
    %v2028 = vpack.c.b16 %v1308, %v1296
    %v2029 = vpack.c.b16 %v1309, %v1297
    %v2030 = vpack.c.b16 %v1310, %v1298
    %v2031 = vpack.c.b16 %v1311, %v1299
    %v2032 = vpack.c.b16 %v1312, %v1300
    %v2033 = vpack.c.b16 %v1313, %v1301
    %v2034 = vpack.c.b16 %v1314, %v1302
    %v2035 = vpack.c.b16 %v1315, %v1303
    %v2036 = vpack.c.b16 %v1316, %v1304
    %v2037 = vpack.c.b16 %v1317, %v1305
    %v2038 = vpack.c.b16 %v1318, %v1306
    %v2039 = vpack.c.b16 %v1319, %v1307
    %v2040 = vpack.c.b16 %v1332, %v1320
    %v2041 = vpack.c.b16 %v1333, %v1321
    %v2042 = vpack.c.b16 %v1334, %v1322
    %v2043 = vpack.c.b16 %v1335, %v1323
    %v2044 = vpack.c.b16 %v1336, %v1324
    %v2045 = vpack.c.b16 %v1337, %v1325
    %v2046 = vpack.c.b16 %v1338, %v1326
    %v2047 = vpack.c.b16 %v1339, %v1327
    %v2048 = vpack.c.b16 %v1340, %v1328
    %v2049 = vpack.c.b16 %v1341, %v1329
    %v2050 = vpack.c.b16 %v1342, %v1330
    %v2051 = vpack.c.b16 %v1343, %v1331
    %v2052 = vpack.c.b16 %v1356, %v1344
    %v2053 = vpack.c.b16 %v1357, %v1345
    %v2054 = vpack.c.b16 %v1358, %v1346
    %v2055 = vpack.c.b16 %v1359, %v1347
    %v2056 = vpack.c.b16 %v1360, %v1348
    %v2057 = vpack.c.b16 %v1361, %v1349
    %v2058 = vpack.c.b16 %v1362, %v1350
    %v2059 = vpack.c.b16 %v1363, %v1351
    %v2060 = vpack.c.b16 %v1364, %v1352
    %v2061 = vpack.c.b16 %v1365, %v1353
    %v2062 = vpack.c.b16 %v1366, %v1354
    %v2063 = vpack.c.b16 %v1367, %v1355
    %v2064 = vpack.c.b16 %v1380, %v1368
    %v2065 = vpack.c.b16 %v1381, %v1369
    %v2066 = vpack.c.b16 %v1382, %v1370
    %v2067 = vpack.c.b16 %v1383, %v1371
    %v2068 = vpack.c.b16 %v1384, %v1372
    %v2069 = vpack.c.b16 %v1385, %v1373
    %v2070 = vpack.c.b16 %v1386, %v1374
    %v2071 = vpack.c.b16 %v1387, %v1375
    %v2072 = vpack.c.b16 %v1388, %v1376
    %v2073 = vpack.c.b16 %v1389, %v1377
    %v2074 = vpack.c.b16 %v1390, %v1378
    %v2075 = vpack.c.b16 %v1391, %v1379
    %v2076 = vpack.c.b16 %v1404, %v1392
    %v2077 = vpack.c.b16 %v1405, %v1393
    %v2078 = vpack.c.b16 %v1406, %v1394
    %v2079 = vpack.c.b16 %v1407, %v1395
    %v2080 = vpack.c.b16 %v1408, %v1396
    %v2081 = vpack.c.b16 %v1409, %v1397
    %v2082 = vpack.c.b16 %v1410, %v1398
    %v2083 = vpack.c.b16 %v1411, %v1399
    %v2084 = vpack.c.b16 %v1412, %v1400
    %v2085 = vpack.c.b16 %v1413, %v1401
    %v2086 = vpack.c.b16 %v1414, %v1402
    %v2087 = vpack.c.b16 %v1415, %v1403
    %v2088 = vpack.c.b16 %v1428, %v1416
    %v2089 = vpack.c.b16 %v1429, %v1417
    %v2090 = vpack.c.b16 %v1430, %v1418
    %v2091 = vpack.c.b16 %v1431, %v1419
    %v2092 = vpack.c.b16 %v1432, %v1420
    %v2093 = vpack.c.b16 %v1433, %v1421
    %v2094 = vpack.c.b16 %v1434, %v1422
    %v2095 = vpack.c.b16 %v1435, %v1423
    %v2096 = vpack.c.b16 %v1436, %v1424
    %v2097 = vpack.c.b16 %v1437, %v1425
    %v2098 = vpack.c.b16 %v1438, %v1426
    %v2099 = vpack.c.b16 %v1439, %v1427
    %v2100 = vpack.c.b16 %v1452, %v1440
    %v2101 = vpack.c.b16 %v1453, %v1441
    %v2102 = vpack.c.b16 %v1454, %v1442
    %v2103 = vpack.c.b16 %v1455, %v1443
    %v2104 = vpack.c.b16 %v1456, %v1444
    %v2105 = vpack.c.b16 %v1457, %v1445
    %v2106 = vpack.c.b16 %v1458, %v1446
    %v2107 = vpack.c.b16 %v1459, %v1447
    %v2108 = vpack.c.b16 %v1460, %v1448
    %v2109 = vpack.c.b16 %v1461, %v1449
    %v2110 = vpack.c.b16 %v1462, %v1450
    %v2111 = vpack.c.b16 %v1463, %v1451
    %v2112 = vpack.c.b16 %v1476, %v1464
    %v2113 = vpack.c.b16 %v1477, %v1465
    %v2114 = vpack.c.b16 %v1478, %v1466
    %v2115 = vpack.c.b16 %v1479, %v1467
    %v2116 = vpack.c.b16 %v1480, %v1468
    %v2117 = vpack.c.b16 %v1481, %v1469
    %v2118 = vpack.c.b16 %v1482, %v1470
    %v2119 = vpack.c.b16 %v1483, %v1471
    %v2120 = vpack.c.b16 %v1484, %v1472
    %v2121 = vpack.c.b16 %v1485, %v1473
    %v2122 = vpack.c.b16 %v1486, %v1474
    %v2123 = vpack.c.b16 %v1487, %v1475
    %v2124 = vpack.c.b16 %v1500, %v1488
    %v2125 = vpack.c.b16 %v1501, %v1489
    %v2126 = vpack.c.b16 %v1502, %v1490
    %v2127 = vpack.c.b16 %v1503, %v1491
    %v2128 = vpack.c.b16 %v1504, %v1492
    %v2129 = vpack.c.b16 %v1505, %v1493
    %v2130 = vpack.c.b16 %v1506, %v1494
    %v2131 = vpack.c.b16 %v1507, %v1495
    %v2132 = vpack.c.b16 %v1508, %v1496
    %v2133 = vpack.c.b16 %v1509, %v1497
    %v2134 = vpack.c.b16 %v1510, %v1498
    %v2135 = vpack.c.b16 %v1511, %v1499
    %v2136 = vpack.c.b16 %v1524, %v1512
    %v2137 = vpack.c.b16 %v1525, %v1513
    %v2138 = vpack.c.b16 %v1526, %v1514
    %v2139 = vpack.c.b16 %v1527, %v1515
    %v2140 = vpack.c.b16 %v1528, %v1516
    %v2141 = vpack.c.b16 %v1529, %v1517
    %v2142 = vpack.c.b16 %v1530, %v1518
    %v2143 = vpack.c.b16 %v1531, %v1519
    %v2144 = vpack.c.b16 %v1532, %v1520
    %v2145 = vpack.c.b16 %v1533, %v1521
    %v2146 = vpack.c.b16 %v1534, %v1522
    %v2147 = vpack.c.b16 %v1535, %v1523
    %v2148 = vpack.c.b16 %v1548, %v1536
    %v2149 = vpack.c.b16 %v1549, %v1537
    %v2150 = vpack.c.b16 %v1550, %v1538
    %v2151 = vpack.c.b16 %v1551, %v1539
    %v2152 = vpack.c.b16 %v1552, %v1540
    %v2153 = vpack.c.b16 %v1553, %v1541
    %v2154 = vpack.c.b16 %v1554, %v1542
    %v2155 = vpack.c.b16 %v1555, %v1543
    %v2156 = vpack.c.b16 %v1556, %v1544
    %v2157 = vpack.c.b16 %v1557, %v1545
    %v2158 = vpack.c.b16 %v1558, %v1546
    %v2159 = vpack.c.b16 %v1559, %v1547
    %v2160 = vpack.c.b16 %v1572, %v1560
    %v2161 = vpack.c.b16 %v1573, %v1561
    %v2162 = vpack.c.b16 %v1574, %v1562
    %v2163 = vpack.c.b16 %v1575, %v1563
    %v2164 = vpack.c.b16 %v1576, %v1564
    %v2165 = vpack.c.b16 %v1577, %v1565
    %v2166 = vpack.c.b16 %v1578, %v1566
    %v2167 = vpack.c.b16 %v1579, %v1567
    %v2168 = vpack.c.b16 %v1580, %v1568
    %v2169 = vpack.c.b16 %v1581, %v1569
    %v2170 = vpack.c.b16 %v1582, %v1570
    %v2171 = vpack.c.b16 %v1583, %v1571
    %v2172 = vpack.c.b16 %v1596, %v1584
    %v2173 = vpack.c.b16 %v1597, %v1585
    %v2174 = vpack.c.b16 %v1598, %v1586
    %v2175 = vpack.c.b16 %v1599, %v1587
    %v2176 = vpack.c.b16 %v1600, %v1588
    %v2177 = vpack.c.b16 %v1601, %v1589
    %v2178 = vpack.c.b16 %v1602, %v1590
    %v2179 = vpack.c.b16 %v1603, %v1591
    %v2180 = vpack.c.b16 %v1604, %v1592
    %v2181 = vpack.c.b16 %v1605, %v1593
    %v2182 = vpack.c.b16 %v1606, %v1594
    %v2183 = vpack.c.b16 %v1607, %v1595
    %v2184 = vpack.c.b16 %v1620, %v1608
    %v2185 = vpack.c.b16 %v1621, %v1609
    %v2186 = vpack.c.b16 %v1622, %v1610
    %v2187 = vpack.c.b16 %v1623, %v1611
    %v2188 = vpack.c.b16 %v1624, %v1612
    %v2189 = vpack.c.b16 %v1625, %v1613
    %v2190 = vpack.c.b16 %v1626, %v1614
    %v2191 = vpack.c.b16 %v1627, %v1615
    %v2192 = vpack.c.b16 %v1628, %v1616
    %v2193 = vpack.c.b16 %v1629, %v1617
    %v2194 = vpack.c.b16 %v1630, %v1618
    %v2195 = vpack.c.b16 %v1631, %v1619
    %v2196 = vpack.c.b16 %v1644, %v1632
    %v2197 = vpack.c.b16 %v1645, %v1633
    %v2198 = vpack.c.b16 %v1646, %v1634
    %v2199 = vpack.c.b16 %v1647, %v1635
    %v2200 = vpack.c.b16 %v1648, %v1636
    %v2201 = vpack.c.b16 %v1649, %v1637
    %v2202 = vpack.c.b16 %v1650, %v1638
    %v2203 = vpack.c.b16 %v1651, %v1639
    %v2204 = vpack.c.b16 %v1652, %v1640
    %v2205 = vpack.c.b16 %v1653, %v1641
    %v2206 = vpack.c.b16 %v1654, %v1642
    %v2207 = vpack.c.b16 %v1655, %v1643
    %v2208 = vpack.c.b16 %v1668, %v1656
    %v2209 = vpack.c.b16 %v1669, %v1657
    %v2210 = vpack.c.b16 %v1670, %v1658
    %v2211 = vpack.c.b16 %v1671, %v1659
    %v2212 = vpack.c.b16 %v1672, %v1660
    %v2213 = vpack.c.b16 %v1673, %v1661
    %v2214 = vpack.c.b16 %v1674, %v1662
    %v2215 = vpack.c.b16 %v1675, %v1663
    %v2216 = vpack.c.b16 %v1676, %v1664
    %v2217 = vpack.c.b16 %v1677, %v1665
    %v2218 = vpack.c.b16 %v1678, %v1666
    %v2219 = vpack.c.b16 %v1679, %v1667
    %v2220 = vpack.c.b16 %v1692, %v1680
    %v2221 = vpack.c.b16 %v1693, %v1681
    %v2222 = vpack.c.b16 %v1694, %v1682
    %v2223 = vpack.c.b16 %v1695, %v1683
    %v2224 = vpack.c.b16 %v1696, %v1684
    %v2225 = vpack.c.b16 %v1697, %v1685
    %v2226 = vpack.c.b16 %v1698, %v1686
    %v2227 = vpack.c.b16 %v1699, %v1687
    %v2228 = vpack.c.b16 %v1700, %v1688
    %v2229 = vpack.c.b16 %v1701, %v1689
    %v2230 = vpack.c.b16 %v1702, %v1690
    %v2231 = vpack.c.b16 %v1703, %v1691
    %v2232 = vpack.c.b16 %v1716, %v1704
    %v2233 = vpack.c.b16 %v1717, %v1705
    %v2234 = vpack.c.b16 %v1718, %v1706
    %v2235 = vpack.c.b16 %v1719, %v1707
    %v2236 = vpack.c.b16 %v1720, %v1708
    %v2237 = vpack.c.b16 %v1721, %v1709
    %v2238 = vpack.c.b16 %v1722, %v1710
    %v2239 = vpack.c.b16 %v1723, %v1711
    %v2240 = vpack.c.b16 %v1724, %v1712
    %v2241 = vpack.c.b16 %v1725, %v1713
    %v2242 = vpack.c.b16 %v1726, %v1714
    %v2243 = vpack.c.b16 %v1727, %v1715
    %v2244 = vpack.c.b16 %v1740, %v1728
    %v2245 = vpack.c.b16 %v1741, %v1729
    %v2246 = vpack.c.b16 %v1742, %v1730
    %v2247 = vpack.c.b16 %v1743, %v1731
    %v2248 = vpack.c.b16 %v1744, %v1732
    %v2249 = vpack.c.b16 %v1745, %v1733
    %v2250 = vpack.c.b16 %v1746, %v1734
    %v2251 = vpack.c.b16 %v1747, %v1735
    %v2252 = vpack.c.b16 %v1748, %v1736
    %v2253 = vpack.c.b16 %v1749, %v1737
    %v2254 = vpack.c.b16 %v1750, %v1738
    %v2255 = vpack.c.b16 %v1751, %v1739
    %v2256 = vpack.c.b16 %v1764, %v1752
    %v2257 = vpack.c.b16 %v1765, %v1753
    %v2258 = vpack.c.b16 %v1766, %v1754
    %v2259 = vpack.c.b16 %v1767, %v1755
    %v2260 = vpack.c.b16 %v1768, %v1756
    %v2261 = vpack.c.b16 %v1769, %v1757
    %v2262 = vpack.c.b16 %v1770, %v1758
    %v2263 = vpack.c.b16 %v1771, %v1759
    %v2264 = vpack.c.b16 %v1772, %v1760
    %v2265 = vpack.c.b16 %v1773, %v1761
    %v2266 = vpack.c.b16 %v1774, %v1762
    %v2267 = vpack.c.b16 %v1775, %v1763
    %v2268 = vpack.c.b16 %v1788, %v1776
    %v2269 = vpack.c.b16 %v1789, %v1777
    %v2270 = vpack.c.b16 %v1790, %v1778
    %v2271 = vpack.c.b16 %v1791, %v1779
    %v2272 = vpack.c.b16 %v1792, %v1780
    %v2273 = vpack.c.b16 %v1793, %v1781
    %v2274 = vpack.c.b16 %v1794, %v1782
    %v2275 = vpack.c.b16 %v1795, %v1783
    %v2276 = vpack.c.b16 %v1796, %v1784
    %v2277 = vpack.c.b16 %v1797, %v1785
    %v2278 = vpack.c.b16 %v1798, %v1786
    %v2279 = vpack.c.b16 %v1799, %v1787
    %v2280 = vpack.c.b16 %v1812, %v1800
    %v2281 = vpack.c.b16 %v1813, %v1801
    %v2282 = vpack.c.b16 %v1814, %v1802
    %v2283 = vpack.c.b16 %v1815, %v1803
    %v2284 = vpack.c.b16 %v1816, %v1804
    %v2285 = vpack.c.b16 %v1817, %v1805
    %v2286 = vpack.c.b16 %v1818, %v1806
    %v2287 = vpack.c.b16 %v1819, %v1807
    %v2288 = vpack.c.b16 %v1820, %v1808
    %v2289 = vpack.c.b16 %v1821, %v1809
    %v2290 = vpack.c.b16 %v1822, %v1810
    %v2291 = vpack.c.b16 %v1823, %v1811
    %v2292 = vpack.c.b16 %v1836, %v1824
    %v2293 = vpack.c.b16 %v1837, %v1825
    %v2294 = vpack.c.b16 %v1838, %v1826
    %v2295 = vpack.c.b16 %v1839, %v1827
    %v2296 = vpack.c.b16 %v1840, %v1828
    %v2297 = vpack.c.b16 %v1841, %v1829
    %v2298 = vpack.c.b16 %v1842, %v1830
    %v2299 = vpack.c.b16 %v1843, %v1831
    %v2300 = vpack.c.b16 %v1844, %v1832
    %v2301 = vpack.c.b16 %v1845, %v1833
    %v2302 = vpack.c.b16 %v1846, %v1834
    %v2303 = vpack.c.b16 %v1847, %v1835
    %v2304 = vpack.c.b16 %v1860, %v1848
    %v2305 = vpack.c.b16 %v1861, %v1849
    %v2306 = vpack.c.b16 %v1862, %v1850
    %v2307 = vpack.c.b16 %v1863, %v1851
    %v2308 = vpack.c.b16 %v1864, %v1852
    %v2309 = vpack.c.b16 %v1865, %v1853
    %v2310 = vpack.c.b16 %v1866, %v1854
    %v2311 = vpack.c.b16 %v1867, %v1855
    %v2312 = vpack.c.b16 %v1868, %v1856
    %v2313 = vpack.c.b16 %v1869, %v1857
    %v2314 = vpack.c.b16 %v1870, %v1858
    %v2315 = vpack.c.b16 %v1871, %v1859
    %v2316 = vpack.c.b16 %v1884, %v1872
    %v2317 = vpack.c.b16 %v1885, %v1873
    %v2318 = vpack.c.b16 %v1886, %v1874
    %v2319 = vpack.c.b16 %v1887, %v1875
    %v2320 = vpack.c.b16 %v1888, %v1876
    %v2321 = vpack.c.b16 %v1889, %v1877
    %v2322 = vpack.c.b16 %v1890, %v1878
    %v2323 = vpack.c.b16 %v1891, %v1879
    %v2324 = vpack.c.b16 %v1892, %v1880
    %v2325 = vpack.c.b16 %v1893, %v1881
    %v2326 = vpack.c.b16 %v1894, %v1882
    %v2327 = vpack.c.b16 %v1895, %v1883
    %v2328 = vpack.c.b16 %v1908, %v1896
    %v2329 = vpack.c.b16 %v1909, %v1897
    %v2330 = vpack.c.b16 %v1910, %v1898
    %v2331 = vpack.c.b16 %v1911, %v1899
    %v2332 = vpack.c.b16 %v1912, %v1900
    %v2333 = vpack.c.b16 %v1913, %v1901
    %v2334 = vpack.c.b16 %v1914, %v1902
    %v2335 = vpack.c.b16 %v1915, %v1903
    %v2336 = vpack.c.b16 %v1916, %v1904
    %v2337 = vpack.c.b16 %v1917, %v1905
    %v2338 = vpack.c.b16 %v1918, %v1906
    %v2339 = vpack.c.b16 %v1919, %v1907
    %v2340 = vpack.c.b16 %v1932, %v1920
    %v2341 = vpack.c.b16 %v1933, %v1921
    %v2342 = vpack.c.b16 %v1934, %v1922
    %v2343 = vpack.c.b16 %v1935, %v1923
    %v2344 = vpack.c.b16 %v1936, %v1924
    %v2345 = vpack.c.b16 %v1937, %v1925
    %v2346 = vpack.c.b16 %v1938, %v1926
    %v2347 = vpack.c.b16 %v1939, %v1927
    %v2348 = vpack.c.b16 %v1940, %v1928
    %v2349 = vpack.c.b16 %v1941, %v1929
    %v2350 = vpack.c.b16 %v1942, %v1930
    %v2351 = vpack.c.b16 %v1943, %v1931
    %v2352 = vpack.c.b16 %v1956, %v1944
    %v2353 = vpack.c.b16 %v1957, %v1945
    %v2354 = vpack.c.b16 %v1958, %v1946
    %v2355 = vpack.c.b16 %v1959, %v1947
    %v2356 = vpack.c.b16 %v1960, %v1948
    %v2357 = vpack.c.b16 %v1961, %v1949
    %v2358 = vpack.c.b16 %v1962, %v1950
    %v2359 = vpack.c.b16 %v1963, %v1951
    %v2360 = vpack.c.b16 %v1964, %v1952
    %v2361 = vpack.c.b16 %v1965, %v1953
    %v2362 = vpack.c.b16 %v1966, %v1954
    %v2363 = vpack.c.b16 %v1967, %v1955
    %v2364 = vpack.c.b16 %v1980, %v1968
    %v2365 = vpack.c.b16 %v1981, %v1969
    %v2366 = vpack.c.b16 %v1982, %v1970
    %v2367 = vpack.c.b16 %v1983, %v1971
    %v2368 = vpack.c.b16 %v1984, %v1972
    %v2369 = vpack.c.b16 %v1985, %v1973
    %v2370 = vpack.c.b16 %v1986, %v1974
    %v2371 = vpack.c.b16 %v1987, %v1975
    %v2372 = vpack.c.b16 %v1988, %v1976
    %v2373 = vpack.c.b16 %v1989, %v1977
    %v2374 = vpack.c.b16 %v1990, %v1978
    %v2375 = vpack.c.b16 %v1991, %v1979
    %2760 = vmatpush.bf16.msra.mxu0 %v2076
    %2761 = vmatpush.bf16.msra.mxu0 %v2064
    %2762 = vmatpush.bf16.msra.mxu0 %v2052
    %2763 = vmatpush.bf16.msra.mxu0 %v2040
    %2764 = vmatpush.bf16.msra.mxu0 %v2028
    %2765 = vmatpush.bf16.msra.mxu0 %v2016
    %2766 = vmatpush.bf16.msra.mxu0 %v2004
    %2767 = vmatpush.bf16.msra.mxu0 %v1992
    %2768 = vmatmul.bf16.gmra.mxu0 %v712
    %v2769 = vpop.f32.mrf.mxu0
    %v2770 = vadd.f32 %v496, %v2769
    %v2771 = vpop.f32.mrf.mxu0
    %v2772 = vadd.f32 %v496, %v2771
    %2773 = vmatmul.bf16.gmra.mxu0 %v716
    %v2774 = vpop.f32.mrf.mxu0
    %v2775 = vadd.f32 %v496, %v2774
    %v2776 = vpop.f32.mrf.mxu0
    %v2777 = vadd.f32 %v496, %v2776
    %2778 = vmatmul.bf16.gmra.mxu0 %v720
    %v2779 = vpop.f32.mrf.mxu0
    %v2780 = vadd.f32 %v496, %v2779
    %v2781 = vpop.f32.mrf.mxu0
    %v2782 = vadd.f32 %v496, %v2781
    %2783 = vmatmul.bf16.gmra.mxu0 %v724
    %v2784 = vpop.f32.mrf.mxu0
    %v2785 = vadd.f32 %v496, %v2784
    %v2786 = vpop.f32.mrf.mxu0
    %v2787 = vadd.f32 %v496, %v2786
    %2788 = vmatmul.bf16.gmra.mxu0 %v728
    %v2789 = vpop.f32.mrf.mxu0
    %v2790 = vadd.f32 %v496, %v2789
    %v2791 = vpop.f32.mrf.mxu0
    %v2792 = vadd.f32 %v496, %v2791
    %2793 = vmatmul.bf16.gmra.mxu0 %v732
    %v2794 = vpop.f32.mrf.mxu0
    %v2795 = vadd.f32 %v496, %v2794
    %v2796 = vpop.f32.mrf.mxu0
    %v2797 = vadd.f32 %v496, %v2796
    %2798 = vmatmul.bf16.gmra.mxu0 %v736
    %v2799 = vpop.f32.mrf.mxu0
    %v2800 = vadd.f32 %v496, %v2799
    %v2801 = vpop.f32.mrf.mxu0
    %v2802 = vadd.f32 %v496, %v2801
    %2803 = vmatmul.bf16.gmra.mxu0 %v740
    %v2804 = vpop.f32.mrf.mxu0
    %v2805 = vadd.f32 %v496, %v2804
    %v2806 = vpop.f32.mrf.mxu0
    %v2807 = vadd.f32 %v496, %v2806
    %2808 = vmatmul.bf16.gmra.mxu0 %v744
    %v2809 = vpop.f32.mrf.mxu0
    %v2810 = vadd.f32 %v496, %v2809
    %v2811 = vpop.f32.mrf.mxu0
    %v2812 = vadd.f32 %v496, %v2811
    %2813 = vmatmul.bf16.gmra.mxu0 %v748
    %v2814 = vpop.f32.mrf.mxu0
    %v2815 = vadd.f32 %v496, %v2814
    %v2816 = vpop.f32.mrf.mxu0
    %v2817 = vadd.f32 %v496, %v2816
    %2818 = vmatmul.bf16.gmra.mxu0 %v752
    %v2819 = vpop.f32.mrf.mxu0
    %v2820 = vadd.f32 %v496, %v2819
    %v2821 = vpop.f32.mrf.mxu0
    %v2822 = vadd.f32 %v496, %v2821
    %2823 = vmatmul.bf16.gmra.mxu0 %v756
    %v2824 = vpop.f32.mrf.mxu0
    %v2825 = vadd.f32 %v496, %v2824
    %v2826 = vpop.f32.mrf.mxu0
    %v2827 = vadd.f32 %v496, %v2826
    %2828 = vmatmul.bf16.gmra.mxu0 %v760
    %v2829 = vpop.f32.mrf.mxu0
    %v2830 = vadd.f32 %v496, %v2829
    %v2831 = vpop.f32.mrf.mxu0
    %v2832 = vadd.f32 %v496, %v2831
    %2833 = vmatmul.bf16.gmra.mxu0 %v764
    %v2834 = vpop.f32.mrf.mxu0
    %v2835 = vadd.f32 %v496, %v2834
    %v2836 = vpop.f32.mrf.mxu0
    %v2837 = vadd.f32 %v496, %v2836
    %2838 = vmatmul.bf16.gmra.mxu0 %v768
    %v2839 = vpop.f32.mrf.mxu0
    %v2840 = vadd.f32 %v496, %v2839
    %v2841 = vpop.f32.mrf.mxu0
    %v2842 = vadd.f32 %v496, %v2841
    %2843 = vmatmul.bf16.gmra.mxu0 %v772
    %v2844 = vpop.f32.mrf.mxu0
    %v2845 = vadd.f32 %v496, %v2844
    %v2846 = vpop.f32.mrf.mxu0
    %v2847 = vadd.f32 %v496, %v2846
    %2848 = vdwg.mxu0
    %2849 = vmatpush.bf16.msra.mxu0 %v2172
    %2850 = vmatpush.bf16.msra.mxu0 %v2160
    %2851 = vmatpush.bf16.msra.mxu0 %v2148
    %2852 = vmatpush.bf16.msra.mxu0 %v2136
    %2853 = vmatpush.bf16.msra.mxu0 %v2124
    %2854 = vmatpush.bf16.msra.mxu0 %v2112
    %2855 = vmatpush.bf16.msra.mxu0 %v2100
    %2856 = vmatpush.bf16.msra.mxu0 %v2088
    %2857 = vmatmul.bf16.gmra.mxu0 %v713
    %v2858 = vpop.f32.mrf.mxu0
    %v2859 = vadd.f32 %v2770, %v2858
    %v2860 = vpop.f32.mrf.mxu0
    %v2861 = vadd.f32 %v2772, %v2860
    %2862 = vmatmul.bf16.gmra.mxu0 %v717
    %v2863 = vpop.f32.mrf.mxu0
    %v2864 = vadd.f32 %v2775, %v2863
    %v2865 = vpop.f32.mrf.mxu0
    %v2866 = vadd.f32 %v2777, %v2865
    %2867 = vmatmul.bf16.gmra.mxu0 %v721
    %v2868 = vpop.f32.mrf.mxu0
    %v2869 = vadd.f32 %v2780, %v2868
    %v2870 = vpop.f32.mrf.mxu0
    %v2871 = vadd.f32 %v2782, %v2870
    %2872 = vmatmul.bf16.gmra.mxu0 %v725
    %v2873 = vpop.f32.mrf.mxu0
    %v2874 = vadd.f32 %v2785, %v2873
    %v2875 = vpop.f32.mrf.mxu0
    %v2876 = vadd.f32 %v2787, %v2875
    %2877 = vmatmul.bf16.gmra.mxu0 %v729
    %v2878 = vpop.f32.mrf.mxu0
    %v2879 = vadd.f32 %v2790, %v2878
    %v2880 = vpop.f32.mrf.mxu0
    %v2881 = vadd.f32 %v2792, %v2880
    %2882 = vmatmul.bf16.gmra.mxu0 %v733
    %v2883 = vpop.f32.mrf.mxu0
    %v2884 = vadd.f32 %v2795, %v2883
    %v2885 = vpop.f32.mrf.mxu0
    %v2886 = vadd.f32 %v2797, %v2885
    %2887 = vmatmul.bf16.gmra.mxu0 %v737
    %v2888 = vpop.f32.mrf.mxu0
    %v2889 = vadd.f32 %v2800, %v2888
    %v2890 = vpop.f32.mrf.mxu0
    %v2891 = vadd.f32 %v2802, %v2890
    %2892 = vmatmul.bf16.gmra.mxu0 %v741
    %v2893 = vpop.f32.mrf.mxu0
    %v2894 = vadd.f32 %v2805, %v2893
    %v2895 = vpop.f32.mrf.mxu0
    %v2896 = vadd.f32 %v2807, %v2895
    %2897 = vmatmul.bf16.gmra.mxu0 %v745
    %v2898 = vpop.f32.mrf.mxu0
    %v2899 = vadd.f32 %v2810, %v2898
    %v2900 = vpop.f32.mrf.mxu0
    %v2901 = vadd.f32 %v2812, %v2900
    %2902 = vmatmul.bf16.gmra.mxu0 %v749
    %v2903 = vpop.f32.mrf.mxu0
    %v2904 = vadd.f32 %v2815, %v2903
    %v2905 = vpop.f32.mrf.mxu0
    %v2906 = vadd.f32 %v2817, %v2905
    %2907 = vmatmul.bf16.gmra.mxu0 %v753
    %v2908 = vpop.f32.mrf.mxu0
    %v2909 = vadd.f32 %v2820, %v2908
    %v2910 = vpop.f32.mrf.mxu0
    %v2911 = vadd.f32 %v2822, %v2910
    %2912 = vmatmul.bf16.gmra.mxu0 %v757
    %v2913 = vpop.f32.mrf.mxu0
    %v2914 = vadd.f32 %v2825, %v2913
    %v2915 = vpop.f32.mrf.mxu0
    %v2916 = vadd.f32 %v2827, %v2915
    %2917 = vmatmul.bf16.gmra.mxu0 %v761
    %v2918 = vpop.f32.mrf.mxu0
    %v2919 = vadd.f32 %v2830, %v2918
    %v2920 = vpop.f32.mrf.mxu0
    %v2921 = vadd.f32 %v2832, %v2920
    %2922 = vmatmul.bf16.gmra.mxu0 %v765
    %v2923 = vpop.f32.mrf.mxu0
    %v2924 = vadd.f32 %v2835, %v2923
    %v2925 = vpop.f32.mrf.mxu0
    %v2926 = vadd.f32 %v2837, %v2925
    %2927 = vmatmul.bf16.gmra.mxu0 %v769
    %v2928 = vpop.f32.mrf.mxu0
    %v2929 = vadd.f32 %v2840, %v2928
    %v2930 = vpop.f32.mrf.mxu0
    %v2931 = vadd.f32 %v2842, %v2930
    %2932 = vmatmul.bf16.gmra.mxu0 %v773
    %v2933 = vpop.f32.mrf.mxu0
    %v2934 = vadd.f32 %v2845, %v2933
    %v2935 = vpop.f32.mrf.mxu0
    %v2936 = vadd.f32 %v2847, %v2935
    %2937 = vdwg.mxu0
    %2938 = vmatpush.bf16.msra.mxu0 %v2268
    %2939 = vmatpush.bf16.msra.mxu0 %v2256
    %2940 = vmatpush.bf16.msra.mxu0 %v2244
    %2941 = vmatpush.bf16.msra.mxu0 %v2232
    %2942 = vmatpush.bf16.msra.mxu0 %v2220
    %2943 = vmatpush.bf16.msra.mxu0 %v2208
    %2944 = vmatpush.bf16.msra.mxu0 %v2196
    %2945 = vmatpush.bf16.msra.mxu0 %v2184
    %2946 = vmatmul.bf16.gmra.mxu0 %v714
    %v2947 = vpop.f32.mrf.mxu0
    %v2948 = vadd.f32 %v2859, %v2947
    %v2949 = vpop.f32.mrf.mxu0
    %v2950 = vadd.f32 %v2861, %v2949
    %2951 = vmatmul.bf16.gmra.mxu0 %v718
    %v2952 = vpop.f32.mrf.mxu0
    %v2953 = vadd.f32 %v2864, %v2952
    %v2954 = vpop.f32.mrf.mxu0
    %v2955 = vadd.f32 %v2866, %v2954
    %2956 = vmatmul.bf16.gmra.mxu0 %v722
    %v2957 = vpop.f32.mrf.mxu0
    %v2958 = vadd.f32 %v2869, %v2957
    %v2959 = vpop.f32.mrf.mxu0
    %v2960 = vadd.f32 %v2871, %v2959
    %2961 = vmatmul.bf16.gmra.mxu0 %v726
    %v2962 = vpop.f32.mrf.mxu0
    %v2963 = vadd.f32 %v2874, %v2962
    %v2964 = vpop.f32.mrf.mxu0
    %v2965 = vadd.f32 %v2876, %v2964
    %2966 = vmatmul.bf16.gmra.mxu0 %v730
    %v2967 = vpop.f32.mrf.mxu0
    %v2968 = vadd.f32 %v2879, %v2967
    %v2969 = vpop.f32.mrf.mxu0
    %v2970 = vadd.f32 %v2881, %v2969
    %2971 = vmatmul.bf16.gmra.mxu0 %v734
    %v2972 = vpop.f32.mrf.mxu0
    %v2973 = vadd.f32 %v2884, %v2972
    %v2974 = vpop.f32.mrf.mxu0
    %v2975 = vadd.f32 %v2886, %v2974
    %2976 = vmatmul.bf16.gmra.mxu0 %v738
    %v2977 = vpop.f32.mrf.mxu0
    %v2978 = vadd.f32 %v2889, %v2977
    %v2979 = vpop.f32.mrf.mxu0
    %v2980 = vadd.f32 %v2891, %v2979
    %2981 = vmatmul.bf16.gmra.mxu0 %v742
    %v2982 = vpop.f32.mrf.mxu0
    %v2983 = vadd.f32 %v2894, %v2982
    %v2984 = vpop.f32.mrf.mxu0
    %v2985 = vadd.f32 %v2896, %v2984
    %2986 = vmatmul.bf16.gmra.mxu0 %v746
    %v2987 = vpop.f32.mrf.mxu0
    %v2988 = vadd.f32 %v2899, %v2987
    %v2989 = vpop.f32.mrf.mxu0
    %v2990 = vadd.f32 %v2901, %v2989
    %2991 = vmatmul.bf16.gmra.mxu0 %v750
    %v2992 = vpop.f32.mrf.mxu0
    %v2993 = vadd.f32 %v2904, %v2992
    %v2994 = vpop.f32.mrf.mxu0
    %v2995 = vadd.f32 %v2906, %v2994
    %2996 = vmatmul.bf16.gmra.mxu0 %v754
    %v2997 = vpop.f32.mrf.mxu0
    %v2998 = vadd.f32 %v2909, %v2997
    %v2999 = vpop.f32.mrf.mxu0
    %v3000 = vadd.f32 %v2911, %v2999
    %3001 = vmatmul.bf16.gmra.mxu0 %v758
    %v3002 = vpop.f32.mrf.mxu0
    %v3003 = vadd.f32 %v2914, %v3002
    %v3004 = vpop.f32.mrf.mxu0
    %v3005 = vadd.f32 %v2916, %v3004
    %3006 = vmatmul.bf16.gmra.mxu0 %v762
    %v3007 = vpop.f32.mrf.mxu0
    %v3008 = vadd.f32 %v2919, %v3007
    %v3009 = vpop.f32.mrf.mxu0
    %v3010 = vadd.f32 %v2921, %v3009
    %3011 = vmatmul.bf16.gmra.mxu0 %v766
    %v3012 = vpop.f32.mrf.mxu0
    %v3013 = vadd.f32 %v2924, %v3012
    %v3014 = vpop.f32.mrf.mxu0
    %v3015 = vadd.f32 %v2926, %v3014
    %3016 = vmatmul.bf16.gmra.mxu0 %v770
    %v3017 = vpop.f32.mrf.mxu0
    %v3018 = vadd.f32 %v2929, %v3017
    %v3019 = vpop.f32.mrf.mxu0
    %v3020 = vadd.f32 %v2931, %v3019
    %3021 = vmatmul.bf16.gmra.mxu0 %v774
    %v3022 = vpop.f32.mrf.mxu0
    %v3023 = vadd.f32 %v2934, %v3022
    %v3024 = vpop.f32.mrf.mxu0
    %v3025 = vadd.f32 %v2936, %v3024
    %3026 = vdwg.mxu0
    %3027 = vmatpush.bf16.msra.mxu0 %v2364
    %3028 = vmatpush.bf16.msra.mxu0 %v2352
    %3029 = vmatpush.bf16.msra.mxu0 %v2340
    %3030 = vmatpush.bf16.msra.mxu0 %v2328
    %3031 = vmatpush.bf16.msra.mxu0 %v2316
    %3032 = vmatpush.bf16.msra.mxu0 %v2304
    %3033 = vmatpush.bf16.msra.mxu0 %v2292
    %3034 = vmatpush.bf16.msra.mxu0 %v2280
    %3035 = vmatmul.bf16.gmra.mxu0 %v715
    %v3036 = vpop.f32.mrf.mxu0
    %v3037 = vadd.f32 %v2948, %v3036
    %v3038 = vpop.f32.mrf.mxu0
    %v3039 = vadd.f32 %v2950, %v3038
    %3040 = vmatmul.bf16.gmra.mxu0 %v719
    %v3041 = vpop.f32.mrf.mxu0
    %v3042 = vadd.f32 %v2953, %v3041
    %v3043 = vpop.f32.mrf.mxu0
    %v3044 = vadd.f32 %v2955, %v3043
    %3045 = vmatmul.bf16.gmra.mxu0 %v723
    %v3046 = vpop.f32.mrf.mxu0
    %v3047 = vadd.f32 %v2958, %v3046
    %v3048 = vpop.f32.mrf.mxu0
    %v3049 = vadd.f32 %v2960, %v3048
    %3050 = vmatmul.bf16.gmra.mxu0 %v727
    %v3051 = vpop.f32.mrf.mxu0
    %v3052 = vadd.f32 %v2963, %v3051
    %v3053 = vpop.f32.mrf.mxu0
    %v3054 = vadd.f32 %v2965, %v3053
    %3055 = vmatmul.bf16.gmra.mxu0 %v731
    %v3056 = vpop.f32.mrf.mxu0
    %v3057 = vadd.f32 %v2968, %v3056
    %v3058 = vpop.f32.mrf.mxu0
    %v3059 = vadd.f32 %v2970, %v3058
    %3060 = vmatmul.bf16.gmra.mxu0 %v735
    %v3061 = vpop.f32.mrf.mxu0
    %v3062 = vadd.f32 %v2973, %v3061
    %v3063 = vpop.f32.mrf.mxu0
    %v3064 = vadd.f32 %v2975, %v3063
    %3065 = vmatmul.bf16.gmra.mxu0 %v739
    %v3066 = vpop.f32.mrf.mxu0
    %v3067 = vadd.f32 %v2978, %v3066
    %v3068 = vpop.f32.mrf.mxu0
    %v3069 = vadd.f32 %v2980, %v3068
    %3070 = vmatmul.bf16.gmra.mxu0 %v743
    %v3071 = vpop.f32.mrf.mxu0
    %v3072 = vadd.f32 %v2983, %v3071
    %v3073 = vpop.f32.mrf.mxu0
    %v3074 = vadd.f32 %v2985, %v3073
    %3075 = vmatmul.bf16.gmra.mxu0 %v747
    %v3076 = vpop.f32.mrf.mxu0
    %v3077 = vadd.f32 %v2988, %v3076
    %v3078 = vpop.f32.mrf.mxu0
    %v3079 = vadd.f32 %v2990, %v3078
    %3080 = vmatmul.bf16.gmra.mxu0 %v751
    %v3081 = vpop.f32.mrf.mxu0
    %v3082 = vadd.f32 %v2993, %v3081
    %v3083 = vpop.f32.mrf.mxu0
    %v3084 = vadd.f32 %v2995, %v3083
    %3085 = vmatmul.bf16.gmra.mxu0 %v755
    %v3086 = vpop.f32.mrf.mxu0
    %v3087 = vadd.f32 %v2998, %v3086
    %v3088 = vpop.f32.mrf.mxu0
    %v3089 = vadd.f32 %v3000, %v3088
    %3090 = vmatmul.bf16.gmra.mxu0 %v759
    %v3091 = vpop.f32.mrf.mxu0
    %v3092 = vadd.f32 %v3003, %v3091
    %v3093 = vpop.f32.mrf.mxu0
    %v3094 = vadd.f32 %v3005, %v3093
    %3095 = vmatmul.bf16.gmra.mxu0 %v763
    %v3096 = vpop.f32.mrf.mxu0
    %v3097 = vadd.f32 %v3008, %v3096
    %v3098 = vpop.f32.mrf.mxu0
    %v3099 = vadd.f32 %v3010, %v3098
    %3100 = vmatmul.bf16.gmra.mxu0 %v767
    %v3101 = vpop.f32.mrf.mxu0
    %v3102 = vadd.f32 %v3013, %v3101
    %v3103 = vpop.f32.mrf.mxu0
    %v3104 = vadd.f32 %v3015, %v3103
    %3105 = vmatmul.bf16.gmra.mxu0 %v771
    %v3106 = vpop.f32.mrf.mxu0
    %v3107 = vadd.f32 %v3018, %v3106
    %v3108 = vpop.f32.mrf.mxu0
    %v3109 = vadd.f32 %v3020, %v3108
    %3110 = vmatmul.bf16.gmra.mxu0 %v775
    %v3111 = vpop.f32.mrf.mxu0
    %v3112 = vadd.f32 %v3023, %v3111
    %v3113 = vpop.f32.mrf.mxu0
    %v3114 = vadd.f32 %v3025, %v3113
    %3115 = vdwg.mxu0
    %3116 = vmatpush.bf16.msra.mxu0 %v2077
    %3117 = vmatpush.bf16.msra.mxu0 %v2065
    %3118 = vmatpush.bf16.msra.mxu0 %v2053
    %3119 = vmatpush.bf16.msra.mxu0 %v2041
    %3120 = vmatpush.bf16.msra.mxu0 %v2029
    %3121 = vmatpush.bf16.msra.mxu0 %v2017
    %3122 = vmatpush.bf16.msra.mxu0 %v2005
    %3123 = vmatpush.bf16.msra.mxu0 %v1993
    %3124 = vmatmul.bf16.gmra.mxu0 %v712
    %v3125 = vpop.f32.mrf.mxu0
    %v3126 = vadd.f32 %v497, %v3125
    %v3127 = vpop.f32.mrf.mxu0
    %v3128 = vadd.f32 %v497, %v3127
    %3129 = vmatmul.bf16.gmra.mxu0 %v716
    %v3130 = vpop.f32.mrf.mxu0
    %v3131 = vadd.f32 %v497, %v3130
    %v3132 = vpop.f32.mrf.mxu0
    %v3133 = vadd.f32 %v497, %v3132
    %3134 = vmatmul.bf16.gmra.mxu0 %v720
    %v3135 = vpop.f32.mrf.mxu0
    %v3136 = vadd.f32 %v497, %v3135
    %v3137 = vpop.f32.mrf.mxu0
    %v3138 = vadd.f32 %v497, %v3137
    %3139 = vmatmul.bf16.gmra.mxu0 %v724
    %v3140 = vpop.f32.mrf.mxu0
    %v3141 = vadd.f32 %v497, %v3140
    %v3142 = vpop.f32.mrf.mxu0
    %v3143 = vadd.f32 %v497, %v3142
    %3144 = vmatmul.bf16.gmra.mxu0 %v728
    %v3145 = vpop.f32.mrf.mxu0
    %v3146 = vadd.f32 %v497, %v3145
    %v3147 = vpop.f32.mrf.mxu0
    %v3148 = vadd.f32 %v497, %v3147
    %3149 = vmatmul.bf16.gmra.mxu0 %v732
    %v3150 = vpop.f32.mrf.mxu0
    %v3151 = vadd.f32 %v497, %v3150
    %v3152 = vpop.f32.mrf.mxu0
    %v3153 = vadd.f32 %v497, %v3152
    %3154 = vmatmul.bf16.gmra.mxu0 %v736
    %v3155 = vpop.f32.mrf.mxu0
    %v3156 = vadd.f32 %v497, %v3155
    %v3157 = vpop.f32.mrf.mxu0
    %v3158 = vadd.f32 %v497, %v3157
    %3159 = vmatmul.bf16.gmra.mxu0 %v740
    %v3160 = vpop.f32.mrf.mxu0
    %v3161 = vadd.f32 %v497, %v3160
    %v3162 = vpop.f32.mrf.mxu0
    %v3163 = vadd.f32 %v497, %v3162
    %3164 = vmatmul.bf16.gmra.mxu0 %v744
    %v3165 = vpop.f32.mrf.mxu0
    %v3166 = vadd.f32 %v497, %v3165
    %v3167 = vpop.f32.mrf.mxu0
    %v3168 = vadd.f32 %v497, %v3167
    %3169 = vmatmul.bf16.gmra.mxu0 %v748
    %v3170 = vpop.f32.mrf.mxu0
    %v3171 = vadd.f32 %v497, %v3170
    %v3172 = vpop.f32.mrf.mxu0
    %v3173 = vadd.f32 %v497, %v3172
    %3174 = vmatmul.bf16.gmra.mxu0 %v752
    %v3175 = vpop.f32.mrf.mxu0
    %v3176 = vadd.f32 %v497, %v3175
    %v3177 = vpop.f32.mrf.mxu0
    %v3178 = vadd.f32 %v497, %v3177
    %3179 = vmatmul.bf16.gmra.mxu0 %v756
    %v3180 = vpop.f32.mrf.mxu0
    %v3181 = vadd.f32 %v497, %v3180
    %v3182 = vpop.f32.mrf.mxu0
    %v3183 = vadd.f32 %v497, %v3182
    %3184 = vmatmul.bf16.gmra.mxu0 %v760
    %v3185 = vpop.f32.mrf.mxu0
    %v3186 = vadd.f32 %v497, %v3185
    %v3187 = vpop.f32.mrf.mxu0
    %v3188 = vadd.f32 %v497, %v3187
    %3189 = vmatmul.bf16.gmra.mxu0 %v764
    %v3190 = vpop.f32.mrf.mxu0
    %v3191 = vadd.f32 %v497, %v3190
    %v3192 = vpop.f32.mrf.mxu0
    %v3193 = vadd.f32 %v497, %v3192
    %3194 = vmatmul.bf16.gmra.mxu0 %v768
    %v3195 = vpop.f32.mrf.mxu0
    %v3196 = vadd.f32 %v497, %v3195
    %v3197 = vpop.f32.mrf.mxu0
    %v3198 = vadd.f32 %v497, %v3197
    %3199 = vmatmul.bf16.gmra.mxu0 %v772
    %v3200 = vpop.f32.mrf.mxu0
    %v3201 = vadd.f32 %v497, %v3200
    %v3202 = vpop.f32.mrf.mxu0
    %v3203 = vadd.f32 %v497, %v3202
    %3204 = vdwg.mxu0
    %3205 = vmatpush.bf16.msra.mxu0 %v2173
    %3206 = vmatpush.bf16.msra.mxu0 %v2161
    %3207 = vmatpush.bf16.msra.mxu0 %v2149
    %3208 = vmatpush.bf16.msra.mxu0 %v2137
    %3209 = vmatpush.bf16.msra.mxu0 %v2125
    %3210 = vmatpush.bf16.msra.mxu0 %v2113
    %3211 = vmatpush.bf16.msra.mxu0 %v2101
    %3212 = vmatpush.bf16.msra.mxu0 %v2089
    %3213 = vmatmul.bf16.gmra.mxu0 %v713
    %v3214 = vpop.f32.mrf.mxu0
    %v3215 = vadd.f32 %v3126, %v3214
    %v3216 = vpop.f32.mrf.mxu0
    %v3217 = vadd.f32 %v3128, %v3216
    %3218 = vmatmul.bf16.gmra.mxu0 %v717
    %v3219 = vpop.f32.mrf.mxu0
    %v3220 = vadd.f32 %v3131, %v3219
    %v3221 = vpop.f32.mrf.mxu0
    %v3222 = vadd.f32 %v3133, %v3221
    %3223 = vmatmul.bf16.gmra.mxu0 %v721
    %v3224 = vpop.f32.mrf.mxu0
    %v3225 = vadd.f32 %v3136, %v3224
    %v3226 = vpop.f32.mrf.mxu0
    %v3227 = vadd.f32 %v3138, %v3226
    %3228 = vmatmul.bf16.gmra.mxu0 %v725
    %v3229 = vpop.f32.mrf.mxu0
    %v3230 = vadd.f32 %v3141, %v3229
    %v3231 = vpop.f32.mrf.mxu0
    %v3232 = vadd.f32 %v3143, %v3231
    %3233 = vmatmul.bf16.gmra.mxu0 %v729
    %v3234 = vpop.f32.mrf.mxu0
    %v3235 = vadd.f32 %v3146, %v3234
    %v3236 = vpop.f32.mrf.mxu0
    %v3237 = vadd.f32 %v3148, %v3236
    %3238 = vmatmul.bf16.gmra.mxu0 %v733
    %v3239 = vpop.f32.mrf.mxu0
    %v3240 = vadd.f32 %v3151, %v3239
    %v3241 = vpop.f32.mrf.mxu0
    %v3242 = vadd.f32 %v3153, %v3241
    %3243 = vmatmul.bf16.gmra.mxu0 %v737
    %v3244 = vpop.f32.mrf.mxu0
    %v3245 = vadd.f32 %v3156, %v3244
    %v3246 = vpop.f32.mrf.mxu0
    %v3247 = vadd.f32 %v3158, %v3246
    %3248 = vmatmul.bf16.gmra.mxu0 %v741
    %v3249 = vpop.f32.mrf.mxu0
    %v3250 = vadd.f32 %v3161, %v3249
    %v3251 = vpop.f32.mrf.mxu0
    %v3252 = vadd.f32 %v3163, %v3251
    %3253 = vmatmul.bf16.gmra.mxu0 %v745
    %v3254 = vpop.f32.mrf.mxu0
    %v3255 = vadd.f32 %v3166, %v3254
    %v3256 = vpop.f32.mrf.mxu0
    %v3257 = vadd.f32 %v3168, %v3256
    %3258 = vmatmul.bf16.gmra.mxu0 %v749
    %v3259 = vpop.f32.mrf.mxu0
    %v3260 = vadd.f32 %v3171, %v3259
    %v3261 = vpop.f32.mrf.mxu0
    %v3262 = vadd.f32 %v3173, %v3261
    %3263 = vmatmul.bf16.gmra.mxu0 %v753
    %v3264 = vpop.f32.mrf.mxu0
    %v3265 = vadd.f32 %v3176, %v3264
    %v3266 = vpop.f32.mrf.mxu0
    %v3267 = vadd.f32 %v3178, %v3266
    %3268 = vmatmul.bf16.gmra.mxu0 %v757
    %v3269 = vpop.f32.mrf.mxu0
    %v3270 = vadd.f32 %v3181, %v3269
    %v3271 = vpop.f32.mrf.mxu0
    %v3272 = vadd.f32 %v3183, %v3271
    %3273 = vmatmul.bf16.gmra.mxu0 %v761
    %v3274 = vpop.f32.mrf.mxu0
    %v3275 = vadd.f32 %v3186, %v3274
    %v3276 = vpop.f32.mrf.mxu0
    %v3277 = vadd.f32 %v3188, %v3276
    %3278 = vmatmul.bf16.gmra.mxu0 %v765
    %v3279 = vpop.f32.mrf.mxu0
    %v3280 = vadd.f32 %v3191, %v3279
    %v3281 = vpop.f32.mrf.mxu0
    %v3282 = vadd.f32 %v3193, %v3281
    %3283 = vmatmul.bf16.gmra.mxu0 %v769
    %v3284 = vpop.f32.mrf.mxu0
    %v3285 = vadd.f32 %v3196, %v3284
    %v3286 = vpop.f32.mrf.mxu0
    %v3287 = vadd.f32 %v3198, %v3286
    %3288 = vmatmul.bf16.gmra.mxu0 %v773
    %v3289 = vpop.f32.mrf.mxu0
    %v3290 = vadd.f32 %v3201, %v3289
    %v3291 = vpop.f32.mrf.mxu0
    %v3292 = vadd.f32 %v3203, %v3291
    %3293 = vdwg.mxu0
    %3294 = vmatpush.bf16.msra.mxu0 %v2269
    %3295 = vmatpush.bf16.msra.mxu0 %v2257
    %3296 = vmatpush.bf16.msra.mxu0 %v2245
    %3297 = vmatpush.bf16.msra.mxu0 %v2233
    %3298 = vmatpush.bf16.msra.mxu0 %v2221
    %3299 = vmatpush.bf16.msra.mxu0 %v2209
    %3300 = vmatpush.bf16.msra.mxu0 %v2197
    %3301 = vmatpush.bf16.msra.mxu0 %v2185
    %3302 = vmatmul.bf16.gmra.mxu0 %v714
    %v3303 = vpop.f32.mrf.mxu0
    %v3304 = vadd.f32 %v3215, %v3303
    %v3305 = vpop.f32.mrf.mxu0
    %v3306 = vadd.f32 %v3217, %v3305
    %3307 = vmatmul.bf16.gmra.mxu0 %v718
    %v3308 = vpop.f32.mrf.mxu0
    %v3309 = vadd.f32 %v3220, %v3308
    %v3310 = vpop.f32.mrf.mxu0
    %v3311 = vadd.f32 %v3222, %v3310
    %3312 = vmatmul.bf16.gmra.mxu0 %v722
    %v3313 = vpop.f32.mrf.mxu0
    %v3314 = vadd.f32 %v3225, %v3313
    %v3315 = vpop.f32.mrf.mxu0
    %v3316 = vadd.f32 %v3227, %v3315
    %3317 = vmatmul.bf16.gmra.mxu0 %v726
    %v3318 = vpop.f32.mrf.mxu0
    %v3319 = vadd.f32 %v3230, %v3318
    %v3320 = vpop.f32.mrf.mxu0
    %v3321 = vadd.f32 %v3232, %v3320
    %3322 = vmatmul.bf16.gmra.mxu0 %v730
    %v3323 = vpop.f32.mrf.mxu0
    %v3324 = vadd.f32 %v3235, %v3323
    %v3325 = vpop.f32.mrf.mxu0
    %v3326 = vadd.f32 %v3237, %v3325
    %3327 = vmatmul.bf16.gmra.mxu0 %v734
    %v3328 = vpop.f32.mrf.mxu0
    %v3329 = vadd.f32 %v3240, %v3328
    %v3330 = vpop.f32.mrf.mxu0
    %v3331 = vadd.f32 %v3242, %v3330
    %3332 = vmatmul.bf16.gmra.mxu0 %v738
    %v3333 = vpop.f32.mrf.mxu0
    %v3334 = vadd.f32 %v3245, %v3333
    %v3335 = vpop.f32.mrf.mxu0
    %v3336 = vadd.f32 %v3247, %v3335
    %3337 = vmatmul.bf16.gmra.mxu0 %v742
    %v3338 = vpop.f32.mrf.mxu0
    %v3339 = vadd.f32 %v3250, %v3338
    %v3340 = vpop.f32.mrf.mxu0
    %v3341 = vadd.f32 %v3252, %v3340
    %3342 = vmatmul.bf16.gmra.mxu0 %v746
    %v3343 = vpop.f32.mrf.mxu0
    %v3344 = vadd.f32 %v3255, %v3343
    %v3345 = vpop.f32.mrf.mxu0
    %v3346 = vadd.f32 %v3257, %v3345
    %3347 = vmatmul.bf16.gmra.mxu0 %v750
    %v3348 = vpop.f32.mrf.mxu0
    %v3349 = vadd.f32 %v3260, %v3348
    %v3350 = vpop.f32.mrf.mxu0
    %v3351 = vadd.f32 %v3262, %v3350
    %3352 = vmatmul.bf16.gmra.mxu0 %v754
    %v3353 = vpop.f32.mrf.mxu0
    %v3354 = vadd.f32 %v3265, %v3353
    %v3355 = vpop.f32.mrf.mxu0
    %v3356 = vadd.f32 %v3267, %v3355
    %3357 = vmatmul.bf16.gmra.mxu0 %v758
    %v3358 = vpop.f32.mrf.mxu0
    %v3359 = vadd.f32 %v3270, %v3358
    %v3360 = vpop.f32.mrf.mxu0
    %v3361 = vadd.f32 %v3272, %v3360
    %3362 = vmatmul.bf16.gmra.mxu0 %v762
    %v3363 = vpop.f32.mrf.mxu0
    %v3364 = vadd.f32 %v3275, %v3363
    %v3365 = vpop.f32.mrf.mxu0
    %v3366 = vadd.f32 %v3277, %v3365
    %3367 = vmatmul.bf16.gmra.mxu0 %v766
    %v3368 = vpop.f32.mrf.mxu0
    %v3369 = vadd.f32 %v3280, %v3368
    %v3370 = vpop.f32.mrf.mxu0
    %v3371 = vadd.f32 %v3282, %v3370
    %3372 = vmatmul.bf16.gmra.mxu0 %v770
    %v3373 = vpop.f32.mrf.mxu0
    %v3374 = vadd.f32 %v3285, %v3373
    %v3375 = vpop.f32.mrf.mxu0
    %v3376 = vadd.f32 %v3287, %v3375
    %3377 = vmatmul.bf16.gmra.mxu0 %v774
    %v3378 = vpop.f32.mrf.mxu0
    %v3379 = vadd.f32 %v3290, %v3378
    %v3380 = vpop.f32.mrf.mxu0
    %v3381 = vadd.f32 %v3292, %v3380
    %3382 = vdwg.mxu0
    %3383 = vmatpush.bf16.msra.mxu0 %v2365
    %3384 = vmatpush.bf16.msra.mxu0 %v2353
    %3385 = vmatpush.bf16.msra.mxu0 %v2341
    %3386 = vmatpush.bf16.msra.mxu0 %v2329
    %3387 = vmatpush.bf16.msra.mxu0 %v2317
    %3388 = vmatpush.bf16.msra.mxu0 %v2305
    %3389 = vmatpush.bf16.msra.mxu0 %v2293
    %3390 = vmatpush.bf16.msra.mxu0 %v2281
    %3391 = vmatmul.bf16.gmra.mxu0 %v715
    %v3392 = vpop.f32.mrf.mxu0
    %v3393 = vadd.f32 %v3304, %v3392
    %v3394 = vpop.f32.mrf.mxu0
    %v3395 = vadd.f32 %v3306, %v3394
    %3396 = vmatmul.bf16.gmra.mxu0 %v719
    %v3397 = vpop.f32.mrf.mxu0
    %v3398 = vadd.f32 %v3309, %v3397
    %v3399 = vpop.f32.mrf.mxu0
    %v3400 = vadd.f32 %v3311, %v3399
    %3401 = vmatmul.bf16.gmra.mxu0 %v723
    %v3402 = vpop.f32.mrf.mxu0
    %v3403 = vadd.f32 %v3314, %v3402
    %v3404 = vpop.f32.mrf.mxu0
    %v3405 = vadd.f32 %v3316, %v3404
    %3406 = vmatmul.bf16.gmra.mxu0 %v727
    %v3407 = vpop.f32.mrf.mxu0
    %v3408 = vadd.f32 %v3319, %v3407
    %v3409 = vpop.f32.mrf.mxu0
    %v3410 = vadd.f32 %v3321, %v3409
    %3411 = vmatmul.bf16.gmra.mxu0 %v731
    %v3412 = vpop.f32.mrf.mxu0
    %v3413 = vadd.f32 %v3324, %v3412
    %v3414 = vpop.f32.mrf.mxu0
    %v3415 = vadd.f32 %v3326, %v3414
    %3416 = vmatmul.bf16.gmra.mxu0 %v735
    %v3417 = vpop.f32.mrf.mxu0
    %v3418 = vadd.f32 %v3329, %v3417
    %v3419 = vpop.f32.mrf.mxu0
    %v3420 = vadd.f32 %v3331, %v3419
    %3421 = vmatmul.bf16.gmra.mxu0 %v739
    %v3422 = vpop.f32.mrf.mxu0
    %v3423 = vadd.f32 %v3334, %v3422
    %v3424 = vpop.f32.mrf.mxu0
    %v3425 = vadd.f32 %v3336, %v3424
    %3426 = vmatmul.bf16.gmra.mxu0 %v743
    %v3427 = vpop.f32.mrf.mxu0
    %v3428 = vadd.f32 %v3339, %v3427
    %v3429 = vpop.f32.mrf.mxu0
    %v3430 = vadd.f32 %v3341, %v3429
    %3431 = vmatmul.bf16.gmra.mxu0 %v747
    %v3432 = vpop.f32.mrf.mxu0
    %v3433 = vadd.f32 %v3344, %v3432
    %v3434 = vpop.f32.mrf.mxu0
    %v3435 = vadd.f32 %v3346, %v3434
    %3436 = vmatmul.bf16.gmra.mxu0 %v751
    %v3437 = vpop.f32.mrf.mxu0
    %v3438 = vadd.f32 %v3349, %v3437
    %v3439 = vpop.f32.mrf.mxu0
    %v3440 = vadd.f32 %v3351, %v3439
    %3441 = vmatmul.bf16.gmra.mxu0 %v755
    %v3442 = vpop.f32.mrf.mxu0
    %v3443 = vadd.f32 %v3354, %v3442
    %v3444 = vpop.f32.mrf.mxu0
    %v3445 = vadd.f32 %v3356, %v3444
    %3446 = vmatmul.bf16.gmra.mxu0 %v759
    %v3447 = vpop.f32.mrf.mxu0
    %v3448 = vadd.f32 %v3359, %v3447
    %v3449 = vpop.f32.mrf.mxu0
    %v3450 = vadd.f32 %v3361, %v3449
    %3451 = vmatmul.bf16.gmra.mxu0 %v763
    %v3452 = vpop.f32.mrf.mxu0
    %v3453 = vadd.f32 %v3364, %v3452
    %v3454 = vpop.f32.mrf.mxu0
    %v3455 = vadd.f32 %v3366, %v3454
    %3456 = vmatmul.bf16.gmra.mxu0 %v767
    %v3457 = vpop.f32.mrf.mxu0
    %v3458 = vadd.f32 %v3369, %v3457
    %v3459 = vpop.f32.mrf.mxu0
    %v3460 = vadd.f32 %v3371, %v3459
    %3461 = vmatmul.bf16.gmra.mxu0 %v771
    %v3462 = vpop.f32.mrf.mxu0
    %v3463 = vadd.f32 %v3374, %v3462
    %v3464 = vpop.f32.mrf.mxu0
    %v3465 = vadd.f32 %v3376, %v3464
    %3466 = vmatmul.bf16.gmra.mxu0 %v775
    %v3467 = vpop.f32.mrf.mxu0
    %v3468 = vadd.f32 %v3379, %v3467
    %v3469 = vpop.f32.mrf.mxu0
    %v3470 = vadd.f32 %v3381, %v3469
    %3471 = vdwg.mxu0
    %3472 = vmatpush.bf16.msra.mxu0 %v2078
    %3473 = vmatpush.bf16.msra.mxu0 %v2066
    %3474 = vmatpush.bf16.msra.mxu0 %v2054
    %3475 = vmatpush.bf16.msra.mxu0 %v2042
    %3476 = vmatpush.bf16.msra.mxu0 %v2030
    %3477 = vmatpush.bf16.msra.mxu0 %v2018
    %3478 = vmatpush.bf16.msra.mxu0 %v2006
    %3479 = vmatpush.bf16.msra.mxu0 %v1994
    %3480 = vmatmul.bf16.gmra.mxu0 %v712
    %v3481 = vpop.f32.mrf.mxu0
    %v3482 = vadd.f32 %v498, %v3481
    %v3483 = vpop.f32.mrf.mxu0
    %v3484 = vadd.f32 %v498, %v3483
    %3485 = vmatmul.bf16.gmra.mxu0 %v716
    %v3486 = vpop.f32.mrf.mxu0
    %v3487 = vadd.f32 %v498, %v3486
    %v3488 = vpop.f32.mrf.mxu0
    %v3489 = vadd.f32 %v498, %v3488
    %3490 = vmatmul.bf16.gmra.mxu0 %v720
    %v3491 = vpop.f32.mrf.mxu0
    %v3492 = vadd.f32 %v498, %v3491
    %v3493 = vpop.f32.mrf.mxu0
    %v3494 = vadd.f32 %v498, %v3493
    %3495 = vmatmul.bf16.gmra.mxu0 %v724
    %v3496 = vpop.f32.mrf.mxu0
    %v3497 = vadd.f32 %v498, %v3496
    %v3498 = vpop.f32.mrf.mxu0
    %v3499 = vadd.f32 %v498, %v3498
    %3500 = vmatmul.bf16.gmra.mxu0 %v728
    %v3501 = vpop.f32.mrf.mxu0
    %v3502 = vadd.f32 %v498, %v3501
    %v3503 = vpop.f32.mrf.mxu0
    %v3504 = vadd.f32 %v498, %v3503
    %3505 = vmatmul.bf16.gmra.mxu0 %v732
    %v3506 = vpop.f32.mrf.mxu0
    %v3507 = vadd.f32 %v498, %v3506
    %v3508 = vpop.f32.mrf.mxu0
    %v3509 = vadd.f32 %v498, %v3508
    %3510 = vmatmul.bf16.gmra.mxu0 %v736
    %v3511 = vpop.f32.mrf.mxu0
    %v3512 = vadd.f32 %v498, %v3511
    %v3513 = vpop.f32.mrf.mxu0
    %v3514 = vadd.f32 %v498, %v3513
    %3515 = vmatmul.bf16.gmra.mxu0 %v740
    %v3516 = vpop.f32.mrf.mxu0
    %v3517 = vadd.f32 %v498, %v3516
    %v3518 = vpop.f32.mrf.mxu0
    %v3519 = vadd.f32 %v498, %v3518
    %3520 = vmatmul.bf16.gmra.mxu0 %v744
    %v3521 = vpop.f32.mrf.mxu0
    %v3522 = vadd.f32 %v498, %v3521
    %v3523 = vpop.f32.mrf.mxu0
    %v3524 = vadd.f32 %v498, %v3523
    %3525 = vmatmul.bf16.gmra.mxu0 %v748
    %v3526 = vpop.f32.mrf.mxu0
    %v3527 = vadd.f32 %v498, %v3526
    %v3528 = vpop.f32.mrf.mxu0
    %v3529 = vadd.f32 %v498, %v3528
    %3530 = vmatmul.bf16.gmra.mxu0 %v752
    %v3531 = vpop.f32.mrf.mxu0
    %v3532 = vadd.f32 %v498, %v3531
    %v3533 = vpop.f32.mrf.mxu0
    %v3534 = vadd.f32 %v498, %v3533
    %3535 = vmatmul.bf16.gmra.mxu0 %v756
    %v3536 = vpop.f32.mrf.mxu0
    %v3537 = vadd.f32 %v498, %v3536
    %v3538 = vpop.f32.mrf.mxu0
    %v3539 = vadd.f32 %v498, %v3538
    %3540 = vmatmul.bf16.gmra.mxu0 %v760
    %v3541 = vpop.f32.mrf.mxu0
    %v3542 = vadd.f32 %v498, %v3541
    %v3543 = vpop.f32.mrf.mxu0
    %v3544 = vadd.f32 %v498, %v3543
    %3545 = vmatmul.bf16.gmra.mxu0 %v764
    %v3546 = vpop.f32.mrf.mxu0
    %v3547 = vadd.f32 %v498, %v3546
    %v3548 = vpop.f32.mrf.mxu0
    %v3549 = vadd.f32 %v498, %v3548
    %3550 = vmatmul.bf16.gmra.mxu0 %v768
    %v3551 = vpop.f32.mrf.mxu0
    %v3552 = vadd.f32 %v498, %v3551
    %v3553 = vpop.f32.mrf.mxu0
    %v3554 = vadd.f32 %v498, %v3553
    %3555 = vmatmul.bf16.gmra.mxu0 %v772
    %v3556 = vpop.f32.mrf.mxu0
    %v3557 = vadd.f32 %v498, %v3556
    %v3558 = vpop.f32.mrf.mxu0
    %v3559 = vadd.f32 %v498, %v3558
    %3560 = vdwg.mxu0
    %3561 = vmatpush.bf16.msra.mxu0 %v2174
    %3562 = vmatpush.bf16.msra.mxu0 %v2162
    %3563 = vmatpush.bf16.msra.mxu0 %v2150
    %3564 = vmatpush.bf16.msra.mxu0 %v2138
    %3565 = vmatpush.bf16.msra.mxu0 %v2126
    %3566 = vmatpush.bf16.msra.mxu0 %v2114
    %3567 = vmatpush.bf16.msra.mxu0 %v2102
    %3568 = vmatpush.bf16.msra.mxu0 %v2090
    %3569 = vmatmul.bf16.gmra.mxu0 %v713
    %v3570 = vpop.f32.mrf.mxu0
    %v3571 = vadd.f32 %v3482, %v3570
    %v3572 = vpop.f32.mrf.mxu0
    %v3573 = vadd.f32 %v3484, %v3572
    %3574 = vmatmul.bf16.gmra.mxu0 %v717
    %v3575 = vpop.f32.mrf.mxu0
    %v3576 = vadd.f32 %v3487, %v3575
    %v3577 = vpop.f32.mrf.mxu0
    %v3578 = vadd.f32 %v3489, %v3577
    %3579 = vmatmul.bf16.gmra.mxu0 %v721
    %v3580 = vpop.f32.mrf.mxu0
    %v3581 = vadd.f32 %v3492, %v3580
    %v3582 = vpop.f32.mrf.mxu0
    %v3583 = vadd.f32 %v3494, %v3582
    %3584 = vmatmul.bf16.gmra.mxu0 %v725
    %v3585 = vpop.f32.mrf.mxu0
    %v3586 = vadd.f32 %v3497, %v3585
    %v3587 = vpop.f32.mrf.mxu0
    %v3588 = vadd.f32 %v3499, %v3587
    %3589 = vmatmul.bf16.gmra.mxu0 %v729
    %v3590 = vpop.f32.mrf.mxu0
    %v3591 = vadd.f32 %v3502, %v3590
    %v3592 = vpop.f32.mrf.mxu0
    %v3593 = vadd.f32 %v3504, %v3592
    %3594 = vmatmul.bf16.gmra.mxu0 %v733
    %v3595 = vpop.f32.mrf.mxu0
    %v3596 = vadd.f32 %v3507, %v3595
    %v3597 = vpop.f32.mrf.mxu0
    %v3598 = vadd.f32 %v3509, %v3597
    %3599 = vmatmul.bf16.gmra.mxu0 %v737
    %v3600 = vpop.f32.mrf.mxu0
    %v3601 = vadd.f32 %v3512, %v3600
    %v3602 = vpop.f32.mrf.mxu0
    %v3603 = vadd.f32 %v3514, %v3602
    %3604 = vmatmul.bf16.gmra.mxu0 %v741
    %v3605 = vpop.f32.mrf.mxu0
    %v3606 = vadd.f32 %v3517, %v3605
    %v3607 = vpop.f32.mrf.mxu0
    %v3608 = vadd.f32 %v3519, %v3607
    %3609 = vmatmul.bf16.gmra.mxu0 %v745
    %v3610 = vpop.f32.mrf.mxu0
    %v3611 = vadd.f32 %v3522, %v3610
    %v3612 = vpop.f32.mrf.mxu0
    %v3613 = vadd.f32 %v3524, %v3612
    %3614 = vmatmul.bf16.gmra.mxu0 %v749
    %v3615 = vpop.f32.mrf.mxu0
    %v3616 = vadd.f32 %v3527, %v3615
    %v3617 = vpop.f32.mrf.mxu0
    %v3618 = vadd.f32 %v3529, %v3617
    %3619 = vmatmul.bf16.gmra.mxu0 %v753
    %v3620 = vpop.f32.mrf.mxu0
    %v3621 = vadd.f32 %v3532, %v3620
    %v3622 = vpop.f32.mrf.mxu0
    %v3623 = vadd.f32 %v3534, %v3622
    %3624 = vmatmul.bf16.gmra.mxu0 %v757
    %v3625 = vpop.f32.mrf.mxu0
    %v3626 = vadd.f32 %v3537, %v3625
    %v3627 = vpop.f32.mrf.mxu0
    %v3628 = vadd.f32 %v3539, %v3627
    %3629 = vmatmul.bf16.gmra.mxu0 %v761
    %v3630 = vpop.f32.mrf.mxu0
    %v3631 = vadd.f32 %v3542, %v3630
    %v3632 = vpop.f32.mrf.mxu0
    %v3633 = vadd.f32 %v3544, %v3632
    %3634 = vmatmul.bf16.gmra.mxu0 %v765
    %v3635 = vpop.f32.mrf.mxu0
    %v3636 = vadd.f32 %v3547, %v3635
    %v3637 = vpop.f32.mrf.mxu0
    %v3638 = vadd.f32 %v3549, %v3637
    %3639 = vmatmul.bf16.gmra.mxu0 %v769
    %v3640 = vpop.f32.mrf.mxu0
    %v3641 = vadd.f32 %v3552, %v3640
    %v3642 = vpop.f32.mrf.mxu0
    %v3643 = vadd.f32 %v3554, %v3642
    %3644 = vmatmul.bf16.gmra.mxu0 %v773
    %v3645 = vpop.f32.mrf.mxu0
    %v3646 = vadd.f32 %v3557, %v3645
    %v3647 = vpop.f32.mrf.mxu0
    %v3648 = vadd.f32 %v3559, %v3647
    %3649 = vdwg.mxu0
    %3650 = vmatpush.bf16.msra.mxu0 %v2270
    %3651 = vmatpush.bf16.msra.mxu0 %v2258
    %3652 = vmatpush.bf16.msra.mxu0 %v2246
    %3653 = vmatpush.bf16.msra.mxu0 %v2234
    %3654 = vmatpush.bf16.msra.mxu0 %v2222
    %3655 = vmatpush.bf16.msra.mxu0 %v2210
    %3656 = vmatpush.bf16.msra.mxu0 %v2198
    %3657 = vmatpush.bf16.msra.mxu0 %v2186
    %3658 = vmatmul.bf16.gmra.mxu0 %v714
    %v3659 = vpop.f32.mrf.mxu0
    %v3660 = vadd.f32 %v3571, %v3659
    %v3661 = vpop.f32.mrf.mxu0
    %v3662 = vadd.f32 %v3573, %v3661
    %3663 = vmatmul.bf16.gmra.mxu0 %v718
    %v3664 = vpop.f32.mrf.mxu0
    %v3665 = vadd.f32 %v3576, %v3664
    %v3666 = vpop.f32.mrf.mxu0
    %v3667 = vadd.f32 %v3578, %v3666
    %3668 = vmatmul.bf16.gmra.mxu0 %v722
    %v3669 = vpop.f32.mrf.mxu0
    %v3670 = vadd.f32 %v3581, %v3669
    %v3671 = vpop.f32.mrf.mxu0
    %v3672 = vadd.f32 %v3583, %v3671
    %3673 = vmatmul.bf16.gmra.mxu0 %v726
    %v3674 = vpop.f32.mrf.mxu0
    %v3675 = vadd.f32 %v3586, %v3674
    %v3676 = vpop.f32.mrf.mxu0
    %v3677 = vadd.f32 %v3588, %v3676
    %3678 = vmatmul.bf16.gmra.mxu0 %v730
    %v3679 = vpop.f32.mrf.mxu0
    %v3680 = vadd.f32 %v3591, %v3679
    %v3681 = vpop.f32.mrf.mxu0
    %v3682 = vadd.f32 %v3593, %v3681
    %3683 = vmatmul.bf16.gmra.mxu0 %v734
    %v3684 = vpop.f32.mrf.mxu0
    %v3685 = vadd.f32 %v3596, %v3684
    %v3686 = vpop.f32.mrf.mxu0
    %v3687 = vadd.f32 %v3598, %v3686
    %3688 = vmatmul.bf16.gmra.mxu0 %v738
    %v3689 = vpop.f32.mrf.mxu0
    %v3690 = vadd.f32 %v3601, %v3689
    %v3691 = vpop.f32.mrf.mxu0
    %v3692 = vadd.f32 %v3603, %v3691
    %3693 = vmatmul.bf16.gmra.mxu0 %v742
    %v3694 = vpop.f32.mrf.mxu0
    %v3695 = vadd.f32 %v3606, %v3694
    %v3696 = vpop.f32.mrf.mxu0
    %v3697 = vadd.f32 %v3608, %v3696
    %3698 = vmatmul.bf16.gmra.mxu0 %v746
    %v3699 = vpop.f32.mrf.mxu0
    %v3700 = vadd.f32 %v3611, %v3699
    %v3701 = vpop.f32.mrf.mxu0
    %v3702 = vadd.f32 %v3613, %v3701
    %3703 = vmatmul.bf16.gmra.mxu0 %v750
    %v3704 = vpop.f32.mrf.mxu0
    %v3705 = vadd.f32 %v3616, %v3704
    %v3706 = vpop.f32.mrf.mxu0
    %v3707 = vadd.f32 %v3618, %v3706
    %3708 = vmatmul.bf16.gmra.mxu0 %v754
    %v3709 = vpop.f32.mrf.mxu0
    %v3710 = vadd.f32 %v3621, %v3709
    %v3711 = vpop.f32.mrf.mxu0
    %v3712 = vadd.f32 %v3623, %v3711
    %3713 = vmatmul.bf16.gmra.mxu0 %v758
    %v3714 = vpop.f32.mrf.mxu0
    %v3715 = vadd.f32 %v3626, %v3714
    %v3716 = vpop.f32.mrf.mxu0
    %v3717 = vadd.f32 %v3628, %v3716
    %3718 = vmatmul.bf16.gmra.mxu0 %v762
    %v3719 = vpop.f32.mrf.mxu0
    %v3720 = vadd.f32 %v3631, %v3719
    %v3721 = vpop.f32.mrf.mxu0
    %v3722 = vadd.f32 %v3633, %v3721
    %3723 = vmatmul.bf16.gmra.mxu0 %v766
    %v3724 = vpop.f32.mrf.mxu0
    %v3725 = vadd.f32 %v3636, %v3724
    %v3726 = vpop.f32.mrf.mxu0
    %v3727 = vadd.f32 %v3638, %v3726
    %3728 = vmatmul.bf16.gmra.mxu0 %v770
    %v3729 = vpop.f32.mrf.mxu0
    %v3730 = vadd.f32 %v3641, %v3729
    %v3731 = vpop.f32.mrf.mxu0
    %v3732 = vadd.f32 %v3643, %v3731
    %3733 = vmatmul.bf16.gmra.mxu0 %v774
    %v3734 = vpop.f32.mrf.mxu0
    %v3735 = vadd.f32 %v3646, %v3734
    %v3736 = vpop.f32.mrf.mxu0
    %v3737 = vadd.f32 %v3648, %v3736
    %3738 = vdwg.mxu0
    %3739 = vmatpush.bf16.msra.mxu0 %v2366
    %3740 = vmatpush.bf16.msra.mxu0 %v2354
    %3741 = vmatpush.bf16.msra.mxu0 %v2342
    %3742 = vmatpush.bf16.msra.mxu0 %v2330
    %3743 = vmatpush.bf16.msra.mxu0 %v2318
    %3744 = vmatpush.bf16.msra.mxu0 %v2306
    %3745 = vmatpush.bf16.msra.mxu0 %v2294
    %3746 = vmatpush.bf16.msra.mxu0 %v2282
    %3747 = vmatmul.bf16.gmra.mxu0 %v715
    %v3748 = vpop.f32.mrf.mxu0
    %v3749 = vadd.f32 %v3660, %v3748
    %v3750 = vpop.f32.mrf.mxu0
    %v3751 = vadd.f32 %v3662, %v3750
    %3752 = vmatmul.bf16.gmra.mxu0 %v719
    %v3753 = vpop.f32.mrf.mxu0
    %v3754 = vadd.f32 %v3665, %v3753
    %v3755 = vpop.f32.mrf.mxu0
    %v3756 = vadd.f32 %v3667, %v3755
    %3757 = vmatmul.bf16.gmra.mxu0 %v723
    %v3758 = vpop.f32.mrf.mxu0
    %v3759 = vadd.f32 %v3670, %v3758
    %v3760 = vpop.f32.mrf.mxu0
    %v3761 = vadd.f32 %v3672, %v3760
    %3762 = vmatmul.bf16.gmra.mxu0 %v727
    %v3763 = vpop.f32.mrf.mxu0
    %v3764 = vadd.f32 %v3675, %v3763
    %v3765 = vpop.f32.mrf.mxu0
    %v3766 = vadd.f32 %v3677, %v3765
    %3767 = vmatmul.bf16.gmra.mxu0 %v731
    %v3768 = vpop.f32.mrf.mxu0
    %v3769 = vadd.f32 %v3680, %v3768
    %v3770 = vpop.f32.mrf.mxu0
    %v3771 = vadd.f32 %v3682, %v3770
    %3772 = vmatmul.bf16.gmra.mxu0 %v735
    %v3773 = vpop.f32.mrf.mxu0
    %v3774 = vadd.f32 %v3685, %v3773
    %v3775 = vpop.f32.mrf.mxu0
    %v3776 = vadd.f32 %v3687, %v3775
    %3777 = vmatmul.bf16.gmra.mxu0 %v739
    %v3778 = vpop.f32.mrf.mxu0
    %v3779 = vadd.f32 %v3690, %v3778
    %v3780 = vpop.f32.mrf.mxu0
    %v3781 = vadd.f32 %v3692, %v3780
    %3782 = vmatmul.bf16.gmra.mxu0 %v743
    %v3783 = vpop.f32.mrf.mxu0
    %v3784 = vadd.f32 %v3695, %v3783
    %v3785 = vpop.f32.mrf.mxu0
    %v3786 = vadd.f32 %v3697, %v3785
    %3787 = vmatmul.bf16.gmra.mxu0 %v747
    %v3788 = vpop.f32.mrf.mxu0
    %v3789 = vadd.f32 %v3700, %v3788
    %v3790 = vpop.f32.mrf.mxu0
    %v3791 = vadd.f32 %v3702, %v3790
    %3792 = vmatmul.bf16.gmra.mxu0 %v751
    %v3793 = vpop.f32.mrf.mxu0
    %v3794 = vadd.f32 %v3705, %v3793
    %v3795 = vpop.f32.mrf.mxu0
    %v3796 = vadd.f32 %v3707, %v3795
    %3797 = vmatmul.bf16.gmra.mxu0 %v755
    %v3798 = vpop.f32.mrf.mxu0
    %v3799 = vadd.f32 %v3710, %v3798
    %v3800 = vpop.f32.mrf.mxu0
    %v3801 = vadd.f32 %v3712, %v3800
    %3802 = vmatmul.bf16.gmra.mxu0 %v759
    %v3803 = vpop.f32.mrf.mxu0
    %v3804 = vadd.f32 %v3715, %v3803
    %v3805 = vpop.f32.mrf.mxu0
    %v3806 = vadd.f32 %v3717, %v3805
    %3807 = vmatmul.bf16.gmra.mxu0 %v763
    %v3808 = vpop.f32.mrf.mxu0
    %v3809 = vadd.f32 %v3720, %v3808
    %v3810 = vpop.f32.mrf.mxu0
    %v3811 = vadd.f32 %v3722, %v3810
    %3812 = vmatmul.bf16.gmra.mxu0 %v767
    %v3813 = vpop.f32.mrf.mxu0
    %v3814 = vadd.f32 %v3725, %v3813
    %v3815 = vpop.f32.mrf.mxu0
    %v3816 = vadd.f32 %v3727, %v3815
    %3817 = vmatmul.bf16.gmra.mxu0 %v771
    %v3818 = vpop.f32.mrf.mxu0
    %v3819 = vadd.f32 %v3730, %v3818
    %v3820 = vpop.f32.mrf.mxu0
    %v3821 = vadd.f32 %v3732, %v3820
    %3822 = vmatmul.bf16.gmra.mxu0 %v775
    %v3823 = vpop.f32.mrf.mxu0
    %v3824 = vadd.f32 %v3735, %v3823
    %v3825 = vpop.f32.mrf.mxu0
    %v3826 = vadd.f32 %v3737, %v3825
    %3827 = vdwg.mxu0
    %3828 = vmatpush.bf16.msra.mxu0 %v2079
    %3829 = vmatpush.bf16.msra.mxu0 %v2067
    %3830 = vmatpush.bf16.msra.mxu0 %v2055
    %3831 = vmatpush.bf16.msra.mxu0 %v2043
    %3832 = vmatpush.bf16.msra.mxu0 %v2031
    %3833 = vmatpush.bf16.msra.mxu0 %v2019
    %3834 = vmatpush.bf16.msra.mxu0 %v2007
    %3835 = vmatpush.bf16.msra.mxu0 %v1995
    %3836 = vmatmul.bf16.gmra.mxu0 %v712
    %v3837 = vpop.f32.mrf.mxu0
    %v3838 = vadd.f32 %v499, %v3837
    %v3839 = vpop.f32.mrf.mxu0
    %v3840 = vadd.f32 %v499, %v3839
    %3841 = vmatmul.bf16.gmra.mxu0 %v716
    %v3842 = vpop.f32.mrf.mxu0
    %v3843 = vadd.f32 %v499, %v3842
    %v3844 = vpop.f32.mrf.mxu0
    %v3845 = vadd.f32 %v499, %v3844
    %3846 = vmatmul.bf16.gmra.mxu0 %v720
    %v3847 = vpop.f32.mrf.mxu0
    %v3848 = vadd.f32 %v499, %v3847
    %v3849 = vpop.f32.mrf.mxu0
    %v3850 = vadd.f32 %v499, %v3849
    %3851 = vmatmul.bf16.gmra.mxu0 %v724
    %v3852 = vpop.f32.mrf.mxu0
    %v3853 = vadd.f32 %v499, %v3852
    %v3854 = vpop.f32.mrf.mxu0
    %v3855 = vadd.f32 %v499, %v3854
    %3856 = vmatmul.bf16.gmra.mxu0 %v728
    %v3857 = vpop.f32.mrf.mxu0
    %v3858 = vadd.f32 %v499, %v3857
    %v3859 = vpop.f32.mrf.mxu0
    %v3860 = vadd.f32 %v499, %v3859
    %3861 = vmatmul.bf16.gmra.mxu0 %v732
    %v3862 = vpop.f32.mrf.mxu0
    %v3863 = vadd.f32 %v499, %v3862
    %v3864 = vpop.f32.mrf.mxu0
    %v3865 = vadd.f32 %v499, %v3864
    %3866 = vmatmul.bf16.gmra.mxu0 %v736
    %v3867 = vpop.f32.mrf.mxu0
    %v3868 = vadd.f32 %v499, %v3867
    %v3869 = vpop.f32.mrf.mxu0
    %v3870 = vadd.f32 %v499, %v3869
    %3871 = vmatmul.bf16.gmra.mxu0 %v740
    %v3872 = vpop.f32.mrf.mxu0
    %v3873 = vadd.f32 %v499, %v3872
    %v3874 = vpop.f32.mrf.mxu0
    %v3875 = vadd.f32 %v499, %v3874
    %3876 = vmatmul.bf16.gmra.mxu0 %v744
    %v3877 = vpop.f32.mrf.mxu0
    %v3878 = vadd.f32 %v499, %v3877
    %v3879 = vpop.f32.mrf.mxu0
    %v3880 = vadd.f32 %v499, %v3879
    %3881 = vmatmul.bf16.gmra.mxu0 %v748
    %v3882 = vpop.f32.mrf.mxu0
    %v3883 = vadd.f32 %v499, %v3882
    %v3884 = vpop.f32.mrf.mxu0
    %v3885 = vadd.f32 %v499, %v3884
    %3886 = vmatmul.bf16.gmra.mxu0 %v752
    %v3887 = vpop.f32.mrf.mxu0
    %v3888 = vadd.f32 %v499, %v3887
    %v3889 = vpop.f32.mrf.mxu0
    %v3890 = vadd.f32 %v499, %v3889
    %3891 = vmatmul.bf16.gmra.mxu0 %v756
    %v3892 = vpop.f32.mrf.mxu0
    %v3893 = vadd.f32 %v499, %v3892
    %v3894 = vpop.f32.mrf.mxu0
    %v3895 = vadd.f32 %v499, %v3894
    %3896 = vmatmul.bf16.gmra.mxu0 %v760
    %v3897 = vpop.f32.mrf.mxu0
    %v3898 = vadd.f32 %v499, %v3897
    %v3899 = vpop.f32.mrf.mxu0
    %v3900 = vadd.f32 %v499, %v3899
    %3901 = vmatmul.bf16.gmra.mxu0 %v764
    %v3902 = vpop.f32.mrf.mxu0
    %v3903 = vadd.f32 %v499, %v3902
    %v3904 = vpop.f32.mrf.mxu0
    %v3905 = vadd.f32 %v499, %v3904
    %3906 = vmatmul.bf16.gmra.mxu0 %v768
    %v3907 = vpop.f32.mrf.mxu0
    %v3908 = vadd.f32 %v499, %v3907
    %v3909 = vpop.f32.mrf.mxu0
    %v3910 = vadd.f32 %v499, %v3909
    %3911 = vmatmul.bf16.gmra.mxu0 %v772
    %v3912 = vpop.f32.mrf.mxu0
    %v3913 = vadd.f32 %v499, %v3912
    %v3914 = vpop.f32.mrf.mxu0
    %v3915 = vadd.f32 %v499, %v3914
    %3916 = vdwg.mxu0
    %3917 = vmatpush.bf16.msra.mxu0 %v2175
    %3918 = vmatpush.bf16.msra.mxu0 %v2163
    %3919 = vmatpush.bf16.msra.mxu0 %v2151
    %3920 = vmatpush.bf16.msra.mxu0 %v2139
    %3921 = vmatpush.bf16.msra.mxu0 %v2127
    %3922 = vmatpush.bf16.msra.mxu0 %v2115
    %3923 = vmatpush.bf16.msra.mxu0 %v2103
    %3924 = vmatpush.bf16.msra.mxu0 %v2091
    %3925 = vmatmul.bf16.gmra.mxu0 %v713
    %v3926 = vpop.f32.mrf.mxu0
    %v3927 = vadd.f32 %v3838, %v3926
    %v3928 = vpop.f32.mrf.mxu0
    %v3929 = vadd.f32 %v3840, %v3928
    %3930 = vmatmul.bf16.gmra.mxu0 %v717
    %v3931 = vpop.f32.mrf.mxu0
    %v3932 = vadd.f32 %v3843, %v3931
    %v3933 = vpop.f32.mrf.mxu0
    %v3934 = vadd.f32 %v3845, %v3933
    %3935 = vmatmul.bf16.gmra.mxu0 %v721
    %v3936 = vpop.f32.mrf.mxu0
    %v3937 = vadd.f32 %v3848, %v3936
    %v3938 = vpop.f32.mrf.mxu0
    %v3939 = vadd.f32 %v3850, %v3938
    %3940 = vmatmul.bf16.gmra.mxu0 %v725
    %v3941 = vpop.f32.mrf.mxu0
    %v3942 = vadd.f32 %v3853, %v3941
    %v3943 = vpop.f32.mrf.mxu0
    %v3944 = vadd.f32 %v3855, %v3943
    %3945 = vmatmul.bf16.gmra.mxu0 %v729
    %v3946 = vpop.f32.mrf.mxu0
    %v3947 = vadd.f32 %v3858, %v3946
    %v3948 = vpop.f32.mrf.mxu0
    %v3949 = vadd.f32 %v3860, %v3948
    %3950 = vmatmul.bf16.gmra.mxu0 %v733
    %v3951 = vpop.f32.mrf.mxu0
    %v3952 = vadd.f32 %v3863, %v3951
    %v3953 = vpop.f32.mrf.mxu0
    %v3954 = vadd.f32 %v3865, %v3953
    %3955 = vmatmul.bf16.gmra.mxu0 %v737
    %v3956 = vpop.f32.mrf.mxu0
    %v3957 = vadd.f32 %v3868, %v3956
    %v3958 = vpop.f32.mrf.mxu0
    %v3959 = vadd.f32 %v3870, %v3958
    %3960 = vmatmul.bf16.gmra.mxu0 %v741
    %v3961 = vpop.f32.mrf.mxu0
    %v3962 = vadd.f32 %v3873, %v3961
    %v3963 = vpop.f32.mrf.mxu0
    %v3964 = vadd.f32 %v3875, %v3963
    %3965 = vmatmul.bf16.gmra.mxu0 %v745
    %v3966 = vpop.f32.mrf.mxu0
    %v3967 = vadd.f32 %v3878, %v3966
    %v3968 = vpop.f32.mrf.mxu0
    %v3969 = vadd.f32 %v3880, %v3968
    %3970 = vmatmul.bf16.gmra.mxu0 %v749
    %v3971 = vpop.f32.mrf.mxu0
    %v3972 = vadd.f32 %v3883, %v3971
    %v3973 = vpop.f32.mrf.mxu0
    %v3974 = vadd.f32 %v3885, %v3973
    %3975 = vmatmul.bf16.gmra.mxu0 %v753
    %v3976 = vpop.f32.mrf.mxu0
    %v3977 = vadd.f32 %v3888, %v3976
    %v3978 = vpop.f32.mrf.mxu0
    %v3979 = vadd.f32 %v3890, %v3978
    %3980 = vmatmul.bf16.gmra.mxu0 %v757
    %v3981 = vpop.f32.mrf.mxu0
    %v3982 = vadd.f32 %v3893, %v3981
    %v3983 = vpop.f32.mrf.mxu0
    %v3984 = vadd.f32 %v3895, %v3983
    %3985 = vmatmul.bf16.gmra.mxu0 %v761
    %v3986 = vpop.f32.mrf.mxu0
    %v3987 = vadd.f32 %v3898, %v3986
    %v3988 = vpop.f32.mrf.mxu0
    %v3989 = vadd.f32 %v3900, %v3988
    %3990 = vmatmul.bf16.gmra.mxu0 %v765
    %v3991 = vpop.f32.mrf.mxu0
    %v3992 = vadd.f32 %v3903, %v3991
    %v3993 = vpop.f32.mrf.mxu0
    %v3994 = vadd.f32 %v3905, %v3993
    %3995 = vmatmul.bf16.gmra.mxu0 %v769
    %v3996 = vpop.f32.mrf.mxu0
    %v3997 = vadd.f32 %v3908, %v3996
    %v3998 = vpop.f32.mrf.mxu0
    %v3999 = vadd.f32 %v3910, %v3998
    %4000 = vmatmul.bf16.gmra.mxu0 %v773
    %v4001 = vpop.f32.mrf.mxu0
    %v4002 = vadd.f32 %v3913, %v4001
    %v4003 = vpop.f32.mrf.mxu0
    %v4004 = vadd.f32 %v3915, %v4003
    %4005 = vdwg.mxu0
    %4006 = vmatpush.bf16.msra.mxu0 %v2271
    %4007 = vmatpush.bf16.msra.mxu0 %v2259
    %4008 = vmatpush.bf16.msra.mxu0 %v2247
    %4009 = vmatpush.bf16.msra.mxu0 %v2235
    %4010 = vmatpush.bf16.msra.mxu0 %v2223
    %4011 = vmatpush.bf16.msra.mxu0 %v2211
    %4012 = vmatpush.bf16.msra.mxu0 %v2199
    %4013 = vmatpush.bf16.msra.mxu0 %v2187
    %4014 = vmatmul.bf16.gmra.mxu0 %v714
    %v4015 = vpop.f32.mrf.mxu0
    %v4016 = vadd.f32 %v3927, %v4015
    %v4017 = vpop.f32.mrf.mxu0
    %v4018 = vadd.f32 %v3929, %v4017
    %4019 = vmatmul.bf16.gmra.mxu0 %v718
    %v4020 = vpop.f32.mrf.mxu0
    %v4021 = vadd.f32 %v3932, %v4020
    %v4022 = vpop.f32.mrf.mxu0
    %v4023 = vadd.f32 %v3934, %v4022
    %4024 = vmatmul.bf16.gmra.mxu0 %v722
    %v4025 = vpop.f32.mrf.mxu0
    %v4026 = vadd.f32 %v3937, %v4025
    %v4027 = vpop.f32.mrf.mxu0
    %v4028 = vadd.f32 %v3939, %v4027
    %4029 = vmatmul.bf16.gmra.mxu0 %v726
    %v4030 = vpop.f32.mrf.mxu0
    %v4031 = vadd.f32 %v3942, %v4030
    %v4032 = vpop.f32.mrf.mxu0
    %v4033 = vadd.f32 %v3944, %v4032
    %4034 = vmatmul.bf16.gmra.mxu0 %v730
    %v4035 = vpop.f32.mrf.mxu0
    %v4036 = vadd.f32 %v3947, %v4035
    %v4037 = vpop.f32.mrf.mxu0
    %v4038 = vadd.f32 %v3949, %v4037
    %4039 = vmatmul.bf16.gmra.mxu0 %v734
    %v4040 = vpop.f32.mrf.mxu0
    %v4041 = vadd.f32 %v3952, %v4040
    %v4042 = vpop.f32.mrf.mxu0
    %v4043 = vadd.f32 %v3954, %v4042
    %4044 = vmatmul.bf16.gmra.mxu0 %v738
    %v4045 = vpop.f32.mrf.mxu0
    %v4046 = vadd.f32 %v3957, %v4045
    %v4047 = vpop.f32.mrf.mxu0
    %v4048 = vadd.f32 %v3959, %v4047
    %4049 = vmatmul.bf16.gmra.mxu0 %v742
    %v4050 = vpop.f32.mrf.mxu0
    %v4051 = vadd.f32 %v3962, %v4050
    %v4052 = vpop.f32.mrf.mxu0
    %v4053 = vadd.f32 %v3964, %v4052
    %4054 = vmatmul.bf16.gmra.mxu0 %v746
    %v4055 = vpop.f32.mrf.mxu0
    %v4056 = vadd.f32 %v3967, %v4055
    %v4057 = vpop.f32.mrf.mxu0
    %v4058 = vadd.f32 %v3969, %v4057
    %4059 = vmatmul.bf16.gmra.mxu0 %v750
    %v4060 = vpop.f32.mrf.mxu0
    %v4061 = vadd.f32 %v3972, %v4060
    %v4062 = vpop.f32.mrf.mxu0
    %v4063 = vadd.f32 %v3974, %v4062
    %4064 = vmatmul.bf16.gmra.mxu0 %v754
    %v4065 = vpop.f32.mrf.mxu0
    %v4066 = vadd.f32 %v3977, %v4065
    %v4067 = vpop.f32.mrf.mxu0
    %v4068 = vadd.f32 %v3979, %v4067
    %4069 = vmatmul.bf16.gmra.mxu0 %v758
    %v4070 = vpop.f32.mrf.mxu0
    %v4071 = vadd.f32 %v3982, %v4070
    %v4072 = vpop.f32.mrf.mxu0
    %v4073 = vadd.f32 %v3984, %v4072
    %4074 = vmatmul.bf16.gmra.mxu0 %v762
    %v4075 = vpop.f32.mrf.mxu0
    %v4076 = vadd.f32 %v3987, %v4075
    %v4077 = vpop.f32.mrf.mxu0
    %v4078 = vadd.f32 %v3989, %v4077
    %4079 = vmatmul.bf16.gmra.mxu0 %v766
    %v4080 = vpop.f32.mrf.mxu0
    %v4081 = vadd.f32 %v3992, %v4080
    %v4082 = vpop.f32.mrf.mxu0
    %v4083 = vadd.f32 %v3994, %v4082
    %4084 = vmatmul.bf16.gmra.mxu0 %v770
    %v4085 = vpop.f32.mrf.mxu0
    %v4086 = vadd.f32 %v3997, %v4085
    %v4087 = vpop.f32.mrf.mxu0
    %v4088 = vadd.f32 %v3999, %v4087
    %4089 = vmatmul.bf16.gmra.mxu0 %v774
    %v4090 = vpop.f32.mrf.mxu0
    %v4091 = vadd.f32 %v4002, %v4090
    %v4092 = vpop.f32.mrf.mxu0
    %v4093 = vadd.f32 %v4004, %v4092
    %4094 = vdwg.mxu0
    %4095 = vmatpush.bf16.msra.mxu0 %v2367
    %4096 = vmatpush.bf16.msra.mxu0 %v2355
    %4097 = vmatpush.bf16.msra.mxu0 %v2343
    %4098 = vmatpush.bf16.msra.mxu0 %v2331
    %4099 = vmatpush.bf16.msra.mxu0 %v2319
    %4100 = vmatpush.bf16.msra.mxu0 %v2307
    %4101 = vmatpush.bf16.msra.mxu0 %v2295
    %4102 = vmatpush.bf16.msra.mxu0 %v2283
    %4103 = vmatmul.bf16.gmra.mxu0 %v715
    %v4104 = vpop.f32.mrf.mxu0
    %v4105 = vadd.f32 %v4016, %v4104
    %v4106 = vpop.f32.mrf.mxu0
    %v4107 = vadd.f32 %v4018, %v4106
    %4108 = vmatmul.bf16.gmra.mxu0 %v719
    %v4109 = vpop.f32.mrf.mxu0
    %v4110 = vadd.f32 %v4021, %v4109
    %v4111 = vpop.f32.mrf.mxu0
    %v4112 = vadd.f32 %v4023, %v4111
    %4113 = vmatmul.bf16.gmra.mxu0 %v723
    %v4114 = vpop.f32.mrf.mxu0
    %v4115 = vadd.f32 %v4026, %v4114
    %v4116 = vpop.f32.mrf.mxu0
    %v4117 = vadd.f32 %v4028, %v4116
    %4118 = vmatmul.bf16.gmra.mxu0 %v727
    %v4119 = vpop.f32.mrf.mxu0
    %v4120 = vadd.f32 %v4031, %v4119
    %v4121 = vpop.f32.mrf.mxu0
    %v4122 = vadd.f32 %v4033, %v4121
    %4123 = vmatmul.bf16.gmra.mxu0 %v731
    %v4124 = vpop.f32.mrf.mxu0
    %v4125 = vadd.f32 %v4036, %v4124
    %v4126 = vpop.f32.mrf.mxu0
    %v4127 = vadd.f32 %v4038, %v4126
    %4128 = vmatmul.bf16.gmra.mxu0 %v735
    %v4129 = vpop.f32.mrf.mxu0
    %v4130 = vadd.f32 %v4041, %v4129
    %v4131 = vpop.f32.mrf.mxu0
    %v4132 = vadd.f32 %v4043, %v4131
    %4133 = vmatmul.bf16.gmra.mxu0 %v739
    %v4134 = vpop.f32.mrf.mxu0
    %v4135 = vadd.f32 %v4046, %v4134
    %v4136 = vpop.f32.mrf.mxu0
    %v4137 = vadd.f32 %v4048, %v4136
    %4138 = vmatmul.bf16.gmra.mxu0 %v743
    %v4139 = vpop.f32.mrf.mxu0
    %v4140 = vadd.f32 %v4051, %v4139
    %v4141 = vpop.f32.mrf.mxu0
    %v4142 = vadd.f32 %v4053, %v4141
    %4143 = vmatmul.bf16.gmra.mxu0 %v747
    %v4144 = vpop.f32.mrf.mxu0
    %v4145 = vadd.f32 %v4056, %v4144
    %v4146 = vpop.f32.mrf.mxu0
    %v4147 = vadd.f32 %v4058, %v4146
    %4148 = vmatmul.bf16.gmra.mxu0 %v751
    %v4149 = vpop.f32.mrf.mxu0
    %v4150 = vadd.f32 %v4061, %v4149
    %v4151 = vpop.f32.mrf.mxu0
    %v4152 = vadd.f32 %v4063, %v4151
    %4153 = vmatmul.bf16.gmra.mxu0 %v755
    %v4154 = vpop.f32.mrf.mxu0
    %v4155 = vadd.f32 %v4066, %v4154
    %v4156 = vpop.f32.mrf.mxu0
    %v4157 = vadd.f32 %v4068, %v4156
    %4158 = vmatmul.bf16.gmra.mxu0 %v759
    %v4159 = vpop.f32.mrf.mxu0
    %v4160 = vadd.f32 %v4071, %v4159
    %v4161 = vpop.f32.mrf.mxu0
    %v4162 = vadd.f32 %v4073, %v4161
    %4163 = vmatmul.bf16.gmra.mxu0 %v763
    %v4164 = vpop.f32.mrf.mxu0
    %v4165 = vadd.f32 %v4076, %v4164
    %v4166 = vpop.f32.mrf.mxu0
    %v4167 = vadd.f32 %v4078, %v4166
    %4168 = vmatmul.bf16.gmra.mxu0 %v767
    %v4169 = vpop.f32.mrf.mxu0
    %v4170 = vadd.f32 %v4081, %v4169
    %v4171 = vpop.f32.mrf.mxu0
    %v4172 = vadd.f32 %v4083, %v4171
    %4173 = vmatmul.bf16.gmra.mxu0 %v771
    %v4174 = vpop.f32.mrf.mxu0
    %v4175 = vadd.f32 %v4086, %v4174
    %v4176 = vpop.f32.mrf.mxu0
    %v4177 = vadd.f32 %v4088, %v4176
    %4178 = vmatmul.bf16.gmra.mxu0 %v775
    %v4179 = vpop.f32.mrf.mxu0
    %v4180 = vadd.f32 %v4091, %v4179
    %v4181 = vpop.f32.mrf.mxu0
    %v4182 = vadd.f32 %v4093, %v4181
    %4183 = vdwg.mxu0
    %4184 = vmatpush.bf16.msra.mxu0 %v2080
    %4185 = vmatpush.bf16.msra.mxu0 %v2068
    %4186 = vmatpush.bf16.msra.mxu0 %v2056
    %4187 = vmatpush.bf16.msra.mxu0 %v2044
    %4188 = vmatpush.bf16.msra.mxu0 %v2032
    %4189 = vmatpush.bf16.msra.mxu0 %v2020
    %4190 = vmatpush.bf16.msra.mxu0 %v2008
    %4191 = vmatpush.bf16.msra.mxu0 %v1996
    %4192 = vmatmul.bf16.gmra.mxu0 %v712
    %v4193 = vpop.f32.mrf.mxu0
    %v4194 = vadd.f32 %v500, %v4193
    %v4195 = vpop.f32.mrf.mxu0
    %v4196 = vadd.f32 %v500, %v4195
    %4197 = vmatmul.bf16.gmra.mxu0 %v716
    %v4198 = vpop.f32.mrf.mxu0
    %v4199 = vadd.f32 %v500, %v4198
    %v4200 = vpop.f32.mrf.mxu0
    %v4201 = vadd.f32 %v500, %v4200
    %4202 = vmatmul.bf16.gmra.mxu0 %v720
    %v4203 = vpop.f32.mrf.mxu0
    %v4204 = vadd.f32 %v500, %v4203
    %v4205 = vpop.f32.mrf.mxu0
    %v4206 = vadd.f32 %v500, %v4205
    %4207 = vmatmul.bf16.gmra.mxu0 %v724
    %v4208 = vpop.f32.mrf.mxu0
    %v4209 = vadd.f32 %v500, %v4208
    %v4210 = vpop.f32.mrf.mxu0
    %v4211 = vadd.f32 %v500, %v4210
    %4212 = vmatmul.bf16.gmra.mxu0 %v728
    %v4213 = vpop.f32.mrf.mxu0
    %v4214 = vadd.f32 %v500, %v4213
    %v4215 = vpop.f32.mrf.mxu0
    %v4216 = vadd.f32 %v500, %v4215
    %4217 = vmatmul.bf16.gmra.mxu0 %v732
    %v4218 = vpop.f32.mrf.mxu0
    %v4219 = vadd.f32 %v500, %v4218
    %v4220 = vpop.f32.mrf.mxu0
    %v4221 = vadd.f32 %v500, %v4220
    %4222 = vmatmul.bf16.gmra.mxu0 %v736
    %v4223 = vpop.f32.mrf.mxu0
    %v4224 = vadd.f32 %v500, %v4223
    %v4225 = vpop.f32.mrf.mxu0
    %v4226 = vadd.f32 %v500, %v4225
    %4227 = vmatmul.bf16.gmra.mxu0 %v740
    %v4228 = vpop.f32.mrf.mxu0
    %v4229 = vadd.f32 %v500, %v4228
    %v4230 = vpop.f32.mrf.mxu0
    %v4231 = vadd.f32 %v500, %v4230
    %4232 = vmatmul.bf16.gmra.mxu0 %v744
    %v4233 = vpop.f32.mrf.mxu0
    %v4234 = vadd.f32 %v500, %v4233
    %v4235 = vpop.f32.mrf.mxu0
    %v4236 = vadd.f32 %v500, %v4235
    %4237 = vmatmul.bf16.gmra.mxu0 %v748
    %v4238 = vpop.f32.mrf.mxu0
    %v4239 = vadd.f32 %v500, %v4238
    %v4240 = vpop.f32.mrf.mxu0
    %v4241 = vadd.f32 %v500, %v4240
    %4242 = vmatmul.bf16.gmra.mxu0 %v752
    %v4243 = vpop.f32.mrf.mxu0
    %v4244 = vadd.f32 %v500, %v4243
    %v4245 = vpop.f32.mrf.mxu0
    %v4246 = vadd.f32 %v500, %v4245
    %4247 = vmatmul.bf16.gmra.mxu0 %v756
    %v4248 = vpop.f32.mrf.mxu0
    %v4249 = vadd.f32 %v500, %v4248
    %v4250 = vpop.f32.mrf.mxu0
    %v4251 = vadd.f32 %v500, %v4250
    %4252 = vmatmul.bf16.gmra.mxu0 %v760
    %v4253 = vpop.f32.mrf.mxu0
    %v4254 = vadd.f32 %v500, %v4253
    %v4255 = vpop.f32.mrf.mxu0
    %v4256 = vadd.f32 %v500, %v4255
    %4257 = vmatmul.bf16.gmra.mxu0 %v764
    %v4258 = vpop.f32.mrf.mxu0
    %v4259 = vadd.f32 %v500, %v4258
    %v4260 = vpop.f32.mrf.mxu0
    %v4261 = vadd.f32 %v500, %v4260
    %4262 = vmatmul.bf16.gmra.mxu0 %v768
    %v4263 = vpop.f32.mrf.mxu0
    %v4264 = vadd.f32 %v500, %v4263
    %v4265 = vpop.f32.mrf.mxu0
    %v4266 = vadd.f32 %v500, %v4265
    %4267 = vmatmul.bf16.gmra.mxu0 %v772
    %v4268 = vpop.f32.mrf.mxu0
    %v4269 = vadd.f32 %v500, %v4268
    %v4270 = vpop.f32.mrf.mxu0
    %v4271 = vadd.f32 %v500, %v4270
    %4272 = vdwg.mxu0
    %4273 = vmatpush.bf16.msra.mxu0 %v2176
    %4274 = vmatpush.bf16.msra.mxu0 %v2164
    %4275 = vmatpush.bf16.msra.mxu0 %v2152
    %4276 = vmatpush.bf16.msra.mxu0 %v2140
    %4277 = vmatpush.bf16.msra.mxu0 %v2128
    %4278 = vmatpush.bf16.msra.mxu0 %v2116
    %4279 = vmatpush.bf16.msra.mxu0 %v2104
    %4280 = vmatpush.bf16.msra.mxu0 %v2092
    %4281 = vmatmul.bf16.gmra.mxu0 %v713
    %v4282 = vpop.f32.mrf.mxu0
    %v4283 = vadd.f32 %v4194, %v4282
    %v4284 = vpop.f32.mrf.mxu0
    %v4285 = vadd.f32 %v4196, %v4284
    %4286 = vmatmul.bf16.gmra.mxu0 %v717
    %v4287 = vpop.f32.mrf.mxu0
    %v4288 = vadd.f32 %v4199, %v4287
    %v4289 = vpop.f32.mrf.mxu0
    %v4290 = vadd.f32 %v4201, %v4289
    %4291 = vmatmul.bf16.gmra.mxu0 %v721
    %v4292 = vpop.f32.mrf.mxu0
    %v4293 = vadd.f32 %v4204, %v4292
    %v4294 = vpop.f32.mrf.mxu0
    %v4295 = vadd.f32 %v4206, %v4294
    %4296 = vmatmul.bf16.gmra.mxu0 %v725
    %v4297 = vpop.f32.mrf.mxu0
    %v4298 = vadd.f32 %v4209, %v4297
    %v4299 = vpop.f32.mrf.mxu0
    %v4300 = vadd.f32 %v4211, %v4299
    %4301 = vmatmul.bf16.gmra.mxu0 %v729
    %v4302 = vpop.f32.mrf.mxu0
    %v4303 = vadd.f32 %v4214, %v4302
    %v4304 = vpop.f32.mrf.mxu0
    %v4305 = vadd.f32 %v4216, %v4304
    %4306 = vmatmul.bf16.gmra.mxu0 %v733
    %v4307 = vpop.f32.mrf.mxu0
    %v4308 = vadd.f32 %v4219, %v4307
    %v4309 = vpop.f32.mrf.mxu0
    %v4310 = vadd.f32 %v4221, %v4309
    %4311 = vmatmul.bf16.gmra.mxu0 %v737
    %v4312 = vpop.f32.mrf.mxu0
    %v4313 = vadd.f32 %v4224, %v4312
    %v4314 = vpop.f32.mrf.mxu0
    %v4315 = vadd.f32 %v4226, %v4314
    %4316 = vmatmul.bf16.gmra.mxu0 %v741
    %v4317 = vpop.f32.mrf.mxu0
    %v4318 = vadd.f32 %v4229, %v4317
    %v4319 = vpop.f32.mrf.mxu0
    %v4320 = vadd.f32 %v4231, %v4319
    %4321 = vmatmul.bf16.gmra.mxu0 %v745
    %v4322 = vpop.f32.mrf.mxu0
    %v4323 = vadd.f32 %v4234, %v4322
    %v4324 = vpop.f32.mrf.mxu0
    %v4325 = vadd.f32 %v4236, %v4324
    %4326 = vmatmul.bf16.gmra.mxu0 %v749
    %v4327 = vpop.f32.mrf.mxu0
    %v4328 = vadd.f32 %v4239, %v4327
    %v4329 = vpop.f32.mrf.mxu0
    %v4330 = vadd.f32 %v4241, %v4329
    %4331 = vmatmul.bf16.gmra.mxu0 %v753
    %v4332 = vpop.f32.mrf.mxu0
    %v4333 = vadd.f32 %v4244, %v4332
    %v4334 = vpop.f32.mrf.mxu0
    %v4335 = vadd.f32 %v4246, %v4334
    %4336 = vmatmul.bf16.gmra.mxu0 %v757
    %v4337 = vpop.f32.mrf.mxu0
    %v4338 = vadd.f32 %v4249, %v4337
    %v4339 = vpop.f32.mrf.mxu0
    %v4340 = vadd.f32 %v4251, %v4339
    %4341 = vmatmul.bf16.gmra.mxu0 %v761
    %v4342 = vpop.f32.mrf.mxu0
    %v4343 = vadd.f32 %v4254, %v4342
    %v4344 = vpop.f32.mrf.mxu0
    %v4345 = vadd.f32 %v4256, %v4344
    %4346 = vmatmul.bf16.gmra.mxu0 %v765
    %v4347 = vpop.f32.mrf.mxu0
    %v4348 = vadd.f32 %v4259, %v4347
    %v4349 = vpop.f32.mrf.mxu0
    %v4350 = vadd.f32 %v4261, %v4349
    %4351 = vmatmul.bf16.gmra.mxu0 %v769
    %v4352 = vpop.f32.mrf.mxu0
    %v4353 = vadd.f32 %v4264, %v4352
    %v4354 = vpop.f32.mrf.mxu0
    %v4355 = vadd.f32 %v4266, %v4354
    %4356 = vmatmul.bf16.gmra.mxu0 %v773
    %v4357 = vpop.f32.mrf.mxu0
    %v4358 = vadd.f32 %v4269, %v4357
    %v4359 = vpop.f32.mrf.mxu0
    %v4360 = vadd.f32 %v4271, %v4359
    %4361 = vdwg.mxu0
    %4362 = vmatpush.bf16.msra.mxu0 %v2272
    %4363 = vmatpush.bf16.msra.mxu0 %v2260
    %4364 = vmatpush.bf16.msra.mxu0 %v2248
    %4365 = vmatpush.bf16.msra.mxu0 %v2236
    %4366 = vmatpush.bf16.msra.mxu0 %v2224
    %4367 = vmatpush.bf16.msra.mxu0 %v2212
    %4368 = vmatpush.bf16.msra.mxu0 %v2200
    %4369 = vmatpush.bf16.msra.mxu0 %v2188
    %4370 = vmatmul.bf16.gmra.mxu0 %v714
    %v4371 = vpop.f32.mrf.mxu0
    %v4372 = vadd.f32 %v4283, %v4371
    %v4373 = vpop.f32.mrf.mxu0
    %v4374 = vadd.f32 %v4285, %v4373
    %4375 = vmatmul.bf16.gmra.mxu0 %v718
    %v4376 = vpop.f32.mrf.mxu0
    %v4377 = vadd.f32 %v4288, %v4376
    %v4378 = vpop.f32.mrf.mxu0
    %v4379 = vadd.f32 %v4290, %v4378
    %4380 = vmatmul.bf16.gmra.mxu0 %v722
    %v4381 = vpop.f32.mrf.mxu0
    %v4382 = vadd.f32 %v4293, %v4381
    %v4383 = vpop.f32.mrf.mxu0
    %v4384 = vadd.f32 %v4295, %v4383
    %4385 = vmatmul.bf16.gmra.mxu0 %v726
    %v4386 = vpop.f32.mrf.mxu0
    %v4387 = vadd.f32 %v4298, %v4386
    %v4388 = vpop.f32.mrf.mxu0
    %v4389 = vadd.f32 %v4300, %v4388
    %4390 = vmatmul.bf16.gmra.mxu0 %v730
    %v4391 = vpop.f32.mrf.mxu0
    %v4392 = vadd.f32 %v4303, %v4391
    %v4393 = vpop.f32.mrf.mxu0
    %v4394 = vadd.f32 %v4305, %v4393
    %4395 = vmatmul.bf16.gmra.mxu0 %v734
    %v4396 = vpop.f32.mrf.mxu0
    %v4397 = vadd.f32 %v4308, %v4396
    %v4398 = vpop.f32.mrf.mxu0
    %v4399 = vadd.f32 %v4310, %v4398
    %4400 = vmatmul.bf16.gmra.mxu0 %v738
    %v4401 = vpop.f32.mrf.mxu0
    %v4402 = vadd.f32 %v4313, %v4401
    %v4403 = vpop.f32.mrf.mxu0
    %v4404 = vadd.f32 %v4315, %v4403
    %4405 = vmatmul.bf16.gmra.mxu0 %v742
    %v4406 = vpop.f32.mrf.mxu0
    %v4407 = vadd.f32 %v4318, %v4406
    %v4408 = vpop.f32.mrf.mxu0
    %v4409 = vadd.f32 %v4320, %v4408
    %4410 = vmatmul.bf16.gmra.mxu0 %v746
    %v4411 = vpop.f32.mrf.mxu0
    %v4412 = vadd.f32 %v4323, %v4411
    %v4413 = vpop.f32.mrf.mxu0
    %v4414 = vadd.f32 %v4325, %v4413
    %4415 = vmatmul.bf16.gmra.mxu0 %v750
    %v4416 = vpop.f32.mrf.mxu0
    %v4417 = vadd.f32 %v4328, %v4416
    %v4418 = vpop.f32.mrf.mxu0
    %v4419 = vadd.f32 %v4330, %v4418
    %4420 = vmatmul.bf16.gmra.mxu0 %v754
    %v4421 = vpop.f32.mrf.mxu0
    %v4422 = vadd.f32 %v4333, %v4421
    %v4423 = vpop.f32.mrf.mxu0
    %v4424 = vadd.f32 %v4335, %v4423
    %4425 = vmatmul.bf16.gmra.mxu0 %v758
    %v4426 = vpop.f32.mrf.mxu0
    %v4427 = vadd.f32 %v4338, %v4426
    %v4428 = vpop.f32.mrf.mxu0
    %v4429 = vadd.f32 %v4340, %v4428
    %4430 = vmatmul.bf16.gmra.mxu0 %v762
    %v4431 = vpop.f32.mrf.mxu0
    %v4432 = vadd.f32 %v4343, %v4431
    %v4433 = vpop.f32.mrf.mxu0
    %v4434 = vadd.f32 %v4345, %v4433
    %4435 = vmatmul.bf16.gmra.mxu0 %v766
    %v4436 = vpop.f32.mrf.mxu0
    %v4437 = vadd.f32 %v4348, %v4436
    %v4438 = vpop.f32.mrf.mxu0
    %v4439 = vadd.f32 %v4350, %v4438
    %4440 = vmatmul.bf16.gmra.mxu0 %v770
    %v4441 = vpop.f32.mrf.mxu0
    %v4442 = vadd.f32 %v4353, %v4441
    %v4443 = vpop.f32.mrf.mxu0
    %v4444 = vadd.f32 %v4355, %v4443
    %4445 = vmatmul.bf16.gmra.mxu0 %v774
    %v4446 = vpop.f32.mrf.mxu0
    %v4447 = vadd.f32 %v4358, %v4446
    %v4448 = vpop.f32.mrf.mxu0
    %v4449 = vadd.f32 %v4360, %v4448
    %4450 = vdwg.mxu0
    %4451 = vmatpush.bf16.msra.mxu0 %v2368
    %4452 = vmatpush.bf16.msra.mxu0 %v2356
    %4453 = vmatpush.bf16.msra.mxu0 %v2344
    %4454 = vmatpush.bf16.msra.mxu0 %v2332
    %4455 = vmatpush.bf16.msra.mxu0 %v2320
    %4456 = vmatpush.bf16.msra.mxu0 %v2308
    %4457 = vmatpush.bf16.msra.mxu0 %v2296
    %4458 = vmatpush.bf16.msra.mxu0 %v2284
    %4459 = vmatmul.bf16.gmra.mxu0 %v715
    %v4460 = vpop.f32.mrf.mxu0
    %v4461 = vadd.f32 %v4372, %v4460
    %v4462 = vpop.f32.mrf.mxu0
    %v4463 = vadd.f32 %v4374, %v4462
    %4464 = vmatmul.bf16.gmra.mxu0 %v719
    %v4465 = vpop.f32.mrf.mxu0
    %v4466 = vadd.f32 %v4377, %v4465
    %v4467 = vpop.f32.mrf.mxu0
    %v4468 = vadd.f32 %v4379, %v4467
    %4469 = vmatmul.bf16.gmra.mxu0 %v723
    %v4470 = vpop.f32.mrf.mxu0
    %v4471 = vadd.f32 %v4382, %v4470
    %v4472 = vpop.f32.mrf.mxu0
    %v4473 = vadd.f32 %v4384, %v4472
    %4474 = vmatmul.bf16.gmra.mxu0 %v727
    %v4475 = vpop.f32.mrf.mxu0
    %v4476 = vadd.f32 %v4387, %v4475
    %v4477 = vpop.f32.mrf.mxu0
    %v4478 = vadd.f32 %v4389, %v4477
    %4479 = vmatmul.bf16.gmra.mxu0 %v731
    %v4480 = vpop.f32.mrf.mxu0
    %v4481 = vadd.f32 %v4392, %v4480
    %v4482 = vpop.f32.mrf.mxu0
    %v4483 = vadd.f32 %v4394, %v4482
    %4484 = vmatmul.bf16.gmra.mxu0 %v735
    %v4485 = vpop.f32.mrf.mxu0
    %v4486 = vadd.f32 %v4397, %v4485
    %v4487 = vpop.f32.mrf.mxu0
    %v4488 = vadd.f32 %v4399, %v4487
    %4489 = vmatmul.bf16.gmra.mxu0 %v739
    %v4490 = vpop.f32.mrf.mxu0
    %v4491 = vadd.f32 %v4402, %v4490
    %v4492 = vpop.f32.mrf.mxu0
    %v4493 = vadd.f32 %v4404, %v4492
    %4494 = vmatmul.bf16.gmra.mxu0 %v743
    %v4495 = vpop.f32.mrf.mxu0
    %v4496 = vadd.f32 %v4407, %v4495
    %v4497 = vpop.f32.mrf.mxu0
    %v4498 = vadd.f32 %v4409, %v4497
    %4499 = vmatmul.bf16.gmra.mxu0 %v747
    %v4500 = vpop.f32.mrf.mxu0
    %v4501 = vadd.f32 %v4412, %v4500
    %v4502 = vpop.f32.mrf.mxu0
    %v4503 = vadd.f32 %v4414, %v4502
    %4504 = vmatmul.bf16.gmra.mxu0 %v751
    %v4505 = vpop.f32.mrf.mxu0
    %v4506 = vadd.f32 %v4417, %v4505
    %v4507 = vpop.f32.mrf.mxu0
    %v4508 = vadd.f32 %v4419, %v4507
    %4509 = vmatmul.bf16.gmra.mxu0 %v755
    %v4510 = vpop.f32.mrf.mxu0
    %v4511 = vadd.f32 %v4422, %v4510
    %v4512 = vpop.f32.mrf.mxu0
    %v4513 = vadd.f32 %v4424, %v4512
    %4514 = vmatmul.bf16.gmra.mxu0 %v759
    %v4515 = vpop.f32.mrf.mxu0
    %v4516 = vadd.f32 %v4427, %v4515
    %v4517 = vpop.f32.mrf.mxu0
    %v4518 = vadd.f32 %v4429, %v4517
    %4519 = vmatmul.bf16.gmra.mxu0 %v763
    %v4520 = vpop.f32.mrf.mxu0
    %v4521 = vadd.f32 %v4432, %v4520
    %v4522 = vpop.f32.mrf.mxu0
    %v4523 = vadd.f32 %v4434, %v4522
    %4524 = vmatmul.bf16.gmra.mxu0 %v767
    %v4525 = vpop.f32.mrf.mxu0
    %v4526 = vadd.f32 %v4437, %v4525
    %v4527 = vpop.f32.mrf.mxu0
    %v4528 = vadd.f32 %v4439, %v4527
    %4529 = vmatmul.bf16.gmra.mxu0 %v771
    %v4530 = vpop.f32.mrf.mxu0
    %v4531 = vadd.f32 %v4442, %v4530
    %v4532 = vpop.f32.mrf.mxu0
    %v4533 = vadd.f32 %v4444, %v4532
    %4534 = vmatmul.bf16.gmra.mxu0 %v775
    %v4535 = vpop.f32.mrf.mxu0
    %v4536 = vadd.f32 %v4447, %v4535
    %v4537 = vpop.f32.mrf.mxu0
    %v4538 = vadd.f32 %v4449, %v4537
    %4539 = vdwg.mxu0
    %4540 = vmatpush.bf16.msra.mxu0 %v2081
    %4541 = vmatpush.bf16.msra.mxu0 %v2069
    %4542 = vmatpush.bf16.msra.mxu0 %v2057
    %4543 = vmatpush.bf16.msra.mxu0 %v2045
    %4544 = vmatpush.bf16.msra.mxu0 %v2033
    %4545 = vmatpush.bf16.msra.mxu0 %v2021
    %4546 = vmatpush.bf16.msra.mxu0 %v2009
    %4547 = vmatpush.bf16.msra.mxu0 %v1997
    %4548 = vmatmul.bf16.gmra.mxu0 %v712
    %v4549 = vpop.f32.mrf.mxu0
    %v4550 = vadd.f32 %v501, %v4549
    %v4551 = vpop.f32.mrf.mxu0
    %v4552 = vadd.f32 %v501, %v4551
    %4553 = vmatmul.bf16.gmra.mxu0 %v716
    %v4554 = vpop.f32.mrf.mxu0
    %v4555 = vadd.f32 %v501, %v4554
    %v4556 = vpop.f32.mrf.mxu0
    %v4557 = vadd.f32 %v501, %v4556
    %4558 = vmatmul.bf16.gmra.mxu0 %v720
    %v4559 = vpop.f32.mrf.mxu0
    %v4560 = vadd.f32 %v501, %v4559
    %v4561 = vpop.f32.mrf.mxu0
    %v4562 = vadd.f32 %v501, %v4561
    %4563 = vmatmul.bf16.gmra.mxu0 %v724
    %v4564 = vpop.f32.mrf.mxu0
    %v4565 = vadd.f32 %v501, %v4564
    %v4566 = vpop.f32.mrf.mxu0
    %v4567 = vadd.f32 %v501, %v4566
    %4568 = vmatmul.bf16.gmra.mxu0 %v728
    %v4569 = vpop.f32.mrf.mxu0
    %v4570 = vadd.f32 %v501, %v4569
    %v4571 = vpop.f32.mrf.mxu0
    %v4572 = vadd.f32 %v501, %v4571
    %4573 = vmatmul.bf16.gmra.mxu0 %v732
    %v4574 = vpop.f32.mrf.mxu0
    %v4575 = vadd.f32 %v501, %v4574
    %v4576 = vpop.f32.mrf.mxu0
    %v4577 = vadd.f32 %v501, %v4576
    %4578 = vmatmul.bf16.gmra.mxu0 %v736
    %v4579 = vpop.f32.mrf.mxu0
    %v4580 = vadd.f32 %v501, %v4579
    %v4581 = vpop.f32.mrf.mxu0
    %v4582 = vadd.f32 %v501, %v4581
    %4583 = vmatmul.bf16.gmra.mxu0 %v740
    %v4584 = vpop.f32.mrf.mxu0
    %v4585 = vadd.f32 %v501, %v4584
    %v4586 = vpop.f32.mrf.mxu0
    %v4587 = vadd.f32 %v501, %v4586
    %4588 = vmatmul.bf16.gmra.mxu0 %v744
    %v4589 = vpop.f32.mrf.mxu0
    %v4590 = vadd.f32 %v501, %v4589
    %v4591 = vpop.f32.mrf.mxu0
    %v4592 = vadd.f32 %v501, %v4591
    %4593 = vmatmul.bf16.gmra.mxu0 %v748
    %v4594 = vpop.f32.mrf.mxu0
    %v4595 = vadd.f32 %v501, %v4594
    %v4596 = vpop.f32.mrf.mxu0
    %v4597 = vadd.f32 %v501, %v4596
    %4598 = vmatmul.bf16.gmra.mxu0 %v752
    %v4599 = vpop.f32.mrf.mxu0
    %v4600 = vadd.f32 %v501, %v4599
    %v4601 = vpop.f32.mrf.mxu0
    %v4602 = vadd.f32 %v501, %v4601
    %4603 = vmatmul.bf16.gmra.mxu0 %v756
    %v4604 = vpop.f32.mrf.mxu0
    %v4605 = vadd.f32 %v501, %v4604
    %v4606 = vpop.f32.mrf.mxu0
    %v4607 = vadd.f32 %v501, %v4606
    %4608 = vmatmul.bf16.gmra.mxu0 %v760
    %v4609 = vpop.f32.mrf.mxu0
    %v4610 = vadd.f32 %v501, %v4609
    %v4611 = vpop.f32.mrf.mxu0
    %v4612 = vadd.f32 %v501, %v4611
    %4613 = vmatmul.bf16.gmra.mxu0 %v764
    %v4614 = vpop.f32.mrf.mxu0
    %v4615 = vadd.f32 %v501, %v4614
    %v4616 = vpop.f32.mrf.mxu0
    %v4617 = vadd.f32 %v501, %v4616
    %4618 = vmatmul.bf16.gmra.mxu0 %v768
    %v4619 = vpop.f32.mrf.mxu0
    %v4620 = vadd.f32 %v501, %v4619
    %v4621 = vpop.f32.mrf.mxu0
    %v4622 = vadd.f32 %v501, %v4621
    %4623 = vmatmul.bf16.gmra.mxu0 %v772
    %v4624 = vpop.f32.mrf.mxu0
    %v4625 = vadd.f32 %v501, %v4624
    %v4626 = vpop.f32.mrf.mxu0
    %v4627 = vadd.f32 %v501, %v4626
    %4628 = vdwg.mxu0
    %4629 = vmatpush.bf16.msra.mxu0 %v2177
    %4630 = vmatpush.bf16.msra.mxu0 %v2165
    %4631 = vmatpush.bf16.msra.mxu0 %v2153
    %4632 = vmatpush.bf16.msra.mxu0 %v2141
    %4633 = vmatpush.bf16.msra.mxu0 %v2129
    %4634 = vmatpush.bf16.msra.mxu0 %v2117
    %4635 = vmatpush.bf16.msra.mxu0 %v2105
    %4636 = vmatpush.bf16.msra.mxu0 %v2093
    %4637 = vmatmul.bf16.gmra.mxu0 %v713
    %v4638 = vpop.f32.mrf.mxu0
    %v4639 = vadd.f32 %v4550, %v4638
    %v4640 = vpop.f32.mrf.mxu0
    %v4641 = vadd.f32 %v4552, %v4640
    %4642 = vmatmul.bf16.gmra.mxu0 %v717
    %v4643 = vpop.f32.mrf.mxu0
    %v4644 = vadd.f32 %v4555, %v4643
    %v4645 = vpop.f32.mrf.mxu0
    %v4646 = vadd.f32 %v4557, %v4645
    %4647 = vmatmul.bf16.gmra.mxu0 %v721
    %v4648 = vpop.f32.mrf.mxu0
    %v4649 = vadd.f32 %v4560, %v4648
    %v4650 = vpop.f32.mrf.mxu0
    %v4651 = vadd.f32 %v4562, %v4650
    %4652 = vmatmul.bf16.gmra.mxu0 %v725
    %v4653 = vpop.f32.mrf.mxu0
    %v4654 = vadd.f32 %v4565, %v4653
    %v4655 = vpop.f32.mrf.mxu0
    %v4656 = vadd.f32 %v4567, %v4655
    %4657 = vmatmul.bf16.gmra.mxu0 %v729
    %v4658 = vpop.f32.mrf.mxu0
    %v4659 = vadd.f32 %v4570, %v4658
    %v4660 = vpop.f32.mrf.mxu0
    %v4661 = vadd.f32 %v4572, %v4660
    %4662 = vmatmul.bf16.gmra.mxu0 %v733
    %v4663 = vpop.f32.mrf.mxu0
    %v4664 = vadd.f32 %v4575, %v4663
    %v4665 = vpop.f32.mrf.mxu0
    %v4666 = vadd.f32 %v4577, %v4665
    %4667 = vmatmul.bf16.gmra.mxu0 %v737
    %v4668 = vpop.f32.mrf.mxu0
    %v4669 = vadd.f32 %v4580, %v4668
    %v4670 = vpop.f32.mrf.mxu0
    %v4671 = vadd.f32 %v4582, %v4670
    %4672 = vmatmul.bf16.gmra.mxu0 %v741
    %v4673 = vpop.f32.mrf.mxu0
    %v4674 = vadd.f32 %v4585, %v4673
    %v4675 = vpop.f32.mrf.mxu0
    %v4676 = vadd.f32 %v4587, %v4675
    %4677 = vmatmul.bf16.gmra.mxu0 %v745
    %v4678 = vpop.f32.mrf.mxu0
    %v4679 = vadd.f32 %v4590, %v4678
    %v4680 = vpop.f32.mrf.mxu0
    %v4681 = vadd.f32 %v4592, %v4680
    %4682 = vmatmul.bf16.gmra.mxu0 %v749
    %v4683 = vpop.f32.mrf.mxu0
    %v4684 = vadd.f32 %v4595, %v4683
    %v4685 = vpop.f32.mrf.mxu0
    %v4686 = vadd.f32 %v4597, %v4685
    %4687 = vmatmul.bf16.gmra.mxu0 %v753
    %v4688 = vpop.f32.mrf.mxu0
    %v4689 = vadd.f32 %v4600, %v4688
    %v4690 = vpop.f32.mrf.mxu0
    %v4691 = vadd.f32 %v4602, %v4690
    %4692 = vmatmul.bf16.gmra.mxu0 %v757
    %v4693 = vpop.f32.mrf.mxu0
    %v4694 = vadd.f32 %v4605, %v4693
    %v4695 = vpop.f32.mrf.mxu0
    %v4696 = vadd.f32 %v4607, %v4695
    %4697 = vmatmul.bf16.gmra.mxu0 %v761
    %v4698 = vpop.f32.mrf.mxu0
    %v4699 = vadd.f32 %v4610, %v4698
    %v4700 = vpop.f32.mrf.mxu0
    %v4701 = vadd.f32 %v4612, %v4700
    %4702 = vmatmul.bf16.gmra.mxu0 %v765
    %v4703 = vpop.f32.mrf.mxu0
    %v4704 = vadd.f32 %v4615, %v4703
    %v4705 = vpop.f32.mrf.mxu0
    %v4706 = vadd.f32 %v4617, %v4705
    %4707 = vmatmul.bf16.gmra.mxu0 %v769
    %v4708 = vpop.f32.mrf.mxu0
    %v4709 = vadd.f32 %v4620, %v4708
    %v4710 = vpop.f32.mrf.mxu0
    %v4711 = vadd.f32 %v4622, %v4710
    %4712 = vmatmul.bf16.gmra.mxu0 %v773
    %v4713 = vpop.f32.mrf.mxu0
    %v4714 = vadd.f32 %v4625, %v4713
    %v4715 = vpop.f32.mrf.mxu0
    %v4716 = vadd.f32 %v4627, %v4715
    %4717 = vdwg.mxu0
    %4718 = vmatpush.bf16.msra.mxu0 %v2273
    %4719 = vmatpush.bf16.msra.mxu0 %v2261
    %4720 = vmatpush.bf16.msra.mxu0 %v2249
    %4721 = vmatpush.bf16.msra.mxu0 %v2237
    %4722 = vmatpush.bf16.msra.mxu0 %v2225
    %4723 = vmatpush.bf16.msra.mxu0 %v2213
    %4724 = vmatpush.bf16.msra.mxu0 %v2201
    %4725 = vmatpush.bf16.msra.mxu0 %v2189
    %4726 = vmatmul.bf16.gmra.mxu0 %v714
    %v4727 = vpop.f32.mrf.mxu0
    %v4728 = vadd.f32 %v4639, %v4727
    %v4729 = vpop.f32.mrf.mxu0
    %v4730 = vadd.f32 %v4641, %v4729
    %4731 = vmatmul.bf16.gmra.mxu0 %v718
    %v4732 = vpop.f32.mrf.mxu0
    %v4733 = vadd.f32 %v4644, %v4732
    %v4734 = vpop.f32.mrf.mxu0
    %v4735 = vadd.f32 %v4646, %v4734
    %4736 = vmatmul.bf16.gmra.mxu0 %v722
    %v4737 = vpop.f32.mrf.mxu0
    %v4738 = vadd.f32 %v4649, %v4737
    %v4739 = vpop.f32.mrf.mxu0
    %v4740 = vadd.f32 %v4651, %v4739
    %4741 = vmatmul.bf16.gmra.mxu0 %v726
    %v4742 = vpop.f32.mrf.mxu0
    %v4743 = vadd.f32 %v4654, %v4742
    %v4744 = vpop.f32.mrf.mxu0
    %v4745 = vadd.f32 %v4656, %v4744
    %4746 = vmatmul.bf16.gmra.mxu0 %v730
    %v4747 = vpop.f32.mrf.mxu0
    %v4748 = vadd.f32 %v4659, %v4747
    %v4749 = vpop.f32.mrf.mxu0
    %v4750 = vadd.f32 %v4661, %v4749
    %4751 = vmatmul.bf16.gmra.mxu0 %v734
    %v4752 = vpop.f32.mrf.mxu0
    %v4753 = vadd.f32 %v4664, %v4752
    %v4754 = vpop.f32.mrf.mxu0
    %v4755 = vadd.f32 %v4666, %v4754
    %4756 = vmatmul.bf16.gmra.mxu0 %v738
    %v4757 = vpop.f32.mrf.mxu0
    %v4758 = vadd.f32 %v4669, %v4757
    %v4759 = vpop.f32.mrf.mxu0
    %v4760 = vadd.f32 %v4671, %v4759
    %4761 = vmatmul.bf16.gmra.mxu0 %v742
    %v4762 = vpop.f32.mrf.mxu0
    %v4763 = vadd.f32 %v4674, %v4762
    %v4764 = vpop.f32.mrf.mxu0
    %v4765 = vadd.f32 %v4676, %v4764
    %4766 = vmatmul.bf16.gmra.mxu0 %v746
    %v4767 = vpop.f32.mrf.mxu0
    %v4768 = vadd.f32 %v4679, %v4767
    %v4769 = vpop.f32.mrf.mxu0
    %v4770 = vadd.f32 %v4681, %v4769
    %4771 = vmatmul.bf16.gmra.mxu0 %v750
    %v4772 = vpop.f32.mrf.mxu0
    %v4773 = vadd.f32 %v4684, %v4772
    %v4774 = vpop.f32.mrf.mxu0
    %v4775 = vadd.f32 %v4686, %v4774
    %4776 = vmatmul.bf16.gmra.mxu0 %v754
    %v4777 = vpop.f32.mrf.mxu0
    %v4778 = vadd.f32 %v4689, %v4777
    %v4779 = vpop.f32.mrf.mxu0
    %v4780 = vadd.f32 %v4691, %v4779
    %4781 = vmatmul.bf16.gmra.mxu0 %v758
    %v4782 = vpop.f32.mrf.mxu0
    %v4783 = vadd.f32 %v4694, %v4782
    %v4784 = vpop.f32.mrf.mxu0
    %v4785 = vadd.f32 %v4696, %v4784
    %4786 = vmatmul.bf16.gmra.mxu0 %v762
    %v4787 = vpop.f32.mrf.mxu0
    %v4788 = vadd.f32 %v4699, %v4787
    %v4789 = vpop.f32.mrf.mxu0
    %v4790 = vadd.f32 %v4701, %v4789
    %4791 = vmatmul.bf16.gmra.mxu0 %v766
    %v4792 = vpop.f32.mrf.mxu0
    %v4793 = vadd.f32 %v4704, %v4792
    %v4794 = vpop.f32.mrf.mxu0
    %v4795 = vadd.f32 %v4706, %v4794
    %4796 = vmatmul.bf16.gmra.mxu0 %v770
    %v4797 = vpop.f32.mrf.mxu0
    %v4798 = vadd.f32 %v4709, %v4797
    %v4799 = vpop.f32.mrf.mxu0
    %v4800 = vadd.f32 %v4711, %v4799
    %4801 = vmatmul.bf16.gmra.mxu0 %v774
    %v4802 = vpop.f32.mrf.mxu0
    %v4803 = vadd.f32 %v4714, %v4802
    %v4804 = vpop.f32.mrf.mxu0
    %v4805 = vadd.f32 %v4716, %v4804
    %4806 = vdwg.mxu0
    %4807 = vmatpush.bf16.msra.mxu0 %v2369
    %4808 = vmatpush.bf16.msra.mxu0 %v2357
    %4809 = vmatpush.bf16.msra.mxu0 %v2345
    %4810 = vmatpush.bf16.msra.mxu0 %v2333
    %4811 = vmatpush.bf16.msra.mxu0 %v2321
    %4812 = vmatpush.bf16.msra.mxu0 %v2309
    %4813 = vmatpush.bf16.msra.mxu0 %v2297
    %4814 = vmatpush.bf16.msra.mxu0 %v2285
    %4815 = vmatmul.bf16.gmra.mxu0 %v715
    %v4816 = vpop.f32.mrf.mxu0
    %v4817 = vadd.f32 %v4728, %v4816
    %v4818 = vpop.f32.mrf.mxu0
    %v4819 = vadd.f32 %v4730, %v4818
    %4820 = vmatmul.bf16.gmra.mxu0 %v719
    %v4821 = vpop.f32.mrf.mxu0
    %v4822 = vadd.f32 %v4733, %v4821
    %v4823 = vpop.f32.mrf.mxu0
    %v4824 = vadd.f32 %v4735, %v4823
    %4825 = vmatmul.bf16.gmra.mxu0 %v723
    %v4826 = vpop.f32.mrf.mxu0
    %v4827 = vadd.f32 %v4738, %v4826
    %v4828 = vpop.f32.mrf.mxu0
    %v4829 = vadd.f32 %v4740, %v4828
    %4830 = vmatmul.bf16.gmra.mxu0 %v727
    %v4831 = vpop.f32.mrf.mxu0
    %v4832 = vadd.f32 %v4743, %v4831
    %v4833 = vpop.f32.mrf.mxu0
    %v4834 = vadd.f32 %v4745, %v4833
    %4835 = vmatmul.bf16.gmra.mxu0 %v731
    %v4836 = vpop.f32.mrf.mxu0
    %v4837 = vadd.f32 %v4748, %v4836
    %v4838 = vpop.f32.mrf.mxu0
    %v4839 = vadd.f32 %v4750, %v4838
    %4840 = vmatmul.bf16.gmra.mxu0 %v735
    %v4841 = vpop.f32.mrf.mxu0
    %v4842 = vadd.f32 %v4753, %v4841
    %v4843 = vpop.f32.mrf.mxu0
    %v4844 = vadd.f32 %v4755, %v4843
    %4845 = vmatmul.bf16.gmra.mxu0 %v739
    %v4846 = vpop.f32.mrf.mxu0
    %v4847 = vadd.f32 %v4758, %v4846
    %v4848 = vpop.f32.mrf.mxu0
    %v4849 = vadd.f32 %v4760, %v4848
    %4850 = vmatmul.bf16.gmra.mxu0 %v743
    %v4851 = vpop.f32.mrf.mxu0
    %v4852 = vadd.f32 %v4763, %v4851
    %v4853 = vpop.f32.mrf.mxu0
    %v4854 = vadd.f32 %v4765, %v4853
    %4855 = vmatmul.bf16.gmra.mxu0 %v747
    %v4856 = vpop.f32.mrf.mxu0
    %v4857 = vadd.f32 %v4768, %v4856
    %v4858 = vpop.f32.mrf.mxu0
    %v4859 = vadd.f32 %v4770, %v4858
    %4860 = vmatmul.bf16.gmra.mxu0 %v751
    %v4861 = vpop.f32.mrf.mxu0
    %v4862 = vadd.f32 %v4773, %v4861
    %v4863 = vpop.f32.mrf.mxu0
    %v4864 = vadd.f32 %v4775, %v4863
    %4865 = vmatmul.bf16.gmra.mxu0 %v755
    %v4866 = vpop.f32.mrf.mxu0
    %v4867 = vadd.f32 %v4778, %v4866
    %v4868 = vpop.f32.mrf.mxu0
    %v4869 = vadd.f32 %v4780, %v4868
    %4870 = vmatmul.bf16.gmra.mxu0 %v759
    %v4871 = vpop.f32.mrf.mxu0
    %v4872 = vadd.f32 %v4783, %v4871
    %v4873 = vpop.f32.mrf.mxu0
    %v4874 = vadd.f32 %v4785, %v4873
    %4875 = vmatmul.bf16.gmra.mxu0 %v763
    %v4876 = vpop.f32.mrf.mxu0
    %v4877 = vadd.f32 %v4788, %v4876
    %v4878 = vpop.f32.mrf.mxu0
    %v4879 = vadd.f32 %v4790, %v4878
    %4880 = vmatmul.bf16.gmra.mxu0 %v767
    %v4881 = vpop.f32.mrf.mxu0
    %v4882 = vadd.f32 %v4793, %v4881
    %v4883 = vpop.f32.mrf.mxu0
    %v4884 = vadd.f32 %v4795, %v4883
    %4885 = vmatmul.bf16.gmra.mxu0 %v771
    %v4886 = vpop.f32.mrf.mxu0
    %v4887 = vadd.f32 %v4798, %v4886
    %v4888 = vpop.f32.mrf.mxu0
    %v4889 = vadd.f32 %v4800, %v4888
    %4890 = vmatmul.bf16.gmra.mxu0 %v775
    %v4891 = vpop.f32.mrf.mxu0
    %v4892 = vadd.f32 %v4803, %v4891
    %v4893 = vpop.f32.mrf.mxu0
    %v4894 = vadd.f32 %v4805, %v4893
    %4895 = vdwg.mxu0
    %4896 = vmatpush.bf16.msra.mxu0 %v2082
    %4897 = vmatpush.bf16.msra.mxu0 %v2070
    %4898 = vmatpush.bf16.msra.mxu0 %v2058
    %4899 = vmatpush.bf16.msra.mxu0 %v2046
    %4900 = vmatpush.bf16.msra.mxu0 %v2034
    %4901 = vmatpush.bf16.msra.mxu0 %v2022
    %4902 = vmatpush.bf16.msra.mxu0 %v2010
    %4903 = vmatpush.bf16.msra.mxu0 %v1998
    %4904 = vmatmul.bf16.gmra.mxu0 %v712
    %v4905 = vpop.f32.mrf.mxu0
    %v4906 = vadd.f32 %v502, %v4905
    %v4907 = vpop.f32.mrf.mxu0
    %v4908 = vadd.f32 %v502, %v4907
    %4909 = vmatmul.bf16.gmra.mxu0 %v716
    %v4910 = vpop.f32.mrf.mxu0
    %v4911 = vadd.f32 %v502, %v4910
    %v4912 = vpop.f32.mrf.mxu0
    %v4913 = vadd.f32 %v502, %v4912
    %4914 = vmatmul.bf16.gmra.mxu0 %v720
    %v4915 = vpop.f32.mrf.mxu0
    %v4916 = vadd.f32 %v502, %v4915
    %v4917 = vpop.f32.mrf.mxu0
    %v4918 = vadd.f32 %v502, %v4917
    %4919 = vmatmul.bf16.gmra.mxu0 %v724
    %v4920 = vpop.f32.mrf.mxu0
    %v4921 = vadd.f32 %v502, %v4920
    %v4922 = vpop.f32.mrf.mxu0
    %v4923 = vadd.f32 %v502, %v4922
    %4924 = vmatmul.bf16.gmra.mxu0 %v728
    %v4925 = vpop.f32.mrf.mxu0
    %v4926 = vadd.f32 %v502, %v4925
    %v4927 = vpop.f32.mrf.mxu0
    %v4928 = vadd.f32 %v502, %v4927
    %4929 = vmatmul.bf16.gmra.mxu0 %v732
    %v4930 = vpop.f32.mrf.mxu0
    %v4931 = vadd.f32 %v502, %v4930
    %v4932 = vpop.f32.mrf.mxu0
    %v4933 = vadd.f32 %v502, %v4932
    %4934 = vmatmul.bf16.gmra.mxu0 %v736
    %v4935 = vpop.f32.mrf.mxu0
    %v4936 = vadd.f32 %v502, %v4935
    %v4937 = vpop.f32.mrf.mxu0
    %v4938 = vadd.f32 %v502, %v4937
    %4939 = vmatmul.bf16.gmra.mxu0 %v740
    %v4940 = vpop.f32.mrf.mxu0
    %v4941 = vadd.f32 %v502, %v4940
    %v4942 = vpop.f32.mrf.mxu0
    %v4943 = vadd.f32 %v502, %v4942
    %4944 = vmatmul.bf16.gmra.mxu0 %v744
    %v4945 = vpop.f32.mrf.mxu0
    %v4946 = vadd.f32 %v502, %v4945
    %v4947 = vpop.f32.mrf.mxu0
    %v4948 = vadd.f32 %v502, %v4947
    %4949 = vmatmul.bf16.gmra.mxu0 %v748
    %v4950 = vpop.f32.mrf.mxu0
    %v4951 = vadd.f32 %v502, %v4950
    %v4952 = vpop.f32.mrf.mxu0
    %v4953 = vadd.f32 %v502, %v4952
    %4954 = vmatmul.bf16.gmra.mxu0 %v752
    %v4955 = vpop.f32.mrf.mxu0
    %v4956 = vadd.f32 %v502, %v4955
    %v4957 = vpop.f32.mrf.mxu0
    %v4958 = vadd.f32 %v502, %v4957
    %4959 = vmatmul.bf16.gmra.mxu0 %v756
    %v4960 = vpop.f32.mrf.mxu0
    %v4961 = vadd.f32 %v502, %v4960
    %v4962 = vpop.f32.mrf.mxu0
    %v4963 = vadd.f32 %v502, %v4962
    %4964 = vmatmul.bf16.gmra.mxu0 %v760
    %v4965 = vpop.f32.mrf.mxu0
    %v4966 = vadd.f32 %v502, %v4965
    %v4967 = vpop.f32.mrf.mxu0
    %v4968 = vadd.f32 %v502, %v4967
    %4969 = vmatmul.bf16.gmra.mxu0 %v764
    %v4970 = vpop.f32.mrf.mxu0
    %v4971 = vadd.f32 %v502, %v4970
    %v4972 = vpop.f32.mrf.mxu0
    %v4973 = vadd.f32 %v502, %v4972
    %4974 = vmatmul.bf16.gmra.mxu0 %v768
    %v4975 = vpop.f32.mrf.mxu0
    %v4976 = vadd.f32 %v502, %v4975
    %v4977 = vpop.f32.mrf.mxu0
    %v4978 = vadd.f32 %v502, %v4977
    %4979 = vmatmul.bf16.gmra.mxu0 %v772
    %v4980 = vpop.f32.mrf.mxu0
    %v4981 = vadd.f32 %v502, %v4980
    %v4982 = vpop.f32.mrf.mxu0
    %v4983 = vadd.f32 %v502, %v4982
    %4984 = vdwg.mxu0
    %4985 = vmatpush.bf16.msra.mxu0 %v2178
    %4986 = vmatpush.bf16.msra.mxu0 %v2166
    %4987 = vmatpush.bf16.msra.mxu0 %v2154
    %4988 = vmatpush.bf16.msra.mxu0 %v2142
    %4989 = vmatpush.bf16.msra.mxu0 %v2130
    %4990 = vmatpush.bf16.msra.mxu0 %v2118
    %4991 = vmatpush.bf16.msra.mxu0 %v2106
    %4992 = vmatpush.bf16.msra.mxu0 %v2094
    %4993 = vmatmul.bf16.gmra.mxu0 %v713
    %v4994 = vpop.f32.mrf.mxu0
    %v4995 = vadd.f32 %v4906, %v4994
    %v4996 = vpop.f32.mrf.mxu0
    %v4997 = vadd.f32 %v4908, %v4996
    %4998 = vmatmul.bf16.gmra.mxu0 %v717
    %v4999 = vpop.f32.mrf.mxu0
    %v5000 = vadd.f32 %v4911, %v4999
    %v5001 = vpop.f32.mrf.mxu0
    %v5002 = vadd.f32 %v4913, %v5001
    %5003 = vmatmul.bf16.gmra.mxu0 %v721
    %v5004 = vpop.f32.mrf.mxu0
    %v5005 = vadd.f32 %v4916, %v5004
    %v5006 = vpop.f32.mrf.mxu0
    %v5007 = vadd.f32 %v4918, %v5006
    %5008 = vmatmul.bf16.gmra.mxu0 %v725
    %v5009 = vpop.f32.mrf.mxu0
    %v5010 = vadd.f32 %v4921, %v5009
    %v5011 = vpop.f32.mrf.mxu0
    %v5012 = vadd.f32 %v4923, %v5011
    %5013 = vmatmul.bf16.gmra.mxu0 %v729
    %v5014 = vpop.f32.mrf.mxu0
    %v5015 = vadd.f32 %v4926, %v5014
    %v5016 = vpop.f32.mrf.mxu0
    %v5017 = vadd.f32 %v4928, %v5016
    %5018 = vmatmul.bf16.gmra.mxu0 %v733
    %v5019 = vpop.f32.mrf.mxu0
    %v5020 = vadd.f32 %v4931, %v5019
    %v5021 = vpop.f32.mrf.mxu0
    %v5022 = vadd.f32 %v4933, %v5021
    %5023 = vmatmul.bf16.gmra.mxu0 %v737
    %v5024 = vpop.f32.mrf.mxu0
    %v5025 = vadd.f32 %v4936, %v5024
    %v5026 = vpop.f32.mrf.mxu0
    %v5027 = vadd.f32 %v4938, %v5026
    %5028 = vmatmul.bf16.gmra.mxu0 %v741
    %v5029 = vpop.f32.mrf.mxu0
    %v5030 = vadd.f32 %v4941, %v5029
    %v5031 = vpop.f32.mrf.mxu0
    %v5032 = vadd.f32 %v4943, %v5031
    %5033 = vmatmul.bf16.gmra.mxu0 %v745
    %v5034 = vpop.f32.mrf.mxu0
    %v5035 = vadd.f32 %v4946, %v5034
    %v5036 = vpop.f32.mrf.mxu0
    %v5037 = vadd.f32 %v4948, %v5036
    %5038 = vmatmul.bf16.gmra.mxu0 %v749
    %v5039 = vpop.f32.mrf.mxu0
    %v5040 = vadd.f32 %v4951, %v5039
    %v5041 = vpop.f32.mrf.mxu0
    %v5042 = vadd.f32 %v4953, %v5041
    %5043 = vmatmul.bf16.gmra.mxu0 %v753
    %v5044 = vpop.f32.mrf.mxu0
    %v5045 = vadd.f32 %v4956, %v5044
    %v5046 = vpop.f32.mrf.mxu0
    %v5047 = vadd.f32 %v4958, %v5046
    %5048 = vmatmul.bf16.gmra.mxu0 %v757
    %v5049 = vpop.f32.mrf.mxu0
    %v5050 = vadd.f32 %v4961, %v5049
    %v5051 = vpop.f32.mrf.mxu0
    %v5052 = vadd.f32 %v4963, %v5051
    %5053 = vmatmul.bf16.gmra.mxu0 %v761
    %v5054 = vpop.f32.mrf.mxu0
    %v5055 = vadd.f32 %v4966, %v5054
    %v5056 = vpop.f32.mrf.mxu0
    %v5057 = vadd.f32 %v4968, %v5056
    %5058 = vmatmul.bf16.gmra.mxu0 %v765
    %v5059 = vpop.f32.mrf.mxu0
    %v5060 = vadd.f32 %v4971, %v5059
    %v5061 = vpop.f32.mrf.mxu0
    %v5062 = vadd.f32 %v4973, %v5061
    %5063 = vmatmul.bf16.gmra.mxu0 %v769
    %v5064 = vpop.f32.mrf.mxu0
    %v5065 = vadd.f32 %v4976, %v5064
    %v5066 = vpop.f32.mrf.mxu0
    %v5067 = vadd.f32 %v4978, %v5066
    %5068 = vmatmul.bf16.gmra.mxu0 %v773
    %v5069 = vpop.f32.mrf.mxu0
    %v5070 = vadd.f32 %v4981, %v5069
    %v5071 = vpop.f32.mrf.mxu0
    %v5072 = vadd.f32 %v4983, %v5071
    %5073 = vdwg.mxu0
    %5074 = vmatpush.bf16.msra.mxu0 %v2274
    %5075 = vmatpush.bf16.msra.mxu0 %v2262
    %5076 = vmatpush.bf16.msra.mxu0 %v2250
    %5077 = vmatpush.bf16.msra.mxu0 %v2238
    %5078 = vmatpush.bf16.msra.mxu0 %v2226
    %5079 = vmatpush.bf16.msra.mxu0 %v2214
    %5080 = vmatpush.bf16.msra.mxu0 %v2202
    %5081 = vmatpush.bf16.msra.mxu0 %v2190
    %5082 = vmatmul.bf16.gmra.mxu0 %v714
    %v5083 = vpop.f32.mrf.mxu0
    %v5084 = vadd.f32 %v4995, %v5083
    %v5085 = vpop.f32.mrf.mxu0
    %v5086 = vadd.f32 %v4997, %v5085
    %5087 = vmatmul.bf16.gmra.mxu0 %v718
    %v5088 = vpop.f32.mrf.mxu0
    %v5089 = vadd.f32 %v5000, %v5088
    %v5090 = vpop.f32.mrf.mxu0
    %v5091 = vadd.f32 %v5002, %v5090
    %5092 = vmatmul.bf16.gmra.mxu0 %v722
    %v5093 = vpop.f32.mrf.mxu0
    %v5094 = vadd.f32 %v5005, %v5093
    %v5095 = vpop.f32.mrf.mxu0
    %v5096 = vadd.f32 %v5007, %v5095
    %5097 = vmatmul.bf16.gmra.mxu0 %v726
    %v5098 = vpop.f32.mrf.mxu0
    %v5099 = vadd.f32 %v5010, %v5098
    %v5100 = vpop.f32.mrf.mxu0
    %v5101 = vadd.f32 %v5012, %v5100
    %5102 = vmatmul.bf16.gmra.mxu0 %v730
    %v5103 = vpop.f32.mrf.mxu0
    %v5104 = vadd.f32 %v5015, %v5103
    %v5105 = vpop.f32.mrf.mxu0
    %v5106 = vadd.f32 %v5017, %v5105
    %5107 = vmatmul.bf16.gmra.mxu0 %v734
    %v5108 = vpop.f32.mrf.mxu0
    %v5109 = vadd.f32 %v5020, %v5108
    %v5110 = vpop.f32.mrf.mxu0
    %v5111 = vadd.f32 %v5022, %v5110
    %5112 = vmatmul.bf16.gmra.mxu0 %v738
    %v5113 = vpop.f32.mrf.mxu0
    %v5114 = vadd.f32 %v5025, %v5113
    %v5115 = vpop.f32.mrf.mxu0
    %v5116 = vadd.f32 %v5027, %v5115
    %5117 = vmatmul.bf16.gmra.mxu0 %v742
    %v5118 = vpop.f32.mrf.mxu0
    %v5119 = vadd.f32 %v5030, %v5118
    %v5120 = vpop.f32.mrf.mxu0
    %v5121 = vadd.f32 %v5032, %v5120
    %5122 = vmatmul.bf16.gmra.mxu0 %v746
    %v5123 = vpop.f32.mrf.mxu0
    %v5124 = vadd.f32 %v5035, %v5123
    %v5125 = vpop.f32.mrf.mxu0
    %v5126 = vadd.f32 %v5037, %v5125
    %5127 = vmatmul.bf16.gmra.mxu0 %v750
    %v5128 = vpop.f32.mrf.mxu0
    %v5129 = vadd.f32 %v5040, %v5128
    %v5130 = vpop.f32.mrf.mxu0
    %v5131 = vadd.f32 %v5042, %v5130
    %5132 = vmatmul.bf16.gmra.mxu0 %v754
    %v5133 = vpop.f32.mrf.mxu0
    %v5134 = vadd.f32 %v5045, %v5133
    %v5135 = vpop.f32.mrf.mxu0
    %v5136 = vadd.f32 %v5047, %v5135
    %5137 = vmatmul.bf16.gmra.mxu0 %v758
    %v5138 = vpop.f32.mrf.mxu0
    %v5139 = vadd.f32 %v5050, %v5138
    %v5140 = vpop.f32.mrf.mxu0
    %v5141 = vadd.f32 %v5052, %v5140
    %5142 = vmatmul.bf16.gmra.mxu0 %v762
    %v5143 = vpop.f32.mrf.mxu0
    %v5144 = vadd.f32 %v5055, %v5143
    %v5145 = vpop.f32.mrf.mxu0
    %v5146 = vadd.f32 %v5057, %v5145
    %5147 = vmatmul.bf16.gmra.mxu0 %v766
    %v5148 = vpop.f32.mrf.mxu0
    %v5149 = vadd.f32 %v5060, %v5148
    %v5150 = vpop.f32.mrf.mxu0
    %v5151 = vadd.f32 %v5062, %v5150
    %5152 = vmatmul.bf16.gmra.mxu0 %v770
    %v5153 = vpop.f32.mrf.mxu0
    %v5154 = vadd.f32 %v5065, %v5153
    %v5155 = vpop.f32.mrf.mxu0
    %v5156 = vadd.f32 %v5067, %v5155
    %5157 = vmatmul.bf16.gmra.mxu0 %v774
    %v5158 = vpop.f32.mrf.mxu0
    %v5159 = vadd.f32 %v5070, %v5158
    %v5160 = vpop.f32.mrf.mxu0
    %v5161 = vadd.f32 %v5072, %v5160
    %5162 = vdwg.mxu0
    %5163 = vmatpush.bf16.msra.mxu0 %v2370
    %5164 = vmatpush.bf16.msra.mxu0 %v2358
    %5165 = vmatpush.bf16.msra.mxu0 %v2346
    %5166 = vmatpush.bf16.msra.mxu0 %v2334
    %5167 = vmatpush.bf16.msra.mxu0 %v2322
    %5168 = vmatpush.bf16.msra.mxu0 %v2310
    %5169 = vmatpush.bf16.msra.mxu0 %v2298
    %5170 = vmatpush.bf16.msra.mxu0 %v2286
    %5171 = vmatmul.bf16.gmra.mxu0 %v715
    %v5172 = vpop.f32.mrf.mxu0
    %v5173 = vadd.f32 %v5084, %v5172
    %v5174 = vpop.f32.mrf.mxu0
    %v5175 = vadd.f32 %v5086, %v5174
    %5176 = vmatmul.bf16.gmra.mxu0 %v719
    %v5177 = vpop.f32.mrf.mxu0
    %v5178 = vadd.f32 %v5089, %v5177
    %v5179 = vpop.f32.mrf.mxu0
    %v5180 = vadd.f32 %v5091, %v5179
    %5181 = vmatmul.bf16.gmra.mxu0 %v723
    %v5182 = vpop.f32.mrf.mxu0
    %v5183 = vadd.f32 %v5094, %v5182
    %v5184 = vpop.f32.mrf.mxu0
    %v5185 = vadd.f32 %v5096, %v5184
    %5186 = vmatmul.bf16.gmra.mxu0 %v727
    %v5187 = vpop.f32.mrf.mxu0
    %v5188 = vadd.f32 %v5099, %v5187
    %v5189 = vpop.f32.mrf.mxu0
    %v5190 = vadd.f32 %v5101, %v5189
    %5191 = vmatmul.bf16.gmra.mxu0 %v731
    %v5192 = vpop.f32.mrf.mxu0
    %v5193 = vadd.f32 %v5104, %v5192
    %v5194 = vpop.f32.mrf.mxu0
    %v5195 = vadd.f32 %v5106, %v5194
    %5196 = vmatmul.bf16.gmra.mxu0 %v735
    %v5197 = vpop.f32.mrf.mxu0
    %v5198 = vadd.f32 %v5109, %v5197
    %v5199 = vpop.f32.mrf.mxu0
    %v5200 = vadd.f32 %v5111, %v5199
    %5201 = vmatmul.bf16.gmra.mxu0 %v739
    %v5202 = vpop.f32.mrf.mxu0
    %v5203 = vadd.f32 %v5114, %v5202
    %v5204 = vpop.f32.mrf.mxu0
    %v5205 = vadd.f32 %v5116, %v5204
    %5206 = vmatmul.bf16.gmra.mxu0 %v743
    %v5207 = vpop.f32.mrf.mxu0
    %v5208 = vadd.f32 %v5119, %v5207
    %v5209 = vpop.f32.mrf.mxu0
    %v5210 = vadd.f32 %v5121, %v5209
    %5211 = vmatmul.bf16.gmra.mxu0 %v747
    %v5212 = vpop.f32.mrf.mxu0
    %v5213 = vadd.f32 %v5124, %v5212
    %v5214 = vpop.f32.mrf.mxu0
    %v5215 = vadd.f32 %v5126, %v5214
    %5216 = vmatmul.bf16.gmra.mxu0 %v751
    %v5217 = vpop.f32.mrf.mxu0
    %v5218 = vadd.f32 %v5129, %v5217
    %v5219 = vpop.f32.mrf.mxu0
    %v5220 = vadd.f32 %v5131, %v5219
    %5221 = vmatmul.bf16.gmra.mxu0 %v755
    %v5222 = vpop.f32.mrf.mxu0
    %v5223 = vadd.f32 %v5134, %v5222
    %v5224 = vpop.f32.mrf.mxu0
    %v5225 = vadd.f32 %v5136, %v5224
    %5226 = vmatmul.bf16.gmra.mxu0 %v759
    %v5227 = vpop.f32.mrf.mxu0
    %v5228 = vadd.f32 %v5139, %v5227
    %v5229 = vpop.f32.mrf.mxu0
    %v5230 = vadd.f32 %v5141, %v5229
    %5231 = vmatmul.bf16.gmra.mxu0 %v763
    %v5232 = vpop.f32.mrf.mxu0
    %v5233 = vadd.f32 %v5144, %v5232
    %v5234 = vpop.f32.mrf.mxu0
    %v5235 = vadd.f32 %v5146, %v5234
    %5236 = vmatmul.bf16.gmra.mxu0 %v767
    %v5237 = vpop.f32.mrf.mxu0
    %v5238 = vadd.f32 %v5149, %v5237
    %v5239 = vpop.f32.mrf.mxu0
    %v5240 = vadd.f32 %v5151, %v5239
    %5241 = vmatmul.bf16.gmra.mxu0 %v771
    %v5242 = vpop.f32.mrf.mxu0
    %v5243 = vadd.f32 %v5154, %v5242
    %v5244 = vpop.f32.mrf.mxu0
    %v5245 = vadd.f32 %v5156, %v5244
    %5246 = vmatmul.bf16.gmra.mxu0 %v775
    %v5247 = vpop.f32.mrf.mxu0
    %v5248 = vadd.f32 %v5159, %v5247
    %v5249 = vpop.f32.mrf.mxu0
    %v5250 = vadd.f32 %v5161, %v5249
    %5251 = vdwg.mxu0
    %5252 = vmatpush.bf16.msra.mxu0 %v2083
    %5253 = vmatpush.bf16.msra.mxu0 %v2071
    %5254 = vmatpush.bf16.msra.mxu0 %v2059
    %5255 = vmatpush.bf16.msra.mxu0 %v2047
    %5256 = vmatpush.bf16.msra.mxu0 %v2035
    %5257 = vmatpush.bf16.msra.mxu0 %v2023
    %5258 = vmatpush.bf16.msra.mxu0 %v2011
    %5259 = vmatpush.bf16.msra.mxu0 %v1999
    %5260 = vmatmul.bf16.gmra.mxu0 %v712
    %v5261 = vpop.f32.mrf.mxu0
    %v5262 = vadd.f32 %v503, %v5261
    %v5263 = vpop.f32.mrf.mxu0
    %v5264 = vadd.f32 %v503, %v5263
    %5265 = vmatmul.bf16.gmra.mxu0 %v716
    %v5266 = vpop.f32.mrf.mxu0
    %v5267 = vadd.f32 %v503, %v5266
    %v5268 = vpop.f32.mrf.mxu0
    %v5269 = vadd.f32 %v503, %v5268
    %5270 = vmatmul.bf16.gmra.mxu0 %v720
    %v5271 = vpop.f32.mrf.mxu0
    %v5272 = vadd.f32 %v503, %v5271
    %v5273 = vpop.f32.mrf.mxu0
    %v5274 = vadd.f32 %v503, %v5273
    %5275 = vmatmul.bf16.gmra.mxu0 %v724
    %v5276 = vpop.f32.mrf.mxu0
    %v5277 = vadd.f32 %v503, %v5276
    %v5278 = vpop.f32.mrf.mxu0
    %v5279 = vadd.f32 %v503, %v5278
    %5280 = vmatmul.bf16.gmra.mxu0 %v728
    %v5281 = vpop.f32.mrf.mxu0
    %v5282 = vadd.f32 %v503, %v5281
    %v5283 = vpop.f32.mrf.mxu0
    %v5284 = vadd.f32 %v503, %v5283
    %5285 = vmatmul.bf16.gmra.mxu0 %v732
    %v5286 = vpop.f32.mrf.mxu0
    %v5287 = vadd.f32 %v503, %v5286
    %v5288 = vpop.f32.mrf.mxu0
    %v5289 = vadd.f32 %v503, %v5288
    %5290 = vmatmul.bf16.gmra.mxu0 %v736
    %v5291 = vpop.f32.mrf.mxu0
    %v5292 = vadd.f32 %v503, %v5291
    %v5293 = vpop.f32.mrf.mxu0
    %v5294 = vadd.f32 %v503, %v5293
    %5295 = vmatmul.bf16.gmra.mxu0 %v740
    %v5296 = vpop.f32.mrf.mxu0
    %v5297 = vadd.f32 %v503, %v5296
    %v5298 = vpop.f32.mrf.mxu0
    %v5299 = vadd.f32 %v503, %v5298
    %5300 = vmatmul.bf16.gmra.mxu0 %v744
    %v5301 = vpop.f32.mrf.mxu0
    %v5302 = vadd.f32 %v503, %v5301
    %v5303 = vpop.f32.mrf.mxu0
    %v5304 = vadd.f32 %v503, %v5303
    %5305 = vmatmul.bf16.gmra.mxu0 %v748
    %v5306 = vpop.f32.mrf.mxu0
    %v5307 = vadd.f32 %v503, %v5306
    %v5308 = vpop.f32.mrf.mxu0
    %v5309 = vadd.f32 %v503, %v5308
    %5310 = vmatmul.bf16.gmra.mxu0 %v752
    %v5311 = vpop.f32.mrf.mxu0
    %v5312 = vadd.f32 %v503, %v5311
    %v5313 = vpop.f32.mrf.mxu0
    %v5314 = vadd.f32 %v503, %v5313
    %5315 = vmatmul.bf16.gmra.mxu0 %v756
    %v5316 = vpop.f32.mrf.mxu0
    %v5317 = vadd.f32 %v503, %v5316
    %v5318 = vpop.f32.mrf.mxu0
    %v5319 = vadd.f32 %v503, %v5318
    %5320 = vmatmul.bf16.gmra.mxu0 %v760
    %v5321 = vpop.f32.mrf.mxu0
    %v5322 = vadd.f32 %v503, %v5321
    %v5323 = vpop.f32.mrf.mxu0
    %v5324 = vadd.f32 %v503, %v5323
    %5325 = vmatmul.bf16.gmra.mxu0 %v764
    %v5326 = vpop.f32.mrf.mxu0
    %v5327 = vadd.f32 %v503, %v5326
    %v5328 = vpop.f32.mrf.mxu0
    %v5329 = vadd.f32 %v503, %v5328
    %5330 = vmatmul.bf16.gmra.mxu0 %v768
    %v5331 = vpop.f32.mrf.mxu0
    %v5332 = vadd.f32 %v503, %v5331
    %v5333 = vpop.f32.mrf.mxu0
    %v5334 = vadd.f32 %v503, %v5333
    %5335 = vmatmul.bf16.gmra.mxu0 %v772
    %v5336 = vpop.f32.mrf.mxu0
    %v5337 = vadd.f32 %v503, %v5336
    %v5338 = vpop.f32.mrf.mxu0
    %v5339 = vadd.f32 %v503, %v5338
    %5340 = vdwg.mxu0
    %5341 = vmatpush.bf16.msra.mxu0 %v2179
    %5342 = vmatpush.bf16.msra.mxu0 %v2167
    %5343 = vmatpush.bf16.msra.mxu0 %v2155
    %5344 = vmatpush.bf16.msra.mxu0 %v2143
    %5345 = vmatpush.bf16.msra.mxu0 %v2131
    %5346 = vmatpush.bf16.msra.mxu0 %v2119
    %5347 = vmatpush.bf16.msra.mxu0 %v2107
    %5348 = vmatpush.bf16.msra.mxu0 %v2095
    %5349 = vmatmul.bf16.gmra.mxu0 %v713
    %v5350 = vpop.f32.mrf.mxu0
    %v5351 = vadd.f32 %v5262, %v5350
    %v5352 = vpop.f32.mrf.mxu0
    %v5353 = vadd.f32 %v5264, %v5352
    %5354 = vmatmul.bf16.gmra.mxu0 %v717
    %v5355 = vpop.f32.mrf.mxu0
    %v5356 = vadd.f32 %v5267, %v5355
    %v5357 = vpop.f32.mrf.mxu0
    %v5358 = vadd.f32 %v5269, %v5357
    %5359 = vmatmul.bf16.gmra.mxu0 %v721
    %v5360 = vpop.f32.mrf.mxu0
    %v5361 = vadd.f32 %v5272, %v5360
    %v5362 = vpop.f32.mrf.mxu0
    %v5363 = vadd.f32 %v5274, %v5362
    %5364 = vmatmul.bf16.gmra.mxu0 %v725
    %v5365 = vpop.f32.mrf.mxu0
    %v5366 = vadd.f32 %v5277, %v5365
    %v5367 = vpop.f32.mrf.mxu0
    %v5368 = vadd.f32 %v5279, %v5367
    %5369 = vmatmul.bf16.gmra.mxu0 %v729
    %v5370 = vpop.f32.mrf.mxu0
    %v5371 = vadd.f32 %v5282, %v5370
    %v5372 = vpop.f32.mrf.mxu0
    %v5373 = vadd.f32 %v5284, %v5372
    %5374 = vmatmul.bf16.gmra.mxu0 %v733
    %v5375 = vpop.f32.mrf.mxu0
    %v5376 = vadd.f32 %v5287, %v5375
    %v5377 = vpop.f32.mrf.mxu0
    %v5378 = vadd.f32 %v5289, %v5377
    %5379 = vmatmul.bf16.gmra.mxu0 %v737
    %v5380 = vpop.f32.mrf.mxu0
    %v5381 = vadd.f32 %v5292, %v5380
    %v5382 = vpop.f32.mrf.mxu0
    %v5383 = vadd.f32 %v5294, %v5382
    %5384 = vmatmul.bf16.gmra.mxu0 %v741
    %v5385 = vpop.f32.mrf.mxu0
    %v5386 = vadd.f32 %v5297, %v5385
    %v5387 = vpop.f32.mrf.mxu0
    %v5388 = vadd.f32 %v5299, %v5387
    %5389 = vmatmul.bf16.gmra.mxu0 %v745
    %v5390 = vpop.f32.mrf.mxu0
    %v5391 = vadd.f32 %v5302, %v5390
    %v5392 = vpop.f32.mrf.mxu0
    %v5393 = vadd.f32 %v5304, %v5392
    %5394 = vmatmul.bf16.gmra.mxu0 %v749
    %v5395 = vpop.f32.mrf.mxu0
    %v5396 = vadd.f32 %v5307, %v5395
    %v5397 = vpop.f32.mrf.mxu0
    %v5398 = vadd.f32 %v5309, %v5397
    %5399 = vmatmul.bf16.gmra.mxu0 %v753
    %v5400 = vpop.f32.mrf.mxu0
    %v5401 = vadd.f32 %v5312, %v5400
    %v5402 = vpop.f32.mrf.mxu0
    %v5403 = vadd.f32 %v5314, %v5402
    %5404 = vmatmul.bf16.gmra.mxu0 %v757
    %v5405 = vpop.f32.mrf.mxu0
    %v5406 = vadd.f32 %v5317, %v5405
    %v5407 = vpop.f32.mrf.mxu0
    %v5408 = vadd.f32 %v5319, %v5407
    %5409 = vmatmul.bf16.gmra.mxu0 %v761
    %v5410 = vpop.f32.mrf.mxu0
    %v5411 = vadd.f32 %v5322, %v5410
    %v5412 = vpop.f32.mrf.mxu0
    %v5413 = vadd.f32 %v5324, %v5412
    %5414 = vmatmul.bf16.gmra.mxu0 %v765
    %v5415 = vpop.f32.mrf.mxu0
    %v5416 = vadd.f32 %v5327, %v5415
    %v5417 = vpop.f32.mrf.mxu0
    %v5418 = vadd.f32 %v5329, %v5417
    %5419 = vmatmul.bf16.gmra.mxu0 %v769
    %v5420 = vpop.f32.mrf.mxu0
    %v5421 = vadd.f32 %v5332, %v5420
    %v5422 = vpop.f32.mrf.mxu0
    %v5423 = vadd.f32 %v5334, %v5422
    %5424 = vmatmul.bf16.gmra.mxu0 %v773
    %v5425 = vpop.f32.mrf.mxu0
    %v5426 = vadd.f32 %v5337, %v5425
    %v5427 = vpop.f32.mrf.mxu0
    %v5428 = vadd.f32 %v5339, %v5427
    %5429 = vdwg.mxu0
    %5430 = vmatpush.bf16.msra.mxu0 %v2275
    %5431 = vmatpush.bf16.msra.mxu0 %v2263
    %5432 = vmatpush.bf16.msra.mxu0 %v2251
    %5433 = vmatpush.bf16.msra.mxu0 %v2239
    %5434 = vmatpush.bf16.msra.mxu0 %v2227
    %5435 = vmatpush.bf16.msra.mxu0 %v2215
    %5436 = vmatpush.bf16.msra.mxu0 %v2203
    %5437 = vmatpush.bf16.msra.mxu0 %v2191
    %5438 = vmatmul.bf16.gmra.mxu0 %v714
    %v5439 = vpop.f32.mrf.mxu0
    %v5440 = vadd.f32 %v5351, %v5439
    %v5441 = vpop.f32.mrf.mxu0
    %v5442 = vadd.f32 %v5353, %v5441
    %5443 = vmatmul.bf16.gmra.mxu0 %v718
    %v5444 = vpop.f32.mrf.mxu0
    %v5445 = vadd.f32 %v5356, %v5444
    %v5446 = vpop.f32.mrf.mxu0
    %v5447 = vadd.f32 %v5358, %v5446
    %5448 = vmatmul.bf16.gmra.mxu0 %v722
    %v5449 = vpop.f32.mrf.mxu0
    %v5450 = vadd.f32 %v5361, %v5449
    %v5451 = vpop.f32.mrf.mxu0
    %v5452 = vadd.f32 %v5363, %v5451
    %5453 = vmatmul.bf16.gmra.mxu0 %v726
    %v5454 = vpop.f32.mrf.mxu0
    %v5455 = vadd.f32 %v5366, %v5454
    %v5456 = vpop.f32.mrf.mxu0
    %v5457 = vadd.f32 %v5368, %v5456
    %5458 = vmatmul.bf16.gmra.mxu0 %v730
    %v5459 = vpop.f32.mrf.mxu0
    %v5460 = vadd.f32 %v5371, %v5459
    %v5461 = vpop.f32.mrf.mxu0
    %v5462 = vadd.f32 %v5373, %v5461
    %5463 = vmatmul.bf16.gmra.mxu0 %v734
    %v5464 = vpop.f32.mrf.mxu0
    %v5465 = vadd.f32 %v5376, %v5464
    %v5466 = vpop.f32.mrf.mxu0
    %v5467 = vadd.f32 %v5378, %v5466
    %5468 = vmatmul.bf16.gmra.mxu0 %v738
    %v5469 = vpop.f32.mrf.mxu0
    %v5470 = vadd.f32 %v5381, %v5469
    %v5471 = vpop.f32.mrf.mxu0
    %v5472 = vadd.f32 %v5383, %v5471
    %5473 = vmatmul.bf16.gmra.mxu0 %v742
    %v5474 = vpop.f32.mrf.mxu0
    %v5475 = vadd.f32 %v5386, %v5474
    %v5476 = vpop.f32.mrf.mxu0
    %v5477 = vadd.f32 %v5388, %v5476
    %5478 = vmatmul.bf16.gmra.mxu0 %v746
    %v5479 = vpop.f32.mrf.mxu0
    %v5480 = vadd.f32 %v5391, %v5479
    %v5481 = vpop.f32.mrf.mxu0
    %v5482 = vadd.f32 %v5393, %v5481
    %5483 = vmatmul.bf16.gmra.mxu0 %v750
    %v5484 = vpop.f32.mrf.mxu0
    %v5485 = vadd.f32 %v5396, %v5484
    %v5486 = vpop.f32.mrf.mxu0
    %v5487 = vadd.f32 %v5398, %v5486
    %5488 = vmatmul.bf16.gmra.mxu0 %v754
    %v5489 = vpop.f32.mrf.mxu0
    %v5490 = vadd.f32 %v5401, %v5489
    %v5491 = vpop.f32.mrf.mxu0
    %v5492 = vadd.f32 %v5403, %v5491
    %5493 = vmatmul.bf16.gmra.mxu0 %v758
    %v5494 = vpop.f32.mrf.mxu0
    %v5495 = vadd.f32 %v5406, %v5494
    %v5496 = vpop.f32.mrf.mxu0
    %v5497 = vadd.f32 %v5408, %v5496
    %5498 = vmatmul.bf16.gmra.mxu0 %v762
    %v5499 = vpop.f32.mrf.mxu0
    %v5500 = vadd.f32 %v5411, %v5499
    %v5501 = vpop.f32.mrf.mxu0
    %v5502 = vadd.f32 %v5413, %v5501
    %5503 = vmatmul.bf16.gmra.mxu0 %v766
    %v5504 = vpop.f32.mrf.mxu0
    %v5505 = vadd.f32 %v5416, %v5504
    %v5506 = vpop.f32.mrf.mxu0
    %v5507 = vadd.f32 %v5418, %v5506
    %5508 = vmatmul.bf16.gmra.mxu0 %v770
    %v5509 = vpop.f32.mrf.mxu0
    %v5510 = vadd.f32 %v5421, %v5509
    %v5511 = vpop.f32.mrf.mxu0
    %v5512 = vadd.f32 %v5423, %v5511
    %5513 = vmatmul.bf16.gmra.mxu0 %v774
    %v5514 = vpop.f32.mrf.mxu0
    %v5515 = vadd.f32 %v5426, %v5514
    %v5516 = vpop.f32.mrf.mxu0
    %v5517 = vadd.f32 %v5428, %v5516
    %5518 = vdwg.mxu0
    %5519 = vmatpush.bf16.msra.mxu0 %v2371
    %5520 = vmatpush.bf16.msra.mxu0 %v2359
    %5521 = vmatpush.bf16.msra.mxu0 %v2347
    %5522 = vmatpush.bf16.msra.mxu0 %v2335
    %5523 = vmatpush.bf16.msra.mxu0 %v2323
    %5524 = vmatpush.bf16.msra.mxu0 %v2311
    %5525 = vmatpush.bf16.msra.mxu0 %v2299
    %5526 = vmatpush.bf16.msra.mxu0 %v2287
    %5527 = vmatmul.bf16.gmra.mxu0 %v715
    %v5528 = vpop.f32.mrf.mxu0
    %v5529 = vadd.f32 %v5440, %v5528
    %v5530 = vpop.f32.mrf.mxu0
    %v5531 = vadd.f32 %v5442, %v5530
    %5532 = vmatmul.bf16.gmra.mxu0 %v719
    %v5533 = vpop.f32.mrf.mxu0
    %v5534 = vadd.f32 %v5445, %v5533
    %v5535 = vpop.f32.mrf.mxu0
    %v5536 = vadd.f32 %v5447, %v5535
    %5537 = vmatmul.bf16.gmra.mxu0 %v723
    %v5538 = vpop.f32.mrf.mxu0
    %v5539 = vadd.f32 %v5450, %v5538
    %v5540 = vpop.f32.mrf.mxu0
    %v5541 = vadd.f32 %v5452, %v5540
    %5542 = vmatmul.bf16.gmra.mxu0 %v727
    %v5543 = vpop.f32.mrf.mxu0
    %v5544 = vadd.f32 %v5455, %v5543
    %v5545 = vpop.f32.mrf.mxu0
    %v5546 = vadd.f32 %v5457, %v5545
    %5547 = vmatmul.bf16.gmra.mxu0 %v731
    %v5548 = vpop.f32.mrf.mxu0
    %v5549 = vadd.f32 %v5460, %v5548
    %v5550 = vpop.f32.mrf.mxu0
    %v5551 = vadd.f32 %v5462, %v5550
    %5552 = vmatmul.bf16.gmra.mxu0 %v735
    %v5553 = vpop.f32.mrf.mxu0
    %v5554 = vadd.f32 %v5465, %v5553
    %v5555 = vpop.f32.mrf.mxu0
    %v5556 = vadd.f32 %v5467, %v5555
    %5557 = vmatmul.bf16.gmra.mxu0 %v739
    %v5558 = vpop.f32.mrf.mxu0
    %v5559 = vadd.f32 %v5470, %v5558
    %v5560 = vpop.f32.mrf.mxu0
    %v5561 = vadd.f32 %v5472, %v5560
    %5562 = vmatmul.bf16.gmra.mxu0 %v743
    %v5563 = vpop.f32.mrf.mxu0
    %v5564 = vadd.f32 %v5475, %v5563
    %v5565 = vpop.f32.mrf.mxu0
    %v5566 = vadd.f32 %v5477, %v5565
    %5567 = vmatmul.bf16.gmra.mxu0 %v747
    %v5568 = vpop.f32.mrf.mxu0
    %v5569 = vadd.f32 %v5480, %v5568
    %v5570 = vpop.f32.mrf.mxu0
    %v5571 = vadd.f32 %v5482, %v5570
    %5572 = vmatmul.bf16.gmra.mxu0 %v751
    %v5573 = vpop.f32.mrf.mxu0
    %v5574 = vadd.f32 %v5485, %v5573
    %v5575 = vpop.f32.mrf.mxu0
    %v5576 = vadd.f32 %v5487, %v5575
    %5577 = vmatmul.bf16.gmra.mxu0 %v755
    %v5578 = vpop.f32.mrf.mxu0
    %v5579 = vadd.f32 %v5490, %v5578
    %v5580 = vpop.f32.mrf.mxu0
    %v5581 = vadd.f32 %v5492, %v5580
    %5582 = vmatmul.bf16.gmra.mxu0 %v759
    %v5583 = vpop.f32.mrf.mxu0
    %v5584 = vadd.f32 %v5495, %v5583
    %v5585 = vpop.f32.mrf.mxu0
    %v5586 = vadd.f32 %v5497, %v5585
    %5587 = vmatmul.bf16.gmra.mxu0 %v763
    %v5588 = vpop.f32.mrf.mxu0
    %v5589 = vadd.f32 %v5500, %v5588
    %v5590 = vpop.f32.mrf.mxu0
    %v5591 = vadd.f32 %v5502, %v5590
    %5592 = vmatmul.bf16.gmra.mxu0 %v767
    %v5593 = vpop.f32.mrf.mxu0
    %v5594 = vadd.f32 %v5505, %v5593
    %v5595 = vpop.f32.mrf.mxu0
    %v5596 = vadd.f32 %v5507, %v5595
    %5597 = vmatmul.bf16.gmra.mxu0 %v771
    %v5598 = vpop.f32.mrf.mxu0
    %v5599 = vadd.f32 %v5510, %v5598
    %v5600 = vpop.f32.mrf.mxu0
    %v5601 = vadd.f32 %v5512, %v5600
    %5602 = vmatmul.bf16.gmra.mxu0 %v775
    %v5603 = vpop.f32.mrf.mxu0
    %v5604 = vadd.f32 %v5515, %v5603
    %v5605 = vpop.f32.mrf.mxu0
    %v5606 = vadd.f32 %v5517, %v5605
    %5607 = vdwg.mxu0
    %5608 = vmatpush.bf16.msra.mxu0 %v2084
    %5609 = vmatpush.bf16.msra.mxu0 %v2072
    %5610 = vmatpush.bf16.msra.mxu0 %v2060
    %5611 = vmatpush.bf16.msra.mxu0 %v2048
    %5612 = vmatpush.bf16.msra.mxu0 %v2036
    %5613 = vmatpush.bf16.msra.mxu0 %v2024
    %5614 = vmatpush.bf16.msra.mxu0 %v2012
    %5615 = vmatpush.bf16.msra.mxu0 %v2000
    %5616 = vmatmul.bf16.gmra.mxu0 %v712
    %v5617 = vpop.f32.mrf.mxu0
    %v5618 = vadd.f32 %v504, %v5617
    %v5619 = vpop.f32.mrf.mxu0
    %v5620 = vadd.f32 %v504, %v5619
    %5621 = vmatmul.bf16.gmra.mxu0 %v716
    %v5622 = vpop.f32.mrf.mxu0
    %v5623 = vadd.f32 %v504, %v5622
    %v5624 = vpop.f32.mrf.mxu0
    %v5625 = vadd.f32 %v504, %v5624
    %5626 = vmatmul.bf16.gmra.mxu0 %v720
    %v5627 = vpop.f32.mrf.mxu0
    %v5628 = vadd.f32 %v504, %v5627
    %v5629 = vpop.f32.mrf.mxu0
    %v5630 = vadd.f32 %v504, %v5629
    %5631 = vmatmul.bf16.gmra.mxu0 %v724
    %v5632 = vpop.f32.mrf.mxu0
    %v5633 = vadd.f32 %v504, %v5632
    %v5634 = vpop.f32.mrf.mxu0
    %v5635 = vadd.f32 %v504, %v5634
    %5636 = vmatmul.bf16.gmra.mxu0 %v728
    %v5637 = vpop.f32.mrf.mxu0
    %v5638 = vadd.f32 %v504, %v5637
    %v5639 = vpop.f32.mrf.mxu0
    %v5640 = vadd.f32 %v504, %v5639
    %5641 = vmatmul.bf16.gmra.mxu0 %v732
    %v5642 = vpop.f32.mrf.mxu0
    %v5643 = vadd.f32 %v504, %v5642
    %v5644 = vpop.f32.mrf.mxu0
    %v5645 = vadd.f32 %v504, %v5644
    %5646 = vmatmul.bf16.gmra.mxu0 %v736
    %v5647 = vpop.f32.mrf.mxu0
    %v5648 = vadd.f32 %v504, %v5647
    %v5649 = vpop.f32.mrf.mxu0
    %v5650 = vadd.f32 %v504, %v5649
    %5651 = vmatmul.bf16.gmra.mxu0 %v740
    %v5652 = vpop.f32.mrf.mxu0
    %v5653 = vadd.f32 %v504, %v5652
    %v5654 = vpop.f32.mrf.mxu0
    %v5655 = vadd.f32 %v504, %v5654
    %5656 = vmatmul.bf16.gmra.mxu0 %v744
    %v5657 = vpop.f32.mrf.mxu0
    %v5658 = vadd.f32 %v504, %v5657
    %v5659 = vpop.f32.mrf.mxu0
    %v5660 = vadd.f32 %v504, %v5659
    %5661 = vmatmul.bf16.gmra.mxu0 %v748
    %v5662 = vpop.f32.mrf.mxu0
    %v5663 = vadd.f32 %v504, %v5662
    %v5664 = vpop.f32.mrf.mxu0
    %v5665 = vadd.f32 %v504, %v5664
    %5666 = vmatmul.bf16.gmra.mxu0 %v752
    %v5667 = vpop.f32.mrf.mxu0
    %v5668 = vadd.f32 %v504, %v5667
    %v5669 = vpop.f32.mrf.mxu0
    %v5670 = vadd.f32 %v504, %v5669
    %5671 = vmatmul.bf16.gmra.mxu0 %v756
    %v5672 = vpop.f32.mrf.mxu0
    %v5673 = vadd.f32 %v504, %v5672
    %v5674 = vpop.f32.mrf.mxu0
    %v5675 = vadd.f32 %v504, %v5674
    %5676 = vmatmul.bf16.gmra.mxu0 %v760
    %v5677 = vpop.f32.mrf.mxu0
    %v5678 = vadd.f32 %v504, %v5677
    %v5679 = vpop.f32.mrf.mxu0
    %v5680 = vadd.f32 %v504, %v5679
    %5681 = vmatmul.bf16.gmra.mxu0 %v764
    %v5682 = vpop.f32.mrf.mxu0
    %v5683 = vadd.f32 %v504, %v5682
    %v5684 = vpop.f32.mrf.mxu0
    %v5685 = vadd.f32 %v504, %v5684
    %5686 = vmatmul.bf16.gmra.mxu0 %v768
    %v5687 = vpop.f32.mrf.mxu0
    %v5688 = vadd.f32 %v504, %v5687
    %v5689 = vpop.f32.mrf.mxu0
    %v5690 = vadd.f32 %v504, %v5689
    %5691 = vmatmul.bf16.gmra.mxu0 %v772
    %v5692 = vpop.f32.mrf.mxu0
    %v5693 = vadd.f32 %v504, %v5692
    %v5694 = vpop.f32.mrf.mxu0
    %v5695 = vadd.f32 %v504, %v5694
    %5696 = vdwg.mxu0
    %5697 = vmatpush.bf16.msra.mxu0 %v2180
    %5698 = vmatpush.bf16.msra.mxu0 %v2168
    %5699 = vmatpush.bf16.msra.mxu0 %v2156
    %5700 = vmatpush.bf16.msra.mxu0 %v2144
    %5701 = vmatpush.bf16.msra.mxu0 %v2132
    %5702 = vmatpush.bf16.msra.mxu0 %v2120
    %5703 = vmatpush.bf16.msra.mxu0 %v2108
    %5704 = vmatpush.bf16.msra.mxu0 %v2096
    %5705 = vmatmul.bf16.gmra.mxu0 %v713
    %v5706 = vpop.f32.mrf.mxu0
    %v5707 = vadd.f32 %v5618, %v5706
    %v5708 = vpop.f32.mrf.mxu0
    %v5709 = vadd.f32 %v5620, %v5708
    %5710 = vmatmul.bf16.gmra.mxu0 %v717
    %v5711 = vpop.f32.mrf.mxu0
    %v5712 = vadd.f32 %v5623, %v5711
    %v5713 = vpop.f32.mrf.mxu0
    %v5714 = vadd.f32 %v5625, %v5713
    %5715 = vmatmul.bf16.gmra.mxu0 %v721
    %v5716 = vpop.f32.mrf.mxu0
    %v5717 = vadd.f32 %v5628, %v5716
    %v5718 = vpop.f32.mrf.mxu0
    %v5719 = vadd.f32 %v5630, %v5718
    %5720 = vmatmul.bf16.gmra.mxu0 %v725
    %v5721 = vpop.f32.mrf.mxu0
    %v5722 = vadd.f32 %v5633, %v5721
    %v5723 = vpop.f32.mrf.mxu0
    %v5724 = vadd.f32 %v5635, %v5723
    %5725 = vmatmul.bf16.gmra.mxu0 %v729
    %v5726 = vpop.f32.mrf.mxu0
    %v5727 = vadd.f32 %v5638, %v5726
    %v5728 = vpop.f32.mrf.mxu0
    %v5729 = vadd.f32 %v5640, %v5728
    %5730 = vmatmul.bf16.gmra.mxu0 %v733
    %v5731 = vpop.f32.mrf.mxu0
    %v5732 = vadd.f32 %v5643, %v5731
    %v5733 = vpop.f32.mrf.mxu0
    %v5734 = vadd.f32 %v5645, %v5733
    %5735 = vmatmul.bf16.gmra.mxu0 %v737
    %v5736 = vpop.f32.mrf.mxu0
    %v5737 = vadd.f32 %v5648, %v5736
    %v5738 = vpop.f32.mrf.mxu0
    %v5739 = vadd.f32 %v5650, %v5738
    %5740 = vmatmul.bf16.gmra.mxu0 %v741
    %v5741 = vpop.f32.mrf.mxu0
    %v5742 = vadd.f32 %v5653, %v5741
    %v5743 = vpop.f32.mrf.mxu0
    %v5744 = vadd.f32 %v5655, %v5743
    %5745 = vmatmul.bf16.gmra.mxu0 %v745
    %v5746 = vpop.f32.mrf.mxu0
    %v5747 = vadd.f32 %v5658, %v5746
    %v5748 = vpop.f32.mrf.mxu0
    %v5749 = vadd.f32 %v5660, %v5748
    %5750 = vmatmul.bf16.gmra.mxu0 %v749
    %v5751 = vpop.f32.mrf.mxu0
    %v5752 = vadd.f32 %v5663, %v5751
    %v5753 = vpop.f32.mrf.mxu0
    %v5754 = vadd.f32 %v5665, %v5753
    %5755 = vmatmul.bf16.gmra.mxu0 %v753
    %v5756 = vpop.f32.mrf.mxu0
    %v5757 = vadd.f32 %v5668, %v5756
    %v5758 = vpop.f32.mrf.mxu0
    %v5759 = vadd.f32 %v5670, %v5758
    %5760 = vmatmul.bf16.gmra.mxu0 %v757
    %v5761 = vpop.f32.mrf.mxu0
    %v5762 = vadd.f32 %v5673, %v5761
    %v5763 = vpop.f32.mrf.mxu0
    %v5764 = vadd.f32 %v5675, %v5763
    %5765 = vmatmul.bf16.gmra.mxu0 %v761
    %v5766 = vpop.f32.mrf.mxu0
    %v5767 = vadd.f32 %v5678, %v5766
    %v5768 = vpop.f32.mrf.mxu0
    %v5769 = vadd.f32 %v5680, %v5768
    %5770 = vmatmul.bf16.gmra.mxu0 %v765
    %v5771 = vpop.f32.mrf.mxu0
    %v5772 = vadd.f32 %v5683, %v5771
    %v5773 = vpop.f32.mrf.mxu0
    %v5774 = vadd.f32 %v5685, %v5773
    %5775 = vmatmul.bf16.gmra.mxu0 %v769
    %v5776 = vpop.f32.mrf.mxu0
    %v5777 = vadd.f32 %v5688, %v5776
    %v5778 = vpop.f32.mrf.mxu0
    %v5779 = vadd.f32 %v5690, %v5778
    %5780 = vmatmul.bf16.gmra.mxu0 %v773
    %v5781 = vpop.f32.mrf.mxu0
    %v5782 = vadd.f32 %v5693, %v5781
    %v5783 = vpop.f32.mrf.mxu0
    %v5784 = vadd.f32 %v5695, %v5783
    %5785 = vdwg.mxu0
    %5786 = vmatpush.bf16.msra.mxu0 %v2276
    %5787 = vmatpush.bf16.msra.mxu0 %v2264
    %5788 = vmatpush.bf16.msra.mxu0 %v2252
    %5789 = vmatpush.bf16.msra.mxu0 %v2240
    %5790 = vmatpush.bf16.msra.mxu0 %v2228
    %5791 = vmatpush.bf16.msra.mxu0 %v2216
    %5792 = vmatpush.bf16.msra.mxu0 %v2204
    %5793 = vmatpush.bf16.msra.mxu0 %v2192
    %5794 = vmatmul.bf16.gmra.mxu0 %v714
    %v5795 = vpop.f32.mrf.mxu0
    %v5796 = vadd.f32 %v5707, %v5795
    %v5797 = vpop.f32.mrf.mxu0
    %v5798 = vadd.f32 %v5709, %v5797
    %5799 = vmatmul.bf16.gmra.mxu0 %v718
    %v5800 = vpop.f32.mrf.mxu0
    %v5801 = vadd.f32 %v5712, %v5800
    %v5802 = vpop.f32.mrf.mxu0
    %v5803 = vadd.f32 %v5714, %v5802
    %5804 = vmatmul.bf16.gmra.mxu0 %v722
    %v5805 = vpop.f32.mrf.mxu0
    %v5806 = vadd.f32 %v5717, %v5805
    %v5807 = vpop.f32.mrf.mxu0
    %v5808 = vadd.f32 %v5719, %v5807
    %5809 = vmatmul.bf16.gmra.mxu0 %v726
    %v5810 = vpop.f32.mrf.mxu0
    %v5811 = vadd.f32 %v5722, %v5810
    %v5812 = vpop.f32.mrf.mxu0
    %v5813 = vadd.f32 %v5724, %v5812
    %5814 = vmatmul.bf16.gmra.mxu0 %v730
    %v5815 = vpop.f32.mrf.mxu0
    %v5816 = vadd.f32 %v5727, %v5815
    %v5817 = vpop.f32.mrf.mxu0
    %v5818 = vadd.f32 %v5729, %v5817
    %5819 = vmatmul.bf16.gmra.mxu0 %v734
    %v5820 = vpop.f32.mrf.mxu0
    %v5821 = vadd.f32 %v5732, %v5820
    %v5822 = vpop.f32.mrf.mxu0
    %v5823 = vadd.f32 %v5734, %v5822
    %5824 = vmatmul.bf16.gmra.mxu0 %v738
    %v5825 = vpop.f32.mrf.mxu0
    %v5826 = vadd.f32 %v5737, %v5825
    %v5827 = vpop.f32.mrf.mxu0
    %v5828 = vadd.f32 %v5739, %v5827
    %5829 = vmatmul.bf16.gmra.mxu0 %v742
    %v5830 = vpop.f32.mrf.mxu0
    %v5831 = vadd.f32 %v5742, %v5830
    %v5832 = vpop.f32.mrf.mxu0
    %v5833 = vadd.f32 %v5744, %v5832
    %5834 = vmatmul.bf16.gmra.mxu0 %v746
    %v5835 = vpop.f32.mrf.mxu0
    %v5836 = vadd.f32 %v5747, %v5835
    %v5837 = vpop.f32.mrf.mxu0
    %v5838 = vadd.f32 %v5749, %v5837
    %5839 = vmatmul.bf16.gmra.mxu0 %v750
    %v5840 = vpop.f32.mrf.mxu0
    %v5841 = vadd.f32 %v5752, %v5840
    %v5842 = vpop.f32.mrf.mxu0
    %v5843 = vadd.f32 %v5754, %v5842
    %5844 = vmatmul.bf16.gmra.mxu0 %v754
    %v5845 = vpop.f32.mrf.mxu0
    %v5846 = vadd.f32 %v5757, %v5845
    %v5847 = vpop.f32.mrf.mxu0
    %v5848 = vadd.f32 %v5759, %v5847
    %5849 = vmatmul.bf16.gmra.mxu0 %v758
    %v5850 = vpop.f32.mrf.mxu0
    %v5851 = vadd.f32 %v5762, %v5850
    %v5852 = vpop.f32.mrf.mxu0
    %v5853 = vadd.f32 %v5764, %v5852
    %5854 = vmatmul.bf16.gmra.mxu0 %v762
    %v5855 = vpop.f32.mrf.mxu0
    %v5856 = vadd.f32 %v5767, %v5855
    %v5857 = vpop.f32.mrf.mxu0
    %v5858 = vadd.f32 %v5769, %v5857
    %5859 = vmatmul.bf16.gmra.mxu0 %v766
    %v5860 = vpop.f32.mrf.mxu0
    %v5861 = vadd.f32 %v5772, %v5860
    %v5862 = vpop.f32.mrf.mxu0
    %v5863 = vadd.f32 %v5774, %v5862
    %5864 = vmatmul.bf16.gmra.mxu0 %v770
    %v5865 = vpop.f32.mrf.mxu0
    %v5866 = vadd.f32 %v5777, %v5865
    %v5867 = vpop.f32.mrf.mxu0
    %v5868 = vadd.f32 %v5779, %v5867
    %5869 = vmatmul.bf16.gmra.mxu0 %v774
    %v5870 = vpop.f32.mrf.mxu0
    %v5871 = vadd.f32 %v5782, %v5870
    %v5872 = vpop.f32.mrf.mxu0
    %v5873 = vadd.f32 %v5784, %v5872
    %5874 = vdwg.mxu0
    %5875 = vmatpush.bf16.msra.mxu0 %v2372
    %5876 = vmatpush.bf16.msra.mxu0 %v2360
    %5877 = vmatpush.bf16.msra.mxu0 %v2348
    %5878 = vmatpush.bf16.msra.mxu0 %v2336
    %5879 = vmatpush.bf16.msra.mxu0 %v2324
    %5880 = vmatpush.bf16.msra.mxu0 %v2312
    %5881 = vmatpush.bf16.msra.mxu0 %v2300
    %5882 = vmatpush.bf16.msra.mxu0 %v2288
    %5883 = vmatmul.bf16.gmra.mxu0 %v715
    %v5884 = vpop.f32.mrf.mxu0
    %v5885 = vadd.f32 %v5796, %v5884
    %v5886 = vpop.f32.mrf.mxu0
    %v5887 = vadd.f32 %v5798, %v5886
    %5888 = vmatmul.bf16.gmra.mxu0 %v719
    %v5889 = vpop.f32.mrf.mxu0
    %v5890 = vadd.f32 %v5801, %v5889
    %v5891 = vpop.f32.mrf.mxu0
    %v5892 = vadd.f32 %v5803, %v5891
    %5893 = vmatmul.bf16.gmra.mxu0 %v723
    %v5894 = vpop.f32.mrf.mxu0
    %v5895 = vadd.f32 %v5806, %v5894
    %v5896 = vpop.f32.mrf.mxu0
    %v5897 = vadd.f32 %v5808, %v5896
    %5898 = vmatmul.bf16.gmra.mxu0 %v727
    %v5899 = vpop.f32.mrf.mxu0
    %v5900 = vadd.f32 %v5811, %v5899
    %v5901 = vpop.f32.mrf.mxu0
    %v5902 = vadd.f32 %v5813, %v5901
    %5903 = vmatmul.bf16.gmra.mxu0 %v731
    %v5904 = vpop.f32.mrf.mxu0
    %v5905 = vadd.f32 %v5816, %v5904
    %v5906 = vpop.f32.mrf.mxu0
    %v5907 = vadd.f32 %v5818, %v5906
    %5908 = vmatmul.bf16.gmra.mxu0 %v735
    %v5909 = vpop.f32.mrf.mxu0
    %v5910 = vadd.f32 %v5821, %v5909
    %v5911 = vpop.f32.mrf.mxu0
    %v5912 = vadd.f32 %v5823, %v5911
    %5913 = vmatmul.bf16.gmra.mxu0 %v739
    %v5914 = vpop.f32.mrf.mxu0
    %v5915 = vadd.f32 %v5826, %v5914
    %v5916 = vpop.f32.mrf.mxu0
    %v5917 = vadd.f32 %v5828, %v5916
    %5918 = vmatmul.bf16.gmra.mxu0 %v743
    %v5919 = vpop.f32.mrf.mxu0
    %v5920 = vadd.f32 %v5831, %v5919
    %v5921 = vpop.f32.mrf.mxu0
    %v5922 = vadd.f32 %v5833, %v5921
    %5923 = vmatmul.bf16.gmra.mxu0 %v747
    %v5924 = vpop.f32.mrf.mxu0
    %v5925 = vadd.f32 %v5836, %v5924
    %v5926 = vpop.f32.mrf.mxu0
    %v5927 = vadd.f32 %v5838, %v5926
    %5928 = vmatmul.bf16.gmra.mxu0 %v751
    %v5929 = vpop.f32.mrf.mxu0
    %v5930 = vadd.f32 %v5841, %v5929
    %v5931 = vpop.f32.mrf.mxu0
    %v5932 = vadd.f32 %v5843, %v5931
    %5933 = vmatmul.bf16.gmra.mxu0 %v755
    %v5934 = vpop.f32.mrf.mxu0
    %v5935 = vadd.f32 %v5846, %v5934
    %v5936 = vpop.f32.mrf.mxu0
    %v5937 = vadd.f32 %v5848, %v5936
    %5938 = vmatmul.bf16.gmra.mxu0 %v759
    %v5939 = vpop.f32.mrf.mxu0
    %v5940 = vadd.f32 %v5851, %v5939
    %v5941 = vpop.f32.mrf.mxu0
    %v5942 = vadd.f32 %v5853, %v5941
    %5943 = vmatmul.bf16.gmra.mxu0 %v763
    %v5944 = vpop.f32.mrf.mxu0
    %v5945 = vadd.f32 %v5856, %v5944
    %v5946 = vpop.f32.mrf.mxu0
    %v5947 = vadd.f32 %v5858, %v5946
    %5948 = vmatmul.bf16.gmra.mxu0 %v767
    %v5949 = vpop.f32.mrf.mxu0
    %v5950 = vadd.f32 %v5861, %v5949
    %v5951 = vpop.f32.mrf.mxu0
    %v5952 = vadd.f32 %v5863, %v5951
    %5953 = vmatmul.bf16.gmra.mxu0 %v771
    %v5954 = vpop.f32.mrf.mxu0
    %v5955 = vadd.f32 %v5866, %v5954
    %v5956 = vpop.f32.mrf.mxu0
    %v5957 = vadd.f32 %v5868, %v5956
    %5958 = vmatmul.bf16.gmra.mxu0 %v775
    %v5959 = vpop.f32.mrf.mxu0
    %v5960 = vadd.f32 %v5871, %v5959
    %v5961 = vpop.f32.mrf.mxu0
    %v5962 = vadd.f32 %v5873, %v5961
    %5963 = vdwg.mxu0
    %5964 = vmatpush.bf16.msra.mxu0 %v2085
    %5965 = vmatpush.bf16.msra.mxu0 %v2073
    %5966 = vmatpush.bf16.msra.mxu0 %v2061
    %5967 = vmatpush.bf16.msra.mxu0 %v2049
    %5968 = vmatpush.bf16.msra.mxu0 %v2037
    %5969 = vmatpush.bf16.msra.mxu0 %v2025
    %5970 = vmatpush.bf16.msra.mxu0 %v2013
    %5971 = vmatpush.bf16.msra.mxu0 %v2001
    %5972 = vmatmul.bf16.gmra.mxu0 %v712
    %v5973 = vpop.f32.mrf.mxu0
    %v5974 = vadd.f32 %v505, %v5973
    %v5975 = vpop.f32.mrf.mxu0
    %v5976 = vadd.f32 %v505, %v5975
    %5977 = vmatmul.bf16.gmra.mxu0 %v716
    %v5978 = vpop.f32.mrf.mxu0
    %v5979 = vadd.f32 %v505, %v5978
    %v5980 = vpop.f32.mrf.mxu0
    %v5981 = vadd.f32 %v505, %v5980
    %5982 = vmatmul.bf16.gmra.mxu0 %v720
    %v5983 = vpop.f32.mrf.mxu0
    %v5984 = vadd.f32 %v505, %v5983
    %v5985 = vpop.f32.mrf.mxu0
    %v5986 = vadd.f32 %v505, %v5985
    %5987 = vmatmul.bf16.gmra.mxu0 %v724
    %v5988 = vpop.f32.mrf.mxu0
    %v5989 = vadd.f32 %v505, %v5988
    %v5990 = vpop.f32.mrf.mxu0
    %v5991 = vadd.f32 %v505, %v5990
    %5992 = vmatmul.bf16.gmra.mxu0 %v728
    %v5993 = vpop.f32.mrf.mxu0
    %v5994 = vadd.f32 %v505, %v5993
    %v5995 = vpop.f32.mrf.mxu0
    %v5996 = vadd.f32 %v505, %v5995
    %5997 = vmatmul.bf16.gmra.mxu0 %v732
    %v5998 = vpop.f32.mrf.mxu0
    %v5999 = vadd.f32 %v505, %v5998
    %v6000 = vpop.f32.mrf.mxu0
    %v6001 = vadd.f32 %v505, %v6000
    %6002 = vmatmul.bf16.gmra.mxu0 %v736
    %v6003 = vpop.f32.mrf.mxu0
    %v6004 = vadd.f32 %v505, %v6003
    %v6005 = vpop.f32.mrf.mxu0
    %v6006 = vadd.f32 %v505, %v6005
    %6007 = vmatmul.bf16.gmra.mxu0 %v740
    %v6008 = vpop.f32.mrf.mxu0
    %v6009 = vadd.f32 %v505, %v6008
    %v6010 = vpop.f32.mrf.mxu0
    %v6011 = vadd.f32 %v505, %v6010
    %6012 = vmatmul.bf16.gmra.mxu0 %v744
    %v6013 = vpop.f32.mrf.mxu0
    %v6014 = vadd.f32 %v505, %v6013
    %v6015 = vpop.f32.mrf.mxu0
    %v6016 = vadd.f32 %v505, %v6015
    %6017 = vmatmul.bf16.gmra.mxu0 %v748
    %v6018 = vpop.f32.mrf.mxu0
    %v6019 = vadd.f32 %v505, %v6018
    %v6020 = vpop.f32.mrf.mxu0
    %v6021 = vadd.f32 %v505, %v6020
    %6022 = vmatmul.bf16.gmra.mxu0 %v752
    %v6023 = vpop.f32.mrf.mxu0
    %v6024 = vadd.f32 %v505, %v6023
    %v6025 = vpop.f32.mrf.mxu0
    %v6026 = vadd.f32 %v505, %v6025
    %6027 = vmatmul.bf16.gmra.mxu0 %v756
    %v6028 = vpop.f32.mrf.mxu0
    %v6029 = vadd.f32 %v505, %v6028
    %v6030 = vpop.f32.mrf.mxu0
    %v6031 = vadd.f32 %v505, %v6030
    %6032 = vmatmul.bf16.gmra.mxu0 %v760
    %v6033 = vpop.f32.mrf.mxu0
    %v6034 = vadd.f32 %v505, %v6033
    %v6035 = vpop.f32.mrf.mxu0
    %v6036 = vadd.f32 %v505, %v6035
    %6037 = vmatmul.bf16.gmra.mxu0 %v764
    %v6038 = vpop.f32.mrf.mxu0
    %v6039 = vadd.f32 %v505, %v6038
    %v6040 = vpop.f32.mrf.mxu0
    %v6041 = vadd.f32 %v505, %v6040
    %6042 = vmatmul.bf16.gmra.mxu0 %v768
    %v6043 = vpop.f32.mrf.mxu0
    %v6044 = vadd.f32 %v505, %v6043
    %v6045 = vpop.f32.mrf.mxu0
    %v6046 = vadd.f32 %v505, %v6045
    %6047 = vmatmul.bf16.gmra.mxu0 %v772
    %v6048 = vpop.f32.mrf.mxu0
    %v6049 = vadd.f32 %v505, %v6048
    %v6050 = vpop.f32.mrf.mxu0
    %v6051 = vadd.f32 %v505, %v6050
    %6052 = vdwg.mxu0
    %6053 = vmatpush.bf16.msra.mxu0 %v2181
    %6054 = vmatpush.bf16.msra.mxu0 %v2169
    %6055 = vmatpush.bf16.msra.mxu0 %v2157
    %6056 = vmatpush.bf16.msra.mxu0 %v2145
    %6057 = vmatpush.bf16.msra.mxu0 %v2133
    %6058 = vmatpush.bf16.msra.mxu0 %v2121
    %6059 = vmatpush.bf16.msra.mxu0 %v2109
    %6060 = vmatpush.bf16.msra.mxu0 %v2097
    %6061 = vmatmul.bf16.gmra.mxu0 %v713
    %v6062 = vpop.f32.mrf.mxu0
    %v6063 = vadd.f32 %v5974, %v6062
    %v6064 = vpop.f32.mrf.mxu0
    %v6065 = vadd.f32 %v5976, %v6064
    %6066 = vmatmul.bf16.gmra.mxu0 %v717
    %v6067 = vpop.f32.mrf.mxu0
    %v6068 = vadd.f32 %v5979, %v6067
    %v6069 = vpop.f32.mrf.mxu0
    %v6070 = vadd.f32 %v5981, %v6069
    %6071 = vmatmul.bf16.gmra.mxu0 %v721
    %v6072 = vpop.f32.mrf.mxu0
    %v6073 = vadd.f32 %v5984, %v6072
    %v6074 = vpop.f32.mrf.mxu0
    %v6075 = vadd.f32 %v5986, %v6074
    %6076 = vmatmul.bf16.gmra.mxu0 %v725
    %v6077 = vpop.f32.mrf.mxu0
    %v6078 = vadd.f32 %v5989, %v6077
    %v6079 = vpop.f32.mrf.mxu0
    %v6080 = vadd.f32 %v5991, %v6079
    %6081 = vmatmul.bf16.gmra.mxu0 %v729
    %v6082 = vpop.f32.mrf.mxu0
    %v6083 = vadd.f32 %v5994, %v6082
    %v6084 = vpop.f32.mrf.mxu0
    %v6085 = vadd.f32 %v5996, %v6084
    %6086 = vmatmul.bf16.gmra.mxu0 %v733
    %v6087 = vpop.f32.mrf.mxu0
    %v6088 = vadd.f32 %v5999, %v6087
    %v6089 = vpop.f32.mrf.mxu0
    %v6090 = vadd.f32 %v6001, %v6089
    %6091 = vmatmul.bf16.gmra.mxu0 %v737
    %v6092 = vpop.f32.mrf.mxu0
    %v6093 = vadd.f32 %v6004, %v6092
    %v6094 = vpop.f32.mrf.mxu0
    %v6095 = vadd.f32 %v6006, %v6094
    %6096 = vmatmul.bf16.gmra.mxu0 %v741
    %v6097 = vpop.f32.mrf.mxu0
    %v6098 = vadd.f32 %v6009, %v6097
    %v6099 = vpop.f32.mrf.mxu0
    %v6100 = vadd.f32 %v6011, %v6099
    %6101 = vmatmul.bf16.gmra.mxu0 %v745
    %v6102 = vpop.f32.mrf.mxu0
    %v6103 = vadd.f32 %v6014, %v6102
    %v6104 = vpop.f32.mrf.mxu0
    %v6105 = vadd.f32 %v6016, %v6104
    %6106 = vmatmul.bf16.gmra.mxu0 %v749
    %v6107 = vpop.f32.mrf.mxu0
    %v6108 = vadd.f32 %v6019, %v6107
    %v6109 = vpop.f32.mrf.mxu0
    %v6110 = vadd.f32 %v6021, %v6109
    %6111 = vmatmul.bf16.gmra.mxu0 %v753
    %v6112 = vpop.f32.mrf.mxu0
    %v6113 = vadd.f32 %v6024, %v6112
    %v6114 = vpop.f32.mrf.mxu0
    %v6115 = vadd.f32 %v6026, %v6114
    %6116 = vmatmul.bf16.gmra.mxu0 %v757
    %v6117 = vpop.f32.mrf.mxu0
    %v6118 = vadd.f32 %v6029, %v6117
    %v6119 = vpop.f32.mrf.mxu0
    %v6120 = vadd.f32 %v6031, %v6119
    %6121 = vmatmul.bf16.gmra.mxu0 %v761
    %v6122 = vpop.f32.mrf.mxu0
    %v6123 = vadd.f32 %v6034, %v6122
    %v6124 = vpop.f32.mrf.mxu0
    %v6125 = vadd.f32 %v6036, %v6124
    %6126 = vmatmul.bf16.gmra.mxu0 %v765
    %v6127 = vpop.f32.mrf.mxu0
    %v6128 = vadd.f32 %v6039, %v6127
    %v6129 = vpop.f32.mrf.mxu0
    %v6130 = vadd.f32 %v6041, %v6129
    %6131 = vmatmul.bf16.gmra.mxu0 %v769
    %v6132 = vpop.f32.mrf.mxu0
    %v6133 = vadd.f32 %v6044, %v6132
    %v6134 = vpop.f32.mrf.mxu0
    %v6135 = vadd.f32 %v6046, %v6134
    %6136 = vmatmul.bf16.gmra.mxu0 %v773
    %v6137 = vpop.f32.mrf.mxu0
    %v6138 = vadd.f32 %v6049, %v6137
    %v6139 = vpop.f32.mrf.mxu0
    %v6140 = vadd.f32 %v6051, %v6139
    %6141 = vdwg.mxu0
    %6142 = vmatpush.bf16.msra.mxu0 %v2277
    %6143 = vmatpush.bf16.msra.mxu0 %v2265
    %6144 = vmatpush.bf16.msra.mxu0 %v2253
    %6145 = vmatpush.bf16.msra.mxu0 %v2241
    %6146 = vmatpush.bf16.msra.mxu0 %v2229
    %6147 = vmatpush.bf16.msra.mxu0 %v2217
    %6148 = vmatpush.bf16.msra.mxu0 %v2205
    %6149 = vmatpush.bf16.msra.mxu0 %v2193
    %6150 = vmatmul.bf16.gmra.mxu0 %v714
    %v6151 = vpop.f32.mrf.mxu0
    %v6152 = vadd.f32 %v6063, %v6151
    %v6153 = vpop.f32.mrf.mxu0
    %v6154 = vadd.f32 %v6065, %v6153
    %6155 = vmatmul.bf16.gmra.mxu0 %v718
    %v6156 = vpop.f32.mrf.mxu0
    %v6157 = vadd.f32 %v6068, %v6156
    %v6158 = vpop.f32.mrf.mxu0
    %v6159 = vadd.f32 %v6070, %v6158
    %6160 = vmatmul.bf16.gmra.mxu0 %v722
    %v6161 = vpop.f32.mrf.mxu0
    %v6162 = vadd.f32 %v6073, %v6161
    %v6163 = vpop.f32.mrf.mxu0
    %v6164 = vadd.f32 %v6075, %v6163
    %6165 = vmatmul.bf16.gmra.mxu0 %v726
    %v6166 = vpop.f32.mrf.mxu0
    %v6167 = vadd.f32 %v6078, %v6166
    %v6168 = vpop.f32.mrf.mxu0
    %v6169 = vadd.f32 %v6080, %v6168
    %6170 = vmatmul.bf16.gmra.mxu0 %v730
    %v6171 = vpop.f32.mrf.mxu0
    %v6172 = vadd.f32 %v6083, %v6171
    %v6173 = vpop.f32.mrf.mxu0
    %v6174 = vadd.f32 %v6085, %v6173
    %6175 = vmatmul.bf16.gmra.mxu0 %v734
    %v6176 = vpop.f32.mrf.mxu0
    %v6177 = vadd.f32 %v6088, %v6176
    %v6178 = vpop.f32.mrf.mxu0
    %v6179 = vadd.f32 %v6090, %v6178
    %6180 = vmatmul.bf16.gmra.mxu0 %v738
    %v6181 = vpop.f32.mrf.mxu0
    %v6182 = vadd.f32 %v6093, %v6181
    %v6183 = vpop.f32.mrf.mxu0
    %v6184 = vadd.f32 %v6095, %v6183
    %6185 = vmatmul.bf16.gmra.mxu0 %v742
    %v6186 = vpop.f32.mrf.mxu0
    %v6187 = vadd.f32 %v6098, %v6186
    %v6188 = vpop.f32.mrf.mxu0
    %v6189 = vadd.f32 %v6100, %v6188
    %6190 = vmatmul.bf16.gmra.mxu0 %v746
    %v6191 = vpop.f32.mrf.mxu0
    %v6192 = vadd.f32 %v6103, %v6191
    %v6193 = vpop.f32.mrf.mxu0
    %v6194 = vadd.f32 %v6105, %v6193
    %6195 = vmatmul.bf16.gmra.mxu0 %v750
    %v6196 = vpop.f32.mrf.mxu0
    %v6197 = vadd.f32 %v6108, %v6196
    %v6198 = vpop.f32.mrf.mxu0
    %v6199 = vadd.f32 %v6110, %v6198
    %6200 = vmatmul.bf16.gmra.mxu0 %v754
    %v6201 = vpop.f32.mrf.mxu0
    %v6202 = vadd.f32 %v6113, %v6201
    %v6203 = vpop.f32.mrf.mxu0
    %v6204 = vadd.f32 %v6115, %v6203
    %6205 = vmatmul.bf16.gmra.mxu0 %v758
    %v6206 = vpop.f32.mrf.mxu0
    %v6207 = vadd.f32 %v6118, %v6206
    %v6208 = vpop.f32.mrf.mxu0
    %v6209 = vadd.f32 %v6120, %v6208
    %6210 = vmatmul.bf16.gmra.mxu0 %v762
    %v6211 = vpop.f32.mrf.mxu0
    %v6212 = vadd.f32 %v6123, %v6211
    %v6213 = vpop.f32.mrf.mxu0
    %v6214 = vadd.f32 %v6125, %v6213
    %6215 = vmatmul.bf16.gmra.mxu0 %v766
    %v6216 = vpop.f32.mrf.mxu0
    %v6217 = vadd.f32 %v6128, %v6216
    %v6218 = vpop.f32.mrf.mxu0
    %v6219 = vadd.f32 %v6130, %v6218
    %6220 = vmatmul.bf16.gmra.mxu0 %v770
    %v6221 = vpop.f32.mrf.mxu0
    %v6222 = vadd.f32 %v6133, %v6221
    %v6223 = vpop.f32.mrf.mxu0
    %v6224 = vadd.f32 %v6135, %v6223
    %6225 = vmatmul.bf16.gmra.mxu0 %v774
    %v6226 = vpop.f32.mrf.mxu0
    %v6227 = vadd.f32 %v6138, %v6226
    %v6228 = vpop.f32.mrf.mxu0
    %v6229 = vadd.f32 %v6140, %v6228
    %6230 = vdwg.mxu0
    %6231 = vmatpush.bf16.msra.mxu0 %v2373
    %6232 = vmatpush.bf16.msra.mxu0 %v2361
    %6233 = vmatpush.bf16.msra.mxu0 %v2349
    %6234 = vmatpush.bf16.msra.mxu0 %v2337
    %6235 = vmatpush.bf16.msra.mxu0 %v2325
    %6236 = vmatpush.bf16.msra.mxu0 %v2313
    %6237 = vmatpush.bf16.msra.mxu0 %v2301
    %6238 = vmatpush.bf16.msra.mxu0 %v2289
    %6239 = vmatmul.bf16.gmra.mxu0 %v715
    %v6240 = vpop.f32.mrf.mxu0
    %v6241 = vadd.f32 %v6152, %v6240
    %v6242 = vpop.f32.mrf.mxu0
    %v6243 = vadd.f32 %v6154, %v6242
    %6244 = vmatmul.bf16.gmra.mxu0 %v719
    %v6245 = vpop.f32.mrf.mxu0
    %v6246 = vadd.f32 %v6157, %v6245
    %v6247 = vpop.f32.mrf.mxu0
    %v6248 = vadd.f32 %v6159, %v6247
    %6249 = vmatmul.bf16.gmra.mxu0 %v723
    %v6250 = vpop.f32.mrf.mxu0
    %v6251 = vadd.f32 %v6162, %v6250
    %v6252 = vpop.f32.mrf.mxu0
    %v6253 = vadd.f32 %v6164, %v6252
    %6254 = vmatmul.bf16.gmra.mxu0 %v727
    %v6255 = vpop.f32.mrf.mxu0
    %v6256 = vadd.f32 %v6167, %v6255
    %v6257 = vpop.f32.mrf.mxu0
    %v6258 = vadd.f32 %v6169, %v6257
    %6259 = vmatmul.bf16.gmra.mxu0 %v731
    %v6260 = vpop.f32.mrf.mxu0
    %v6261 = vadd.f32 %v6172, %v6260
    %v6262 = vpop.f32.mrf.mxu0
    %v6263 = vadd.f32 %v6174, %v6262
    %6264 = vmatmul.bf16.gmra.mxu0 %v735
    %v6265 = vpop.f32.mrf.mxu0
    %v6266 = vadd.f32 %v6177, %v6265
    %v6267 = vpop.f32.mrf.mxu0
    %v6268 = vadd.f32 %v6179, %v6267
    %6269 = vmatmul.bf16.gmra.mxu0 %v739
    %v6270 = vpop.f32.mrf.mxu0
    %v6271 = vadd.f32 %v6182, %v6270
    %v6272 = vpop.f32.mrf.mxu0
    %v6273 = vadd.f32 %v6184, %v6272
    %6274 = vmatmul.bf16.gmra.mxu0 %v743
    %v6275 = vpop.f32.mrf.mxu0
    %v6276 = vadd.f32 %v6187, %v6275
    %v6277 = vpop.f32.mrf.mxu0
    %v6278 = vadd.f32 %v6189, %v6277
    %6279 = vmatmul.bf16.gmra.mxu0 %v747
    %v6280 = vpop.f32.mrf.mxu0
    %v6281 = vadd.f32 %v6192, %v6280
    %v6282 = vpop.f32.mrf.mxu0
    %v6283 = vadd.f32 %v6194, %v6282
    %6284 = vmatmul.bf16.gmra.mxu0 %v751
    %v6285 = vpop.f32.mrf.mxu0
    %v6286 = vadd.f32 %v6197, %v6285
    %v6287 = vpop.f32.mrf.mxu0
    %v6288 = vadd.f32 %v6199, %v6287
    %6289 = vmatmul.bf16.gmra.mxu0 %v755
    %v6290 = vpop.f32.mrf.mxu0
    %v6291 = vadd.f32 %v6202, %v6290
    %v6292 = vpop.f32.mrf.mxu0
    %v6293 = vadd.f32 %v6204, %v6292
    %6294 = vmatmul.bf16.gmra.mxu0 %v759
    %v6295 = vpop.f32.mrf.mxu0
    %v6296 = vadd.f32 %v6207, %v6295
    %v6297 = vpop.f32.mrf.mxu0
    %v6298 = vadd.f32 %v6209, %v6297
    %6299 = vmatmul.bf16.gmra.mxu0 %v763
    %v6300 = vpop.f32.mrf.mxu0
    %v6301 = vadd.f32 %v6212, %v6300
    %v6302 = vpop.f32.mrf.mxu0
    %v6303 = vadd.f32 %v6214, %v6302
    %6304 = vmatmul.bf16.gmra.mxu0 %v767
    %v6305 = vpop.f32.mrf.mxu0
    %v6306 = vadd.f32 %v6217, %v6305
    %v6307 = vpop.f32.mrf.mxu0
    %v6308 = vadd.f32 %v6219, %v6307
    %6309 = vmatmul.bf16.gmra.mxu0 %v771
    %v6310 = vpop.f32.mrf.mxu0
    %v6311 = vadd.f32 %v6222, %v6310
    %v6312 = vpop.f32.mrf.mxu0
    %v6313 = vadd.f32 %v6224, %v6312
    %6314 = vmatmul.bf16.gmra.mxu0 %v775
    %v6315 = vpop.f32.mrf.mxu0
    %v6316 = vadd.f32 %v6227, %v6315
    %v6317 = vpop.f32.mrf.mxu0
    %v6318 = vadd.f32 %v6229, %v6317
    %6319 = vdwg.mxu0
    %6320 = vmatpush.bf16.msra.mxu0 %v2086
    %6321 = vmatpush.bf16.msra.mxu0 %v2074
    %6322 = vmatpush.bf16.msra.mxu0 %v2062
    %6323 = vmatpush.bf16.msra.mxu0 %v2050
    %6324 = vmatpush.bf16.msra.mxu0 %v2038
    %6325 = vmatpush.bf16.msra.mxu0 %v2026
    %6326 = vmatpush.bf16.msra.mxu0 %v2014
    %6327 = vmatpush.bf16.msra.mxu0 %v2002
    %6328 = vmatmul.bf16.gmra.mxu0 %v712
    %v6329 = vpop.f32.mrf.mxu0
    %v6330 = vadd.f32 %v506, %v6329
    %v6331 = vpop.f32.mrf.mxu0
    %v6332 = vadd.f32 %v506, %v6331
    %6333 = vmatmul.bf16.gmra.mxu0 %v716
    %v6334 = vpop.f32.mrf.mxu0
    %v6335 = vadd.f32 %v506, %v6334
    %v6336 = vpop.f32.mrf.mxu0
    %v6337 = vadd.f32 %v506, %v6336
    %6338 = vmatmul.bf16.gmra.mxu0 %v720
    %v6339 = vpop.f32.mrf.mxu0
    %v6340 = vadd.f32 %v506, %v6339
    %v6341 = vpop.f32.mrf.mxu0
    %v6342 = vadd.f32 %v506, %v6341
    %6343 = vmatmul.bf16.gmra.mxu0 %v724
    %v6344 = vpop.f32.mrf.mxu0
    %v6345 = vadd.f32 %v506, %v6344
    %v6346 = vpop.f32.mrf.mxu0
    %v6347 = vadd.f32 %v506, %v6346
    %6348 = vmatmul.bf16.gmra.mxu0 %v728
    %v6349 = vpop.f32.mrf.mxu0
    %v6350 = vadd.f32 %v506, %v6349
    %v6351 = vpop.f32.mrf.mxu0
    %v6352 = vadd.f32 %v506, %v6351
    %6353 = vmatmul.bf16.gmra.mxu0 %v732
    %v6354 = vpop.f32.mrf.mxu0
    %v6355 = vadd.f32 %v506, %v6354
    %v6356 = vpop.f32.mrf.mxu0
    %v6357 = vadd.f32 %v506, %v6356
    %6358 = vmatmul.bf16.gmra.mxu0 %v736
    %v6359 = vpop.f32.mrf.mxu0
    %v6360 = vadd.f32 %v506, %v6359
    %v6361 = vpop.f32.mrf.mxu0
    %v6362 = vadd.f32 %v506, %v6361
    %6363 = vmatmul.bf16.gmra.mxu0 %v740
    %v6364 = vpop.f32.mrf.mxu0
    %v6365 = vadd.f32 %v506, %v6364
    %v6366 = vpop.f32.mrf.mxu0
    %v6367 = vadd.f32 %v506, %v6366
    %6368 = vmatmul.bf16.gmra.mxu0 %v744
    %v6369 = vpop.f32.mrf.mxu0
    %v6370 = vadd.f32 %v506, %v6369
    %v6371 = vpop.f32.mrf.mxu0
    %v6372 = vadd.f32 %v506, %v6371
    %6373 = vmatmul.bf16.gmra.mxu0 %v748
    %v6374 = vpop.f32.mrf.mxu0
    %v6375 = vadd.f32 %v506, %v6374
    %v6376 = vpop.f32.mrf.mxu0
    %v6377 = vadd.f32 %v506, %v6376
    %6378 = vmatmul.bf16.gmra.mxu0 %v752
    %v6379 = vpop.f32.mrf.mxu0
    %v6380 = vadd.f32 %v506, %v6379
    %v6381 = vpop.f32.mrf.mxu0
    %v6382 = vadd.f32 %v506, %v6381
    %6383 = vmatmul.bf16.gmra.mxu0 %v756
    %v6384 = vpop.f32.mrf.mxu0
    %v6385 = vadd.f32 %v506, %v6384
    %v6386 = vpop.f32.mrf.mxu0
    %v6387 = vadd.f32 %v506, %v6386
    %6388 = vmatmul.bf16.gmra.mxu0 %v760
    %v6389 = vpop.f32.mrf.mxu0
    %v6390 = vadd.f32 %v506, %v6389
    %v6391 = vpop.f32.mrf.mxu0
    %v6392 = vadd.f32 %v506, %v6391
    %6393 = vmatmul.bf16.gmra.mxu0 %v764
    %v6394 = vpop.f32.mrf.mxu0
    %v6395 = vadd.f32 %v506, %v6394
    %v6396 = vpop.f32.mrf.mxu0
    %v6397 = vadd.f32 %v506, %v6396
    %6398 = vmatmul.bf16.gmra.mxu0 %v768
    %v6399 = vpop.f32.mrf.mxu0
    %v6400 = vadd.f32 %v506, %v6399
    %v6401 = vpop.f32.mrf.mxu0
    %v6402 = vadd.f32 %v506, %v6401
    %6403 = vmatmul.bf16.gmra.mxu0 %v772
    %v6404 = vpop.f32.mrf.mxu0
    %v6405 = vadd.f32 %v506, %v6404
    %v6406 = vpop.f32.mrf.mxu0
    %v6407 = vadd.f32 %v506, %v6406
    %6408 = vdwg.mxu0
    %6409 = vmatpush.bf16.msra.mxu0 %v2182
    %6410 = vmatpush.bf16.msra.mxu0 %v2170
    %6411 = vmatpush.bf16.msra.mxu0 %v2158
    %6412 = vmatpush.bf16.msra.mxu0 %v2146
    %6413 = vmatpush.bf16.msra.mxu0 %v2134
    %6414 = vmatpush.bf16.msra.mxu0 %v2122
    %6415 = vmatpush.bf16.msra.mxu0 %v2110
    %6416 = vmatpush.bf16.msra.mxu0 %v2098
    %6417 = vmatmul.bf16.gmra.mxu0 %v713
    %v6418 = vpop.f32.mrf.mxu0
    %v6419 = vadd.f32 %v6330, %v6418
    %v6420 = vpop.f32.mrf.mxu0
    %v6421 = vadd.f32 %v6332, %v6420
    %6422 = vmatmul.bf16.gmra.mxu0 %v717
    %v6423 = vpop.f32.mrf.mxu0
    %v6424 = vadd.f32 %v6335, %v6423
    %v6425 = vpop.f32.mrf.mxu0
    %v6426 = vadd.f32 %v6337, %v6425
    %6427 = vmatmul.bf16.gmra.mxu0 %v721
    %v6428 = vpop.f32.mrf.mxu0
    %v6429 = vadd.f32 %v6340, %v6428
    %v6430 = vpop.f32.mrf.mxu0
    %v6431 = vadd.f32 %v6342, %v6430
    %6432 = vmatmul.bf16.gmra.mxu0 %v725
    %v6433 = vpop.f32.mrf.mxu0
    %v6434 = vadd.f32 %v6345, %v6433
    %v6435 = vpop.f32.mrf.mxu0
    %v6436 = vadd.f32 %v6347, %v6435
    %6437 = vmatmul.bf16.gmra.mxu0 %v729
    %v6438 = vpop.f32.mrf.mxu0
    %v6439 = vadd.f32 %v6350, %v6438
    %v6440 = vpop.f32.mrf.mxu0
    %v6441 = vadd.f32 %v6352, %v6440
    %6442 = vmatmul.bf16.gmra.mxu0 %v733
    %v6443 = vpop.f32.mrf.mxu0
    %v6444 = vadd.f32 %v6355, %v6443
    %v6445 = vpop.f32.mrf.mxu0
    %v6446 = vadd.f32 %v6357, %v6445
    %6447 = vmatmul.bf16.gmra.mxu0 %v737
    %v6448 = vpop.f32.mrf.mxu0
    %v6449 = vadd.f32 %v6360, %v6448
    %v6450 = vpop.f32.mrf.mxu0
    %v6451 = vadd.f32 %v6362, %v6450
    %6452 = vmatmul.bf16.gmra.mxu0 %v741
    %v6453 = vpop.f32.mrf.mxu0
    %v6454 = vadd.f32 %v6365, %v6453
    %v6455 = vpop.f32.mrf.mxu0
    %v6456 = vadd.f32 %v6367, %v6455
    %6457 = vmatmul.bf16.gmra.mxu0 %v745
    %v6458 = vpop.f32.mrf.mxu0
    %v6459 = vadd.f32 %v6370, %v6458
    %v6460 = vpop.f32.mrf.mxu0
    %v6461 = vadd.f32 %v6372, %v6460
    %6462 = vmatmul.bf16.gmra.mxu0 %v749
    %v6463 = vpop.f32.mrf.mxu0
    %v6464 = vadd.f32 %v6375, %v6463
    %v6465 = vpop.f32.mrf.mxu0
    %v6466 = vadd.f32 %v6377, %v6465
    %6467 = vmatmul.bf16.gmra.mxu0 %v753
    %v6468 = vpop.f32.mrf.mxu0
    %v6469 = vadd.f32 %v6380, %v6468
    %v6470 = vpop.f32.mrf.mxu0
    %v6471 = vadd.f32 %v6382, %v6470
    %6472 = vmatmul.bf16.gmra.mxu0 %v757
    %v6473 = vpop.f32.mrf.mxu0
    %v6474 = vadd.f32 %v6385, %v6473
    %v6475 = vpop.f32.mrf.mxu0
    %v6476 = vadd.f32 %v6387, %v6475
    %6477 = vmatmul.bf16.gmra.mxu0 %v761
    %v6478 = vpop.f32.mrf.mxu0
    %v6479 = vadd.f32 %v6390, %v6478
    %v6480 = vpop.f32.mrf.mxu0
    %v6481 = vadd.f32 %v6392, %v6480
    %6482 = vmatmul.bf16.gmra.mxu0 %v765
    %v6483 = vpop.f32.mrf.mxu0
    %v6484 = vadd.f32 %v6395, %v6483
    %v6485 = vpop.f32.mrf.mxu0
    %v6486 = vadd.f32 %v6397, %v6485
    %6487 = vmatmul.bf16.gmra.mxu0 %v769
    %v6488 = vpop.f32.mrf.mxu0
    %v6489 = vadd.f32 %v6400, %v6488
    %v6490 = vpop.f32.mrf.mxu0
    %v6491 = vadd.f32 %v6402, %v6490
    %6492 = vmatmul.bf16.gmra.mxu0 %v773
    %v6493 = vpop.f32.mrf.mxu0
    %v6494 = vadd.f32 %v6405, %v6493
    %v6495 = vpop.f32.mrf.mxu0
    %v6496 = vadd.f32 %v6407, %v6495
    %6497 = vdwg.mxu0
    %6498 = vmatpush.bf16.msra.mxu0 %v2278
    %6499 = vmatpush.bf16.msra.mxu0 %v2266
    %6500 = vmatpush.bf16.msra.mxu0 %v2254
    %6501 = vmatpush.bf16.msra.mxu0 %v2242
    %6502 = vmatpush.bf16.msra.mxu0 %v2230
    %6503 = vmatpush.bf16.msra.mxu0 %v2218
    %6504 = vmatpush.bf16.msra.mxu0 %v2206
    %6505 = vmatpush.bf16.msra.mxu0 %v2194
    %6506 = vmatmul.bf16.gmra.mxu0 %v714
    %v6507 = vpop.f32.mrf.mxu0
    %v6508 = vadd.f32 %v6419, %v6507
    %v6509 = vpop.f32.mrf.mxu0
    %v6510 = vadd.f32 %v6421, %v6509
    %6511 = vmatmul.bf16.gmra.mxu0 %v718
    %v6512 = vpop.f32.mrf.mxu0
    %v6513 = vadd.f32 %v6424, %v6512
    %v6514 = vpop.f32.mrf.mxu0
    %v6515 = vadd.f32 %v6426, %v6514
    %6516 = vmatmul.bf16.gmra.mxu0 %v722
    %v6517 = vpop.f32.mrf.mxu0
    %v6518 = vadd.f32 %v6429, %v6517
    %v6519 = vpop.f32.mrf.mxu0
    %v6520 = vadd.f32 %v6431, %v6519
    %6521 = vmatmul.bf16.gmra.mxu0 %v726
    %v6522 = vpop.f32.mrf.mxu0
    %v6523 = vadd.f32 %v6434, %v6522
    %v6524 = vpop.f32.mrf.mxu0
    %v6525 = vadd.f32 %v6436, %v6524
    %6526 = vmatmul.bf16.gmra.mxu0 %v730
    %v6527 = vpop.f32.mrf.mxu0
    %v6528 = vadd.f32 %v6439, %v6527
    %v6529 = vpop.f32.mrf.mxu0
    %v6530 = vadd.f32 %v6441, %v6529
    %6531 = vmatmul.bf16.gmra.mxu0 %v734
    %v6532 = vpop.f32.mrf.mxu0
    %v6533 = vadd.f32 %v6444, %v6532
    %v6534 = vpop.f32.mrf.mxu0
    %v6535 = vadd.f32 %v6446, %v6534
    %6536 = vmatmul.bf16.gmra.mxu0 %v738
    %v6537 = vpop.f32.mrf.mxu0
    %v6538 = vadd.f32 %v6449, %v6537
    %v6539 = vpop.f32.mrf.mxu0
    %v6540 = vadd.f32 %v6451, %v6539
    %6541 = vmatmul.bf16.gmra.mxu0 %v742
    %v6542 = vpop.f32.mrf.mxu0
    %v6543 = vadd.f32 %v6454, %v6542
    %v6544 = vpop.f32.mrf.mxu0
    %v6545 = vadd.f32 %v6456, %v6544
    %6546 = vmatmul.bf16.gmra.mxu0 %v746
    %v6547 = vpop.f32.mrf.mxu0
    %v6548 = vadd.f32 %v6459, %v6547
    %v6549 = vpop.f32.mrf.mxu0
    %v6550 = vadd.f32 %v6461, %v6549
    %6551 = vmatmul.bf16.gmra.mxu0 %v750
    %v6552 = vpop.f32.mrf.mxu0
    %v6553 = vadd.f32 %v6464, %v6552
    %v6554 = vpop.f32.mrf.mxu0
    %v6555 = vadd.f32 %v6466, %v6554
    %6556 = vmatmul.bf16.gmra.mxu0 %v754
    %v6557 = vpop.f32.mrf.mxu0
    %v6558 = vadd.f32 %v6469, %v6557
    %v6559 = vpop.f32.mrf.mxu0
    %v6560 = vadd.f32 %v6471, %v6559
    %6561 = vmatmul.bf16.gmra.mxu0 %v758
    %v6562 = vpop.f32.mrf.mxu0
    %v6563 = vadd.f32 %v6474, %v6562
    %v6564 = vpop.f32.mrf.mxu0
    %v6565 = vadd.f32 %v6476, %v6564
    %6566 = vmatmul.bf16.gmra.mxu0 %v762
    %v6567 = vpop.f32.mrf.mxu0
    %v6568 = vadd.f32 %v6479, %v6567
    %v6569 = vpop.f32.mrf.mxu0
    %v6570 = vadd.f32 %v6481, %v6569
    %6571 = vmatmul.bf16.gmra.mxu0 %v766
    %v6572 = vpop.f32.mrf.mxu0
    %v6573 = vadd.f32 %v6484, %v6572
    %v6574 = vpop.f32.mrf.mxu0
    %v6575 = vadd.f32 %v6486, %v6574
    %6576 = vmatmul.bf16.gmra.mxu0 %v770
    %v6577 = vpop.f32.mrf.mxu0
    %v6578 = vadd.f32 %v6489, %v6577
    %v6579 = vpop.f32.mrf.mxu0
    %v6580 = vadd.f32 %v6491, %v6579
    %6581 = vmatmul.bf16.gmra.mxu0 %v774
    %v6582 = vpop.f32.mrf.mxu0
    %v6583 = vadd.f32 %v6494, %v6582
    %v6584 = vpop.f32.mrf.mxu0
    %v6585 = vadd.f32 %v6496, %v6584
    %6586 = vdwg.mxu0
    %6587 = vmatpush.bf16.msra.mxu0 %v2374
    %6588 = vmatpush.bf16.msra.mxu0 %v2362
    %6589 = vmatpush.bf16.msra.mxu0 %v2350
    %6590 = vmatpush.bf16.msra.mxu0 %v2338
    %6591 = vmatpush.bf16.msra.mxu0 %v2326
    %6592 = vmatpush.bf16.msra.mxu0 %v2314
    %6593 = vmatpush.bf16.msra.mxu0 %v2302
    %6594 = vmatpush.bf16.msra.mxu0 %v2290
    %6595 = vmatmul.bf16.gmra.mxu0 %v715
    %v6596 = vpop.f32.mrf.mxu0
    %v6597 = vadd.f32 %v6508, %v6596
    %v6598 = vpop.f32.mrf.mxu0
    %v6599 = vadd.f32 %v6510, %v6598
    %6600 = vmatmul.bf16.gmra.mxu0 %v719
    %v6601 = vpop.f32.mrf.mxu0
    %v6602 = vadd.f32 %v6513, %v6601
    %v6603 = vpop.f32.mrf.mxu0
    %v6604 = vadd.f32 %v6515, %v6603
    %6605 = vmatmul.bf16.gmra.mxu0 %v723
    %v6606 = vpop.f32.mrf.mxu0
    %v6607 = vadd.f32 %v6518, %v6606
    %v6608 = vpop.f32.mrf.mxu0
    %v6609 = vadd.f32 %v6520, %v6608
    %6610 = vmatmul.bf16.gmra.mxu0 %v727
    %v6611 = vpop.f32.mrf.mxu0
    %v6612 = vadd.f32 %v6523, %v6611
    %v6613 = vpop.f32.mrf.mxu0
    %v6614 = vadd.f32 %v6525, %v6613
    %6615 = vmatmul.bf16.gmra.mxu0 %v731
    %v6616 = vpop.f32.mrf.mxu0
    %v6617 = vadd.f32 %v6528, %v6616
    %v6618 = vpop.f32.mrf.mxu0
    %v6619 = vadd.f32 %v6530, %v6618
    %6620 = vmatmul.bf16.gmra.mxu0 %v735
    %v6621 = vpop.f32.mrf.mxu0
    %v6622 = vadd.f32 %v6533, %v6621
    %v6623 = vpop.f32.mrf.mxu0
    %v6624 = vadd.f32 %v6535, %v6623
    %6625 = vmatmul.bf16.gmra.mxu0 %v739
    %v6626 = vpop.f32.mrf.mxu0
    %v6627 = vadd.f32 %v6538, %v6626
    %v6628 = vpop.f32.mrf.mxu0
    %v6629 = vadd.f32 %v6540, %v6628
    %6630 = vmatmul.bf16.gmra.mxu0 %v743
    %v6631 = vpop.f32.mrf.mxu0
    %v6632 = vadd.f32 %v6543, %v6631
    %v6633 = vpop.f32.mrf.mxu0
    %v6634 = vadd.f32 %v6545, %v6633
    %6635 = vmatmul.bf16.gmra.mxu0 %v747
    %v6636 = vpop.f32.mrf.mxu0
    %v6637 = vadd.f32 %v6548, %v6636
    %v6638 = vpop.f32.mrf.mxu0
    %v6639 = vadd.f32 %v6550, %v6638
    %6640 = vmatmul.bf16.gmra.mxu0 %v751
    %v6641 = vpop.f32.mrf.mxu0
    %v6642 = vadd.f32 %v6553, %v6641
    %v6643 = vpop.f32.mrf.mxu0
    %v6644 = vadd.f32 %v6555, %v6643
    %6645 = vmatmul.bf16.gmra.mxu0 %v755
    %v6646 = vpop.f32.mrf.mxu0
    %v6647 = vadd.f32 %v6558, %v6646
    %v6648 = vpop.f32.mrf.mxu0
    %v6649 = vadd.f32 %v6560, %v6648
    %6650 = vmatmul.bf16.gmra.mxu0 %v759
    %v6651 = vpop.f32.mrf.mxu0
    %v6652 = vadd.f32 %v6563, %v6651
    %v6653 = vpop.f32.mrf.mxu0
    %v6654 = vadd.f32 %v6565, %v6653
    %6655 = vmatmul.bf16.gmra.mxu0 %v763
    %v6656 = vpop.f32.mrf.mxu0
    %v6657 = vadd.f32 %v6568, %v6656
    %v6658 = vpop.f32.mrf.mxu0
    %v6659 = vadd.f32 %v6570, %v6658
    %6660 = vmatmul.bf16.gmra.mxu0 %v767
    %v6661 = vpop.f32.mrf.mxu0
    %v6662 = vadd.f32 %v6573, %v6661
    %v6663 = vpop.f32.mrf.mxu0
    %v6664 = vadd.f32 %v6575, %v6663
    %6665 = vmatmul.bf16.gmra.mxu0 %v771
    %v6666 = vpop.f32.mrf.mxu0
    %v6667 = vadd.f32 %v6578, %v6666
    %v6668 = vpop.f32.mrf.mxu0
    %v6669 = vadd.f32 %v6580, %v6668
    %6670 = vmatmul.bf16.gmra.mxu0 %v775
    %v6671 = vpop.f32.mrf.mxu0
    %v6672 = vadd.f32 %v6583, %v6671
    %v6673 = vpop.f32.mrf.mxu0
    %v6674 = vadd.f32 %v6585, %v6673
    %6675 = vdwg.mxu0
    %6676 = vmatpush.bf16.msra.mxu0 %v2087
    %6677 = vmatpush.bf16.msra.mxu0 %v2075
    %6678 = vmatpush.bf16.msra.mxu0 %v2063
    %6679 = vmatpush.bf16.msra.mxu0 %v2051
    %6680 = vmatpush.bf16.msra.mxu0 %v2039
    %6681 = vmatpush.bf16.msra.mxu0 %v2027
    %6682 = vmatpush.bf16.msra.mxu0 %v2015
    %6683 = vmatpush.bf16.msra.mxu0 %v2003
    %6684 = vmatmul.bf16.gmra.mxu0 %v712
    %v6685 = vpop.f32.mrf.mxu0
    %v6686 = vadd.f32 %v507, %v6685
    %v6687 = vpop.f32.mrf.mxu0
    %v6688 = vadd.f32 %v507, %v6687
    %6689 = vmatmul.bf16.gmra.mxu0 %v716
    %v6690 = vpop.f32.mrf.mxu0
    %v6691 = vadd.f32 %v507, %v6690
    %v6692 = vpop.f32.mrf.mxu0
    %v6693 = vadd.f32 %v507, %v6692
    %6694 = vmatmul.bf16.gmra.mxu0 %v720
    %v6695 = vpop.f32.mrf.mxu0
    %v6696 = vadd.f32 %v507, %v6695
    %v6697 = vpop.f32.mrf.mxu0
    %v6698 = vadd.f32 %v507, %v6697
    %6699 = vmatmul.bf16.gmra.mxu0 %v724
    %v6700 = vpop.f32.mrf.mxu0
    %v6701 = vadd.f32 %v507, %v6700
    %v6702 = vpop.f32.mrf.mxu0
    %v6703 = vadd.f32 %v507, %v6702
    %6704 = vmatmul.bf16.gmra.mxu0 %v728
    %v6705 = vpop.f32.mrf.mxu0
    %v6706 = vadd.f32 %v507, %v6705
    %v6707 = vpop.f32.mrf.mxu0
    %v6708 = vadd.f32 %v507, %v6707
    %6709 = vmatmul.bf16.gmra.mxu0 %v732
    %v6710 = vpop.f32.mrf.mxu0
    %v6711 = vadd.f32 %v507, %v6710
    %v6712 = vpop.f32.mrf.mxu0
    %v6713 = vadd.f32 %v507, %v6712
    %6714 = vmatmul.bf16.gmra.mxu0 %v736
    %v6715 = vpop.f32.mrf.mxu0
    %v6716 = vadd.f32 %v507, %v6715
    %v6717 = vpop.f32.mrf.mxu0
    %v6718 = vadd.f32 %v507, %v6717
    %6719 = vmatmul.bf16.gmra.mxu0 %v740
    %v6720 = vpop.f32.mrf.mxu0
    %v6721 = vadd.f32 %v507, %v6720
    %v6722 = vpop.f32.mrf.mxu0
    %v6723 = vadd.f32 %v507, %v6722
    %6724 = vmatmul.bf16.gmra.mxu0 %v744
    %v6725 = vpop.f32.mrf.mxu0
    %v6726 = vadd.f32 %v507, %v6725
    %v6727 = vpop.f32.mrf.mxu0
    %v6728 = vadd.f32 %v507, %v6727
    %6729 = vmatmul.bf16.gmra.mxu0 %v748
    %v6730 = vpop.f32.mrf.mxu0
    %v6731 = vadd.f32 %v507, %v6730
    %v6732 = vpop.f32.mrf.mxu0
    %v6733 = vadd.f32 %v507, %v6732
    %6734 = vmatmul.bf16.gmra.mxu0 %v752
    %v6735 = vpop.f32.mrf.mxu0
    %v6736 = vadd.f32 %v507, %v6735
    %v6737 = vpop.f32.mrf.mxu0
    %v6738 = vadd.f32 %v507, %v6737
    %6739 = vmatmul.bf16.gmra.mxu0 %v756
    %v6740 = vpop.f32.mrf.mxu0
    %v6741 = vadd.f32 %v507, %v6740
    %v6742 = vpop.f32.mrf.mxu0
    %v6743 = vadd.f32 %v507, %v6742
    %6744 = vmatmul.bf16.gmra.mxu0 %v760
    %v6745 = vpop.f32.mrf.mxu0
    %v6746 = vadd.f32 %v507, %v6745
    %v6747 = vpop.f32.mrf.mxu0
    %v6748 = vadd.f32 %v507, %v6747
    %6749 = vmatmul.bf16.gmra.mxu0 %v764
    %v6750 = vpop.f32.mrf.mxu0
    %v6751 = vadd.f32 %v507, %v6750
    %v6752 = vpop.f32.mrf.mxu0
    %v6753 = vadd.f32 %v507, %v6752
    %6754 = vmatmul.bf16.gmra.mxu0 %v768
    %v6755 = vpop.f32.mrf.mxu0
    %v6756 = vadd.f32 %v507, %v6755
    %v6757 = vpop.f32.mrf.mxu0
    %v6758 = vadd.f32 %v507, %v6757
    %6759 = vmatmul.bf16.gmra.mxu0 %v772
    %v6760 = vpop.f32.mrf.mxu0
    %v6761 = vadd.f32 %v507, %v6760
    %v6762 = vpop.f32.mrf.mxu0
    %v6763 = vadd.f32 %v507, %v6762
    %6764 = vdwg.mxu0
    %6765 = vmatpush.bf16.msra.mxu0 %v2183
    %6766 = vmatpush.bf16.msra.mxu0 %v2171
    %6767 = vmatpush.bf16.msra.mxu0 %v2159
    %6768 = vmatpush.bf16.msra.mxu0 %v2147
    %6769 = vmatpush.bf16.msra.mxu0 %v2135
    %6770 = vmatpush.bf16.msra.mxu0 %v2123
    %6771 = vmatpush.bf16.msra.mxu0 %v2111
    %6772 = vmatpush.bf16.msra.mxu0 %v2099
    %6773 = vmatmul.bf16.gmra.mxu0 %v713
    %v6774 = vpop.f32.mrf.mxu0
    %v6775 = vadd.f32 %v6686, %v6774
    %v6776 = vpop.f32.mrf.mxu0
    %v6777 = vadd.f32 %v6688, %v6776
    %6778 = vmatmul.bf16.gmra.mxu0 %v717
    %v6779 = vpop.f32.mrf.mxu0
    %v6780 = vadd.f32 %v6691, %v6779
    %v6781 = vpop.f32.mrf.mxu0
    %v6782 = vadd.f32 %v6693, %v6781
    %6783 = vmatmul.bf16.gmra.mxu0 %v721
    %v6784 = vpop.f32.mrf.mxu0
    %v6785 = vadd.f32 %v6696, %v6784
    %v6786 = vpop.f32.mrf.mxu0
    %v6787 = vadd.f32 %v6698, %v6786
    %6788 = vmatmul.bf16.gmra.mxu0 %v725
    %v6789 = vpop.f32.mrf.mxu0
    %v6790 = vadd.f32 %v6701, %v6789
    %v6791 = vpop.f32.mrf.mxu0
    %v6792 = vadd.f32 %v6703, %v6791
    %6793 = vmatmul.bf16.gmra.mxu0 %v729
    %v6794 = vpop.f32.mrf.mxu0
    %v6795 = vadd.f32 %v6706, %v6794
    %v6796 = vpop.f32.mrf.mxu0
    %v6797 = vadd.f32 %v6708, %v6796
    %6798 = vmatmul.bf16.gmra.mxu0 %v733
    %v6799 = vpop.f32.mrf.mxu0
    %v6800 = vadd.f32 %v6711, %v6799
    %v6801 = vpop.f32.mrf.mxu0
    %v6802 = vadd.f32 %v6713, %v6801
    %6803 = vmatmul.bf16.gmra.mxu0 %v737
    %v6804 = vpop.f32.mrf.mxu0
    %v6805 = vadd.f32 %v6716, %v6804
    %v6806 = vpop.f32.mrf.mxu0
    %v6807 = vadd.f32 %v6718, %v6806
    %6808 = vmatmul.bf16.gmra.mxu0 %v741
    %v6809 = vpop.f32.mrf.mxu0
    %v6810 = vadd.f32 %v6721, %v6809
    %v6811 = vpop.f32.mrf.mxu0
    %v6812 = vadd.f32 %v6723, %v6811
    %6813 = vmatmul.bf16.gmra.mxu0 %v745
    %v6814 = vpop.f32.mrf.mxu0
    %v6815 = vadd.f32 %v6726, %v6814
    %v6816 = vpop.f32.mrf.mxu0
    %v6817 = vadd.f32 %v6728, %v6816
    %6818 = vmatmul.bf16.gmra.mxu0 %v749
    %v6819 = vpop.f32.mrf.mxu0
    %v6820 = vadd.f32 %v6731, %v6819
    %v6821 = vpop.f32.mrf.mxu0
    %v6822 = vadd.f32 %v6733, %v6821
    %6823 = vmatmul.bf16.gmra.mxu0 %v753
    %v6824 = vpop.f32.mrf.mxu0
    %v6825 = vadd.f32 %v6736, %v6824
    %v6826 = vpop.f32.mrf.mxu0
    %v6827 = vadd.f32 %v6738, %v6826
    %6828 = vmatmul.bf16.gmra.mxu0 %v757
    %v6829 = vpop.f32.mrf.mxu0
    %v6830 = vadd.f32 %v6741, %v6829
    %v6831 = vpop.f32.mrf.mxu0
    %v6832 = vadd.f32 %v6743, %v6831
    %6833 = vmatmul.bf16.gmra.mxu0 %v761
    %v6834 = vpop.f32.mrf.mxu0
    %v6835 = vadd.f32 %v6746, %v6834
    %v6836 = vpop.f32.mrf.mxu0
    %v6837 = vadd.f32 %v6748, %v6836
    %6838 = vmatmul.bf16.gmra.mxu0 %v765
    %v6839 = vpop.f32.mrf.mxu0
    %v6840 = vadd.f32 %v6751, %v6839
    %v6841 = vpop.f32.mrf.mxu0
    %v6842 = vadd.f32 %v6753, %v6841
    %6843 = vmatmul.bf16.gmra.mxu0 %v769
    %v6844 = vpop.f32.mrf.mxu0
    %v6845 = vadd.f32 %v6756, %v6844
    %v6846 = vpop.f32.mrf.mxu0
    %v6847 = vadd.f32 %v6758, %v6846
    %6848 = vmatmul.bf16.gmra.mxu0 %v773
    %v6849 = vpop.f32.mrf.mxu0
    %v6850 = vadd.f32 %v6761, %v6849
    %v6851 = vpop.f32.mrf.mxu0
    %v6852 = vadd.f32 %v6763, %v6851
    %6853 = vdwg.mxu0
    %6854 = vmatpush.bf16.msra.mxu0 %v2279
    %6855 = vmatpush.bf16.msra.mxu0 %v2267
    %6856 = vmatpush.bf16.msra.mxu0 %v2255
    %6857 = vmatpush.bf16.msra.mxu0 %v2243
    %6858 = vmatpush.bf16.msra.mxu0 %v2231
    %6859 = vmatpush.bf16.msra.mxu0 %v2219
    %6860 = vmatpush.bf16.msra.mxu0 %v2207
    %6861 = vmatpush.bf16.msra.mxu0 %v2195
    %6862 = vmatmul.bf16.gmra.mxu0 %v714
    %v6863 = vpop.f32.mrf.mxu0
    %v6864 = vadd.f32 %v6775, %v6863
    %v6865 = vpop.f32.mrf.mxu0
    %v6866 = vadd.f32 %v6777, %v6865
    %6867 = vmatmul.bf16.gmra.mxu0 %v718
    %v6868 = vpop.f32.mrf.mxu0
    %v6869 = vadd.f32 %v6780, %v6868
    %v6870 = vpop.f32.mrf.mxu0
    %v6871 = vadd.f32 %v6782, %v6870
    %6872 = vmatmul.bf16.gmra.mxu0 %v722
    %v6873 = vpop.f32.mrf.mxu0
    %v6874 = vadd.f32 %v6785, %v6873
    %v6875 = vpop.f32.mrf.mxu0
    %v6876 = vadd.f32 %v6787, %v6875
    %6877 = vmatmul.bf16.gmra.mxu0 %v726
    %v6878 = vpop.f32.mrf.mxu0
    %v6879 = vadd.f32 %v6790, %v6878
    %v6880 = vpop.f32.mrf.mxu0
    %v6881 = vadd.f32 %v6792, %v6880
    %6882 = vmatmul.bf16.gmra.mxu0 %v730
    %v6883 = vpop.f32.mrf.mxu0
    %v6884 = vadd.f32 %v6795, %v6883
    %v6885 = vpop.f32.mrf.mxu0
    %v6886 = vadd.f32 %v6797, %v6885
    %6887 = vmatmul.bf16.gmra.mxu0 %v734
    %v6888 = vpop.f32.mrf.mxu0
    %v6889 = vadd.f32 %v6800, %v6888
    %v6890 = vpop.f32.mrf.mxu0
    %v6891 = vadd.f32 %v6802, %v6890
    %6892 = vmatmul.bf16.gmra.mxu0 %v738
    %v6893 = vpop.f32.mrf.mxu0
    %v6894 = vadd.f32 %v6805, %v6893
    %v6895 = vpop.f32.mrf.mxu0
    %v6896 = vadd.f32 %v6807, %v6895
    %6897 = vmatmul.bf16.gmra.mxu0 %v742
    %v6898 = vpop.f32.mrf.mxu0
    %v6899 = vadd.f32 %v6810, %v6898
    %v6900 = vpop.f32.mrf.mxu0
    %v6901 = vadd.f32 %v6812, %v6900
    %6902 = vmatmul.bf16.gmra.mxu0 %v746
    %v6903 = vpop.f32.mrf.mxu0
    %v6904 = vadd.f32 %v6815, %v6903
    %v6905 = vpop.f32.mrf.mxu0
    %v6906 = vadd.f32 %v6817, %v6905
    %6907 = vmatmul.bf16.gmra.mxu0 %v750
    %v6908 = vpop.f32.mrf.mxu0
    %v6909 = vadd.f32 %v6820, %v6908
    %v6910 = vpop.f32.mrf.mxu0
    %v6911 = vadd.f32 %v6822, %v6910
    %6912 = vmatmul.bf16.gmra.mxu0 %v754
    %v6913 = vpop.f32.mrf.mxu0
    %v6914 = vadd.f32 %v6825, %v6913
    %v6915 = vpop.f32.mrf.mxu0
    %v6916 = vadd.f32 %v6827, %v6915
    %6917 = vmatmul.bf16.gmra.mxu0 %v758
    %v6918 = vpop.f32.mrf.mxu0
    %v6919 = vadd.f32 %v6830, %v6918
    %v6920 = vpop.f32.mrf.mxu0
    %v6921 = vadd.f32 %v6832, %v6920
    %6922 = vmatmul.bf16.gmra.mxu0 %v762
    %v6923 = vpop.f32.mrf.mxu0
    %v6924 = vadd.f32 %v6835, %v6923
    %v6925 = vpop.f32.mrf.mxu0
    %v6926 = vadd.f32 %v6837, %v6925
    %6927 = vmatmul.bf16.gmra.mxu0 %v766
    %v6928 = vpop.f32.mrf.mxu0
    %v6929 = vadd.f32 %v6840, %v6928
    %v6930 = vpop.f32.mrf.mxu0
    %v6931 = vadd.f32 %v6842, %v6930
    %6932 = vmatmul.bf16.gmra.mxu0 %v770
    %v6933 = vpop.f32.mrf.mxu0
    %v6934 = vadd.f32 %v6845, %v6933
    %v6935 = vpop.f32.mrf.mxu0
    %v6936 = vadd.f32 %v6847, %v6935
    %6937 = vmatmul.bf16.gmra.mxu0 %v774
    %v6938 = vpop.f32.mrf.mxu0
    %v6939 = vadd.f32 %v6850, %v6938
    %v6940 = vpop.f32.mrf.mxu0
    %v6941 = vadd.f32 %v6852, %v6940
    %6942 = vdwg.mxu0
    %6943 = vmatpush.bf16.msra.mxu0 %v2375
    %6944 = vmatpush.bf16.msra.mxu0 %v2363
    %6945 = vmatpush.bf16.msra.mxu0 %v2351
    %6946 = vmatpush.bf16.msra.mxu0 %v2339
    %6947 = vmatpush.bf16.msra.mxu0 %v2327
    %6948 = vmatpush.bf16.msra.mxu0 %v2315
    %6949 = vmatpush.bf16.msra.mxu0 %v2303
    %6950 = vmatpush.bf16.msra.mxu0 %v2291
    %6951 = vmatmul.bf16.gmra.mxu0 %v715
    %v6952 = vpop.f32.mrf.mxu0
    %v6953 = vadd.f32 %v6864, %v6952
    %v6954 = vpop.f32.mrf.mxu0
    %v6955 = vadd.f32 %v6866, %v6954
    %6956 = vmatmul.bf16.gmra.mxu0 %v719
    %v6957 = vpop.f32.mrf.mxu0
    %v6958 = vadd.f32 %v6869, %v6957
    %v6959 = vpop.f32.mrf.mxu0
    %v6960 = vadd.f32 %v6871, %v6959
    %6961 = vmatmul.bf16.gmra.mxu0 %v723
    %v6962 = vpop.f32.mrf.mxu0
    %v6963 = vadd.f32 %v6874, %v6962
    %v6964 = vpop.f32.mrf.mxu0
    %v6965 = vadd.f32 %v6876, %v6964
    %6966 = vmatmul.bf16.gmra.mxu0 %v727
    %v6967 = vpop.f32.mrf.mxu0
    %v6968 = vadd.f32 %v6879, %v6967
    %v6969 = vpop.f32.mrf.mxu0
    %v6970 = vadd.f32 %v6881, %v6969
    %6971 = vmatmul.bf16.gmra.mxu0 %v731
    %v6972 = vpop.f32.mrf.mxu0
    %v6973 = vadd.f32 %v6884, %v6972
    %v6974 = vpop.f32.mrf.mxu0
    %v6975 = vadd.f32 %v6886, %v6974
    %6976 = vmatmul.bf16.gmra.mxu0 %v735
    %v6977 = vpop.f32.mrf.mxu0
    %v6978 = vadd.f32 %v6889, %v6977
    %v6979 = vpop.f32.mrf.mxu0
    %v6980 = vadd.f32 %v6891, %v6979
    %6981 = vmatmul.bf16.gmra.mxu0 %v739
    %v6982 = vpop.f32.mrf.mxu0
    %v6983 = vadd.f32 %v6894, %v6982
    %v6984 = vpop.f32.mrf.mxu0
    %v6985 = vadd.f32 %v6896, %v6984
    %6986 = vmatmul.bf16.gmra.mxu0 %v743
    %v6987 = vpop.f32.mrf.mxu0
    %v6988 = vadd.f32 %v6899, %v6987
    %v6989 = vpop.f32.mrf.mxu0
    %v6990 = vadd.f32 %v6901, %v6989
    %6991 = vmatmul.bf16.gmra.mxu0 %v747
    %v6992 = vpop.f32.mrf.mxu0
    %v6993 = vadd.f32 %v6904, %v6992
    %v6994 = vpop.f32.mrf.mxu0
    %v6995 = vadd.f32 %v6906, %v6994
    %6996 = vmatmul.bf16.gmra.mxu0 %v751
    %v6997 = vpop.f32.mrf.mxu0
    %v6998 = vadd.f32 %v6909, %v6997
    %v6999 = vpop.f32.mrf.mxu0
    %v7000 = vadd.f32 %v6911, %v6999
    %7001 = vmatmul.bf16.gmra.mxu0 %v755
    %v7002 = vpop.f32.mrf.mxu0
    %v7003 = vadd.f32 %v6914, %v7002
    %v7004 = vpop.f32.mrf.mxu0
    %v7005 = vadd.f32 %v6916, %v7004
    %7006 = vmatmul.bf16.gmra.mxu0 %v759
    %v7007 = vpop.f32.mrf.mxu0
    %v7008 = vadd.f32 %v6919, %v7007
    %v7009 = vpop.f32.mrf.mxu0
    %v7010 = vadd.f32 %v6921, %v7009
    %7011 = vmatmul.bf16.gmra.mxu0 %v763
    %v7012 = vpop.f32.mrf.mxu0
    %v7013 = vadd.f32 %v6924, %v7012
    %v7014 = vpop.f32.mrf.mxu0
    %v7015 = vadd.f32 %v6926, %v7014
    %7016 = vmatmul.bf16.gmra.mxu0 %v767
    %v7017 = vpop.f32.mrf.mxu0
    %v7018 = vadd.f32 %v6929, %v7017
    %v7019 = vpop.f32.mrf.mxu0
    %v7020 = vadd.f32 %v6931, %v7019
    %7021 = vmatmul.bf16.gmra.mxu0 %v771
    %v7022 = vpop.f32.mrf.mxu0
    %v7023 = vadd.f32 %v6934, %v7022
    %v7024 = vpop.f32.mrf.mxu0
    %v7025 = vadd.f32 %v6936, %v7024
    %7026 = vmatmul.bf16.gmra.mxu0 %v775
    %v7027 = vpop.f32.mrf.mxu0
    %v7028 = vadd.f32 %v6939, %v7027
    %v7029 = vpop.f32.mrf.mxu0
    %v7030 = vadd.f32 %v6941, %v7029
    %7031 = vdwg.mxu0
    %v7032 = vpack.c.bf16 %v3393, %v3037
    %v7033 = vpack.c.bf16 %v4105, %v3749
    %v7034 = vpack.c.bf16 %v4817, %v4461
    %v7035 = vpack.c.bf16 %v5529, %v5173
    %v7036 = vpack.c.bf16 %v6241, %v5885
    %v7037 = vpack.c.bf16 %v6953, %v6597
    %v7038 = vpack.c.bf16 %v3395, %v3039
    %v7039 = vpack.c.bf16 %v4107, %v3751
    %v7040 = vpack.c.bf16 %v4819, %v4463
    %v7041 = vpack.c.bf16 %v5531, %v5175
    %v7042 = vpack.c.bf16 %v6243, %v5887
    %v7043 = vpack.c.bf16 %v6955, %v6599
    %v7044 = vpack.c.bf16 %v3398, %v3042
    %v7045 = vpack.c.bf16 %v4110, %v3754
    %v7046 = vpack.c.bf16 %v4822, %v4466
    %v7047 = vpack.c.bf16 %v5534, %v5178
    %v7048 = vpack.c.bf16 %v6246, %v5890
    %v7049 = vpack.c.bf16 %v6958, %v6602
    %v7050 = vpack.c.bf16 %v3400, %v3044
    %v7051 = vpack.c.bf16 %v4112, %v3756
    %v7052 = vpack.c.bf16 %v4824, %v4468
    %v7053 = vpack.c.bf16 %v5536, %v5180
    %v7054 = vpack.c.bf16 %v6248, %v5892
    %v7055 = vpack.c.bf16 %v6960, %v6604
    %v7056 = vpack.c.bf16 %v3403, %v3047
    %v7057 = vpack.c.bf16 %v4115, %v3759
    %v7058 = vpack.c.bf16 %v4827, %v4471
    %v7059 = vpack.c.bf16 %v5539, %v5183
    %v7060 = vpack.c.bf16 %v6251, %v5895
    %v7061 = vpack.c.bf16 %v6963, %v6607
    %v7062 = vpack.c.bf16 %v3405, %v3049
    %v7063 = vpack.c.bf16 %v4117, %v3761
    %v7064 = vpack.c.bf16 %v4829, %v4473
    %v7065 = vpack.c.bf16 %v5541, %v5185
    %v7066 = vpack.c.bf16 %v6253, %v5897
    %v7067 = vpack.c.bf16 %v6965, %v6609
    %v7068 = vpack.c.bf16 %v3408, %v3052
    %v7069 = vpack.c.bf16 %v4120, %v3764
    %v7070 = vpack.c.bf16 %v4832, %v4476
    %v7071 = vpack.c.bf16 %v5544, %v5188
    %v7072 = vpack.c.bf16 %v6256, %v5900
    %v7073 = vpack.c.bf16 %v6968, %v6612
    %v7074 = vpack.c.bf16 %v3410, %v3054
    %v7075 = vpack.c.bf16 %v4122, %v3766
    %v7076 = vpack.c.bf16 %v4834, %v4478
    %v7077 = vpack.c.bf16 %v5546, %v5190
    %v7078 = vpack.c.bf16 %v6258, %v5902
    %v7079 = vpack.c.bf16 %v6970, %v6614
    %v7080 = vpack.c.bf16 %v3413, %v3057
    %v7081 = vpack.c.bf16 %v4125, %v3769
    %v7082 = vpack.c.bf16 %v4837, %v4481
    %v7083 = vpack.c.bf16 %v5549, %v5193
    %v7084 = vpack.c.bf16 %v6261, %v5905
    %v7085 = vpack.c.bf16 %v6973, %v6617
    %v7086 = vpack.c.bf16 %v3415, %v3059
    %v7087 = vpack.c.bf16 %v4127, %v3771
    %v7088 = vpack.c.bf16 %v4839, %v4483
    %v7089 = vpack.c.bf16 %v5551, %v5195
    %v7090 = vpack.c.bf16 %v6263, %v5907
    %v7091 = vpack.c.bf16 %v6975, %v6619
    %v7092 = vpack.c.bf16 %v3418, %v3062
    %v7093 = vpack.c.bf16 %v4130, %v3774
    %v7094 = vpack.c.bf16 %v4842, %v4486
    %v7095 = vpack.c.bf16 %v5554, %v5198
    %v7096 = vpack.c.bf16 %v6266, %v5910
    %v7097 = vpack.c.bf16 %v6978, %v6622
    %v7098 = vpack.c.bf16 %v3420, %v3064
    %v7099 = vpack.c.bf16 %v4132, %v3776
    %v7100 = vpack.c.bf16 %v4844, %v4488
    %v7101 = vpack.c.bf16 %v5556, %v5200
    %v7102 = vpack.c.bf16 %v6268, %v5912
    %v7103 = vpack.c.bf16 %v6980, %v6624
    %v7104 = vpack.c.bf16 %v3423, %v3067
    %v7105 = vpack.c.bf16 %v4135, %v3779
    %v7106 = vpack.c.bf16 %v4847, %v4491
    %v7107 = vpack.c.bf16 %v5559, %v5203
    %v7108 = vpack.c.bf16 %v6271, %v5915
    %v7109 = vpack.c.bf16 %v6983, %v6627
    %v7110 = vpack.c.bf16 %v3425, %v3069
    %v7111 = vpack.c.bf16 %v4137, %v3781
    %v7112 = vpack.c.bf16 %v4849, %v4493
    %v7113 = vpack.c.bf16 %v5561, %v5205
    %v7114 = vpack.c.bf16 %v6273, %v5917
    %v7115 = vpack.c.bf16 %v6985, %v6629
    %v7116 = vpack.c.bf16 %v3428, %v3072
    %v7117 = vpack.c.bf16 %v4140, %v3784
    %v7118 = vpack.c.bf16 %v4852, %v4496
    %v7119 = vpack.c.bf16 %v5564, %v5208
    %v7120 = vpack.c.bf16 %v6276, %v5920
    %v7121 = vpack.c.bf16 %v6988, %v6632
    %v7122 = vpack.c.bf16 %v3430, %v3074
    %v7123 = vpack.c.bf16 %v4142, %v3786
    %v7124 = vpack.c.bf16 %v4854, %v4498
    %v7125 = vpack.c.bf16 %v5566, %v5210
    %v7126 = vpack.c.bf16 %v6278, %v5922
    %v7127 = vpack.c.bf16 %v6990, %v6634
    %v7128 = vpack.c.bf16 %v3433, %v3077
    %v7129 = vpack.c.bf16 %v4145, %v3789
    %v7130 = vpack.c.bf16 %v4857, %v4501
    %v7131 = vpack.c.bf16 %v5569, %v5213
    %v7132 = vpack.c.bf16 %v6281, %v5925
    %v7133 = vpack.c.bf16 %v6993, %v6637
    %v7134 = vpack.c.bf16 %v3435, %v3079
    %v7135 = vpack.c.bf16 %v4147, %v3791
    %v7136 = vpack.c.bf16 %v4859, %v4503
    %v7137 = vpack.c.bf16 %v5571, %v5215
    %v7138 = vpack.c.bf16 %v6283, %v5927
    %v7139 = vpack.c.bf16 %v6995, %v6639
    %v7140 = vpack.c.bf16 %v3438, %v3082
    %v7141 = vpack.c.bf16 %v4150, %v3794
    %v7142 = vpack.c.bf16 %v4862, %v4506
    %v7143 = vpack.c.bf16 %v5574, %v5218
    %v7144 = vpack.c.bf16 %v6286, %v5930
    %v7145 = vpack.c.bf16 %v6998, %v6642
    %v7146 = vpack.c.bf16 %v3440, %v3084
    %v7147 = vpack.c.bf16 %v4152, %v3796
    %v7148 = vpack.c.bf16 %v4864, %v4508
    %v7149 = vpack.c.bf16 %v5576, %v5220
    %v7150 = vpack.c.bf16 %v6288, %v5932
    %v7151 = vpack.c.bf16 %v7000, %v6644
    %v7152 = vpack.c.bf16 %v3443, %v3087
    %v7153 = vpack.c.bf16 %v4155, %v3799
    %v7154 = vpack.c.bf16 %v4867, %v4511
    %v7155 = vpack.c.bf16 %v5579, %v5223
    %v7156 = vpack.c.bf16 %v6291, %v5935
    %v7157 = vpack.c.bf16 %v7003, %v6647
    %v7158 = vpack.c.bf16 %v3445, %v3089
    %v7159 = vpack.c.bf16 %v4157, %v3801
    %v7160 = vpack.c.bf16 %v4869, %v4513
    %v7161 = vpack.c.bf16 %v5581, %v5225
    %v7162 = vpack.c.bf16 %v6293, %v5937
    %v7163 = vpack.c.bf16 %v7005, %v6649
    %v7164 = vpack.c.bf16 %v3448, %v3092
    %v7165 = vpack.c.bf16 %v4160, %v3804
    %v7166 = vpack.c.bf16 %v4872, %v4516
    %v7167 = vpack.c.bf16 %v5584, %v5228
    %v7168 = vpack.c.bf16 %v6296, %v5940
    %v7169 = vpack.c.bf16 %v7008, %v6652
    %v7170 = vpack.c.bf16 %v3450, %v3094
    %v7171 = vpack.c.bf16 %v4162, %v3806
    %v7172 = vpack.c.bf16 %v4874, %v4518
    %v7173 = vpack.c.bf16 %v5586, %v5230
    %v7174 = vpack.c.bf16 %v6298, %v5942
    %v7175 = vpack.c.bf16 %v7010, %v6654
    %v7176 = vpack.c.bf16 %v3453, %v3097
    %v7177 = vpack.c.bf16 %v4165, %v3809
    %v7178 = vpack.c.bf16 %v4877, %v4521
    %v7179 = vpack.c.bf16 %v5589, %v5233
    %v7180 = vpack.c.bf16 %v6301, %v5945
    %v7181 = vpack.c.bf16 %v7013, %v6657
    %v7182 = vpack.c.bf16 %v3455, %v3099
    %v7183 = vpack.c.bf16 %v4167, %v3811
    %v7184 = vpack.c.bf16 %v4879, %v4523
    %v7185 = vpack.c.bf16 %v5591, %v5235
    %v7186 = vpack.c.bf16 %v6303, %v5947
    %v7187 = vpack.c.bf16 %v7015, %v6659
    %v7188 = vpack.c.bf16 %v3458, %v3102
    %v7189 = vpack.c.bf16 %v4170, %v3814
    %v7190 = vpack.c.bf16 %v4882, %v4526
    %v7191 = vpack.c.bf16 %v5594, %v5238
    %v7192 = vpack.c.bf16 %v6306, %v5950
    %v7193 = vpack.c.bf16 %v7018, %v6662
    %v7194 = vpack.c.bf16 %v3460, %v3104
    %v7195 = vpack.c.bf16 %v4172, %v3816
    %v7196 = vpack.c.bf16 %v4884, %v4528
    %v7197 = vpack.c.bf16 %v5596, %v5240
    %v7198 = vpack.c.bf16 %v6308, %v5952
    %v7199 = vpack.c.bf16 %v7020, %v6664
    %v7200 = vpack.c.bf16 %v3463, %v3107
    %v7201 = vpack.c.bf16 %v4175, %v3819
    %v7202 = vpack.c.bf16 %v4887, %v4531
    %v7203 = vpack.c.bf16 %v5599, %v5243
    %v7204 = vpack.c.bf16 %v6311, %v5955
    %v7205 = vpack.c.bf16 %v7023, %v6667
    %v7206 = vpack.c.bf16 %v3465, %v3109
    %v7207 = vpack.c.bf16 %v4177, %v3821
    %v7208 = vpack.c.bf16 %v4889, %v4533
    %v7209 = vpack.c.bf16 %v5601, %v5245
    %v7210 = vpack.c.bf16 %v6313, %v5957
    %v7211 = vpack.c.bf16 %v7025, %v6669
    %v7212 = vpack.c.bf16 %v3468, %v3112
    %v7213 = vpack.c.bf16 %v4180, %v3824
    %v7214 = vpack.c.bf16 %v4892, %v4536
    %v7215 = vpack.c.bf16 %v5604, %v5248
    %v7216 = vpack.c.bf16 %v6316, %v5960
    %v7217 = vpack.c.bf16 %v7028, %v6672
    %v7218 = vpack.c.bf16 %v3470, %v3114
    %v7219 = vpack.c.bf16 %v4182, %v3826
    %v7220 = vpack.c.bf16 %v4894, %v4538
    %v7221 = vpack.c.bf16 %v5606, %v5250
    %v7222 = vpack.c.bf16 %v6318, %v5962
    %v7223 = vpack.c.bf16 %v7030, %v6674
    %7224 = vst [vmem:[%s3] sm:$0xff] %v7032
    %7225 = vst [vmem:[%s3 + $0x8] sm:$0xff] %v7033
    %7226 = vst [vmem:[%s3 + $0x10] sm:$0xff] %v7034
    %7227 = vst [vmem:[%s3 + $0x18] sm:$0xff] %v7035
    %7228 = vst [vmem:[%s3 + $0x20] sm:$0xff] %v7036
    %7229 = vst [vmem:[%s3 + $0x28] sm:$0xff] %v7037
    %7230 = vst [vmem:[%s3 + $0x30] sm:$0xff] %v7038
    %7231 = vst [vmem:[%s3 + $0x38] sm:$0xff] %v7039
    %7232 = vst [vmem:[%s3 + $0x40] sm:$0xff] %v7040
    %7233 = vst [vmem:[%s3 + $0x48] sm:$0xff] %v7041
    %7234 = vst [vmem:[%s3 + $0x50] sm:$0xff] %v7042
    %7235 = vst [vmem:[%s3 + $0x58] sm:$0xff] %v7043
    %7236 = vst [vmem:[%s3 + $0x60] sm:$0xff] %v7044
    %7237 = vst [vmem:[%s3 + $0x68] sm:$0xff] %v7045
    %7238 = vst [vmem:[%s3 + $0x70] sm:$0xff] %v7046
    %7239 = vst [vmem:[%s3 + $0x78] sm:$0xff] %v7047
    %7240 = vst [vmem:[%s3 + $0x80] sm:$0xff] %v7048
    %7241 = vst [vmem:[%s3 + $0x88] sm:$0xff] %v7049
    %7242 = vst [vmem:[%s3 + $0x90] sm:$0xff] %v7050
    %7243 = vst [vmem:[%s3 + $0x98] sm:$0xff] %v7051
    %7244 = vst [vmem:[%s3 + $0xa0] sm:$0xff] %v7052
    %7245 = vst [vmem:[%s3 + $0xa8] sm:$0xff] %v7053
    %7246 = vst [vmem:[%s3 + $0xb0] sm:$0xff] %v7054
    %7247 = vst [vmem:[%s3 + $0xb8] sm:$0xff] %v7055
    %7248 = vst [vmem:[%s3 + $0xc0] sm:$0xff] %v7056
    %7249 = vst [vmem:[%s3 + $0xc8] sm:$0xff] %v7057
    %7250 = vst [vmem:[%s3 + $0xd0] sm:$0xff] %v7058
    %7251 = vst [vmem:[%s3 + $0xd8] sm:$0xff] %v7059
    %7252 = vst [vmem:[%s3 + $0xe0] sm:$0xff] %v7060
    %7253 = vst [vmem:[%s3 + $0xe8] sm:$0xff] %v7061
    %7254 = vst [vmem:[%s3 + $0xf0] sm:$0xff] %v7062
    %7255 = vst [vmem:[%s3 + $0xf8] sm:$0xff] %v7063
    %7256 = vst [vmem:[%s3 + $0x100] sm:$0xff] %v7064
    %7257 = vst [vmem:[%s3 + $0x108] sm:$0xff] %v7065
    %7258 = vst [vmem:[%s3 + $0x110] sm:$0xff] %v7066
    %7259 = vst [vmem:[%s3 + $0x118] sm:$0xff] %v7067
    %7260 = vst [vmem:[%s3 + $0x120] sm:$0xff] %v7068
    %7261 = vst [vmem:[%s3 + $0x128] sm:$0xff] %v7069
    %7262 = vst [vmem:[%s3 + $0x130] sm:$0xff] %v7070
    %7263 = vst [vmem:[%s3 + $0x138] sm:$0xff] %v7071
    %7264 = vst [vmem:[%s3 + $0x140] sm:$0xff] %v7072
    %7265 = vst [vmem:[%s3 + $0x148] sm:$0xff] %v7073
    %7266 = vst [vmem:[%s3 + $0x150] sm:$0xff] %v7074
    %7267 = vst [vmem:[%s3 + $0x158] sm:$0xff] %v7075
    %7268 = vst [vmem:[%s3 + $0x160] sm:$0xff] %v7076
    %7269 = vst [vmem:[%s3 + $0x168] sm:$0xff] %v7077
    %7270 = vst [vmem:[%s3 + $0x170] sm:$0xff] %v7078
    %7271 = vst [vmem:[%s3 + $0x178] sm:$0xff] %v7079
    %7272 = vst [vmem:[%s3 + $0x180] sm:$0xff] %v7080
    %7273 = vst [vmem:[%s3 + $0x188] sm:$0xff] %v7081
    %7274 = vst [vmem:[%s3 + $0x190] sm:$0xff] %v7082
    %7275 = vst [vmem:[%s3 + $0x198] sm:$0xff] %v7083
    %7276 = vst [vmem:[%s3 + $0x1a0] sm:$0xff] %v7084
    %7277 = vst [vmem:[%s3 + $0x1a8] sm:$0xff] %v7085
    %7278 = vst [vmem:[%s3 + $0x1b0] sm:$0xff] %v7086
    %7279 = vst [vmem:[%s3 + $0x1b8] sm:$0xff] %v7087
    %7280 = vst [vmem:[%s3 + $0x1c0] sm:$0xff] %v7088
    %7281 = vst [vmem:[%s3 + $0x1c8] sm:$0xff] %v7089
    %7282 = vst [vmem:[%s3 + $0x1d0] sm:$0xff] %v7090
    %7283 = vst [vmem:[%s3 + $0x1d8] sm:$0xff] %v7091
    %7284 = vst [vmem:[%s3 + $0x1e0] sm:$0xff] %v7092
    %7285 = vst [vmem:[%s3 + $0x1e8] sm:$0xff] %v7093
    %7286 = vst [vmem:[%s3 + $0x1f0] sm:$0xff] %v7094
    %7287 = vst [vmem:[%s3 + $0x1f8] sm:$0xff] %v7095
    %7288 = vst [vmem:[%s3 + $0x200] sm:$0xff] %v7096
    %7289 = vst [vmem:[%s3 + $0x208] sm:$0xff] %v7097
    %7290 = vst [vmem:[%s3 + $0x210] sm:$0xff] %v7098
    %7291 = vst [vmem:[%s3 + $0x218] sm:$0xff] %v7099
    %7292 = vst [vmem:[%s3 + $0x220] sm:$0xff] %v7100
    %7293 = vst [vmem:[%s3 + $0x228] sm:$0xff] %v7101
    %7294 = vst [vmem:[%s3 + $0x230] sm:$0xff] %v7102
    %7295 = vst [vmem:[%s3 + $0x238] sm:$0xff] %v7103
    %7296 = vst [vmem:[%s3 + $0x240] sm:$0xff] %v7104
    %7297 = vst [vmem:[%s3 + $0x248] sm:$0xff] %v7105
    %7298 = vst [vmem:[%s3 + $0x250] sm:$0xff] %v7106
    %7299 = vst [vmem:[%s3 + $0x258] sm:$0xff] %v7107
    %7300 = vst [vmem:[%s3 + $0x260] sm:$0xff] %v7108
    %7301 = vst [vmem:[%s3 + $0x268] sm:$0xff] %v7109
    %7302 = vst [vmem:[%s3 + $0x270] sm:$0xff] %v7110
    %7303 = vst [vmem:[%s3 + $0x278] sm:$0xff] %v7111
    %7304 = vst [vmem:[%s3 + $0x280] sm:$0xff] %v7112
    %7305 = vst [vmem:[%s3 + $0x288] sm:$0xff] %v7113
    %7306 = vst [vmem:[%s3 + $0x290] sm:$0xff] %v7114
    %7307 = vst [vmem:[%s3 + $0x298] sm:$0xff] %v7115
    %7308 = vst [vmem:[%s3 + $0x2a0] sm:$0xff] %v7116
    %7309 = vst [vmem:[%s3 + $0x2a8] sm:$0xff] %v7117
    %7310 = vst [vmem:[%s3 + $0x2b0] sm:$0xff] %v7118
    %7311 = vst [vmem:[%s3 + $0x2b8] sm:$0xff] %v7119
    %7312 = vst [vmem:[%s3 + $0x2c0] sm:$0xff] %v7120
    %7313 = vst [vmem:[%s3 + $0x2c8] sm:$0xff] %v7121
    %7314 = vst [vmem:[%s3 + $0x2d0] sm:$0xff] %v7122
    %7315 = vst [vmem:[%s3 + $0x2d8] sm:$0xff] %v7123
    %7316 = vst [vmem:[%s3 + $0x2e0] sm:$0xff] %v7124
    %7317 = vst [vmem:[%s3 + $0x2e8] sm:$0xff] %v7125
    %7318 = vst [vmem:[%s3 + $0x2f0] sm:$0xff] %v7126
    %7319 = vst [vmem:[%s3 + $0x2f8] sm:$0xff] %v7127
    %7320 = vst [vmem:[%s3 + $0x300] sm:$0xff] %v7128
    %7321 = vst [vmem:[%s3 + $0x308] sm:$0xff] %v7129
    %7322 = vst [vmem:[%s3 + $0x310] sm:$0xff] %v7130
    %7323 = vst [vmem:[%s3 + $0x318] sm:$0xff] %v7131
    %7324 = vst [vmem:[%s3 + $0x320] sm:$0xff] %v7132
    %7325 = vst [vmem:[%s3 + $0x328] sm:$0xff] %v7133
    %7326 = vst [vmem:[%s3 + $0x330] sm:$0xff] %v7134
    %7327 = vst [vmem:[%s3 + $0x338] sm:$0xff] %v7135
    %7328 = vst [vmem:[%s3 + $0x340] sm:$0xff] %v7136
    %7329 = vst [vmem:[%s3 + $0x348] sm:$0xff] %v7137
    %7330 = vst [vmem:[%s3 + $0x350] sm:$0xff] %v7138
    %7331 = vst [vmem:[%s3 + $0x358] sm:$0xff] %v7139
    %7332 = vst [vmem:[%s3 + $0x360] sm:$0xff] %v7140
    %7333 = vst [vmem:[%s3 + $0x368] sm:$0xff] %v7141
    %7334 = vst [vmem:[%s3 + $0x370] sm:$0xff] %v7142
    %7335 = vst [vmem:[%s3 + $0x378] sm:$0xff] %v7143
    %7336 = vst [vmem:[%s3 + $0x380] sm:$0xff] %v7144
    %7337 = vst [vmem:[%s3 + $0x388] sm:$0xff] %v7145
    %7338 = vst [vmem:[%s3 + $0x390] sm:$0xff] %v7146
    %7339 = vst [vmem:[%s3 + $0x398] sm:$0xff] %v7147
    %7340 = vst [vmem:[%s3 + $0x3a0] sm:$0xff] %v7148
    %7341 = vst [vmem:[%s3 + $0x3a8] sm:$0xff] %v7149
    %7342 = vst [vmem:[%s3 + $0x3b0] sm:$0xff] %v7150
    %7343 = vst [vmem:[%s3 + $0x3b8] sm:$0xff] %v7151
    %7344 = vst [vmem:[%s3 + $0x3c0] sm:$0xff] %v7152
    %7345 = vst [vmem:[%s3 + $0x3c8] sm:$0xff] %v7153
    %7346 = vst [vmem:[%s3 + $0x3d0] sm:$0xff] %v7154
    %7347 = vst [vmem:[%s3 + $0x3d8] sm:$0xff] %v7155
    %7348 = vst [vmem:[%s3 + $0x3e0] sm:$0xff] %v7156
    %7349 = vst [vmem:[%s3 + $0x3e8] sm:$0xff] %v7157
    %7350 = vst [vmem:[%s3 + $0x3f0] sm:$0xff] %v7158
    %7351 = vst [vmem:[%s3 + $0x3f8] sm:$0xff] %v7159
    %7352 = vst [vmem:[%s3 + $0x400] sm:$0xff] %v7160
    %7353 = vst [vmem:[%s3 + $0x408] sm:$0xff] %v7161
    %7354 = vst [vmem:[%s3 + $0x410] sm:$0xff] %v7162
    %7355 = vst [vmem:[%s3 + $0x418] sm:$0xff] %v7163
    %7356 = vst [vmem:[%s3 + $0x420] sm:$0xff] %v7164
    %7357 = vst [vmem:[%s3 + $0x428] sm:$0xff] %v7165
    %7358 = vst [vmem:[%s3 + $0x430] sm:$0xff] %v7166
    %7359 = vst [vmem:[%s3 + $0x438] sm:$0xff] %v7167
    %7360 = vst [vmem:[%s3 + $0x440] sm:$0xff] %v7168
    %7361 = vst [vmem:[%s3 + $0x448] sm:$0xff] %v7169
    %7362 = vst [vmem:[%s3 + $0x450] sm:$0xff] %v7170
    %7363 = vst [vmem:[%s3 + $0x458] sm:$0xff] %v7171
    %7364 = vst [vmem:[%s3 + $0x460] sm:$0xff] %v7172
    %7365 = vst [vmem:[%s3 + $0x468] sm:$0xff] %v7173
    %7366 = vst [vmem:[%s3 + $0x470] sm:$0xff] %v7174
    %7367 = vst [vmem:[%s3 + $0x478] sm:$0xff] %v7175
    %7368 = vst [vmem:[%s3 + $0x480] sm:$0xff] %v7176
    %7369 = vst [vmem:[%s3 + $0x488] sm:$0xff] %v7177
    %7370 = vst [vmem:[%s3 + $0x490] sm:$0xff] %v7178
    %7371 = vst [vmem:[%s3 + $0x498] sm:$0xff] %v7179
    %7372 = vst [vmem:[%s3 + $0x4a0] sm:$0xff] %v7180
    %7373 = vst [vmem:[%s3 + $0x4a8] sm:$0xff] %v7181
    %7374 = vst [vmem:[%s3 + $0x4b0] sm:$0xff] %v7182
    %7375 = vst [vmem:[%s3 + $0x4b8] sm:$0xff] %v7183
    %7376 = vst [vmem:[%s3 + $0x4c0] sm:$0xff] %v7184
    %7377 = vst [vmem:[%s3 + $0x4c8] sm:$0xff] %v7185
    %7378 = vst [vmem:[%s3 + $0x4d0] sm:$0xff] %v7186
    %7379 = vst [vmem:[%s3 + $0x4d8] sm:$0xff] %v7187
    %7380 = vst [vmem:[%s3 + $0x4e0] sm:$0xff] %v7188
    %7381 = vst [vmem:[%s3 + $0x4e8] sm:$0xff] %v7189
    %7382 = vst [vmem:[%s3 + $0x4f0] sm:$0xff] %v7190
    %7383 = vst [vmem:[%s3 + $0x4f8] sm:$0xff] %v7191
    %7384 = vst [vmem:[%s3 + $0x500] sm:$0xff] %v7192
    %7385 = vst [vmem:[%s3 + $0x508] sm:$0xff] %v7193
    %7386 = vst [vmem:[%s3 + $0x510] sm:$0xff] %v7194
    %7387 = vst [vmem:[%s3 + $0x518] sm:$0xff] %v7195
    %7388 = vst [vmem:[%s3 + $0x520] sm:$0xff] %v7196
    %7389 = vst [vmem:[%s3 + $0x528] sm:$0xff] %v7197
    %7390 = vst [vmem:[%s3 + $0x530] sm:$0xff] %v7198
    %7391 = vst [vmem:[%s3 + $0x538] sm:$0xff] %v7199
    %7392 = vst [vmem:[%s3 + $0x540] sm:$0xff] %v7200
    %7393 = vst [vmem:[%s3 + $0x548] sm:$0xff] %v7201
    %7394 = vst [vmem:[%s3 + $0x550] sm:$0xff] %v7202
    %7395 = vst [vmem:[%s3 + $0x558] sm:$0xff] %v7203
    %7396 = vst [vmem:[%s3 + $0x560] sm:$0xff] %v7204
    %7397 = vst [vmem:[%s3 + $0x568] sm:$0xff] %v7205
    %7398 = vst [vmem:[%s3 + $0x570] sm:$0xff] %v7206
    %7399 = vst [vmem:[%s3 + $0x578] sm:$0xff] %v7207
    %7400 = vst [vmem:[%s3 + $0x580] sm:$0xff] %v7208
    %7401 = vst [vmem:[%s3 + $0x588] sm:$0xff] %v7209
    %7402 = vst [vmem:[%s3 + $0x590] sm:$0xff] %v7210
    %7403 = vst [vmem:[%s3 + $0x598] sm:$0xff] %v7211
    %7404 = vst [vmem:[%s3 + $0x5a0] sm:$0xff] %v7212
    %7405 = vst [vmem:[%s3 + $0x5a8] sm:$0xff] %v7213
    %7406 = vst [vmem:[%s3 + $0x5b0] sm:$0xff] %v7214
    %7407 = vst [vmem:[%s3 + $0x5b8] sm:$0xff] %v7215
    %7408 = vst [vmem:[%s3 + $0x5c0] sm:$0xff] %v7216
    %7409 = vst [vmem:[%s3 + $0x5c8] sm:$0xff] %v7217
    %7410 = vst [vmem:[%s3 + $0x5d0] sm:$0xff] %v7218
    %7411 = vst [vmem:[%s3 + $0x5d8] sm:$0xff] %v7219
    %7412 = vst [vmem:[%s3 + $0x5e0] sm:$0xff] %v7220
    %7413 = vst [vmem:[%s3 + $0x5e8] sm:$0xff] %v7221
    %7414 = vst [vmem:[%s3 + $0x5f0] sm:$0xff] %v7222
    %7415 = vst [vmem:[%s3 + $0x5f8] sm:$0xff] %v7223
    // Predicated region
    $region22: #{self_attention_pallas.3} parent=1 // pred_check
      _
    $region23: #{self_attention_pallas.3} parent=1 // pred_check_branch
      %7417 = sbr.rel (0) target = $region25
    $region24: #{self_attention_pallas.3} parent=1 // pred_region
      _
    $region25: #{self_attention_pallas.3} parent=1 // pred_fallthru
      _
    // Predicated region
    $region26: #{self_attention_pallas.3} parent=1 // pred_check
      _
    $region27: #{self_attention_pallas.3} parent=1 // pred_check_branch
      %7419 = sbr.rel (0) target = $region29
    $region28: #{self_attention_pallas.3} parent=1 // pred_region
      _
    $region29: #{self_attention_pallas.3} parent=1 // pred_fallthru
      _
    %7420 = vsyncpa [#allocation3], 1
    %7421 = vsyncpa [#allocation5], 1

</llo_original>
